<compile_context>
chip_gen: v6e
topology: v6e:2x2x1
jax: 0.10.0
libtpu: 0.0.40
codegen_flags: <defaults>
</compile_context>

<pallas_src>
import jax
import jax.numpy as jnp
from jax.experimental import pallas as pl
from jax.experimental.pallas import tpu as pltpu

VL_DIM = 512        # CLIP image/text feature dim
SD_DIM = 1000       # Swin-S classifier output dim
L1_OUT = 512
L2_OUT = 512
FUSE_IN = L1_OUT + L2_OUT   # 1024
H1 = 1024
H2 = 128
NUM_HEADS = 3


def _fusion_kernel(
    img_ref, txt_ref, sf_ref,                 # backbone features (bf16)
    w1a_ref, w1b_ref, b1_ref,                 # linear1, split over the concat axis
    w2_ref, b2_ref,                           # linear2
    fw1a_ref, fw1b_ref, fb1_ref,              # fusion layer 1 (split over concat axis)
    fw2_ref, fb2_ref, fw3_ref, fb3_ref,       # fusion layers 2 and 3
    out_ref,
):
    # shared trunk (recomputed per head; trivial vs. per-head weight DMA at small B)
    # cat([img, txt]) @ W1 == img @ W1[:512] + txt @ W1[512:]
    l1 = jnp.maximum(
        jnp.dot(img_ref[...], w1a_ref[...], preferred_element_type=jnp.float32)
        + jnp.dot(txt_ref[...], w1b_ref[...], preferred_element_type=jnp.float32)
        + b1_ref[...], 0.0)
    l2 = jnp.maximum(
        jnp.dot(sf_ref[...], w2_ref[...], preferred_element_type=jnp.float32)
        + b2_ref[...], 0.0)
    l1 = l1.astype(jnp.bfloat16)
    l2 = l2.astype(jnp.bfloat16)

    # cat([l1, l2]) @ FW1 == l1 @ FW1[:512] + l2 @ FW1[512:]
    h1 = (jnp.dot(l1, fw1a_ref[0], preferred_element_type=jnp.float32)
          + jnp.dot(l2, fw1b_ref[0], preferred_element_type=jnp.float32)
          + fb1_ref[0])
    h1 = jnp.maximum(h1, 0.0).astype(jnp.bfloat16)
    h2 = jnp.maximum(
        jnp.dot(h1, fw2_ref[0], preferred_element_type=jnp.float32) + fb2_ref[0], 0.0)

    # Linear(128 -> 1): VPU multiply + cross-lane reduce (avoid an N=1 MXU pass)
    out = jnp.sum(h2 * fw3_ref[0], axis=-1, keepdims=True) + fb3_ref[0]
    out_ref[0] = out


def t23dcqav_fusion(img_feat, txt_feat, swin_feat, params):
    """Returns (out_1, out_2, out_3), each of shape [batch]."""
    (w1, b1, w2, b2, fw1, fb1, fw2, fb2, fw3, fb3) = params
    B = img_feat.shape[0]

    # glue (plain JAX): weight splits along the concat axes + bf16 cast of the
    # streamed weights (the kernel is HBM-bandwidth bound on weight traffic).
    wd = jnp.bfloat16
    w1a = w1[:VL_DIM].astype(wd)                        # (512, 512)
    w1b = w1[VL_DIM:].astype(wd)                        # (512, 512)
    w2c = w2.astype(wd)                                 # (1000, 512)
    fw1a = fw1[:, :L1_OUT, :].astype(wd)                # (3, 512, 1024)
    fw1b = fw1[:, L1_OUT:, :].astype(wd)                # (3, 512, 1024)
    fw2c = fw2.astype(wd)                               # (3, 1024, 128)
    fw3v = jnp.transpose(fw3, (0, 2, 1))                # (3, 1, 128) row-vector, f32

    const = lambda shape: pl.BlockSpec(shape, lambda h: (0,) * len(shape))
    head = lambda shape: pl.BlockSpec(shape, lambda h: (h,) + (0,) * (len(shape) - 1))

    out = pl.pallas_call(
        _fusion_kernel,
        out_shape=jax.ShapeDtypeStruct((NUM_HEADS, B, 1), jnp.float32),
        grid=(NUM_HEADS,),
        in_specs=[
            const((B, VL_DIM)),                # img_feat
            const((B, VL_DIM)),                # txt_feat
            const((B, SD_DIM)),                # swin_feat
            const((VL_DIM, L1_OUT)),           # w1a
            const((VL_DIM, L1_OUT)),           # w1b
            const((1, L1_OUT)),                # b1
            const((SD_DIM, L2_OUT)),           # w2
            const((1, L2_OUT)),                # b2
            head((1, L1_OUT, H1)),             # fw1a
            head((1, L2_OUT, H1)),             # fw1b
            head((1, 1, H1)),                  # fb1
            head((1, H1, H2)),                 # fw2
            head((1, 1, H2)),                  # fb2
            head((1, 1, H2)),                  # fw3 (row vector)
            head((1, 1, 1)),                   # fb3
        ],
        out_specs=head((1, B, 1)),
        compiler_params=pltpu.CompilerParams(
            dimension_semantics=("parallel",),   # heads are independent -> megacore split
            vmem_limit_bytes=40 << 20,           # fits v7x's 64 MiB physical VMEM
        ),
    )(img_feat.astype(wd), txt_feat.astype(wd), swin_feat.astype(wd),
      w1a, w1b, b1[None, :], w2c, b2[None, :],
      fw1a, fw1b, fb1[:, None, :],
      fw2c, fb2[:, None, :], fw3v, fb3[:, None, :])

    return out[0, :, 0], out[1, :, 0], out[2, :, 0]


def _init_linear(key, fan_in, fan_out):
    kw, kb = jax.random.split(key)
    bound = 1.0 / jnp.sqrt(fan_in)
    w = jax.random.uniform(kw, (fan_in, fan_out), jnp.float32, -bound, bound)
    b = jax.random.uniform(kb, (fan_out,), jnp.float32, -bound, bound)
    return w, b


def init_params(key):
    keys = jax.random.split(key, 2 + NUM_HEADS)
    w1, b1 = _init_linear(keys[0], 2 * VL_DIM, L1_OUT)
    w2, b2 = _init_linear(keys[1], SD_DIM, L2_OUT)
    fw1s, fb1s, fw2s, fb2s, fw3s, fb3s = [], [], [], [], [], []
    for h in range(NUM_HEADS):
        kw1, kw2, kw3 = jax.random.split(keys[2 + h], 3)
        a, ab = _init_linear(kw1, FUSE_IN, H1)
        c, cb = _init_linear(kw2, H1, H2)
        d, db = _init_linear(kw3, H2, 1)
        fw1s.append(a); fb1s.append(ab)
        fw2s.append(c); fb2s.append(cb)
        fw3s.append(d); fb3s.append(db)
    return (w1, b1, w2, b2,
            jnp.stack(fw1s), jnp.stack(fb1s),
            jnp.stack(fw2s), jnp.stack(fb2s),
            jnp.stack(fw3s), jnp.stack(fb3s))


def reference(img_feat, txt_feat, swin_feat, params):
    (w1, b1, w2, b2, fw1, fb1, fw2, fb2, fw3, fb3) = params
    l1 = jax.nn.relu(jnp.concatenate([img_feat, txt_feat], -1) @ w1 + b1)
    l2 = jax.nn.relu(swin_feat @ w2 + b2)
    feat = jnp.concatenate([l1, l2], axis=-1)
    outs = []
    for h in range(NUM_HEADS):
        h1 = jax.nn.relu(feat @ fw1[h] + fb1[h])
        h2 = jax.nn.relu(h1 @ fw2[h] + fb2[h])
        outs.append((h2 @ fw3[h] + fb3[h])[:, 0])
    return tuple(outs)


if __name__ == "__main__":
    B = 2
    key = jax.random.PRNGKey(0)
    k_img, k_txt, k_sf, k_par = jax.random.split(key, 4)

    # backbone output features (the pretrained encoders themselves are not translated)
    img_feat = jax.random.normal(k_img, (B, VL_DIM), jnp.float32)
    txt_feat = jax.random.normal(k_txt, (B, VL_DIM), jnp.float32)
    swin_feat = jax.random.normal(k_sf, (B, SD_DIM), jnp.float32)
    params = init_params(k_par)

    out1, out2, out3 = t23dcqav_fusion(img_feat, txt_feat, swin_feat, params)
    jax.block_until_ready((out1, out2, out3))

    r1, r2, r3 = reference(img_feat, txt_feat, swin_feat, params)
    assert out1.shape == (B,) and out2.shape == (B,) and out3.shape == (B,)
    for o, r in ((out1, r1), (out2, r2), (out3, r3)):
        # bf16 weight/activation path vs. f32 reference
        assert jnp.allclose(o, r, atol=5e-2, rtol=5e-2), (o, r)

    print("KERNEL_OK")
</pallas_src>

<mosaic_0001>
module attributes {stable_mosaic.version = 11 : i64} {
  func.func @_fusion_kernel(%arg0: i32, %arg1: memref<2x512xbf16, #tpu.memory_space<vmem>>, %arg2: memref<2x512xbf16, #tpu.memory_space<vmem>>, %arg3: memref<2x1000xbf16, #tpu.memory_space<vmem>>, %arg4: memref<512x512xbf16, #tpu.memory_space<vmem>>, %arg5: memref<512x512xbf16, #tpu.memory_space<vmem>>, %arg6: memref<1x512xf32, #tpu.memory_space<vmem>>, %arg7: memref<1000x512xbf16, #tpu.memory_space<vmem>>, %arg8: memref<1x512xf32, #tpu.memory_space<vmem>>, %arg9: memref<1x512x1024xbf16, #tpu.memory_space<vmem>>, %arg10: memref<1x512x1024xbf16, #tpu.memory_space<vmem>>, %arg11: memref<1x1x1024xf32, #tpu.memory_space<vmem>>, %arg12: memref<1x1024x128xbf16, #tpu.memory_space<vmem>>, %arg13: memref<1x1x128xf32, #tpu.memory_space<vmem>>, %arg14: memref<1x1x128xf32, #tpu.memory_space<vmem>>, %arg15: memref<1x1x1xf32, #tpu.memory_space<vmem>>, %arg16: memref<1x2x1xf32, #tpu.memory_space<vmem>>) attributes {dimension_semantics = [#tpu.dimension_semantics<parallel>], iteration_bounds = array<i64: 3>, scalar_prefetch = 0 : i64, scratch_operands = 0 : i64, tpu.core_type = #tpu.core_type<tc>, window_params = [{pipeline_mode = #tpu.pipeline_mode<synchronous>, transform_indices = @transform_0, window_bounds = array<i64: 2, 512>}, {pipeline_mode = #tpu.pipeline_mode<synchronous>, transform_indices = @transform_1, window_bounds = array<i64: 2, 512>}, {pipeline_mode = #tpu.pipeline_mode<synchronous>, transform_indices = @transform_2, window_bounds = array<i64: 2, 1000>}, {pipeline_mode = #tpu.pipeline_mode<synchronous>, transform_indices = @transform_3, window_bounds = array<i64: 512, 512>}, {pipeline_mode = #tpu.pipeline_mode<synchronous>, transform_indices = @transform_4, window_bounds = array<i64: 512, 512>}, {pipeline_mode = #tpu.pipeline_mode<synchronous>, transform_indices = @transform_5, window_bounds = array<i64: 1, 512>}, {pipeline_mode = #tpu.pipeline_mode<synchronous>, transform_indices = @transform_6, window_bounds = array<i64: 1000, 512>}, {pipeline_mode = #tpu.pipeline_mode<synchronous>, transform_indices = @transform_7, window_bounds = array<i64: 1, 512>}, {transform_indices = @transform_8, window_bounds = array<i64: 1, 512, 1024>}, {transform_indices = @transform_9, window_bounds = array<i64: 1, 512, 1024>}, {transform_indices = @transform_10, window_bounds = array<i64: 1, 1, 1024>}, {transform_indices = @transform_11, window_bounds = array<i64: 1, 1024, 128>}, {transform_indices = @transform_12, window_bounds = array<i64: 1, 1, 128>}, {transform_indices = @transform_13, window_bounds = array<i64: 1, 1, 128>}, {transform_indices = @transform_14, window_bounds = array<i64: 1, 1, 1>}, {transform_indices = @transform_15, window_bounds = array<i64: 1, 2, 1>}]} {
    %c0 = arith.constant 0 : index
    %c0_0 = arith.constant 0 : index
    %0 = vector.load %arg1[%c0, %c0_0] : memref<2x512xbf16, #tpu.memory_space<vmem>>, vector<2x512xbf16>
    %c0_1 = arith.constant 0 : index
    %c0_2 = arith.constant 0 : index
    %1 = vector.load %arg4[%c0_1, %c0_2] : memref<512x512xbf16, #tpu.memory_space<vmem>>, vector<512x512xbf16>
    %cst = arith.constant dense<0.000000e+00> : vector<2x512xf32>
    %2 = tpu.matmul %0, %1, %cst {dimension_numbers = #tpu.dot_dimension_numbers<[1], [0], [0], [1], [0, 0, 1, 1], [], []>} : vector<2x512xbf16>, vector<512x512xbf16>, vector<2x512xf32> -> vector<2x512xf32>
    %c0_3 = arith.constant 0 : index
    %c0_4 = arith.constant 0 : index
    %3 = vector.load %arg2[%c0_3, %c0_4] : memref<2x512xbf16, #tpu.memory_space<vmem>>, vector<2x512xbf16>
    %c0_5 = arith.constant 0 : index
    %c0_6 = arith.constant 0 : index
    %4 = vector.load %arg5[%c0_5, %c0_6] : memref<512x512xbf16, #tpu.memory_space<vmem>>, vector<512x512xbf16>
    %cst_7 = arith.constant dense<0.000000e+00> : vector<2x512xf32>
    %5 = tpu.matmul %3, %4, %cst_7 {dimension_numbers = #tpu.dot_dimension_numbers<[1], [0], [0], [1], [0, 0, 1, 1], [], []>} : vector<2x512xbf16>, vector<512x512xbf16>, vector<2x512xf32> -> vector<2x512xf32>
    %6 = arith.addf %2, %5 : vector<2x512xf32>
    %c0_8 = arith.constant 0 : index
    %c0_9 = arith.constant 0 : index
    %7 = vector.load %arg6[%c0_8, %c0_9] : memref<1x512xf32, #tpu.memory_space<vmem>>, vector<1x512xf32>
    %8 = vector.broadcast %7 : vector<1x512xf32> to vector<2x512xf32>
    %9 = arith.addf %6, %8 : vector<2x512xf32>
    %cst_10 = arith.constant 0.000000e+00 : f32
    %10 = vector.broadcast %cst_10 : f32 to vector<2x512xf32>
    %11 = arith.maximumf %9, %10 : vector<2x512xf32>
    %c0_11 = arith.constant 0 : index
    %c0_12 = arith.constant 0 : index
    %12 = vector.load %arg3[%c0_11, %c0_12] : memref<2x1000xbf16, #tpu.memory_space<vmem>>, vector<2x1000xbf16>
    %c0_13 = arith.constant 0 : index
    %c0_14 = arith.constant 0 : index
    %13 = vector.load %arg7[%c0_13, %c0_14] : memref<1000x512xbf16, #tpu.memory_space<vmem>>, vector<1000x512xbf16>
    %cst_15 = arith.constant dense<0.000000e+00> : vector<2x512xf32>
    %14 = tpu.matmul %12, %13, %cst_15 {dimension_numbers = #tpu.dot_dimension_numbers<[1], [0], [0], [1], [0, 0, 1, 1], [], []>} : vector<2x1000xbf16>, vector<1000x512xbf16>, vector<2x512xf32> -> vector<2x512xf32>
    %c0_16 = arith.constant 0 : index
    %c0_17 = arith.constant 0 : index
    %15 = vector.load %arg8[%c0_16, %c0_17] : memref<1x512xf32, #tpu.memory_space<vmem>>, vector<1x512xf32>
    %16 = vector.broadcast %15 : vector<1x512xf32> to vector<2x512xf32>
    %17 = arith.addf %14, %16 : vector<2x512xf32>
    %cst_18 = arith.constant 0.000000e+00 : f32
    %18 = vector.broadcast %cst_18 : f32 to vector<2x512xf32>
    %19 = arith.maximumf %17, %18 : vector<2x512xf32>
    %20 = arith.truncf %11 : vector<2x512xf32> to vector<2x512xbf16>
    %21 = arith.truncf %19 : vector<2x512xf32> to vector<2x512xbf16>
    %c0_19 = arith.constant 0 : index
    %c0_20 = arith.constant 0 : index
    %c0_21 = arith.constant 0 : index
    %22 = vector.load %arg9[%c0_19, %c0_20, %c0_21] : memref<1x512x1024xbf16, #tpu.memory_space<vmem>>, vector<1x512x1024xbf16>
    %23 = vector.shape_cast %22 : vector<1x512x1024xbf16> to vector<512x1024xbf16>
    %cst_22 = arith.constant dense<0.000000e+00> : vector<2x1024xf32>
    %24 = tpu.matmul %20, %23, %cst_22 {dimension_numbers = #tpu.dot_dimension_numbers<[1], [0], [0], [1], [0, 0, 1, 1], [], []>} : vector<2x512xbf16>, vector<512x1024xbf16>, vector<2x1024xf32> -> vector<2x1024xf32>
    %c0_23 = arith.constant 0 : index
    %c0_24 = arith.constant 0 : index
    %c0_25 = arith.constant 0 : index
    %25 = vector.load %arg10[%c0_23, %c0_24, %c0_25] : memref<1x512x1024xbf16, #tpu.memory_space<vmem>>, vector<1x512x1024xbf16>
    %26 = vector.shape_cast %25 : vector<1x512x1024xbf16> to vector<512x1024xbf16>
    %cst_26 = arith.constant dense<0.000000e+00> : vector<2x1024xf32>
    %27 = tpu.matmul %21, %26, %cst_26 {dimension_numbers = #tpu.dot_dimension_numbers<[1], [0], [0], [1], [0, 0, 1, 1], [], []>} : vector<2x512xbf16>, vector<512x1024xbf16>, vector<2x1024xf32> -> vector<2x1024xf32>
    %28 = arith.addf %24, %27 : vector<2x1024xf32>
    %c0_27 = arith.constant 0 : index
    %c0_28 = arith.constant 0 : index
    %c0_29 = arith.constant 0 : index
    %29 = vector.load %arg11[%c0_27, %c0_28, %c0_29] : memref<1x1x1024xf32, #tpu.memory_space<vmem>>, vector<1x1x1024xf32>
    %30 = vector.shape_cast %29 : vector<1x1x1024xf32> to vector<1x1024xf32>
    %31 = vector.broadcast %30 : vector<1x1024xf32> to vector<2x1024xf32>
    %32 = arith.addf %28, %31 : vector<2x1024xf32>
    %cst_30 = arith.constant 0.000000e+00 : f32
    %33 = vector.broadcast %cst_30 : f32 to vector<2x1024xf32>
    %34 = arith.maximumf %32, %33 : vector<2x1024xf32>
    %35 = arith.truncf %34 : vector<2x1024xf32> to vector<2x1024xbf16>
    %c0_31 = arith.constant 0 : index
    %c0_32 = arith.constant 0 : index
    %c0_33 = arith.constant 0 : index
    %36 = vector.load %arg12[%c0_31, %c0_32, %c0_33] : memref<1x1024x128xbf16, #tpu.memory_space<vmem>>, vector<1x1024x128xbf16>
    %37 = vector.shape_cast %36 : vector<1x1024x128xbf16> to vector<1024x128xbf16>
    %cst_34 = arith.constant dense<0.000000e+00> : vector<2x128xf32>
    %38 = tpu.matmul %35, %37, %cst_34 {dimension_numbers = #tpu.dot_dimension_numbers<[1], [0], [0], [1], [0, 0, 1, 1], [], []>} : vector<2x1024xbf16>, vector<1024x128xbf16>, vector<2x128xf32> -> vector<2x128xf32>
    %c0_35 = arith.constant 0 : index
    %c0_36 = arith.constant 0 : index
    %c0_37 = arith.constant 0 : index
    %39 = vector.load %arg13[%c0_35, %c0_36, %c0_37] : memref<1x1x128xf32, #tpu.memory_space<vmem>>, vector<1x1x128xf32>
    %40 = vector.shape_cast %39 : vector<1x1x128xf32> to vector<1x128xf32>
    %41 = vector.broadcast %40 : vector<1x128xf32> to vector<2x128xf32>
    %42 = arith.addf %38, %41 : vector<2x128xf32>
    %cst_38 = arith.constant 0.000000e+00 : f32
    %43 = vector.broadcast %cst_38 : f32 to vector<2x128xf32>
    %44 = arith.maximumf %42, %43 : vector<2x128xf32>
    %c0_39 = arith.constant 0 : index
    %c0_40 = arith.constant 0 : index
    %c0_41 = arith.constant 0 : index
    %45 = vector.load %arg14[%c0_39, %c0_40, %c0_41] : memref<1x1x128xf32, #tpu.memory_space<vmem>>, vector<1x1x128xf32>
    %46 = vector.shape_cast %45 : vector<1x1x128xf32> to vector<1x128xf32>
    %47 = vector.broadcast %46 : vector<1x128xf32> to vector<2x128xf32>
    %48 = arith.mulf %44, %47 : vector<2x128xf32>
    %cst_42 = arith.constant dense<0.000000e+00> : vector<2xf32>
    %49 = vector.multi_reduction <add>, %48, %cst_42 [1] : vector<2x128xf32> to vector<2xf32>
    %50 = vector.shape_cast %49 : vector<2xf32> to vector<2x1xf32>
    %c0_43 = arith.constant 0 : index
    %c0_44 = arith.constant 0 : index
    %c0_45 = arith.constant 0 : index
    %51 = vector.load %arg15[%c0_43, %c0_44, %c0_45] : memref<1x1x1xf32, #tpu.memory_space<vmem>>, vector<1x1x1xf32>
    %52 = vector.shape_cast %51 : vector<1x1x1xf32> to vector<1x1xf32>
    %53 = vector.broadcast %52 : vector<1x1xf32> to vector<2x1xf32>
    %54 = arith.addf %50, %53 : vector<2x1xf32>
    %c0_46 = arith.constant 0 : index
    %c0_47 = arith.constant 0 : index
    %c0_48 = arith.constant 0 : index
    %55 = vector.load %arg16[%c0_46, %c0_47, %c0_48] : memref<1x2x1xf32, #tpu.memory_space<vmem>>, vector<1x2x1xf32>
    %56 = vector.shape_cast %55 : vector<1x2x1xf32> to vector<2x1xf32>
    %57 = vector.shape_cast %54 : vector<2x1xf32> to vector<1x2x1xf32>
    tpu.vector_store %arg16[%c0_46, %c0_47, %c0_48], %57 {strides = array<i32>} : memref<1x2x1xf32, #tpu.memory_space<vmem>>, vector<1x2x1xf32>,
    return
  }
  func.func @transform_0(%arg0: i32) -> (i32, i32) {
    %c0_i32 = arith.constant 0 : i32
    %c0_i32_0 = arith.constant 0 : i32
    %c0_i32_1 = arith.constant 0 : i32
    return %c0_i32, %c0_i32_0 : i32, i32
  }
  func.func @transform_1(%arg0: i32) -> (i32, i32) {
    %c0_i32 = arith.constant 0 : i32
    %c0_i32_0 = arith.constant 0 : i32
    %c0_i32_1 = arith.constant 0 : i32
    return %c0_i32, %c0_i32_0 : i32, i32
  }
  func.func @transform_2(%arg0: i32) -> (i32, i32) {
    %c0_i32 = arith.constant 0 : i32
    %c0_i32_0 = arith.constant 0 : i32
    %c0_i32_1 = arith.constant 0 : i32
    return %c0_i32, %c0_i32_0 : i32, i32
  }
  func.func @transform_3(%arg0: i32) -> (i32, i32) {
    %c0_i32 = arith.constant 0 : i32
    %c0_i32_0 = arith.constant 0 : i32
    %c0_i32_1 = arith.constant 0 : i32
    return %c0_i32, %c0_i32_0 : i32, i32
  }
  func.func @transform_4(%arg0: i32) -> (i32, i32) {
    %c0_i32 = arith.constant 0 : i32
    %c0_i32_0 = arith.constant 0 : i32
    %c0_i32_1 = arith.constant 0 : i32
    return %c0_i32, %c0_i32_0 : i32, i32
  }
  func.func @transform_5(%arg0: i32) -> (i32, i32) {
    %c0_i32 = arith.constant 0 : i32
    %c0_i32_0 = arith.constant 0 : i32
    %c0_i32_1 = arith.constant 0 : i32
    return %c0_i32, %c0_i32_0 : i32, i32
  }
  func.func @transform_6(%arg0: i32) -> (i32, i32) {
    %c0_i32 = arith.constant 0 : i32
    %c0_i32_0 = arith.constant 0 : i32
    %c0_i32_1 = arith.constant 0 : i32
    return %c0_i32, %c0_i32_0 : i32, i32
  }
  func.func @transform_7(%arg0: i32) -> (i32, i32) {
    %c0_i32 = arith.constant 0 : i32
    %c0_i32_0 = arith.constant 0 : i32
    %c0_i32_1 = arith.constant 0 : i32
    return %c0_i32, %c0_i32_0 : i32, i32
  }
  func.func @transform_8(%arg0: i32) -> (i32, i32, i32) {
    %c0_i32 = arith.constant 0 : i32
    %c0_i32_0 = arith.constant 0 : i32
    %c0_i32_1 = arith.constant 0 : i32
    return %arg0, %c0_i32, %c0_i32_0 : i32, i32, i32
  }
  func.func @transform_9(%arg0: i32) -> (i32, i32, i32) {
    %c0_i32 = arith.constant 0 : i32
    %c0_i32_0 = arith.constant 0 : i32
    %c0_i32_1 = arith.constant 0 : i32
    return %arg0, %c0_i32, %c0_i32_0 : i32, i32, i32
  }
  func.func @transform_10(%arg0: i32) -> (i32, i32, i32) {
    %c0_i32 = arith.constant 0 : i32
    %c0_i32_0 = arith.constant 0 : i32
    %c0_i32_1 = arith.constant 0 : i32
    return %arg0, %c0_i32, %c0_i32_0 : i32, i32, i32
  }
  func.func @transform_11(%arg0: i32) -> (i32, i32, i32) {
    %c0_i32 = arith.constant 0 : i32
    %c0_i32_0 = arith.constant 0 : i32
    %c0_i32_1 = arith.constant 0 : i32
    return %arg0, %c0_i32, %c0_i32_0 : i32, i32, i32
  }
  func.func @transform_12(%arg0: i32) -> (i32, i32, i32) {
    %c0_i32 = arith.constant 0 : i32
    %c0_i32_0 = arith.constant 0 : i32
    %c0_i32_1 = arith.constant 0 : i32
    return %arg0, %c0_i32, %c0_i32_0 : i32, i32, i32
  }
  func.func @transform_13(%arg0: i32) -> (i32, i32, i32) {
    %c0_i32 = arith.constant 0 : i32
    %c0_i32_0 = arith.constant 0 : i32
    %c0_i32_1 = arith.constant 0 : i32
    return %arg0, %c0_i32, %c0_i32_0 : i32, i32, i32
  }
  func.func @transform_14(%arg0: i32) -> (i32, i32, i32) {
    %c0_i32 = arith.constant 0 : i32
    %c0_i32_0 = arith.constant 0 : i32
    %c0_i32_1 = arith.constant 0 : i32
    return %arg0, %c0_i32, %c0_i32_0 : i32, i32, i32
  }
  func.func @transform_15(%arg0: i32) -> (i32, i32, i32) {
    %c0_i32 = arith.constant 0 : i32
    %c0_i32_0 = arith.constant 0 : i32
    %c0_i32_1 = arith.constant 0 : i32
    return %arg0, %c0_i32, %c0_i32_0 : i32, i32, i32
  }
}

</mosaic_0001>

<llo_original>
// kernel: tpu_custom_call.1
$region0: #{tpu_custom_call.1}
  #allocation0 [shape = 'u32[]', space=smem, size = 0x4, offset = 0x4, fixed_abs, tag = 'smem constant byte address 0x4 - core index']
  #allocation1 [shape = 'u32[144,128]{1,0:T(1,128)}', space=vmem, size = 0x12000, scoped, tag = 'internal scratch']
  %s0 = inlined_call_operand.hbm [shape: bf16[2,512], index: 0, kind: input, shape index: {}]
  %s1 = inlined_call_operand.hbm [shape: bf16[2,512], index: 1, kind: input, shape index: {}]
  %s2 = inlined_call_operand.hbm [shape: bf16[2,1000], index: 2, kind: input, shape index: {}]
  %s3 = inlined_call_operand.hbm [shape: bf16[512,512], index: 3, kind: input, shape index: {}]
  %s4 = inlined_call_operand.hbm [shape: bf16[512,512], index: 4, kind: input, shape index: {}]
  %s5 = inlined_call_operand.hbm [shape: f32[1,512], index: 5, kind: input, shape index: {}]
  %s6 = inlined_call_operand.hbm [shape: bf16[1000,512], index: 6, kind: input, shape index: {}]
  %s7 = inlined_call_operand.hbm [shape: f32[1,512], index: 7, kind: input, shape index: {}]
  %s8 = inlined_call_operand.hbm [shape: bf16[3,512,1024], index: 8, kind: input, shape index: {}]
  %s9 = inlined_call_operand.hbm [shape: bf16[3,512,1024], index: 9, kind: input, shape index: {}]
  %s10 = inlined_call_operand.hbm [shape: f32[3,1,1024], index: 10, kind: input, shape index: {}]
  %s11 = inlined_call_operand.hbm [shape: bf16[3,1024,128], index: 11, kind: input, shape index: {}]
  %s12 = inlined_call_operand.hbm [shape: f32[3,1,128], index: 12, kind: input, shape index: {}]
  %s13 = inlined_call_operand.hbm [shape: f32[3,1,128], index: 13, kind: input, shape index: {}]
  %s14 = inlined_call_operand.vmem [shape: f32[3,1,1], index: 14, kind: input, shape index: {}]
  %s15 = inlined_call_operand.vmem [shape: f32[3,2,1], index: 15, kind: output, shape index: {}]
  %s16 = sld [smem:[#allocation0]]
  $region149: #{tpu_custom_call.1} parent=0
    _
  %s18 = ssub.s32 1, %s16
  %s19 = scalar_select 0, %s18, %s16
  $region1: #{tpu_custom_call.1} parent=0
    #allocation2 [shape = 'u8[2048]{0}', space=vmem, size = 0x800, scoped, tag = 'input window, operand 0, single buffered']
    #allocation3 [shape = 's32[2]{0}', space=sflag, size = 0x8, scoped, tag = 'scoped memory for tpu_custom_call.1']
    #allocation4 [shape = 'u8[2048]{0}', space=vmem, size = 0x800, scoped, tag = 'input window, operand 1, single buffered']
    #allocation5 [shape = 's32[1]{0}', space=sflag, size = 0x4, scoped, tag = 'scoped memory for tpu_custom_call.1']
    #allocation6 [shape = 'u8[4096]{0}', space=vmem, size = 0x1000, scoped, tag = 'input window, operand 2, single buffered']
    #allocation7 [shape = 'u8[524288]{0}', space=vmem, size = 0x80000, scoped, tag = 'input window, operand 3, single buffered']
    #allocation8 [shape = 's32[1]{0}', space=sflag, size = 0x4, scoped, tag = 'scoped memory for tpu_custom_call.1']
    #allocation9 [shape = 'u8[524288]{0}', space=vmem, size = 0x80000, scoped, tag = 'input window, operand 4, single buffered']
    #allocation10 [shape = 'u8[2048]{0}', space=vmem, size = 0x800, scoped, tag = 'input window, operand 5, single buffered']
    #allocation11 [shape = 's32[1]{0}', space=sflag, size = 0x4, scoped, tag = 'scoped memory for tpu_custom_call.1']
    #allocation12 [shape = 'u8[1024000]{0}', space=vmem, size = 0xfa000, scoped, tag = 'input window, operand 6, single buffered']
    #allocation13 [shape = 'u8[2048]{0}', space=vmem, size = 0x800, scoped, tag = 'input window, operand 7, single buffered']
    #allocation14 [shape = 's32[1]{0}', space=sflag, size = 0x4, scoped, tag = 'scoped memory for tpu_custom_call.1']
    #allocation15 [shape = 'u8[2097152]{0}', space=vmem, size = 0x200000, scoped, tag = 'input window, operand 8']
    #allocation16 [shape = 'u8[2097152]{0}', space=vmem, size = 0x200000, scoped, tag = 'input window, operand 9']
    #allocation17 [shape = 'u8[8192]{0}', space=vmem, size = 0x2000, scoped, tag = 'input window, operand 10']
    #allocation18 [shape = 'u8[524288]{0}', space=vmem, size = 0x80000, scoped, tag = 'input window, operand 11']
    #allocation19 [shape = 'u8[1024]{0}', space=vmem, size = 0x400, scoped, tag = 'input window, operand 12']
    #allocation20 [shape = 'u8[1024]{0}', space=vmem, size = 0x400, scoped, tag = 'input window, operand 13']
    %20 = vsyncpa [#allocation3], 0
    %21 = vsyncpa [#allocation5], 0
    %22 = vsyncpa [#allocation8], 0
    %23 = vsyncpa [#allocation11], 0
    %24 = vsyncpa [#allocation14], 0
    loop: start=0, step=1, limit=5
    $region2: #{tpu_custom_call.1} parent=1 // loop_pre_header
      _
    $region3: #{tpu_custom_call.1} parent=1 // loop_header
      %s26 = sphi 0, %s30
      %p27 = scmp.ge.s32.totalorder %s26, 5
      %s34 = sphi 0, %s34
      %s36 = sphi 0, %s34
      %s37 = sphi 0, %s36
      %s51 = sphi 0, %s37
      %s55 = sphi 0, %s55
      %s57 = sphi 0, %s55
      %s58 = sphi 0, %s57
      %s72 = sphi 0, %s58
      %s76 = sphi 0, %s76
      %s78 = sphi 0, %s76
      %s79 = sphi 0, %s78
      %s93 = sphi 0, %s79
      %s97 = sphi 0, %s97
      %s99 = sphi 0, %s97
      %s100 = sphi 0, %s99
      %s114 = sphi 0, %s100
      %s118 = sphi 0, %s118
      %s120 = sphi 0, %s118
      %s121 = sphi 0, %s120
      %s135 = sphi 0, %s121
      %s139 = sphi 0, %s139
      %s141 = sphi 0, %s139
      %s142 = sphi 0, %s141
      %s156 = sphi 0, %s142
      %s160 = sphi 0, %s160
      %s162 = sphi 0, %s160
      %s163 = sphi 0, %s162
      %s177 = sphi 0, %s163
      %s181 = sphi 0, %s181
      %s183 = sphi 0, %s181
      %s184 = sphi 0, %s183
      %s198 = sphi 0, %s184
      %s204 = sphi 0, %s206
      %s207 = sphi 0, %s204
      %s208 = sphi 0, %s207
      %s224 = sphi 0, %s208
      %s230 = sphi 0, %s232
      %s233 = sphi 0, %s230
      %s234 = sphi 0, %s233
      %s250 = sphi 0, %s234
      %s256 = sphi 0, %s258
      %s259 = sphi 0, %s256
      %s260 = sphi 0, %s259
      %s276 = sphi 0, %s260
      %s282 = sphi 0, %s284
      %s285 = sphi 0, %s282
      %s286 = sphi 0, %s285
      %s302 = sphi 0, %s286
      %s308 = sphi 0, %s310
      %s311 = sphi 0, %s308
      %s312 = sphi 0, %s311
      %s328 = sphi 0, %s312
      %s334 = sphi 0, %s336
      %s337 = sphi 0, %s334
      %s338 = sphi 0, %s337
      %s354 = sphi 0, %s338
      %s360 = sphi 0, %s362
      %s363 = sphi 0, %s360
      %s364 = sphi 0, %s363
      %s380 = sphi 0, %s364
      %s386 = sphi 0, %s388
      %s389 = sphi 0, %s386
      %s390 = sphi 0, %s389
      %s406 = sphi 0, %s390
    $region4: #{tpu_custom_call.1} parent=1 // loop_header_branch
      %29 = sbr.rel (%p27) target = $region8
    $region5: #{tpu_custom_call.1} parent=1 // loop_body
      %s31 = ssub.s32 %s26, 1
      %s32 = ssub.s32 %s26, 2
      %s33 = sadd.s32 %s26, 1
      %s35 = sadd.s32 %s34, 1
      %p38 = scmp.eq.s32.totalorder %s26, 2
      %p39 = scmp.ne.s32.totalorder %s34, %s36
      %p40 = scmp.eq.s32.totalorder %s26, 0
      %p41 = por %p39, %p40
      %p42 = scmp.ne.s32.totalorder %s34, %s36
      %p43 = scmp.eq.s32.totalorder %s31, 2
      %p44 = por %p42, %p43
      %p45 = scmp.ne.s32.totalorder %s36, %s37
      %p46 = scmp.eq.s32.totalorder %s31, 0
      %p47 = por %p45, %p46
      %p48 = scmp.ne.s32.totalorder %s36, %s37
      %p49 = scmp.eq.s32.totalorder %s32, 2
      %p50 = por %p48, %p49
      %p52 = scmp.ne.s32.totalorder %s37, %s51
      %p53 = scmp.eq.s32.totalorder %s32, 0
      %p54 = por %p52, %p53
      %s56 = sadd.s32 %s55, 1
      %p59 = scmp.eq.s32.totalorder %s26, 2
      %p60 = scmp.ne.s32.totalorder %s55, %s57
      %p61 = scmp.eq.s32.totalorder %s26, 0
      %p62 = por %p60, %p61
      %p63 = scmp.ne.s32.totalorder %s55, %s57
      %p64 = scmp.eq.s32.totalorder %s31, 2
      %p65 = por %p63, %p64
      %p66 = scmp.ne.s32.totalorder %s57, %s58
      %p67 = scmp.eq.s32.totalorder %s31, 0
      %p68 = por %p66, %p67
      %p69 = scmp.ne.s32.totalorder %s57, %s58
      %p70 = scmp.eq.s32.totalorder %s32, 2
      %p71 = por %p69, %p70
      %p73 = scmp.ne.s32.totalorder %s58, %s72
      %p74 = scmp.eq.s32.totalorder %s32, 0
      %p75 = por %p73, %p74
      %s77 = sadd.s32 %s76, 1
      %p80 = scmp.eq.s32.totalorder %s26, 2
      %p81 = scmp.ne.s32.totalorder %s76, %s78
      %p82 = scmp.eq.s32.totalorder %s26, 0
      %p83 = por %p81, %p82
      %p84 = scmp.ne.s32.totalorder %s76, %s78
      %p85 = scmp.eq.s32.totalorder %s31, 2
      %p86 = por %p84, %p85
      %p87 = scmp.ne.s32.totalorder %s78, %s79
      %p88 = scmp.eq.s32.totalorder %s31, 0
      %p89 = por %p87, %p88
      %p90 = scmp.ne.s32.totalorder %s78, %s79
      %p91 = scmp.eq.s32.totalorder %s32, 2
      %p92 = por %p90, %p91
      %p94 = scmp.ne.s32.totalorder %s79, %s93
      %p95 = scmp.eq.s32.totalorder %s32, 0
      %p96 = por %p94, %p95
      %s98 = sadd.s32 %s97, 1
      %p101 = scmp.eq.s32.totalorder %s26, 2
      %p102 = scmp.ne.s32.totalorder %s97, %s99
      %p103 = scmp.eq.s32.totalorder %s26, 0
      %p104 = por %p102, %p103
      %p105 = scmp.ne.s32.totalorder %s97, %s99
      %p106 = scmp.eq.s32.totalorder %s31, 2
      %p107 = por %p105, %p106
      %p108 = scmp.ne.s32.totalorder %s99, %s100
      %p109 = scmp.eq.s32.totalorder %s31, 0
      %p110 = por %p108, %p109
      %p111 = scmp.ne.s32.totalorder %s99, %s100
      %p112 = scmp.eq.s32.totalorder %s32, 2
      %p113 = por %p111, %p112
      %p115 = scmp.ne.s32.totalorder %s100, %s114
      %p116 = scmp.eq.s32.totalorder %s32, 0
      %p117 = por %p115, %p116
      %s119 = sadd.s32 %s118, 1
      %p122 = scmp.eq.s32.totalorder %s26, 2
      %p123 = scmp.ne.s32.totalorder %s118, %s120
      %p124 = scmp.eq.s32.totalorder %s26, 0
      %p125 = por %p123, %p124
      %p126 = scmp.ne.s32.totalorder %s118, %s120
      %p127 = scmp.eq.s32.totalorder %s31, 2
      %p128 = por %p126, %p127
      %p129 = scmp.ne.s32.totalorder %s120, %s121
      %p130 = scmp.eq.s32.totalorder %s31, 0
      %p131 = por %p129, %p130
      %p132 = scmp.ne.s32.totalorder %s120, %s121
      %p133 = scmp.eq.s32.totalorder %s32, 2
      %p134 = por %p132, %p133
      %p136 = scmp.ne.s32.totalorder %s121, %s135
      %p137 = scmp.eq.s32.totalorder %s32, 0
      %p138 = por %p136, %p137
      %s140 = sadd.s32 %s139, 1
      %p143 = scmp.eq.s32.totalorder %s26, 2
      %p144 = scmp.ne.s32.totalorder %s139, %s141
      %p145 = scmp.eq.s32.totalorder %s26, 0
      %p146 = por %p144, %p145
      %p147 = scmp.ne.s32.totalorder %s139, %s141
      %p148 = scmp.eq.s32.totalorder %s31, 2
      %p149 = por %p147, %p148
      %p150 = scmp.ne.s32.totalorder %s141, %s142
      %p151 = scmp.eq.s32.totalorder %s31, 0
      %p152 = por %p150, %p151
      %p153 = scmp.ne.s32.totalorder %s141, %s142
      %p154 = scmp.eq.s32.totalorder %s32, 2
      %p155 = por %p153, %p154
      %p157 = scmp.ne.s32.totalorder %s142, %s156
      %p158 = scmp.eq.s32.totalorder %s32, 0
      %p159 = por %p157, %p158
      %s161 = sadd.s32 %s160, 1
      %p164 = scmp.eq.s32.totalorder %s26, 2
      %p165 = scmp.ne.s32.totalorder %s160, %s162
      %p166 = scmp.eq.s32.totalorder %s26, 0
      %p167 = por %p165, %p166
      %p168 = scmp.ne.s32.totalorder %s160, %s162
      %p169 = scmp.eq.s32.totalorder %s31, 2
      %p170 = por %p168, %p169
      %p171 = scmp.ne.s32.totalorder %s162, %s163
      %p172 = scmp.eq.s32.totalorder %s31, 0
      %p173 = por %p171, %p172
      %p174 = scmp.ne.s32.totalorder %s162, %s163
      %p175 = scmp.eq.s32.totalorder %s32, 2
      %p176 = por %p174, %p175
      %p178 = scmp.ne.s32.totalorder %s163, %s177
      %p179 = scmp.eq.s32.totalorder %s32, 0
      %p180 = por %p178, %p179
      %s182 = sadd.s32 %s181, 1
      %p185 = scmp.eq.s32.totalorder %s26, 2
      %p186 = scmp.ne.s32.totalorder %s181, %s183
      %p187 = scmp.eq.s32.totalorder %s26, 0
      %p188 = por %p186, %p187
      %p189 = scmp.ne.s32.totalorder %s181, %s183
      %p190 = scmp.eq.s32.totalorder %s31, 2
      %p191 = por %p189, %p190
      %p192 = scmp.ne.s32.totalorder %s183, %s184
      %p193 = scmp.eq.s32.totalorder %s31, 0
      %p194 = por %p192, %p193
      %p195 = scmp.ne.s32.totalorder %s183, %s184
      %p196 = scmp.eq.s32.totalorder %s32, 2
      %p197 = por %p195, %p196
      %p199 = scmp.ne.s32.totalorder %s184, %s198
      %p200 = scmp.eq.s32.totalorder %s32, 0
      %p201 = por %p199, %p200
      %s202 = ssub.s32 %s26, %s33
      %p203 = scmp.eq.s32.totalorder %s202, 0
      %s205 = sadd.s32 %s204, 1
      %s206 = scalar_select %p203, %s204, %s205
      %p209 = pneg %p203
      %p210 = scmp.eq.s32.totalorder %s26, 2
      %p211 = por %p209, %p210
      %p212 = scmp.ne.s32.totalorder %s204, %s207
      %p213 = scmp.eq.s32.totalorder %s26, 0
      %p214 = por %p212, %p213
      %p215 = scmp.ne.s32.totalorder %s204, %s207
      %p216 = scmp.eq.s32.totalorder %s31, 2
      %p217 = por %p215, %p216
      %p218 = scmp.ne.s32.totalorder %s207, %s208
      %p219 = scmp.eq.s32.totalorder %s31, 0
      %p220 = por %p218, %p219
      %p221 = scmp.ne.s32.totalorder %s207, %s208
      %p222 = scmp.eq.s32.totalorder %s32, 2
      %p223 = por %p221, %p222
      %p225 = scmp.ne.s32.totalorder %s208, %s224
      %p226 = scmp.eq.s32.totalorder %s32, 0
      %p227 = por %p225, %p226
      %s228 = ssub.s32 %s26, %s33
      %p229 = scmp.eq.s32.totalorder %s228, 0
      %s231 = sadd.s32 %s230, 1
      %s232 = scalar_select %p229, %s230, %s231
      %p235 = pneg %p229
      %p236 = scmp.eq.s32.totalorder %s26, 2
      %p237 = por %p235, %p236
      %p238 = scmp.ne.s32.totalorder %s230, %s233
      %p239 = scmp.eq.s32.totalorder %s26, 0
      %p240 = por %p238, %p239
      %p241 = scmp.ne.s32.totalorder %s230, %s233
      %p242 = scmp.eq.s32.totalorder %s31, 2
      %p243 = por %p241, %p242
      %p244 = scmp.ne.s32.totalorder %s233, %s234
      %p245 = scmp.eq.s32.totalorder %s31, 0
      %p246 = por %p244, %p245
      %p247 = scmp.ne.s32.totalorder %s233, %s234
      %p248 = scmp.eq.s32.totalorder %s32, 2
      %p249 = por %p247, %p248
      %p251 = scmp.ne.s32.totalorder %s234, %s250
      %p252 = scmp.eq.s32.totalorder %s32, 0
      %p253 = por %p251, %p252
      %s254 = ssub.s32 %s26, %s33
      %p255 = scmp.eq.s32.totalorder %s254, 0
      %s257 = sadd.s32 %s256, 1
      %s258 = scalar_select %p255, %s256, %s257
      %p261 = pneg %p255
      %p262 = scmp.eq.s32.totalorder %s26, 2
      %p263 = por %p261, %p262
      %p264 = scmp.ne.s32.totalorder %s256, %s259
      %p265 = scmp.eq.s32.totalorder %s26, 0
      %p266 = por %p264, %p265
      %p267 = scmp.ne.s32.totalorder %s256, %s259
      %p268 = scmp.eq.s32.totalorder %s31, 2
      %p269 = por %p267, %p268
      %p270 = scmp.ne.s32.totalorder %s259, %s260
      %p271 = scmp.eq.s32.totalorder %s31, 0
      %p272 = por %p270, %p271
      %p273 = scmp.ne.s32.totalorder %s259, %s260
      %p274 = scmp.eq.s32.totalorder %s32, 2
      %p275 = por %p273, %p274
      %p277 = scmp.ne.s32.totalorder %s260, %s276
      %p278 = scmp.eq.s32.totalorder %s32, 0
      %p279 = por %p277, %p278
      %s280 = ssub.s32 %s26, %s33
      %p281 = scmp.eq.s32.totalorder %s280, 0
      %s283 = sadd.s32 %s282, 1
      %s284 = scalar_select %p281, %s282, %s283
      %p287 = pneg %p281
      %p288 = scmp.eq.s32.totalorder %s26, 2
      %p289 = por %p287, %p288
      %p290 = scmp.ne.s32.totalorder %s282, %s285
      %p291 = scmp.eq.s32.totalorder %s26, 0
      %p292 = por %p290, %p291
      %p293 = scmp.ne.s32.totalorder %s282, %s285
      %p294 = scmp.eq.s32.totalorder %s31, 2
      %p295 = por %p293, %p294
      %p296 = scmp.ne.s32.totalorder %s285, %s286
      %p297 = scmp.eq.s32.totalorder %s31, 0
      %p298 = por %p296, %p297
      %p299 = scmp.ne.s32.totalorder %s285, %s286
      %p300 = scmp.eq.s32.totalorder %s32, 2
      %p301 = por %p299, %p300
      %p303 = scmp.ne.s32.totalorder %s286, %s302
      %p304 = scmp.eq.s32.totalorder %s32, 0
      %p305 = por %p303, %p304
      %s306 = ssub.s32 %s26, %s33
      %p307 = scmp.eq.s32.totalorder %s306, 0
      %s309 = sadd.s32 %s308, 1
      %s310 = scalar_select %p307, %s308, %s309
      %p313 = pneg %p307
      %p314 = scmp.eq.s32.totalorder %s26, 2
      %p315 = por %p313, %p314
      %p316 = scmp.ne.s32.totalorder %s308, %s311
      %p317 = scmp.eq.s32.totalorder %s26, 0
      %p318 = por %p316, %p317
      %p319 = scmp.ne.s32.totalorder %s308, %s311
      %p320 = scmp.eq.s32.totalorder %s31, 2
      %p321 = por %p319, %p320
      %p322 = scmp.ne.s32.totalorder %s311, %s312
      %p323 = scmp.eq.s32.totalorder %s31, 0
      %p324 = por %p322, %p323
      %p325 = scmp.ne.s32.totalorder %s311, %s312
      %p326 = scmp.eq.s32.totalorder %s32, 2
      %p327 = por %p325, %p326
      %p329 = scmp.ne.s32.totalorder %s312, %s328
      %p330 = scmp.eq.s32.totalorder %s32, 0
      %p331 = por %p329, %p330
      %s332 = ssub.s32 %s26, %s33
      %p333 = scmp.eq.s32.totalorder %s332, 0
      %s335 = sadd.s32 %s334, 1
      %s336 = scalar_select %p333, %s334, %s335
      %p339 = pneg %p333
      %p340 = scmp.eq.s32.totalorder %s26, 2
      %p341 = por %p339, %p340
      %p342 = scmp.ne.s32.totalorder %s334, %s337
      %p343 = scmp.eq.s32.totalorder %s26, 0
      %p344 = por %p342, %p343
      %p345 = scmp.ne.s32.totalorder %s334, %s337
      %p346 = scmp.eq.s32.totalorder %s31, 2
      %p347 = por %p345, %p346
      %p348 = scmp.ne.s32.totalorder %s337, %s338
      %p349 = scmp.eq.s32.totalorder %s31, 0
      %p350 = por %p348, %p349
      %p351 = scmp.ne.s32.totalorder %s337, %s338
      %p352 = scmp.eq.s32.totalorder %s32, 2
      %p353 = por %p351, %p352
      %p355 = scmp.ne.s32.totalorder %s338, %s354
      %p356 = scmp.eq.s32.totalorder %s32, 0
      %p357 = por %p355, %p356
      %s358 = ssub.s32 %s26, %s33
      %p359 = scmp.eq.s32.totalorder %s358, 0
      %s361 = sadd.s32 %s360, 1
      %s362 = scalar_select %p359, %s360, %s361
      %p365 = pneg %p359
      %p366 = scmp.eq.s32.totalorder %s26, 2
      %p367 = por %p365, %p366
      %p368 = scmp.ne.s32.totalorder %s360, %s363
      %p369 = scmp.eq.s32.totalorder %s26, 0
      %p370 = por %p368, %p369
      %p371 = scmp.ne.s32.totalorder %s360, %s363
      %p372 = scmp.eq.s32.totalorder %s31, 2
      %p373 = por %p371, %p372
      %p374 = scmp.ne.s32.totalorder %s363, %s364
      %p375 = scmp.eq.s32.totalorder %s31, 0
      %p376 = por %p374, %p375
      %p377 = scmp.ne.s32.totalorder %s363, %s364
      %p378 = scmp.eq.s32.totalorder %s32, 2
      %p379 = por %p377, %p378
      %p381 = scmp.ne.s32.totalorder %s364, %s380
      %p382 = scmp.eq.s32.totalorder %s32, 0
      %p383 = por %p381, %p382
      %s384 = ssub.s32 %s26, %s33
      %p385 = scmp.eq.s32.totalorder %s384, 0
      %s387 = sadd.s32 %s386, 1
      %s388 = scalar_select %p385, %s386, %s387
      %p391 = pneg %p385
      %p392 = scmp.eq.s32.totalorder %s26, 2
      %p393 = por %p391, %p392
      %p394 = scmp.ne.s32.totalorder %s386, %s389
      %p395 = scmp.eq.s32.totalorder %s26, 0
      %p396 = por %p394, %p395
      %p397 = scmp.ne.s32.totalorder %s386, %s389
      %p398 = scmp.eq.s32.totalorder %s31, 2
      %p399 = por %p397, %p398
      %p400 = scmp.ne.s32.totalorder %s389, %s390
      %p401 = scmp.eq.s32.totalorder %s31, 0
      %p402 = por %p400, %p401
      %p403 = scmp.ne.s32.totalorder %s389, %s390
      %p404 = scmp.eq.s32.totalorder %s32, 2
      %p405 = por %p403, %p404
      %p407 = scmp.ne.s32.totalorder %s390, %s406
      %p408 = scmp.eq.s32.totalorder %s32, 0
      %p409 = por %p407, %p408
      %p410 = scmp.le.s32.totalorder 1, %s26
      %p411 = scmp.lt.s32.totalorder %s26, 4
      %p412 = pnand %p410, %p411
      %p413 = pneg %p412
      // Predicated region
      $region9: #{tpu_custom_call.1} parent=5 // pred_check
        _
      $region10: #{tpu_custom_call.1} parent=5 // pred_check_branch
        %415 = sbr.rel (%p412) target = $region12
      $region11: #{tpu_custom_call.1} parent=5 // pred_region
        %s416 = ssub.s32 %s26, 1
        // Predicated region
        $region13: #{tpu_custom_call.1} parent=11 // pred_check
          %p417 = pneg %p47
        $region14: #{tpu_custom_call.1} parent=11 // pred_check_branch
          %419 = sbr.rel (%p417) target = $region16
        $region15: #{tpu_custom_call.1} parent=11 // pred_region
          %s421 = ssub.s32 64, 64
          %422 = vsyncadd [#allocation3], %s421
          %s424 = sshll.u32 [#allocation2], 4
          %s425 = int_to_ptr.vmem [resolvable:$true] %s424
          %427 = dma.hbm_to_vmem [thread:$0]  %s0, 64, %s425, [#allocation3]
        $region16: #{tpu_custom_call.1} parent=11 // pred_fallthru
          _
        // Predicated region
        $region17: #{tpu_custom_call.1} parent=11 // pred_check
          %p428 = pneg %p68
        $region18: #{tpu_custom_call.1} parent=11 // pred_check_branch
          %430 = sbr.rel (%p428) target = $region20
        $region19: #{tpu_custom_call.1} parent=11 // pred_region
          %s432 = ssub.s32 64, 64
          %433 = vsyncadd [#allocation5], %s432
          %s435 = sshll.u32 [#allocation4], 4
          %s436 = int_to_ptr.vmem [resolvable:$true] %s435
          %438 = dma.hbm_to_vmem [thread:$0]  %s1, 64, %s436, [#allocation5]
        $region20: #{tpu_custom_call.1} parent=11 // pred_fallthru
          _
        // Predicated region
        $region21: #{tpu_custom_call.1} parent=11 // pred_check
          %p439 = pneg %p89
        $region22: #{tpu_custom_call.1} parent=11 // pred_check_branch
          %441 = sbr.rel (%p439) target = $region24
        $region23: #{tpu_custom_call.1} parent=11 // pred_region
          %s443 = ssub.s32 128, 128
          %444 = vsyncadd [#allocation5], %s443
          %s446 = sshll.u32 [#allocation6], 4
          %s447 = int_to_ptr.vmem [resolvable:$true] %s446
          %449 = dma.hbm_to_vmem [thread:$0]  %s2, 128, %s447, [#allocation5]
        $region24: #{tpu_custom_call.1} parent=11 // pred_fallthru
          _
        // Predicated region
        $region25: #{tpu_custom_call.1} parent=11 // pred_check
          %p450 = pneg %p110
        $region26: #{tpu_custom_call.1} parent=11 // pred_check_branch
          %452 = sbr.rel (%p450) target = $region28
        $region27: #{tpu_custom_call.1} parent=11 // pred_region
          %s454 = ssub.s32 16384, 16384
          %455 = vsyncadd [#allocation8], %s454
          %s456 = sshll.u32 [#allocation7], 4
          %s457 = int_to_ptr.vmem [resolvable:$true] %s456
          %462 = dma.hbm_to_vmem [thread:$0]  %s3, 16384, %s457, [#allocation8], 256, 256, 16
        $region28: #{tpu_custom_call.1} parent=11 // pred_fallthru
          _
        // Predicated region
        $region29: #{tpu_custom_call.1} parent=11 // pred_check
          %p463 = pneg %p131
        $region30: #{tpu_custom_call.1} parent=11 // pred_check_branch
          %465 = sbr.rel (%p463) target = $region32
        $region31: #{tpu_custom_call.1} parent=11 // pred_region
          %s467 = ssub.s32 16384, 16384
          %468 = vsyncadd [#allocation8], %s467
          %s469 = sshll.u32 [#allocation9], 4
          %s470 = int_to_ptr.vmem [resolvable:$true] %s469
          %475 = dma.hbm_to_vmem [thread:$0]  %s4, 16384, %s470, [#allocation8], 256, 256, 16
        $region32: #{tpu_custom_call.1} parent=11 // pred_fallthru
          _
        // Predicated region
        $region33: #{tpu_custom_call.1} parent=11 // pred_check
          %p476 = pneg %p152
        $region34: #{tpu_custom_call.1} parent=11 // pred_check_branch
          %478 = sbr.rel (%p476) target = $region36
        $region35: #{tpu_custom_call.1} parent=11 // pred_region
          %s480 = ssub.s32 64, 64
          %481 = vsyncadd [#allocation11], %s480
          %s483 = sshll.u32 [#allocation10], 4
          %s484 = int_to_ptr.vmem [resolvable:$true] %s483
          %486 = dma.hbm_to_vmem [thread:$0]  %s5, 64, %s484, [#allocation11]
        $region36: #{tpu_custom_call.1} parent=11 // pred_fallthru
          _
        // Predicated region
        $region37: #{tpu_custom_call.1} parent=11 // pred_check
          %p487 = pneg %p173
        $region38: #{tpu_custom_call.1} parent=11 // pred_check_branch
          %489 = sbr.rel (%p487) target = $region40
        $region39: #{tpu_custom_call.1} parent=11 // pred_region
          %s491 = ssub.s32 32000, 32000
          %492 = vsyncadd [#allocation11], %s491
          %s493 = sshll.u32 [#allocation12], 4
          %s494 = int_to_ptr.vmem [resolvable:$true] %s493
          %499 = dma.hbm_to_vmem [thread:$0]  %s6, 32000, %s494, [#allocation11], 256, 256, 16
        $region40: #{tpu_custom_call.1} parent=11 // pred_fallthru
          _
        // Predicated region
        $region41: #{tpu_custom_call.1} parent=11 // pred_check
          %p500 = pneg %p194
        $region42: #{tpu_custom_call.1} parent=11 // pred_check_branch
          %502 = sbr.rel (%p500) target = $region44
        $region43: #{tpu_custom_call.1} parent=11 // pred_region
          %s504 = ssub.s32 64, 64
          %505 = vsyncadd [#allocation14], %s504
          %s507 = sshll.u32 [#allocation13], 4
          %s508 = int_to_ptr.vmem [resolvable:$true] %s507
          %510 = dma.hbm_to_vmem [thread:$0]  %s7, 64, %s508, [#allocation14]
        $region44: #{tpu_custom_call.1} parent=11 // pred_fallthru
          _
      $region12: #{tpu_custom_call.1} parent=5 // pred_fallthru
        _
      %p511 = scmp.lt.s32.totalorder %s26, 3
      // Predicated region
      $region45: #{tpu_custom_call.1} parent=5 // pred_check
        %p512 = pneg %p511
      $region46: #{tpu_custom_call.1} parent=5 // pred_check_branch
        %514 = sbr.rel (%p512) target = $region48
      $region47: #{tpu_custom_call.1} parent=5 // pred_region
        // Predicated region
        $region49: #{tpu_custom_call.1} parent=47 // pred_check
          %p515 = pneg %p214
        $region50: #{tpu_custom_call.1} parent=47 // pred_check_branch
          %517 = sbr.rel (%p515) target = $region52
        $region51: #{tpu_custom_call.1} parent=47 // pred_region
          %s518 = sand.u32 %s26, 1
          %s519 = scalar_lea.sflag [#allocation3], %s518
          %s520 = sand.u32 %s204, 1
          %s521 = smul.addr %s520, 2048
          %s522 = scalar_lea.vmem [#allocation15], %s521
          %s524 = ssub.s32 32768, 32768
          %525 = vsyncadd %s519, %s524
          %s526 = smul.addr %s26, 512
          %s527 = smul.addr %s526, 64
          %s528 = scalar_lea.hbm %s8, %s527
          %s529 = sshll.u32 %s522, 4
          %s530 = int_to_ptr.vmem [resolvable:$true] %s529
          %535 = dma.hbm_to_vmem [thread:$0]  %s528, 32768, %s530, %s519, 512, 512, 32
        $region52: #{tpu_custom_call.1} parent=47 // pred_fallthru
          _
        // Predicated region
        $region53: #{tpu_custom_call.1} parent=47 // pred_check
          %p536 = pneg %p240
        $region54: #{tpu_custom_call.1} parent=47 // pred_check_branch
          %538 = sbr.rel (%p536) target = $region56
        $region55: #{tpu_custom_call.1} parent=47 // pred_region
          %s539 = sand.u32 %s26, 1
          %s540 = scalar_lea.sflag [#allocation3], %s539
          %s541 = sand.u32 %s230, 1
          %s542 = smul.addr %s541, 2048
          %s543 = scalar_lea.vmem [#allocation16], %s542
          %s545 = ssub.s32 32768, 32768
          %546 = vsyncadd %s540, %s545
          %s547 = smul.addr %s26, 512
          %s548 = smul.addr %s547, 64
          %s549 = scalar_lea.hbm %s9, %s548
          %s550 = sshll.u32 %s543, 4
          %s551 = int_to_ptr.vmem [resolvable:$true] %s550
          %556 = dma.hbm_to_vmem [thread:$0]  %s549, 32768, %s551, %s540, 512, 512, 32
        $region56: #{tpu_custom_call.1} parent=47 // pred_fallthru
          _
        // Predicated region
        $region57: #{tpu_custom_call.1} parent=47 // pred_check
          %p557 = pneg %p266
        $region58: #{tpu_custom_call.1} parent=47 // pred_check_branch
          %559 = sbr.rel (%p557) target = $region60
        $region59: #{tpu_custom_call.1} parent=47 // pred_region
          %s560 = sand.u32 %s26, 1
          %s561 = scalar_lea.sflag [#allocation3], %s560
          %s562 = sand.u32 %s256, 1
          %s563 = smul.addr %s562, 8
          %s564 = scalar_lea.vmem [#allocation17], %s563
          %s566 = ssub.s32 128, 128
          %567 = vsyncadd %s561, %s566
          %s568 = smul.addr %s26, 8
          %s569 = smul.addr %s568, 16
          %s570 = scalar_lea.hbm %s10, %s569
          %s572 = sshll.u32 %s564, 4
          %s573 = int_to_ptr.vmem [resolvable:$true] %s572
          %575 = dma.hbm_to_vmem [thread:$0]  %s570, 128, %s573, %s561
        $region60: #{tpu_custom_call.1} parent=47 // pred_fallthru
          _
        // Predicated region
        $region61: #{tpu_custom_call.1} parent=47 // pred_check
          %p576 = pneg %p292
        $region62: #{tpu_custom_call.1} parent=47 // pred_check_branch
          %578 = sbr.rel (%p576) target = $region64
        $region63: #{tpu_custom_call.1} parent=47 // pred_region
          %s579 = sand.u32 %s26, 1
          %s580 = scalar_lea.sflag [#allocation3], %s579
          %s581 = sand.u32 %s282, 1
          %s582 = smul.addr %s581, 512
          %s583 = scalar_lea.vmem [#allocation18], %s582
          %s585 = ssub.s32 8192, 8192
          %586 = vsyncadd %s580, %s585
          %s587 = smul.addr %s26, 128
          %s588 = smul.addr %s587, 64
          %s589 = scalar_lea.hbm %s11, %s588
          %s590 = sshll.u32 %s583, 4
          %s591 = int_to_ptr.vmem [resolvable:$true] %s590
          %596 = dma.hbm_to_vmem [thread:$0]  %s589, 8192, %s591, %s580, 64, 64, 4
        $region64: #{tpu_custom_call.1} parent=47 // pred_fallthru
          _
        // Predicated region
        $region65: #{tpu_custom_call.1} parent=47 // pred_check
          %p597 = pneg %p318
        $region66: #{tpu_custom_call.1} parent=47 // pred_check_branch
          %599 = sbr.rel (%p597) target = $region68
        $region67: #{tpu_custom_call.1} parent=47 // pred_region
          %s600 = sand.u32 %s26, 1
          %s601 = scalar_lea.sflag [#allocation3], %s600
          %s602 = sand.u32 %s308, 1
          %s603 = scalar_lea.vmem [#allocation19], %s602
          %s605 = ssub.s32 16, 16
          %606 = vsyncadd %s601, %s605
          %s607 = smul.addr %s26, 16
          %s608 = scalar_lea.hbm %s12, %s607
          %s610 = sshll.u32 %s603, 4
          %s611 = int_to_ptr.vmem [resolvable:$true] %s610
          %613 = dma.hbm_to_vmem [thread:$0]  %s608, 16, %s611, %s601
        $region68: #{tpu_custom_call.1} parent=47 // pred_fallthru
          _
        // Predicated region
        $region69: #{tpu_custom_call.1} parent=47 // pred_check
          %p614 = pneg %p344
        $region70: #{tpu_custom_call.1} parent=47 // pred_check_branch
          %616 = sbr.rel (%p614) target = $region72
        $region71: #{tpu_custom_call.1} parent=47 // pred_region
          %s617 = sand.u32 %s26, 1
          %s618 = scalar_lea.sflag [#allocation3], %s617
          %s619 = sand.u32 %s334, 1
          %s620 = scalar_lea.vmem [#allocation20], %s619
          %s622 = ssub.s32 16, 16
          %623 = vsyncadd %s618, %s622
          %s624 = smul.addr %s26, 16
          %s625 = scalar_lea.hbm %s13, %s624
          %s627 = sshll.u32 %s620, 4
          %s628 = int_to_ptr.vmem [resolvable:$true] %s627
          %630 = dma.hbm_to_vmem [thread:$0]  %s625, 16, %s628, %s618
        $region72: #{tpu_custom_call.1} parent=47 // pred_fallthru
          _
        // Predicated region
        $region73: #{tpu_custom_call.1} parent=47 // pred_check
          %p631 = pneg %p370
        $region74: #{tpu_custom_call.1} parent=47 // pred_check_branch
          %633 = sbr.rel (%p631) target = $region76
        $region75: #{tpu_custom_call.1} parent=47 // pred_region
          %p634 = scmp.lt.s32.totalorder %s26, 2
          %s635 = scalar_select %p634, %s26, 2
          %s636 = scalar_lea.vmem %s14, %s635
        $region76: #{tpu_custom_call.1} parent=47 // pred_fallthru
          _
      $region48: #{tpu_custom_call.1} parent=5 // pred_fallthru
        _
      %p637 = scmp.le.s32.totalorder 1, %s26
      %p638 = scmp.lt.s32.totalorder %s26, 4
      %p639 = pnand %p637, %p638
      %p640 = pneg %p639
      // Predicated region
      $region77: #{tpu_custom_call.1} parent=5 // pred_check
        _
      $region78: #{tpu_custom_call.1} parent=5 // pred_check_branch
        %642 = sbr.rel (%p639) target = $region80
      $region79: #{tpu_custom_call.1} parent=5 // pred_region
        %s643 = ssub.s32 %s26, 1
        // Predicated region
        $region81: #{tpu_custom_call.1} parent=79 // pred_check
          %p644 = pneg %p47
        $region82: #{tpu_custom_call.1} parent=79 // pred_check_branch
          %646 = sbr.rel (%p644) target = $region84
        $region83: #{tpu_custom_call.1} parent=79 // pred_region
          %647 = dma.done [#allocation3], 64
        $region84: #{tpu_custom_call.1} parent=79 // pred_fallthru
          _
        // Predicated region
        $region85: #{tpu_custom_call.1} parent=79 // pred_check
          %p648 = pneg %p68
        $region86: #{tpu_custom_call.1} parent=79 // pred_check_branch
          %650 = sbr.rel (%p648) target = $region88
        $region87: #{tpu_custom_call.1} parent=79 // pred_region
          %651 = dma.done [#allocation5], 64
        $region88: #{tpu_custom_call.1} parent=79 // pred_fallthru
          _
        // Predicated region
        $region89: #{tpu_custom_call.1} parent=79 // pred_check
          %p652 = pneg %p89
        $region90: #{tpu_custom_call.1} parent=79 // pred_check_branch
          %654 = sbr.rel (%p652) target = $region92
        $region91: #{tpu_custom_call.1} parent=79 // pred_region
          %655 = dma.done [#allocation5], 128
        $region92: #{tpu_custom_call.1} parent=79 // pred_fallthru
          _
        // Predicated region
        $region93: #{tpu_custom_call.1} parent=79 // pred_check
          %p656 = pneg %p110
        $region94: #{tpu_custom_call.1} parent=79 // pred_check_branch
          %658 = sbr.rel (%p656) target = $region96
        $region95: #{tpu_custom_call.1} parent=79 // pred_region
          %659 = dma.done [#allocation8], 16384
        $region96: #{tpu_custom_call.1} parent=79 // pred_fallthru
          _
        // Predicated region
        $region97: #{tpu_custom_call.1} parent=79 // pred_check
          %p660 = pneg %p131
        $region98: #{tpu_custom_call.1} parent=79 // pred_check_branch
          %662 = sbr.rel (%p660) target = $region100
        $region99: #{tpu_custom_call.1} parent=79 // pred_region
          %663 = dma.done [#allocation8], 16384
        $region100: #{tpu_custom_call.1} parent=79 // pred_fallthru
          _
        // Predicated region
        $region101: #{tpu_custom_call.1} parent=79 // pred_check
          %p664 = pneg %p152
        $region102: #{tpu_custom_call.1} parent=79 // pred_check_branch
          %666 = sbr.rel (%p664) target = $region104
        $region103: #{tpu_custom_call.1} parent=79 // pred_region
          %667 = dma.done [#allocation11], 64
        $region104: #{tpu_custom_call.1} parent=79 // pred_fallthru
          _
        // Predicated region
        $region105: #{tpu_custom_call.1} parent=79 // pred_check
          %p668 = pneg %p173
        $region106: #{tpu_custom_call.1} parent=79 // pred_check_branch
          %670 = sbr.rel (%p668) target = $region108
        $region107: #{tpu_custom_call.1} parent=79 // pred_region
          %671 = dma.done [#allocation11], 32000
        $region108: #{tpu_custom_call.1} parent=79 // pred_fallthru
          _
        // Predicated region
        $region109: #{tpu_custom_call.1} parent=79 // pred_check
          %p672 = pneg %p194
        $region110: #{tpu_custom_call.1} parent=79 // pred_check_branch
          %674 = sbr.rel (%p672) target = $region112
        $region111: #{tpu_custom_call.1} parent=79 // pred_region
          %675 = dma.done [#allocation14], 64
        $region112: #{tpu_custom_call.1} parent=79 // pred_fallthru
          _
        %s676 = sand.u32 %s31, 1
        %s677 = scalar_lea.sflag [#allocation3], %s676
        %s678 = sand.u32 %s207, 1
        %s679 = smul.addr %s678, 2048
        %s680 = scalar_lea.vmem [#allocation15], %s679
        // Predicated region
        $region113: #{tpu_custom_call.1} parent=79 // pred_check
          %p681 = pneg %p220
        $region114: #{tpu_custom_call.1} parent=79 // pred_check_branch
          %683 = sbr.rel (%p681) target = $region116
        $region115: #{tpu_custom_call.1} parent=79 // pred_region
          %684 = dma.done %s677, 32768
        $region116: #{tpu_custom_call.1} parent=79 // pred_fallthru
          _
        %s685 = sand.u32 %s31, 1
        %s686 = scalar_lea.sflag [#allocation3], %s685
        %s687 = sand.u32 %s233, 1
        %s688 = smul.addr %s687, 2048
        %s689 = scalar_lea.vmem [#allocation16], %s688
        // Predicated region
        $region117: #{tpu_custom_call.1} parent=79 // pred_check
          %p690 = pneg %p246
        $region118: #{tpu_custom_call.1} parent=79 // pred_check_branch
          %692 = sbr.rel (%p690) target = $region120
        $region119: #{tpu_custom_call.1} parent=79 // pred_region
          %693 = dma.done %s686, 32768
        $region120: #{tpu_custom_call.1} parent=79 // pred_fallthru
          _
        %s694 = sand.u32 %s31, 1
        %s695 = scalar_lea.sflag [#allocation3], %s694
        %s696 = sand.u32 %s259, 1
        %s697 = smul.addr %s696, 8
        %s698 = scalar_lea.vmem [#allocation17], %s697
        // Predicated region
        $region121: #{tpu_custom_call.1} parent=79 // pred_check
          %p699 = pneg %p272
        $region122: #{tpu_custom_call.1} parent=79 // pred_check_branch
          %701 = sbr.rel (%p699) target = $region124
        $region123: #{tpu_custom_call.1} parent=79 // pred_region
          %702 = dma.done %s695, 128
        $region124: #{tpu_custom_call.1} parent=79 // pred_fallthru
          _
        %s703 = sand.u32 %s31, 1
        %s704 = scalar_lea.sflag [#allocation3], %s703
        %s705 = sand.u32 %s285, 1
        %s706 = smul.addr %s705, 512
        %s707 = scalar_lea.vmem [#allocation18], %s706
        // Predicated region
        $region125: #{tpu_custom_call.1} parent=79 // pred_check
          %p708 = pneg %p298
        $region126: #{tpu_custom_call.1} parent=79 // pred_check_branch
          %710 = sbr.rel (%p708) target = $region128
        $region127: #{tpu_custom_call.1} parent=79 // pred_region
          %711 = dma.done %s704, 8192
        $region128: #{tpu_custom_call.1} parent=79 // pred_fallthru
          _
        %s712 = sand.u32 %s31, 1
        %s713 = scalar_lea.sflag [#allocation3], %s712
        %s714 = sand.u32 %s311, 1
        %s715 = scalar_lea.vmem [#allocation19], %s714
        // Predicated region
        $region129: #{tpu_custom_call.1} parent=79 // pred_check
          %p716 = pneg %p324
        $region130: #{tpu_custom_call.1} parent=79 // pred_check_branch
          %718 = sbr.rel (%p716) target = $region132
        $region131: #{tpu_custom_call.1} parent=79 // pred_region
          %719 = dma.done %s713, 16
        $region132: #{tpu_custom_call.1} parent=79 // pred_fallthru
          _
        %s720 = sand.u32 %s31, 1
        %s721 = scalar_lea.sflag [#allocation3], %s720
        %s722 = sand.u32 %s337, 1
        %s723 = scalar_lea.vmem [#allocation20], %s722
        // Predicated region
        $region133: #{tpu_custom_call.1} parent=79 // pred_check
          %p724 = pneg %p350
        $region134: #{tpu_custom_call.1} parent=79 // pred_check_branch
          %726 = sbr.rel (%p724) target = $region136
        $region135: #{tpu_custom_call.1} parent=79 // pred_region
          %727 = dma.done %s721, 16
        $region136: #{tpu_custom_call.1} parent=79 // pred_fallthru
          _
        %p728 = pneg %p47
        %p729 = pneg %p44
        %p730 = pneg %p68
        %p731 = pneg %p65
        %p732 = pneg %p89
        %p733 = pneg %p86
        %p734 = pneg %p110
        %p735 = pneg %p107
        %p736 = pneg %p131
        %p737 = pneg %p128
        %p738 = pneg %p152
        %p739 = pneg %p149
        %p740 = pneg %p173
        %p741 = pneg %p170
        %p742 = pneg %p194
        %p743 = pneg %p191
        %s744 = sand.u32 %s31, 1
        %s745 = scalar_lea.sflag [#allocation3], %s744
        %s746 = sand.u32 %s207, 1
        %s747 = smul.addr %s746, 2048
        %s748 = scalar_lea.vmem [#allocation15], %s747
        %p749 = pneg %p220
        %p750 = pneg %p217
        %s751 = sand.u32 %s31, 1
        %s752 = scalar_lea.sflag [#allocation3], %s751
        %s753 = sand.u32 %s233, 1
        %s754 = smul.addr %s753, 2048
        %s755 = scalar_lea.vmem [#allocation16], %s754
        %p756 = pneg %p246
        %p757 = pneg %p243
        %s758 = sand.u32 %s31, 1
        %s759 = scalar_lea.sflag [#allocation3], %s758
        %s760 = sand.u32 %s259, 1
        %s761 = smul.addr %s760, 8
        %s762 = scalar_lea.vmem [#allocation17], %s761
        %p763 = pneg %p272
        %p764 = pneg %p269
        %s765 = sand.u32 %s31, 1
        %s766 = scalar_lea.sflag [#allocation3], %s765
        %s767 = sand.u32 %s285, 1
        %s768 = smul.addr %s767, 512
        %s769 = scalar_lea.vmem [#allocation18], %s768
        %p770 = pneg %p298
        %p771 = pneg %p295
        %s772 = sand.u32 %s31, 1
        %s773 = scalar_lea.sflag [#allocation3], %s772
        %s774 = sand.u32 %s311, 1
        %s775 = scalar_lea.vmem [#allocation19], %s774
        %p776 = pneg %p324
        %p777 = pneg %p321
        %s778 = sand.u32 %s31, 1
        %s779 = scalar_lea.sflag [#allocation3], %s778
        %s780 = sand.u32 %s337, 1
        %s781 = scalar_lea.vmem [#allocation20], %s780
        %p782 = pneg %p350
        %p783 = pneg %p347
        %p784 = scmp.lt.s32.totalorder %s31, 2
        %s785 = scalar_select %p784, %s31, 2
        %s786 = scalar_lea.vmem %s14, %s785
        %p787 = pneg %p376
        %p788 = pneg %p373
        %p789 = pneg %p402
        %p790 = pneg %p399
        %p791 = scmp.lt.s32.totalorder %s31, 2
        %s792 = scalar_select %p791, %s31, 2
        %s793 = smul.addr %s792, 2
        %s794 = scalar_lea.vmem %s15, %s793
        %p795 = scmp.lt.s32.totalorder %s31, 2
        %s796 = scalar_select %p795, %s31, 2
        %s797 = scalar_lea.vmem %s14, %s796
        %p798 = scmp.lt.s32.totalorder %s31, 2
        %s799 = scalar_select %p798, %s31, 2
        %s800 = smul.addr %s799, 2
        %s801 = scalar_lea.vmem %s15, %s800
        %v803 = vld [vmem:[#allocation2] sm:$0xf]
        %v804 = vld [vmem:[#allocation7] sm:$0xff]
        %v805 = vld [vmem:[#allocation7 + $0x8] sm:$0xff]
        %v806 = vld [vmem:[#allocation7 + $0x10] sm:$0xff]
        %v807 = vld [vmem:[#allocation7 + $0x18] sm:$0xff]
        %v808 = vld [vmem:[#allocation7 + $0x20] sm:$0xff]
        %v809 = vld [vmem:[#allocation7 + $0x28] sm:$0xff]
        %v810 = vld [vmem:[#allocation7 + $0x30] sm:$0xff]
        %v811 = vld [vmem:[#allocation7 + $0x38] sm:$0xff]
        %v812 = vld [vmem:[#allocation7 + $0x40] sm:$0xff]
        %v813 = vld [vmem:[#allocation7 + $0x48] sm:$0xff]
        %v814 = vld [vmem:[#allocation7 + $0x50] sm:$0xff]
        %v815 = vld [vmem:[#allocation7 + $0x58] sm:$0xff]
        %v816 = vld [vmem:[#allocation7 + $0x60] sm:$0xff]
        %v817 = vld [vmem:[#allocation7 + $0x68] sm:$0xff]
        %v818 = vld [vmem:[#allocation7 + $0x70] sm:$0xff]
        %v819 = vld [vmem:[#allocation7 + $0x78] sm:$0xff]
        %v820 = vld [vmem:[#allocation7 + $0x80] sm:$0xff]
        %v821 = vld [vmem:[#allocation7 + $0x88] sm:$0xff]
        %v822 = vld [vmem:[#allocation7 + $0x90] sm:$0xff]
        %v823 = vld [vmem:[#allocation7 + $0x98] sm:$0xff]
        %v824 = vld [vmem:[#allocation7 + $0xa0] sm:$0xff]
        %v825 = vld [vmem:[#allocation7 + $0xa8] sm:$0xff]
        %v826 = vld [vmem:[#allocation7 + $0xb0] sm:$0xff]
        %v827 = vld [vmem:[#allocation7 + $0xb8] sm:$0xff]
        %v828 = vld [vmem:[#allocation7 + $0xc0] sm:$0xff]
        %v829 = vld [vmem:[#allocation7 + $0xc8] sm:$0xff]
        %v830 = vld [vmem:[#allocation7 + $0xd0] sm:$0xff]
        %v831 = vld [vmem:[#allocation7 + $0xd8] sm:$0xff]
        %v832 = vld [vmem:[#allocation7 + $0xe0] sm:$0xff]
        %v833 = vld [vmem:[#allocation7 + $0xe8] sm:$0xff]
        %v834 = vld [vmem:[#allocation7 + $0xf0] sm:$0xff]
        %v835 = vld [vmem:[#allocation7 + $0xf8] sm:$0xff]
        %v836 = vld [vmem:[#allocation7 + $0x100] sm:$0xff]
        %v837 = vld [vmem:[#allocation7 + $0x108] sm:$0xff]
        %v838 = vld [vmem:[#allocation7 + $0x110] sm:$0xff]
        %v839 = vld [vmem:[#allocation7 + $0x118] sm:$0xff]
        %v840 = vld [vmem:[#allocation7 + $0x120] sm:$0xff]
        %v841 = vld [vmem:[#allocation7 + $0x128] sm:$0xff]
        %v842 = vld [vmem:[#allocation7 + $0x130] sm:$0xff]
        %v843 = vld [vmem:[#allocation7 + $0x138] sm:$0xff]
        %v844 = vld [vmem:[#allocation7 + $0x140] sm:$0xff]
        %v845 = vld [vmem:[#allocation7 + $0x148] sm:$0xff]
        %v846 = vld [vmem:[#allocation7 + $0x150] sm:$0xff]
        %v847 = vld [vmem:[#allocation7 + $0x158] sm:$0xff]
        %v848 = vld [vmem:[#allocation7 + $0x160] sm:$0xff]
        %v849 = vld [vmem:[#allocation7 + $0x168] sm:$0xff]
        %v850 = vld [vmem:[#allocation7 + $0x170] sm:$0xff]
        %v851 = vld [vmem:[#allocation7 + $0x178] sm:$0xff]
        %v852 = vld [vmem:[#allocation7 + $0x180] sm:$0xff]
        %v853 = vld [vmem:[#allocation7 + $0x188] sm:$0xff]
        %v854 = vld [vmem:[#allocation7 + $0x190] sm:$0xff]
        %v855 = vld [vmem:[#allocation7 + $0x198] sm:$0xff]
        %v856 = vld [vmem:[#allocation7 + $0x1a0] sm:$0xff]
        %v857 = vld [vmem:[#allocation7 + $0x1a8] sm:$0xff]
        %v858 = vld [vmem:[#allocation7 + $0x1b0] sm:$0xff]
        %v859 = vld [vmem:[#allocation7 + $0x1b8] sm:$0xff]
        %v860 = vld [vmem:[#allocation7 + $0x1c0] sm:$0xff]
        %v861 = vld [vmem:[#allocation7 + $0x1c8] sm:$0xff]
        %v862 = vld [vmem:[#allocation7 + $0x1d0] sm:$0xff]
        %v863 = vld [vmem:[#allocation7 + $0x1d8] sm:$0xff]
        %v864 = vld [vmem:[#allocation7 + $0x1e0] sm:$0xff]
        %v865 = vld [vmem:[#allocation7 + $0x1e8] sm:$0xff]
        %v866 = vld [vmem:[#allocation7 + $0x1f0] sm:$0xff]
        %v867 = vld [vmem:[#allocation7 + $0x1f8] sm:$0xff]
        %v868 = vld [vmem:[#allocation7 + $0x200] sm:$0xff]
        %v869 = vld [vmem:[#allocation7 + $0x208] sm:$0xff]
        %v870 = vld [vmem:[#allocation7 + $0x210] sm:$0xff]
        %v871 = vld [vmem:[#allocation7 + $0x218] sm:$0xff]
        %v872 = vld [vmem:[#allocation7 + $0x220] sm:$0xff]
        %v873 = vld [vmem:[#allocation7 + $0x228] sm:$0xff]
        %v874 = vld [vmem:[#allocation7 + $0x230] sm:$0xff]
        %v875 = vld [vmem:[#allocation7 + $0x238] sm:$0xff]
        %v876 = vld [vmem:[#allocation7 + $0x240] sm:$0xff]
        %v877 = vld [vmem:[#allocation7 + $0x248] sm:$0xff]
        %v878 = vld [vmem:[#allocation7 + $0x250] sm:$0xff]
        %v879 = vld [vmem:[#allocation7 + $0x258] sm:$0xff]
        %v880 = vld [vmem:[#allocation7 + $0x260] sm:$0xff]
        %v881 = vld [vmem:[#allocation7 + $0x268] sm:$0xff]
        %v882 = vld [vmem:[#allocation7 + $0x270] sm:$0xff]
        %v883 = vld [vmem:[#allocation7 + $0x278] sm:$0xff]
        %v884 = vld [vmem:[#allocation7 + $0x280] sm:$0xff]
        %v885 = vld [vmem:[#allocation7 + $0x288] sm:$0xff]
        %v886 = vld [vmem:[#allocation7 + $0x290] sm:$0xff]
        %v887 = vld [vmem:[#allocation7 + $0x298] sm:$0xff]
        %v888 = vld [vmem:[#allocation7 + $0x2a0] sm:$0xff]
        %v889 = vld [vmem:[#allocation7 + $0x2a8] sm:$0xff]
        %v890 = vld [vmem:[#allocation7 + $0x2b0] sm:$0xff]
        %v891 = vld [vmem:[#allocation7 + $0x2b8] sm:$0xff]
        %v892 = vld [vmem:[#allocation7 + $0x2c0] sm:$0xff]
        %v893 = vld [vmem:[#allocation7 + $0x2c8] sm:$0xff]
        %v894 = vld [vmem:[#allocation7 + $0x2d0] sm:$0xff]
        %v895 = vld [vmem:[#allocation7 + $0x2d8] sm:$0xff]
        %v896 = vld [vmem:[#allocation7 + $0x2e0] sm:$0xff]
        %v897 = vld [vmem:[#allocation7 + $0x2e8] sm:$0xff]
        %v898 = vld [vmem:[#allocation7 + $0x2f0] sm:$0xff]
        %v899 = vld [vmem:[#allocation7 + $0x2f8] sm:$0xff]
        %v900 = vld [vmem:[#allocation7 + $0x300] sm:$0xff]
        %v901 = vld [vmem:[#allocation7 + $0x308] sm:$0xff]
        %v902 = vld [vmem:[#allocation7 + $0x310] sm:$0xff]
        %v903 = vld [vmem:[#allocation7 + $0x318] sm:$0xff]
        %v904 = vld [vmem:[#allocation7 + $0x320] sm:$0xff]
        %v905 = vld [vmem:[#allocation7 + $0x328] sm:$0xff]
        %v906 = vld [vmem:[#allocation7 + $0x330] sm:$0xff]
        %v907 = vld [vmem:[#allocation7 + $0x338] sm:$0xff]
        %v908 = vld [vmem:[#allocation7 + $0x340] sm:$0xff]
        %v909 = vld [vmem:[#allocation7 + $0x348] sm:$0xff]
        %v910 = vld [vmem:[#allocation7 + $0x350] sm:$0xff]
        %v911 = vld [vmem:[#allocation7 + $0x358] sm:$0xff]
        %v912 = vld [vmem:[#allocation7 + $0x360] sm:$0xff]
        %v913 = vld [vmem:[#allocation7 + $0x368] sm:$0xff]
        %v914 = vld [vmem:[#allocation7 + $0x370] sm:$0xff]
        %v915 = vld [vmem:[#allocation7 + $0x378] sm:$0xff]
        %v916 = vld [vmem:[#allocation7 + $0x380] sm:$0xff]
        %v917 = vld [vmem:[#allocation7 + $0x388] sm:$0xff]
        %v918 = vld [vmem:[#allocation7 + $0x390] sm:$0xff]
        %v919 = vld [vmem:[#allocation7 + $0x398] sm:$0xff]
        %v920 = vld [vmem:[#allocation7 + $0x3a0] sm:$0xff]
        %v921 = vld [vmem:[#allocation7 + $0x3a8] sm:$0xff]
        %v922 = vld [vmem:[#allocation7 + $0x3b0] sm:$0xff]
        %v923 = vld [vmem:[#allocation7 + $0x3b8] sm:$0xff]
        %v924 = vld [vmem:[#allocation7 + $0x3c0] sm:$0xff]
        %v925 = vld [vmem:[#allocation7 + $0x3c8] sm:$0xff]
        %v926 = vld [vmem:[#allocation7 + $0x3d0] sm:$0xff]
        %v927 = vld [vmem:[#allocation7 + $0x3d8] sm:$0xff]
        %v928 = vld [vmem:[#allocation7 + $0x3e0] sm:$0xff]
        %v929 = vld [vmem:[#allocation7 + $0x3e8] sm:$0xff]
        %v930 = vld [vmem:[#allocation7 + $0x3f0] sm:$0xff]
        %v931 = vld [vmem:[#allocation7 + $0x3f8] sm:$0xff]
        %v932 = vld [vmem:[#allocation4] sm:$0xf]
        %v933 = vld [vmem:[#allocation9] sm:$0xff]
        %v934 = vld [vmem:[#allocation9 + $0x8] sm:$0xff]
        %v935 = vld [vmem:[#allocation9 + $0x10] sm:$0xff]
        %v936 = vld [vmem:[#allocation9 + $0x18] sm:$0xff]
        %v937 = vld [vmem:[#allocation9 + $0x20] sm:$0xff]
        %v938 = vld [vmem:[#allocation9 + $0x28] sm:$0xff]
        %v939 = vld [vmem:[#allocation9 + $0x30] sm:$0xff]
        %v940 = vld [vmem:[#allocation9 + $0x38] sm:$0xff]
        %v941 = vld [vmem:[#allocation9 + $0x40] sm:$0xff]
        %v942 = vld [vmem:[#allocation9 + $0x48] sm:$0xff]
        %v943 = vld [vmem:[#allocation9 + $0x50] sm:$0xff]
        %v944 = vld [vmem:[#allocation9 + $0x58] sm:$0xff]
        %v945 = vld [vmem:[#allocation9 + $0x60] sm:$0xff]
        %v946 = vld [vmem:[#allocation9 + $0x68] sm:$0xff]
        %v947 = vld [vmem:[#allocation9 + $0x70] sm:$0xff]
        %v948 = vld [vmem:[#allocation9 + $0x78] sm:$0xff]
        %v949 = vld [vmem:[#allocation9 + $0x80] sm:$0xff]
        %v950 = vld [vmem:[#allocation9 + $0x88] sm:$0xff]
        %v951 = vld [vmem:[#allocation9 + $0x90] sm:$0xff]
        %v952 = vld [vmem:[#allocation9 + $0x98] sm:$0xff]
        %v953 = vld [vmem:[#allocation9 + $0xa0] sm:$0xff]
        %v954 = vld [vmem:[#allocation9 + $0xa8] sm:$0xff]
        %v955 = vld [vmem:[#allocation9 + $0xb0] sm:$0xff]
        %v956 = vld [vmem:[#allocation9 + $0xb8] sm:$0xff]
        %v957 = vld [vmem:[#allocation9 + $0xc0] sm:$0xff]
        %v958 = vld [vmem:[#allocation9 + $0xc8] sm:$0xff]
        %v959 = vld [vmem:[#allocation9 + $0xd0] sm:$0xff]
        %v960 = vld [vmem:[#allocation9 + $0xd8] sm:$0xff]
        %v961 = vld [vmem:[#allocation9 + $0xe0] sm:$0xff]
        %v962 = vld [vmem:[#allocation9 + $0xe8] sm:$0xff]
        %v963 = vld [vmem:[#allocation9 + $0xf0] sm:$0xff]
        %v964 = vld [vmem:[#allocation9 + $0xf8] sm:$0xff]
        %v965 = vld [vmem:[#allocation9 + $0x100] sm:$0xff]
        %v966 = vld [vmem:[#allocation9 + $0x108] sm:$0xff]
        %v967 = vld [vmem:[#allocation9 + $0x110] sm:$0xff]
        %v968 = vld [vmem:[#allocation9 + $0x118] sm:$0xff]
        %v969 = vld [vmem:[#allocation9 + $0x120] sm:$0xff]
        %v970 = vld [vmem:[#allocation9 + $0x128] sm:$0xff]
        %v971 = vld [vmem:[#allocation9 + $0x130] sm:$0xff]
        %v972 = vld [vmem:[#allocation9 + $0x138] sm:$0xff]
        %v973 = vld [vmem:[#allocation9 + $0x140] sm:$0xff]
        %v974 = vld [vmem:[#allocation9 + $0x148] sm:$0xff]
        %v975 = vld [vmem:[#allocation9 + $0x150] sm:$0xff]
        %v976 = vld [vmem:[#allocation9 + $0x158] sm:$0xff]
        %v977 = vld [vmem:[#allocation9 + $0x160] sm:$0xff]
        %v978 = vld [vmem:[#allocation9 + $0x168] sm:$0xff]
        %v979 = vld [vmem:[#allocation9 + $0x170] sm:$0xff]
        %v980 = vld [vmem:[#allocation9 + $0x178] sm:$0xff]
        %v981 = vld [vmem:[#allocation9 + $0x180] sm:$0xff]
        %v982 = vld [vmem:[#allocation9 + $0x188] sm:$0xff]
        %v983 = vld [vmem:[#allocation9 + $0x190] sm:$0xff]
        %v984 = vld [vmem:[#allocation9 + $0x198] sm:$0xff]
        %v985 = vld [vmem:[#allocation9 + $0x1a0] sm:$0xff]
        %v986 = vld [vmem:[#allocation9 + $0x1a8] sm:$0xff]
        %v987 = vld [vmem:[#allocation9 + $0x1b0] sm:$0xff]
        %v988 = vld [vmem:[#allocation9 + $0x1b8] sm:$0xff]
        %v989 = vld [vmem:[#allocation9 + $0x1c0] sm:$0xff]
        %v990 = vld [vmem:[#allocation9 + $0x1c8] sm:$0xff]
        %v991 = vld [vmem:[#allocation9 + $0x1d0] sm:$0xff]
        %v992 = vld [vmem:[#allocation9 + $0x1d8] sm:$0xff]
        %v993 = vld [vmem:[#allocation9 + $0x1e0] sm:$0xff]
        %v994 = vld [vmem:[#allocation9 + $0x1e8] sm:$0xff]
        %v995 = vld [vmem:[#allocation9 + $0x1f0] sm:$0xff]
        %v996 = vld [vmem:[#allocation9 + $0x1f8] sm:$0xff]
        %v997 = vld [vmem:[#allocation9 + $0x200] sm:$0xff]
        %v998 = vld [vmem:[#allocation9 + $0x208] sm:$0xff]
        %v999 = vld [vmem:[#allocation9 + $0x210] sm:$0xff]
        %v1000 = vld [vmem:[#allocation9 + $0x218] sm:$0xff]
        %v1001 = vld [vmem:[#allocation9 + $0x220] sm:$0xff]
        %v1002 = vld [vmem:[#allocation9 + $0x228] sm:$0xff]
        %v1003 = vld [vmem:[#allocation9 + $0x230] sm:$0xff]
        %v1004 = vld [vmem:[#allocation9 + $0x238] sm:$0xff]
        %v1005 = vld [vmem:[#allocation9 + $0x240] sm:$0xff]
        %v1006 = vld [vmem:[#allocation9 + $0x248] sm:$0xff]
        %v1007 = vld [vmem:[#allocation9 + $0x250] sm:$0xff]
        %v1008 = vld [vmem:[#allocation9 + $0x258] sm:$0xff]
        %v1009 = vld [vmem:[#allocation9 + $0x260] sm:$0xff]
        %v1010 = vld [vmem:[#allocation9 + $0x268] sm:$0xff]
        %v1011 = vld [vmem:[#allocation9 + $0x270] sm:$0xff]
        %v1012 = vld [vmem:[#allocation9 + $0x278] sm:$0xff]
        %v1013 = vld [vmem:[#allocation9 + $0x280] sm:$0xff]
        %v1014 = vld [vmem:[#allocation9 + $0x288] sm:$0xff]
        %v1015 = vld [vmem:[#allocation9 + $0x290] sm:$0xff]
        %v1016 = vld [vmem:[#allocation9 + $0x298] sm:$0xff]
        %v1017 = vld [vmem:[#allocation9 + $0x2a0] sm:$0xff]
        %v1018 = vld [vmem:[#allocation9 + $0x2a8] sm:$0xff]
        %v1019 = vld [vmem:[#allocation9 + $0x2b0] sm:$0xff]
        %v1020 = vld [vmem:[#allocation9 + $0x2b8] sm:$0xff]
        %v1021 = vld [vmem:[#allocation9 + $0x2c0] sm:$0xff]
        %v1022 = vld [vmem:[#allocation9 + $0x2c8] sm:$0xff]
        %v1023 = vld [vmem:[#allocation9 + $0x2d0] sm:$0xff]
        %v1024 = vld [vmem:[#allocation9 + $0x2d8] sm:$0xff]
        %v1025 = vld [vmem:[#allocation9 + $0x2e0] sm:$0xff]
        %v1026 = vld [vmem:[#allocation9 + $0x2e8] sm:$0xff]
        %v1027 = vld [vmem:[#allocation9 + $0x2f0] sm:$0xff]
        %v1028 = vld [vmem:[#allocation9 + $0x2f8] sm:$0xff]
        %v1029 = vld [vmem:[#allocation9 + $0x300] sm:$0xff]
        %v1030 = vld [vmem:[#allocation9 + $0x308] sm:$0xff]
        %v1031 = vld [vmem:[#allocation9 + $0x310] sm:$0xff]
        %v1032 = vld [vmem:[#allocation9 + $0x318] sm:$0xff]
        %v1033 = vld [vmem:[#allocation9 + $0x320] sm:$0xff]
        %v1034 = vld [vmem:[#allocation9 + $0x328] sm:$0xff]
        %v1035 = vld [vmem:[#allocation9 + $0x330] sm:$0xff]
        %v1036 = vld [vmem:[#allocation9 + $0x338] sm:$0xff]
        %v1037 = vld [vmem:[#allocation9 + $0x340] sm:$0xff]
        %v1038 = vld [vmem:[#allocation9 + $0x348] sm:$0xff]
        %v1039 = vld [vmem:[#allocation9 + $0x350] sm:$0xff]
        %v1040 = vld [vmem:[#allocation9 + $0x358] sm:$0xff]
        %v1041 = vld [vmem:[#allocation9 + $0x360] sm:$0xff]
        %v1042 = vld [vmem:[#allocation9 + $0x368] sm:$0xff]
        %v1043 = vld [vmem:[#allocation9 + $0x370] sm:$0xff]
        %v1044 = vld [vmem:[#allocation9 + $0x378] sm:$0xff]
        %v1045 = vld [vmem:[#allocation9 + $0x380] sm:$0xff]
        %v1046 = vld [vmem:[#allocation9 + $0x388] sm:$0xff]
        %v1047 = vld [vmem:[#allocation9 + $0x390] sm:$0xff]
        %v1048 = vld [vmem:[#allocation9 + $0x398] sm:$0xff]
        %v1049 = vld [vmem:[#allocation9 + $0x3a0] sm:$0xff]
        %v1050 = vld [vmem:[#allocation9 + $0x3a8] sm:$0xff]
        %v1051 = vld [vmem:[#allocation9 + $0x3b0] sm:$0xff]
        %v1052 = vld [vmem:[#allocation9 + $0x3b8] sm:$0xff]
        %v1053 = vld [vmem:[#allocation9 + $0x3c0] sm:$0xff]
        %v1054 = vld [vmem:[#allocation9 + $0x3c8] sm:$0xff]
        %v1055 = vld [vmem:[#allocation9 + $0x3d0] sm:$0xff]
        %v1056 = vld [vmem:[#allocation9 + $0x3d8] sm:$0xff]
        %v1057 = vld [vmem:[#allocation9 + $0x3e0] sm:$0xff]
        %v1058 = vld [vmem:[#allocation9 + $0x3e8] sm:$0xff]
        %v1059 = vld [vmem:[#allocation9 + $0x3f0] sm:$0xff]
        %v1060 = vld [vmem:[#allocation9 + $0x3f8] sm:$0xff]
        %v1063 = vunpack.c.l.s4 1966171168
        %v1064 = vunpack.c.0.s8 %v1063
        %v1065 = vlaneseq
        %v1066 = vshrl.u32 %v1065, 7
        %v1067 = vsub.s32 %v1064, %v1066
        %v1068 = vrot.slane %v932, %v1067
        %v1069 = vcombine.high %v1068, %v1068
        %v1071 = vunpack.c.l.s4 1966171168
        %v1072 = vunpack.c.0.s8 %v1071
        %v1073 = vlaneseq
        %v1074 = vshrl.u32 %v1073, 7
        %v1075 = vsub.s32 %v1072, %v1074
        %v1076 = vrot.slane %v1068, %v1075
        %v1078 = vunpack.c.l.s4 1966171168
        %v1079 = vunpack.c.0.s8 %v1078
        %v1080 = vlaneseq
        %v1081 = vshrl.u32 %v1080, 7
        %v1082 = vsub.s32 %v1079, %v1081
        %v1083 = vrot.slane %v1069, %v1082
        %v1084 = vcombine.high %v1076, %v1076
        %v1085 = vcombine.high %v1083, %v1083
        %v1218 = vunpack.c.l.b16 %v933
        %v1219 = vunpack.c.h.b16 %v933
        %v1220 = vunpack.c.l.b16 %v934
        %v1221 = vunpack.c.h.b16 %v934
        %v1222 = vunpack.c.l.b16 %v935
        %v1223 = vunpack.c.h.b16 %v935
        %v1224 = vunpack.c.l.b16 %v936
        %v1225 = vunpack.c.h.b16 %v936
        %v1226 = vunpack.c.l.b16 %v937
        %v1227 = vunpack.c.h.b16 %v937
        %v1228 = vunpack.c.l.b16 %v938
        %v1229 = vunpack.c.h.b16 %v938
        %v1230 = vunpack.c.l.b16 %v939
        %v1231 = vunpack.c.h.b16 %v939
        %v1232 = vunpack.c.l.b16 %v940
        %v1233 = vunpack.c.h.b16 %v940
        %v1234 = vunpack.c.l.b16 %v941
        %v1235 = vunpack.c.h.b16 %v941
        %v1236 = vunpack.c.l.b16 %v942
        %v1237 = vunpack.c.h.b16 %v942
        %v1238 = vunpack.c.l.b16 %v943
        %v1239 = vunpack.c.h.b16 %v943
        %v1240 = vunpack.c.l.b16 %v944
        %v1241 = vunpack.c.h.b16 %v944
        %v1242 = vunpack.c.l.b16 %v945
        %v1243 = vunpack.c.h.b16 %v945
        %v1244 = vunpack.c.l.b16 %v946
        %v1245 = vunpack.c.h.b16 %v946
        %v1246 = vunpack.c.l.b16 %v947
        %v1247 = vunpack.c.h.b16 %v947
        %v1248 = vunpack.c.l.b16 %v948
        %v1249 = vunpack.c.h.b16 %v948
        %v1250 = vunpack.c.l.b16 %v949
        %v1251 = vunpack.c.h.b16 %v949
        %v1252 = vunpack.c.l.b16 %v950
        %v1253 = vunpack.c.h.b16 %v950
        %v1254 = vunpack.c.l.b16 %v951
        %v1255 = vunpack.c.h.b16 %v951
        %v1256 = vunpack.c.l.b16 %v952
        %v1257 = vunpack.c.h.b16 %v952
        %v1258 = vunpack.c.l.b16 %v953
        %v1259 = vunpack.c.h.b16 %v953
        %v1260 = vunpack.c.l.b16 %v954
        %v1261 = vunpack.c.h.b16 %v954
        %v1262 = vunpack.c.l.b16 %v955
        %v1263 = vunpack.c.h.b16 %v955
        %v1264 = vunpack.c.l.b16 %v956
        %v1265 = vunpack.c.h.b16 %v956
        %v1266 = vunpack.c.l.b16 %v957
        %v1267 = vunpack.c.h.b16 %v957
        %v1268 = vunpack.c.l.b16 %v958
        %v1269 = vunpack.c.h.b16 %v958
        %v1270 = vunpack.c.l.b16 %v959
        %v1271 = vunpack.c.h.b16 %v959
        %v1272 = vunpack.c.l.b16 %v960
        %v1273 = vunpack.c.h.b16 %v960
        %v1274 = vunpack.c.l.b16 %v961
        %v1275 = vunpack.c.h.b16 %v961
        %v1276 = vunpack.c.l.b16 %v962
        %v1277 = vunpack.c.h.b16 %v962
        %v1278 = vunpack.c.l.b16 %v963
        %v1279 = vunpack.c.h.b16 %v963
        %v1280 = vunpack.c.l.b16 %v964
        %v1281 = vunpack.c.h.b16 %v964
        %v1282 = vunpack.c.l.b16 %v965
        %v1283 = vunpack.c.h.b16 %v965
        %v1284 = vunpack.c.l.b16 %v966
        %v1285 = vunpack.c.h.b16 %v966
        %v1286 = vunpack.c.l.b16 %v967
        %v1287 = vunpack.c.h.b16 %v967
        %v1288 = vunpack.c.l.b16 %v968
        %v1289 = vunpack.c.h.b16 %v968
        %v1290 = vunpack.c.l.b16 %v969
        %v1291 = vunpack.c.h.b16 %v969
        %v1292 = vunpack.c.l.b16 %v970
        %v1293 = vunpack.c.h.b16 %v970
        %v1294 = vunpack.c.l.b16 %v971
        %v1295 = vunpack.c.h.b16 %v971
        %v1296 = vunpack.c.l.b16 %v972
        %v1297 = vunpack.c.h.b16 %v972
        %v1298 = vunpack.c.l.b16 %v973
        %v1299 = vunpack.c.h.b16 %v973
        %v1300 = vunpack.c.l.b16 %v974
        %v1301 = vunpack.c.h.b16 %v974
        %v1302 = vunpack.c.l.b16 %v975
        %v1303 = vunpack.c.h.b16 %v975
        %v1304 = vunpack.c.l.b16 %v976
        %v1305 = vunpack.c.h.b16 %v976
        %v1306 = vunpack.c.l.b16 %v977
        %v1307 = vunpack.c.h.b16 %v977
        %v1308 = vunpack.c.l.b16 %v978
        %v1309 = vunpack.c.h.b16 %v978
        %v1310 = vunpack.c.l.b16 %v979
        %v1311 = vunpack.c.h.b16 %v979
        %v1312 = vunpack.c.l.b16 %v980
        %v1313 = vunpack.c.h.b16 %v980
        %v1314 = vunpack.c.l.b16 %v981
        %v1315 = vunpack.c.h.b16 %v981
        %v1316 = vunpack.c.l.b16 %v982
        %v1317 = vunpack.c.h.b16 %v982
        %v1318 = vunpack.c.l.b16 %v983
        %v1319 = vunpack.c.h.b16 %v983
        %v1320 = vunpack.c.l.b16 %v984
        %v1321 = vunpack.c.h.b16 %v984
        %v1322 = vunpack.c.l.b16 %v985
        %v1323 = vunpack.c.h.b16 %v985
        %v1324 = vunpack.c.l.b16 %v986
        %v1325 = vunpack.c.h.b16 %v986
        %v1326 = vunpack.c.l.b16 %v987
        %v1327 = vunpack.c.h.b16 %v987
        %v1328 = vunpack.c.l.b16 %v988
        %v1329 = vunpack.c.h.b16 %v988
        %v1330 = vunpack.c.l.b16 %v989
        %v1331 = vunpack.c.h.b16 %v989
        %v1332 = vunpack.c.l.b16 %v990
        %v1333 = vunpack.c.h.b16 %v990
        %v1334 = vunpack.c.l.b16 %v991
        %v1335 = vunpack.c.h.b16 %v991
        %v1336 = vunpack.c.l.b16 %v992
        %v1337 = vunpack.c.h.b16 %v992
        %v1338 = vunpack.c.l.b16 %v993
        %v1339 = vunpack.c.h.b16 %v993
        %v1340 = vunpack.c.l.b16 %v994
        %v1341 = vunpack.c.h.b16 %v994
        %v1342 = vunpack.c.l.b16 %v995
        %v1343 = vunpack.c.h.b16 %v995
        %v1344 = vunpack.c.l.b16 %v996
        %v1345 = vunpack.c.h.b16 %v996
        %v1346 = vunpack.c.l.b16 %v997
        %v1347 = vunpack.c.h.b16 %v997
        %v1348 = vunpack.c.l.b16 %v998
        %v1349 = vunpack.c.h.b16 %v998
        %v1350 = vunpack.c.l.b16 %v999
        %v1351 = vunpack.c.h.b16 %v999
        %v1352 = vunpack.c.l.b16 %v1000
        %v1353 = vunpack.c.h.b16 %v1000
        %v1354 = vunpack.c.l.b16 %v1001
        %v1355 = vunpack.c.h.b16 %v1001
        %v1356 = vunpack.c.l.b16 %v1002
        %v1357 = vunpack.c.h.b16 %v1002
        %v1358 = vunpack.c.l.b16 %v1003
        %v1359 = vunpack.c.h.b16 %v1003
        %v1360 = vunpack.c.l.b16 %v1004
        %v1361 = vunpack.c.h.b16 %v1004
        %v1362 = vunpack.c.l.b16 %v1005
        %v1363 = vunpack.c.h.b16 %v1005
        %v1364 = vunpack.c.l.b16 %v1006
        %v1365 = vunpack.c.h.b16 %v1006
        %v1366 = vunpack.c.l.b16 %v1007
        %v1367 = vunpack.c.h.b16 %v1007
        %v1368 = vunpack.c.l.b16 %v1008
        %v1369 = vunpack.c.h.b16 %v1008
        %v1370 = vunpack.c.l.b16 %v1009
        %v1371 = vunpack.c.h.b16 %v1009
        %v1372 = vunpack.c.l.b16 %v1010
        %v1373 = vunpack.c.h.b16 %v1010
        %v1374 = vunpack.c.l.b16 %v1011
        %v1375 = vunpack.c.h.b16 %v1011
        %v1376 = vunpack.c.l.b16 %v1012
        %v1377 = vunpack.c.h.b16 %v1012
        %v1378 = vunpack.c.l.b16 %v1013
        %v1379 = vunpack.c.h.b16 %v1013
        %v1380 = vunpack.c.l.b16 %v1014
        %v1381 = vunpack.c.h.b16 %v1014
        %v1382 = vunpack.c.l.b16 %v1015
        %v1383 = vunpack.c.h.b16 %v1015
        %v1384 = vunpack.c.l.b16 %v1016
        %v1385 = vunpack.c.h.b16 %v1016
        %v1386 = vunpack.c.l.b16 %v1017
        %v1387 = vunpack.c.h.b16 %v1017
        %v1388 = vunpack.c.l.b16 %v1018
        %v1389 = vunpack.c.h.b16 %v1018
        %v1390 = vunpack.c.l.b16 %v1019
        %v1391 = vunpack.c.h.b16 %v1019
        %v1392 = vunpack.c.l.b16 %v1020
        %v1393 = vunpack.c.h.b16 %v1020
        %v1394 = vunpack.c.l.b16 %v1021
        %v1395 = vunpack.c.h.b16 %v1021
        %v1396 = vunpack.c.l.b16 %v1022
        %v1397 = vunpack.c.h.b16 %v1022
        %v1398 = vunpack.c.l.b16 %v1023
        %v1399 = vunpack.c.h.b16 %v1023
        %v1400 = vunpack.c.l.b16 %v1024
        %v1401 = vunpack.c.h.b16 %v1024
        %v1402 = vunpack.c.l.b16 %v1025
        %v1403 = vunpack.c.h.b16 %v1025
        %v1404 = vunpack.c.l.b16 %v1026
        %v1405 = vunpack.c.h.b16 %v1026
        %v1406 = vunpack.c.l.b16 %v1027
        %v1407 = vunpack.c.h.b16 %v1027
        %v1408 = vunpack.c.l.b16 %v1028
        %v1409 = vunpack.c.h.b16 %v1028
        %v1410 = vunpack.c.l.b16 %v1029
        %v1411 = vunpack.c.h.b16 %v1029
        %v1412 = vunpack.c.l.b16 %v1030
        %v1413 = vunpack.c.h.b16 %v1030
        %v1414 = vunpack.c.l.b16 %v1031
        %v1415 = vunpack.c.h.b16 %v1031
        %v1416 = vunpack.c.l.b16 %v1032
        %v1417 = vunpack.c.h.b16 %v1032
        %v1418 = vunpack.c.l.b16 %v1033
        %v1419 = vunpack.c.h.b16 %v1033
        %v1420 = vunpack.c.l.b16 %v1034
        %v1421 = vunpack.c.h.b16 %v1034
        %v1422 = vunpack.c.l.b16 %v1035
        %v1423 = vunpack.c.h.b16 %v1035
        %v1424 = vunpack.c.l.b16 %v1036
        %v1425 = vunpack.c.h.b16 %v1036
        %v1426 = vunpack.c.l.b16 %v1037
        %v1427 = vunpack.c.h.b16 %v1037
        %v1428 = vunpack.c.l.b16 %v1038
        %v1429 = vunpack.c.h.b16 %v1038
        %v1430 = vunpack.c.l.b16 %v1039
        %v1431 = vunpack.c.h.b16 %v1039
        %v1432 = vunpack.c.l.b16 %v1040
        %v1433 = vunpack.c.h.b16 %v1040
        %v1434 = vunpack.c.l.b16 %v1041
        %v1435 = vunpack.c.h.b16 %v1041
        %v1436 = vunpack.c.l.b16 %v1042
        %v1437 = vunpack.c.h.b16 %v1042
        %v1438 = vunpack.c.l.b16 %v1043
        %v1439 = vunpack.c.h.b16 %v1043
        %v1440 = vunpack.c.l.b16 %v1044
        %v1441 = vunpack.c.h.b16 %v1044
        %v1442 = vunpack.c.l.b16 %v1045
        %v1443 = vunpack.c.h.b16 %v1045
        %v1444 = vunpack.c.l.b16 %v1046
        %v1445 = vunpack.c.h.b16 %v1046
        %v1446 = vunpack.c.l.b16 %v1047
        %v1447 = vunpack.c.h.b16 %v1047
        %v1448 = vunpack.c.l.b16 %v1048
        %v1449 = vunpack.c.h.b16 %v1048
        %v1450 = vunpack.c.l.b16 %v1049
        %v1451 = vunpack.c.h.b16 %v1049
        %v1452 = vunpack.c.l.b16 %v1050
        %v1453 = vunpack.c.h.b16 %v1050
        %v1454 = vunpack.c.l.b16 %v1051
        %v1455 = vunpack.c.h.b16 %v1051
        %v1456 = vunpack.c.l.b16 %v1052
        %v1457 = vunpack.c.h.b16 %v1052
        %v1458 = vunpack.c.l.b16 %v1053
        %v1459 = vunpack.c.h.b16 %v1053
        %v1460 = vunpack.c.l.b16 %v1054
        %v1461 = vunpack.c.h.b16 %v1054
        %v1462 = vunpack.c.l.b16 %v1055
        %v1463 = vunpack.c.h.b16 %v1055
        %v1464 = vunpack.c.l.b16 %v1056
        %v1465 = vunpack.c.h.b16 %v1056
        %v1466 = vunpack.c.l.b16 %v1057
        %v1467 = vunpack.c.h.b16 %v1057
        %v1468 = vunpack.c.l.b16 %v1058
        %v1469 = vunpack.c.h.b16 %v1058
        %v1470 = vunpack.c.l.b16 %v1059
        %v1471 = vunpack.c.h.b16 %v1059
        %v1472 = vunpack.c.l.b16 %v1060
        %v1473 = vunpack.c.h.b16 %v1060
        %v1474 = vpack.c.b16 %v1222, %v1218
        %v1475 = vpack.c.b16 %v1223, %v1219
        %v1476 = vpack.c.b16 %v1224, %v1220
        %v1477 = vpack.c.b16 %v1225, %v1221
        %v1478 = vpack.c.b16 %v1230, %v1226
        %v1479 = vpack.c.b16 %v1231, %v1227
        %v1480 = vpack.c.b16 %v1232, %v1228
        %v1481 = vpack.c.b16 %v1233, %v1229
        %v1482 = vpack.c.b16 %v1238, %v1234
        %v1483 = vpack.c.b16 %v1239, %v1235
        %v1484 = vpack.c.b16 %v1240, %v1236
        %v1485 = vpack.c.b16 %v1241, %v1237
        %v1486 = vpack.c.b16 %v1246, %v1242
        %v1487 = vpack.c.b16 %v1247, %v1243
        %v1488 = vpack.c.b16 %v1248, %v1244
        %v1489 = vpack.c.b16 %v1249, %v1245
        %v1490 = vpack.c.b16 %v1254, %v1250
        %v1491 = vpack.c.b16 %v1255, %v1251
        %v1492 = vpack.c.b16 %v1256, %v1252
        %v1493 = vpack.c.b16 %v1257, %v1253
        %v1494 = vpack.c.b16 %v1262, %v1258
        %v1495 = vpack.c.b16 %v1263, %v1259
        %v1496 = vpack.c.b16 %v1264, %v1260
        %v1497 = vpack.c.b16 %v1265, %v1261
        %v1498 = vpack.c.b16 %v1270, %v1266
        %v1499 = vpack.c.b16 %v1271, %v1267
        %v1500 = vpack.c.b16 %v1272, %v1268
        %v1501 = vpack.c.b16 %v1273, %v1269
        %v1502 = vpack.c.b16 %v1278, %v1274
        %v1503 = vpack.c.b16 %v1279, %v1275
        %v1504 = vpack.c.b16 %v1280, %v1276
        %v1505 = vpack.c.b16 %v1281, %v1277
        %v1506 = vpack.c.b16 %v1286, %v1282
        %v1507 = vpack.c.b16 %v1287, %v1283
        %v1508 = vpack.c.b16 %v1288, %v1284
        %v1509 = vpack.c.b16 %v1289, %v1285
        %v1510 = vpack.c.b16 %v1294, %v1290
        %v1511 = vpack.c.b16 %v1295, %v1291
        %v1512 = vpack.c.b16 %v1296, %v1292
        %v1513 = vpack.c.b16 %v1297, %v1293
        %v1514 = vpack.c.b16 %v1302, %v1298
        %v1515 = vpack.c.b16 %v1303, %v1299
        %v1516 = vpack.c.b16 %v1304, %v1300
        %v1517 = vpack.c.b16 %v1305, %v1301
        %v1518 = vpack.c.b16 %v1310, %v1306
        %v1519 = vpack.c.b16 %v1311, %v1307
        %v1520 = vpack.c.b16 %v1312, %v1308
        %v1521 = vpack.c.b16 %v1313, %v1309
        %v1522 = vpack.c.b16 %v1318, %v1314
        %v1523 = vpack.c.b16 %v1319, %v1315
        %v1524 = vpack.c.b16 %v1320, %v1316
        %v1525 = vpack.c.b16 %v1321, %v1317
        %v1526 = vpack.c.b16 %v1326, %v1322
        %v1527 = vpack.c.b16 %v1327, %v1323
        %v1528 = vpack.c.b16 %v1328, %v1324
        %v1529 = vpack.c.b16 %v1329, %v1325
        %v1530 = vpack.c.b16 %v1334, %v1330
        %v1531 = vpack.c.b16 %v1335, %v1331
        %v1532 = vpack.c.b16 %v1336, %v1332
        %v1533 = vpack.c.b16 %v1337, %v1333
        %v1534 = vpack.c.b16 %v1342, %v1338
        %v1535 = vpack.c.b16 %v1343, %v1339
        %v1536 = vpack.c.b16 %v1344, %v1340
        %v1537 = vpack.c.b16 %v1345, %v1341
        %v1538 = vpack.c.b16 %v1350, %v1346
        %v1539 = vpack.c.b16 %v1351, %v1347
        %v1540 = vpack.c.b16 %v1352, %v1348
        %v1541 = vpack.c.b16 %v1353, %v1349
        %v1542 = vpack.c.b16 %v1358, %v1354
        %v1543 = vpack.c.b16 %v1359, %v1355
        %v1544 = vpack.c.b16 %v1360, %v1356
        %v1545 = vpack.c.b16 %v1361, %v1357
        %v1546 = vpack.c.b16 %v1366, %v1362
        %v1547 = vpack.c.b16 %v1367, %v1363
        %v1548 = vpack.c.b16 %v1368, %v1364
        %v1549 = vpack.c.b16 %v1369, %v1365
        %v1550 = vpack.c.b16 %v1374, %v1370
        %v1551 = vpack.c.b16 %v1375, %v1371
        %v1552 = vpack.c.b16 %v1376, %v1372
        %v1553 = vpack.c.b16 %v1377, %v1373
        %v1554 = vpack.c.b16 %v1382, %v1378
        %v1555 = vpack.c.b16 %v1383, %v1379
        %v1556 = vpack.c.b16 %v1384, %v1380
        %v1557 = vpack.c.b16 %v1385, %v1381
        %v1558 = vpack.c.b16 %v1390, %v1386
        %v1559 = vpack.c.b16 %v1391, %v1387
        %v1560 = vpack.c.b16 %v1392, %v1388
        %v1561 = vpack.c.b16 %v1393, %v1389
        %v1562 = vpack.c.b16 %v1398, %v1394
        %v1563 = vpack.c.b16 %v1399, %v1395
        %v1564 = vpack.c.b16 %v1400, %v1396
        %v1565 = vpack.c.b16 %v1401, %v1397
        %v1566 = vpack.c.b16 %v1406, %v1402
        %v1567 = vpack.c.b16 %v1407, %v1403
        %v1568 = vpack.c.b16 %v1408, %v1404
        %v1569 = vpack.c.b16 %v1409, %v1405
        %v1570 = vpack.c.b16 %v1414, %v1410
        %v1571 = vpack.c.b16 %v1415, %v1411
        %v1572 = vpack.c.b16 %v1416, %v1412
        %v1573 = vpack.c.b16 %v1417, %v1413
        %v1574 = vpack.c.b16 %v1422, %v1418
        %v1575 = vpack.c.b16 %v1423, %v1419
        %v1576 = vpack.c.b16 %v1424, %v1420
        %v1577 = vpack.c.b16 %v1425, %v1421
        %v1578 = vpack.c.b16 %v1430, %v1426
        %v1579 = vpack.c.b16 %v1431, %v1427
        %v1580 = vpack.c.b16 %v1432, %v1428
        %v1581 = vpack.c.b16 %v1433, %v1429
        %v1582 = vpack.c.b16 %v1438, %v1434
        %v1583 = vpack.c.b16 %v1439, %v1435
        %v1584 = vpack.c.b16 %v1440, %v1436
        %v1585 = vpack.c.b16 %v1441, %v1437
        %v1586 = vpack.c.b16 %v1446, %v1442
        %v1587 = vpack.c.b16 %v1447, %v1443
        %v1588 = vpack.c.b16 %v1448, %v1444
        %v1589 = vpack.c.b16 %v1449, %v1445
        %v1590 = vpack.c.b16 %v1454, %v1450
        %v1591 = vpack.c.b16 %v1455, %v1451
        %v1592 = vpack.c.b16 %v1456, %v1452
        %v1593 = vpack.c.b16 %v1457, %v1453
        %v1594 = vpack.c.b16 %v1462, %v1458
        %v1595 = vpack.c.b16 %v1463, %v1459
        %v1596 = vpack.c.b16 %v1464, %v1460
        %v1597 = vpack.c.b16 %v1465, %v1461
        %v1598 = vpack.c.b16 %v1470, %v1466
        %v1599 = vpack.c.b16 %v1471, %v1467
        %v1600 = vpack.c.b16 %v1472, %v1468
        %v1601 = vpack.c.b16 %v1473, %v1469
        %1730 = vmatprep.subr.bf16.mxu0 %v1503
        %1731 = vmatpush1.bf16.msra.mxu0 %v1502
        %1732 = vmatprep.subr.bf16.mxu0 %v1499
        %1733 = vmatpush1.bf16.msra.mxu0 %v1498
        %1734 = vmatprep.subr.bf16.mxu0 %v1495
        %1735 = vmatpush1.bf16.msra.mxu0 %v1494
        %1736 = vmatprep.subr.bf16.mxu0 %v1491
        %1737 = vmatpush1.bf16.msra.mxu0 %v1490
        %1738 = vmatprep.subr.bf16.mxu0 %v1487
        %1739 = vmatpush1.bf16.msra.mxu0 %v1486
        %1740 = vmatprep.subr.bf16.mxu0 %v1483
        %1741 = vmatpush1.bf16.msra.mxu0 %v1482
        %1742 = vmatprep.subr.bf16.mxu0 %v1479
        %1743 = vmatpush1.bf16.msra.mxu0 %v1478
        %1744 = vmatprep.subr.bf16.mxu0 %v1475
        %1745 = vmatpush1.bf16.msra.mxu0 %v1474
        %1746 = vmatprep.subr.bf16.mxu0 %v1535
        %1747 = vmatpush2.bf16.msra.mxu0 %v1534
        %1748 = vmatprep.subr.bf16.mxu0 %v1531
        %1749 = vmatpush2.bf16.msra.mxu0 %v1530
        %1750 = vmatprep.subr.bf16.mxu0 %v1527
        %1751 = vmatpush2.bf16.msra.mxu0 %v1526
        %1752 = vmatprep.subr.bf16.mxu0 %v1523
        %1753 = vmatpush2.bf16.msra.mxu0 %v1522
        %1754 = vmatprep.subr.bf16.mxu0 %v1519
        %1755 = vmatpush2.bf16.msra.mxu0 %v1518
        %1756 = vmatprep.subr.bf16.mxu0 %v1515
        %1757 = vmatpush2.bf16.msra.mxu0 %v1514
        %1758 = vmatprep.subr.bf16.mxu0 %v1511
        %1759 = vmatpush2.bf16.msra.mxu0 %v1510
        %1760 = vmatprep.subr.bf16.mxu0 %v1507
        %1761 = vmatpush2.bf16.msra.mxu0 %v1506
        %1762 = vmatprep.mubr.bf16.mxu0 %v1083
        %1763 = vmatmul.mubr.bf16.gmra.mxu0 %v1076
        %v1764 = vpop.f32.mrf.mxu0
        %v1765 = vadd.f32 0.0, %v1764
        %v1766 = vpop.f32.mrf.mxu0
        %v1767 = vadd.f32 0.0, %v1766
        %v1768 = vpop.f32.mrf.mxu0
        %v1769 = vpop.f32.mrf.mxu0
        %1770 = vdwg.mxu0
        %1771 = vmatprep.subr.bf16.mxu0 %v1567
        %1772 = vmatpush1.bf16.msra.mxu0 %v1566
        %1773 = vmatprep.subr.bf16.mxu0 %v1563
        %1774 = vmatpush1.bf16.msra.mxu0 %v1562
        %1775 = vmatprep.subr.bf16.mxu0 %v1559
        %1776 = vmatpush1.bf16.msra.mxu0 %v1558
        %1777 = vmatprep.subr.bf16.mxu0 %v1555
        %1778 = vmatpush1.bf16.msra.mxu0 %v1554
        %1779 = vmatprep.subr.bf16.mxu0 %v1551
        %1780 = vmatpush1.bf16.msra.mxu0 %v1550
        %1781 = vmatprep.subr.bf16.mxu0 %v1547
        %1782 = vmatpush1.bf16.msra.mxu0 %v1546
        %1783 = vmatprep.subr.bf16.mxu0 %v1543
        %1784 = vmatpush1.bf16.msra.mxu0 %v1542
        %1785 = vmatprep.subr.bf16.mxu0 %v1539
        %1786 = vmatpush1.bf16.msra.mxu0 %v1538
        %1787 = vmatprep.subr.bf16.mxu0 %v1599
        %1788 = vmatpush2.bf16.msra.mxu0 %v1598
        %1789 = vmatprep.subr.bf16.mxu0 %v1595
        %1790 = vmatpush2.bf16.msra.mxu0 %v1594
        %1791 = vmatprep.subr.bf16.mxu0 %v1591
        %1792 = vmatpush2.bf16.msra.mxu0 %v1590
        %1793 = vmatprep.subr.bf16.mxu0 %v1587
        %1794 = vmatpush2.bf16.msra.mxu0 %v1586
        %1795 = vmatprep.subr.bf16.mxu0 %v1583
        %1796 = vmatpush2.bf16.msra.mxu0 %v1582
        %1797 = vmatprep.subr.bf16.mxu0 %v1579
        %1798 = vmatpush2.bf16.msra.mxu0 %v1578
        %1799 = vmatprep.subr.bf16.mxu0 %v1575
        %1800 = vmatpush2.bf16.msra.mxu0 %v1574
        %1801 = vmatprep.subr.bf16.mxu0 %v1571
        %1802 = vmatpush2.bf16.msra.mxu0 %v1570
        %1803 = vmatprep.mubr.bf16.mxu0 %v1085
        %1804 = vmatmul.mubr.bf16.gmra.mxu0 %v1084
        %v1805 = vpop.f32.mrf.mxu0
        %v1806 = vadd.f32 %v1765, %v1805
        %v1807 = vpop.f32.mrf.mxu0
        %v1808 = vadd.f32 %v1767, %v1807
        %v1809 = vpop.f32.mrf.mxu0
        %v1810 = vpop.f32.mrf.mxu0
        %1811 = vdwg.mxu0
        %1812 = vmatprep.subr.bf16.mxu0 %v1505
        %1813 = vmatpush1.bf16.msra.mxu0 %v1504
        %1814 = vmatprep.subr.bf16.mxu0 %v1501
        %1815 = vmatpush1.bf16.msra.mxu0 %v1500
        %1816 = vmatprep.subr.bf16.mxu0 %v1497
        %1817 = vmatpush1.bf16.msra.mxu0 %v1496
        %1818 = vmatprep.subr.bf16.mxu0 %v1493
        %1819 = vmatpush1.bf16.msra.mxu0 %v1492
        %1820 = vmatprep.subr.bf16.mxu0 %v1489
        %1821 = vmatpush1.bf16.msra.mxu0 %v1488
        %1822 = vmatprep.subr.bf16.mxu0 %v1485
        %1823 = vmatpush1.bf16.msra.mxu0 %v1484
        %1824 = vmatprep.subr.bf16.mxu0 %v1481
        %1825 = vmatpush1.bf16.msra.mxu0 %v1480
        %1826 = vmatprep.subr.bf16.mxu0 %v1477
        %1827 = vmatpush1.bf16.msra.mxu0 %v1476
        %1828 = vmatprep.subr.bf16.mxu0 %v1537
        %1829 = vmatpush2.bf16.msra.mxu0 %v1536
        %1830 = vmatprep.subr.bf16.mxu0 %v1533
        %1831 = vmatpush2.bf16.msra.mxu0 %v1532
        %1832 = vmatprep.subr.bf16.mxu0 %v1529
        %1833 = vmatpush2.bf16.msra.mxu0 %v1528
        %1834 = vmatprep.subr.bf16.mxu0 %v1525
        %1835 = vmatpush2.bf16.msra.mxu0 %v1524
        %1836 = vmatprep.subr.bf16.mxu0 %v1521
        %1837 = vmatpush2.bf16.msra.mxu0 %v1520
        %1838 = vmatprep.subr.bf16.mxu0 %v1517
        %1839 = vmatpush2.bf16.msra.mxu0 %v1516
        %1840 = vmatprep.subr.bf16.mxu0 %v1513
        %1841 = vmatpush2.bf16.msra.mxu0 %v1512
        %1842 = vmatprep.subr.bf16.mxu0 %v1509
        %1843 = vmatpush2.bf16.msra.mxu0 %v1508
        %1844 = vmatprep.mubr.bf16.mxu0 %v1083
        %1845 = vmatmul.mubr.bf16.gmra.mxu0 %v1076
        %v1846 = vpop.f32.mrf.mxu0
        %v1847 = vadd.f32 0.0, %v1846
        %v1848 = vpop.f32.mrf.mxu0
        %v1849 = vadd.f32 0.0, %v1848
        %v1850 = vpop.f32.mrf.mxu0
        %v1851 = vpop.f32.mrf.mxu0
        %1852 = vdwg.mxu0
        %1853 = vmatprep.subr.bf16.mxu0 %v1569
        %1854 = vmatpush1.bf16.msra.mxu0 %v1568
        %1855 = vmatprep.subr.bf16.mxu0 %v1565
        %1856 = vmatpush1.bf16.msra.mxu0 %v1564
        %1857 = vmatprep.subr.bf16.mxu0 %v1561
        %1858 = vmatpush1.bf16.msra.mxu0 %v1560
        %1859 = vmatprep.subr.bf16.mxu0 %v1557
        %1860 = vmatpush1.bf16.msra.mxu0 %v1556
        %1861 = vmatprep.subr.bf16.mxu0 %v1553
        %1862 = vmatpush1.bf16.msra.mxu0 %v1552
        %1863 = vmatprep.subr.bf16.mxu0 %v1549
        %1864 = vmatpush1.bf16.msra.mxu0 %v1548
        %1865 = vmatprep.subr.bf16.mxu0 %v1545
        %1866 = vmatpush1.bf16.msra.mxu0 %v1544
        %1867 = vmatprep.subr.bf16.mxu0 %v1541
        %1868 = vmatpush1.bf16.msra.mxu0 %v1540
        %1869 = vmatprep.subr.bf16.mxu0 %v1601
        %1870 = vmatpush2.bf16.msra.mxu0 %v1600
        %1871 = vmatprep.subr.bf16.mxu0 %v1597
        %1872 = vmatpush2.bf16.msra.mxu0 %v1596
        %1873 = vmatprep.subr.bf16.mxu0 %v1593
        %1874 = vmatpush2.bf16.msra.mxu0 %v1592
        %1875 = vmatprep.subr.bf16.mxu0 %v1589
        %1876 = vmatpush2.bf16.msra.mxu0 %v1588
        %1877 = vmatprep.subr.bf16.mxu0 %v1585
        %1878 = vmatpush2.bf16.msra.mxu0 %v1584
        %1879 = vmatprep.subr.bf16.mxu0 %v1581
        %1880 = vmatpush2.bf16.msra.mxu0 %v1580
        %1881 = vmatprep.subr.bf16.mxu0 %v1577
        %1882 = vmatpush2.bf16.msra.mxu0 %v1576
        %1883 = vmatprep.subr.bf16.mxu0 %v1573
        %1884 = vmatpush2.bf16.msra.mxu0 %v1572
        %1885 = vmatprep.mubr.bf16.mxu0 %v1085
        %1886 = vmatmul.mubr.bf16.gmra.mxu0 %v1084
        %v1887 = vpop.f32.mrf.mxu0
        %v1888 = vadd.f32 %v1847, %v1887
        %v1889 = vpop.f32.mrf.mxu0
        %v1890 = vadd.f32 %v1849, %v1889
        %v1891 = vpop.f32.mrf.mxu0
        %v1892 = vpop.f32.mrf.mxu0
        %1893 = vdwg.mxu0
        %v1896 = vunpack.c.l.s4 1966171168
        %v1897 = vunpack.c.0.s8 %v1896
        %v1898 = vlaneseq
        %v1899 = vshrl.u32 %v1898, 7
        %v1900 = vsub.s32 %v1897, %v1899
        %v1901 = vrot.slane %v803, %v1900
        %v1902 = vcombine.high %v1901, %v1901
        %v1904 = vunpack.c.l.s4 1966171168
        %v1905 = vunpack.c.0.s8 %v1904
        %v1906 = vlaneseq
        %v1907 = vshrl.u32 %v1906, 7
        %v1908 = vsub.s32 %v1905, %v1907
        %v1909 = vrot.slane %v1901, %v1908
        %v1911 = vunpack.c.l.s4 1966171168
        %v1912 = vunpack.c.0.s8 %v1911
        %v1913 = vlaneseq
        %v1914 = vshrl.u32 %v1913, 7
        %v1915 = vsub.s32 %v1912, %v1914
        %v1916 = vrot.slane %v1902, %v1915
        %v1917 = vcombine.high %v1909, %v1909
        %v1918 = vcombine.high %v1916, %v1916
        %v2051 = vunpack.c.l.b16 %v804
        %v2052 = vunpack.c.h.b16 %v804
        %v2053 = vunpack.c.l.b16 %v805
        %v2054 = vunpack.c.h.b16 %v805
        %v2055 = vunpack.c.l.b16 %v806
        %v2056 = vunpack.c.h.b16 %v806
        %v2057 = vunpack.c.l.b16 %v807
        %v2058 = vunpack.c.h.b16 %v807
        %v2059 = vunpack.c.l.b16 %v808
        %v2060 = vunpack.c.h.b16 %v808
        %v2061 = vunpack.c.l.b16 %v809
        %v2062 = vunpack.c.h.b16 %v809
        %v2063 = vunpack.c.l.b16 %v810
        %v2064 = vunpack.c.h.b16 %v810
        %v2065 = vunpack.c.l.b16 %v811
        %v2066 = vunpack.c.h.b16 %v811
        %v2067 = vunpack.c.l.b16 %v812
        %v2068 = vunpack.c.h.b16 %v812
        %v2069 = vunpack.c.l.b16 %v813
        %v2070 = vunpack.c.h.b16 %v813
        %v2071 = vunpack.c.l.b16 %v814
        %v2072 = vunpack.c.h.b16 %v814
        %v2073 = vunpack.c.l.b16 %v815
        %v2074 = vunpack.c.h.b16 %v815
        %v2075 = vunpack.c.l.b16 %v816
        %v2076 = vunpack.c.h.b16 %v816
        %v2077 = vunpack.c.l.b16 %v817
        %v2078 = vunpack.c.h.b16 %v817
        %v2079 = vunpack.c.l.b16 %v818
        %v2080 = vunpack.c.h.b16 %v818
        %v2081 = vunpack.c.l.b16 %v819
        %v2082 = vunpack.c.h.b16 %v819
        %v2083 = vunpack.c.l.b16 %v820
        %v2084 = vunpack.c.h.b16 %v820
        %v2085 = vunpack.c.l.b16 %v821
        %v2086 = vunpack.c.h.b16 %v821
        %v2087 = vunpack.c.l.b16 %v822
        %v2088 = vunpack.c.h.b16 %v822
        %v2089 = vunpack.c.l.b16 %v823
        %v2090 = vunpack.c.h.b16 %v823
        %v2091 = vunpack.c.l.b16 %v824
        %v2092 = vunpack.c.h.b16 %v824
        %v2093 = vunpack.c.l.b16 %v825
        %v2094 = vunpack.c.h.b16 %v825
        %v2095 = vunpack.c.l.b16 %v826
        %v2096 = vunpack.c.h.b16 %v826
        %v2097 = vunpack.c.l.b16 %v827
        %v2098 = vunpack.c.h.b16 %v827
        %v2099 = vunpack.c.l.b16 %v828
        %v2100 = vunpack.c.h.b16 %v828
        %v2101 = vunpack.c.l.b16 %v829
        %v2102 = vunpack.c.h.b16 %v829
        %v2103 = vunpack.c.l.b16 %v830
        %v2104 = vunpack.c.h.b16 %v830
        %v2105 = vunpack.c.l.b16 %v831
        %v2106 = vunpack.c.h.b16 %v831
        %v2107 = vunpack.c.l.b16 %v832
        %v2108 = vunpack.c.h.b16 %v832
        %v2109 = vunpack.c.l.b16 %v833
        %v2110 = vunpack.c.h.b16 %v833
        %v2111 = vunpack.c.l.b16 %v834
        %v2112 = vunpack.c.h.b16 %v834
        %v2113 = vunpack.c.l.b16 %v835
        %v2114 = vunpack.c.h.b16 %v835
        %v2115 = vunpack.c.l.b16 %v836
        %v2116 = vunpack.c.h.b16 %v836
        %v2117 = vunpack.c.l.b16 %v837
        %v2118 = vunpack.c.h.b16 %v837
        %v2119 = vunpack.c.l.b16 %v838
        %v2120 = vunpack.c.h.b16 %v838
        %v2121 = vunpack.c.l.b16 %v839
        %v2122 = vunpack.c.h.b16 %v839
        %v2123 = vunpack.c.l.b16 %v840
        %v2124 = vunpack.c.h.b16 %v840
        %v2125 = vunpack.c.l.b16 %v841
        %v2126 = vunpack.c.h.b16 %v841
        %v2127 = vunpack.c.l.b16 %v842
        %v2128 = vunpack.c.h.b16 %v842
        %v2129 = vunpack.c.l.b16 %v843
        %v2130 = vunpack.c.h.b16 %v843
        %v2131 = vunpack.c.l.b16 %v844
        %v2132 = vunpack.c.h.b16 %v844
        %v2133 = vunpack.c.l.b16 %v845
        %v2134 = vunpack.c.h.b16 %v845
        %v2135 = vunpack.c.l.b16 %v846
        %v2136 = vunpack.c.h.b16 %v846
        %v2137 = vunpack.c.l.b16 %v847
        %v2138 = vunpack.c.h.b16 %v847
        %v2139 = vunpack.c.l.b16 %v848
        %v2140 = vunpack.c.h.b16 %v848
        %v2141 = vunpack.c.l.b16 %v849
        %v2142 = vunpack.c.h.b16 %v849
        %v2143 = vunpack.c.l.b16 %v850
        %v2144 = vunpack.c.h.b16 %v850
        %v2145 = vunpack.c.l.b16 %v851
        %v2146 = vunpack.c.h.b16 %v851
        %v2147 = vunpack.c.l.b16 %v852
        %v2148 = vunpack.c.h.b16 %v852
        %v2149 = vunpack.c.l.b16 %v853
        %v2150 = vunpack.c.h.b16 %v853
        %v2151 = vunpack.c.l.b16 %v854
        %v2152 = vunpack.c.h.b16 %v854
        %v2153 = vunpack.c.l.b16 %v855
        %v2154 = vunpack.c.h.b16 %v855
        %v2155 = vunpack.c.l.b16 %v856
        %v2156 = vunpack.c.h.b16 %v856
        %v2157 = vunpack.c.l.b16 %v857
        %v2158 = vunpack.c.h.b16 %v857
        %v2159 = vunpack.c.l.b16 %v858
        %v2160 = vunpack.c.h.b16 %v858
        %v2161 = vunpack.c.l.b16 %v859
        %v2162 = vunpack.c.h.b16 %v859
        %v2163 = vunpack.c.l.b16 %v860
        %v2164 = vunpack.c.h.b16 %v860
        %v2165 = vunpack.c.l.b16 %v861
        %v2166 = vunpack.c.h.b16 %v861
        %v2167 = vunpack.c.l.b16 %v862
        %v2168 = vunpack.c.h.b16 %v862
        %v2169 = vunpack.c.l.b16 %v863
        %v2170 = vunpack.c.h.b16 %v863
        %v2171 = vunpack.c.l.b16 %v864
        %v2172 = vunpack.c.h.b16 %v864
        %v2173 = vunpack.c.l.b16 %v865
        %v2174 = vunpack.c.h.b16 %v865
        %v2175 = vunpack.c.l.b16 %v866
        %v2176 = vunpack.c.h.b16 %v866
        %v2177 = vunpack.c.l.b16 %v867
        %v2178 = vunpack.c.h.b16 %v867
        %v2179 = vunpack.c.l.b16 %v868
        %v2180 = vunpack.c.h.b16 %v868
        %v2181 = vunpack.c.l.b16 %v869
        %v2182 = vunpack.c.h.b16 %v869
        %v2183 = vunpack.c.l.b16 %v870
        %v2184 = vunpack.c.h.b16 %v870
        %v2185 = vunpack.c.l.b16 %v871
        %v2186 = vunpack.c.h.b16 %v871
        %v2187 = vunpack.c.l.b16 %v872
        %v2188 = vunpack.c.h.b16 %v872
        %v2189 = vunpack.c.l.b16 %v873
        %v2190 = vunpack.c.h.b16 %v873
        %v2191 = vunpack.c.l.b16 %v874
        %v2192 = vunpack.c.h.b16 %v874
        %v2193 = vunpack.c.l.b16 %v875
        %v2194 = vunpack.c.h.b16 %v875
        %v2195 = vunpack.c.l.b16 %v876
        %v2196 = vunpack.c.h.b16 %v876
        %v2197 = vunpack.c.l.b16 %v877
        %v2198 = vunpack.c.h.b16 %v877
        %v2199 = vunpack.c.l.b16 %v878
        %v2200 = vunpack.c.h.b16 %v878
        %v2201 = vunpack.c.l.b16 %v879
        %v2202 = vunpack.c.h.b16 %v879
        %v2203 = vunpack.c.l.b16 %v880
        %v2204 = vunpack.c.h.b16 %v880
        %v2205 = vunpack.c.l.b16 %v881
        %v2206 = vunpack.c.h.b16 %v881
        %v2207 = vunpack.c.l.b16 %v882
        %v2208 = vunpack.c.h.b16 %v882
        %v2209 = vunpack.c.l.b16 %v883
        %v2210 = vunpack.c.h.b16 %v883
        %v2211 = vunpack.c.l.b16 %v884
        %v2212 = vunpack.c.h.b16 %v884
        %v2213 = vunpack.c.l.b16 %v885
        %v2214 = vunpack.c.h.b16 %v885
        %v2215 = vunpack.c.l.b16 %v886
        %v2216 = vunpack.c.h.b16 %v886
        %v2217 = vunpack.c.l.b16 %v887
        %v2218 = vunpack.c.h.b16 %v887
        %v2219 = vunpack.c.l.b16 %v888
        %v2220 = vunpack.c.h.b16 %v888
        %v2221 = vunpack.c.l.b16 %v889
        %v2222 = vunpack.c.h.b16 %v889
        %v2223 = vunpack.c.l.b16 %v890
        %v2224 = vunpack.c.h.b16 %v890
        %v2225 = vunpack.c.l.b16 %v891
        %v2226 = vunpack.c.h.b16 %v891
        %v2227 = vunpack.c.l.b16 %v892
        %v2228 = vunpack.c.h.b16 %v892
        %v2229 = vunpack.c.l.b16 %v893
        %v2230 = vunpack.c.h.b16 %v893
        %v2231 = vunpack.c.l.b16 %v894
        %v2232 = vunpack.c.h.b16 %v894
        %v2233 = vunpack.c.l.b16 %v895
        %v2234 = vunpack.c.h.b16 %v895
        %v2235 = vunpack.c.l.b16 %v896
        %v2236 = vunpack.c.h.b16 %v896
        %v2237 = vunpack.c.l.b16 %v897
        %v2238 = vunpack.c.h.b16 %v897
        %v2239 = vunpack.c.l.b16 %v898
        %v2240 = vunpack.c.h.b16 %v898
        %v2241 = vunpack.c.l.b16 %v899
        %v2242 = vunpack.c.h.b16 %v899
        %v2243 = vunpack.c.l.b16 %v900
        %v2244 = vunpack.c.h.b16 %v900
        %v2245 = vunpack.c.l.b16 %v901
        %v2246 = vunpack.c.h.b16 %v901
        %v2247 = vunpack.c.l.b16 %v902
        %v2248 = vunpack.c.h.b16 %v902
        %v2249 = vunpack.c.l.b16 %v903
        %v2250 = vunpack.c.h.b16 %v903
        %v2251 = vunpack.c.l.b16 %v904
        %v2252 = vunpack.c.h.b16 %v904
        %v2253 = vunpack.c.l.b16 %v905
        %v2254 = vunpack.c.h.b16 %v905
        %v2255 = vunpack.c.l.b16 %v906
        %v2256 = vunpack.c.h.b16 %v906
        %v2257 = vunpack.c.l.b16 %v907
        %v2258 = vunpack.c.h.b16 %v907
        %v2259 = vunpack.c.l.b16 %v908
        %v2260 = vunpack.c.h.b16 %v908
        %v2261 = vunpack.c.l.b16 %v909
        %v2262 = vunpack.c.h.b16 %v909
        %v2263 = vunpack.c.l.b16 %v910
        %v2264 = vunpack.c.h.b16 %v910
        %v2265 = vunpack.c.l.b16 %v911
        %v2266 = vunpack.c.h.b16 %v911
        %v2267 = vunpack.c.l.b16 %v912
        %v2268 = vunpack.c.h.b16 %v912
        %v2269 = vunpack.c.l.b16 %v913
        %v2270 = vunpack.c.h.b16 %v913
        %v2271 = vunpack.c.l.b16 %v914
        %v2272 = vunpack.c.h.b16 %v914
        %v2273 = vunpack.c.l.b16 %v915
        %v2274 = vunpack.c.h.b16 %v915
        %v2275 = vunpack.c.l.b16 %v916
        %v2276 = vunpack.c.h.b16 %v916
        %v2277 = vunpack.c.l.b16 %v917
        %v2278 = vunpack.c.h.b16 %v917
        %v2279 = vunpack.c.l.b16 %v918
        %v2280 = vunpack.c.h.b16 %v918
        %v2281 = vunpack.c.l.b16 %v919
        %v2282 = vunpack.c.h.b16 %v919
        %v2283 = vunpack.c.l.b16 %v920
        %v2284 = vunpack.c.h.b16 %v920
        %v2285 = vunpack.c.l.b16 %v921
        %v2286 = vunpack.c.h.b16 %v921
        %v2287 = vunpack.c.l.b16 %v922
        %v2288 = vunpack.c.h.b16 %v922
        %v2289 = vunpack.c.l.b16 %v923
        %v2290 = vunpack.c.h.b16 %v923
        %v2291 = vunpack.c.l.b16 %v924
        %v2292 = vunpack.c.h.b16 %v924
        %v2293 = vunpack.c.l.b16 %v925
        %v2294 = vunpack.c.h.b16 %v925
        %v2295 = vunpack.c.l.b16 %v926
        %v2296 = vunpack.c.h.b16 %v926
        %v2297 = vunpack.c.l.b16 %v927
        %v2298 = vunpack.c.h.b16 %v927
        %v2299 = vunpack.c.l.b16 %v928
        %v2300 = vunpack.c.h.b16 %v928
        %v2301 = vunpack.c.l.b16 %v929
        %v2302 = vunpack.c.h.b16 %v929
        %v2303 = vunpack.c.l.b16 %v930
        %v2304 = vunpack.c.h.b16 %v930
        %v2305 = vunpack.c.l.b16 %v931
        %v2306 = vunpack.c.h.b16 %v931
        %v2307 = vpack.c.b16 %v2055, %v2051
        %v2308 = vpack.c.b16 %v2056, %v2052
        %v2309 = vpack.c.b16 %v2057, %v2053
        %v2310 = vpack.c.b16 %v2058, %v2054
        %v2311 = vpack.c.b16 %v2063, %v2059
        %v2312 = vpack.c.b16 %v2064, %v2060
        %v2313 = vpack.c.b16 %v2065, %v2061
        %v2314 = vpack.c.b16 %v2066, %v2062
        %v2315 = vpack.c.b16 %v2071, %v2067
        %v2316 = vpack.c.b16 %v2072, %v2068
        %v2317 = vpack.c.b16 %v2073, %v2069
        %v2318 = vpack.c.b16 %v2074, %v2070
        %v2319 = vpack.c.b16 %v2079, %v2075
        %v2320 = vpack.c.b16 %v2080, %v2076
        %v2321 = vpack.c.b16 %v2081, %v2077
        %v2322 = vpack.c.b16 %v2082, %v2078
        %v2323 = vpack.c.b16 %v2087, %v2083
        %v2324 = vpack.c.b16 %v2088, %v2084
        %v2325 = vpack.c.b16 %v2089, %v2085
        %v2326 = vpack.c.b16 %v2090, %v2086
        %v2327 = vpack.c.b16 %v2095, %v2091
        %v2328 = vpack.c.b16 %v2096, %v2092
        %v2329 = vpack.c.b16 %v2097, %v2093
        %v2330 = vpack.c.b16 %v2098, %v2094
        %v2331 = vpack.c.b16 %v2103, %v2099
        %v2332 = vpack.c.b16 %v2104, %v2100
        %v2333 = vpack.c.b16 %v2105, %v2101
        %v2334 = vpack.c.b16 %v2106, %v2102
        %v2335 = vpack.c.b16 %v2111, %v2107
        %v2336 = vpack.c.b16 %v2112, %v2108
        %v2337 = vpack.c.b16 %v2113, %v2109
        %v2338 = vpack.c.b16 %v2114, %v2110
        %v2339 = vpack.c.b16 %v2119, %v2115
        %v2340 = vpack.c.b16 %v2120, %v2116
        %v2341 = vpack.c.b16 %v2121, %v2117
        %v2342 = vpack.c.b16 %v2122, %v2118
        %v2343 = vpack.c.b16 %v2127, %v2123
        %v2344 = vpack.c.b16 %v2128, %v2124
        %v2345 = vpack.c.b16 %v2129, %v2125
        %v2346 = vpack.c.b16 %v2130, %v2126
        %v2347 = vpack.c.b16 %v2135, %v2131
        %v2348 = vpack.c.b16 %v2136, %v2132
        %v2349 = vpack.c.b16 %v2137, %v2133
        %v2350 = vpack.c.b16 %v2138, %v2134
        %v2351 = vpack.c.b16 %v2143, %v2139
        %v2352 = vpack.c.b16 %v2144, %v2140
        %v2353 = vpack.c.b16 %v2145, %v2141
        %v2354 = vpack.c.b16 %v2146, %v2142
        %v2355 = vpack.c.b16 %v2151, %v2147
        %v2356 = vpack.c.b16 %v2152, %v2148
        %v2357 = vpack.c.b16 %v2153, %v2149
        %v2358 = vpack.c.b16 %v2154, %v2150
        %v2359 = vpack.c.b16 %v2159, %v2155
        %v2360 = vpack.c.b16 %v2160, %v2156
        %v2361 = vpack.c.b16 %v2161, %v2157
        %v2362 = vpack.c.b16 %v2162, %v2158
        %v2363 = vpack.c.b16 %v2167, %v2163
        %v2364 = vpack.c.b16 %v2168, %v2164
        %v2365 = vpack.c.b16 %v2169, %v2165
        %v2366 = vpack.c.b16 %v2170, %v2166
        %v2367 = vpack.c.b16 %v2175, %v2171
        %v2368 = vpack.c.b16 %v2176, %v2172
        %v2369 = vpack.c.b16 %v2177, %v2173
        %v2370 = vpack.c.b16 %v2178, %v2174
        %v2371 = vpack.c.b16 %v2183, %v2179
        %v2372 = vpack.c.b16 %v2184, %v2180
        %v2373 = vpack.c.b16 %v2185, %v2181
        %v2374 = vpack.c.b16 %v2186, %v2182
        %v2375 = vpack.c.b16 %v2191, %v2187
        %v2376 = vpack.c.b16 %v2192, %v2188
        %v2377 = vpack.c.b16 %v2193, %v2189
        %v2378 = vpack.c.b16 %v2194, %v2190
        %v2379 = vpack.c.b16 %v2199, %v2195
        %v2380 = vpack.c.b16 %v2200, %v2196
        %v2381 = vpack.c.b16 %v2201, %v2197
        %v2382 = vpack.c.b16 %v2202, %v2198
        %v2383 = vpack.c.b16 %v2207, %v2203
        %v2384 = vpack.c.b16 %v2208, %v2204
        %v2385 = vpack.c.b16 %v2209, %v2205
        %v2386 = vpack.c.b16 %v2210, %v2206
        %v2387 = vpack.c.b16 %v2215, %v2211
        %v2388 = vpack.c.b16 %v2216, %v2212
        %v2389 = vpack.c.b16 %v2217, %v2213
        %v2390 = vpack.c.b16 %v2218, %v2214
        %v2391 = vpack.c.b16 %v2223, %v2219
        %v2392 = vpack.c.b16 %v2224, %v2220
        %v2393 = vpack.c.b16 %v2225, %v2221
        %v2394 = vpack.c.b16 %v2226, %v2222
        %v2395 = vpack.c.b16 %v2231, %v2227
        %v2396 = vpack.c.b16 %v2232, %v2228
        %v2397 = vpack.c.b16 %v2233, %v2229
        %v2398 = vpack.c.b16 %v2234, %v2230
        %v2399 = vpack.c.b16 %v2239, %v2235
        %v2400 = vpack.c.b16 %v2240, %v2236
        %v2401 = vpack.c.b16 %v2241, %v2237
        %v2402 = vpack.c.b16 %v2242, %v2238
        %v2403 = vpack.c.b16 %v2247, %v2243
        %v2404 = vpack.c.b16 %v2248, %v2244
        %v2405 = vpack.c.b16 %v2249, %v2245
        %v2406 = vpack.c.b16 %v2250, %v2246
        %v2407 = vpack.c.b16 %v2255, %v2251
        %v2408 = vpack.c.b16 %v2256, %v2252
        %v2409 = vpack.c.b16 %v2257, %v2253
        %v2410 = vpack.c.b16 %v2258, %v2254
        %v2411 = vpack.c.b16 %v2263, %v2259
        %v2412 = vpack.c.b16 %v2264, %v2260
        %v2413 = vpack.c.b16 %v2265, %v2261
        %v2414 = vpack.c.b16 %v2266, %v2262
        %v2415 = vpack.c.b16 %v2271, %v2267
        %v2416 = vpack.c.b16 %v2272, %v2268
        %v2417 = vpack.c.b16 %v2273, %v2269
        %v2418 = vpack.c.b16 %v2274, %v2270
        %v2419 = vpack.c.b16 %v2279, %v2275
        %v2420 = vpack.c.b16 %v2280, %v2276
        %v2421 = vpack.c.b16 %v2281, %v2277
        %v2422 = vpack.c.b16 %v2282, %v2278
        %v2423 = vpack.c.b16 %v2287, %v2283
        %v2424 = vpack.c.b16 %v2288, %v2284
        %v2425 = vpack.c.b16 %v2289, %v2285
        %v2426 = vpack.c.b16 %v2290, %v2286
        %v2427 = vpack.c.b16 %v2295, %v2291
        %v2428 = vpack.c.b16 %v2296, %v2292
        %v2429 = vpack.c.b16 %v2297, %v2293
        %v2430 = vpack.c.b16 %v2298, %v2294
        %v2431 = vpack.c.b16 %v2303, %v2299
        %v2432 = vpack.c.b16 %v2304, %v2300
        %v2433 = vpack.c.b16 %v2305, %v2301
        %v2434 = vpack.c.b16 %v2306, %v2302
        %2563 = vmatprep.subr.bf16.mxu0 %v2336
        %2564 = vmatpush1.bf16.msra.mxu0 %v2335
        %2565 = vmatprep.subr.bf16.mxu0 %v2332
        %2566 = vmatpush1.bf16.msra.mxu0 %v2331
        %2567 = vmatprep.subr.bf16.mxu0 %v2328
        %2568 = vmatpush1.bf16.msra.mxu0 %v2327
        %2569 = vmatprep.subr.bf16.mxu0 %v2324
        %2570 = vmatpush1.bf16.msra.mxu0 %v2323
        %2571 = vmatprep.subr.bf16.mxu0 %v2320
        %2572 = vmatpush1.bf16.msra.mxu0 %v2319
        %2573 = vmatprep.subr.bf16.mxu0 %v2316
        %2574 = vmatpush1.bf16.msra.mxu0 %v2315
        %2575 = vmatprep.subr.bf16.mxu0 %v2312
        %2576 = vmatpush1.bf16.msra.mxu0 %v2311
        %2577 = vmatprep.subr.bf16.mxu0 %v2308
        %2578 = vmatpush1.bf16.msra.mxu0 %v2307
        %2579 = vmatprep.subr.bf16.mxu0 %v2368
        %2580 = vmatpush2.bf16.msra.mxu0 %v2367
        %2581 = vmatprep.subr.bf16.mxu0 %v2364
        %2582 = vmatpush2.bf16.msra.mxu0 %v2363
        %2583 = vmatprep.subr.bf16.mxu0 %v2360
        %2584 = vmatpush2.bf16.msra.mxu0 %v2359
        %2585 = vmatprep.subr.bf16.mxu0 %v2356
        %2586 = vmatpush2.bf16.msra.mxu0 %v2355
        %2587 = vmatprep.subr.bf16.mxu0 %v2352
        %2588 = vmatpush2.bf16.msra.mxu0 %v2351
        %2589 = vmatprep.subr.bf16.mxu0 %v2348
        %2590 = vmatpush2.bf16.msra.mxu0 %v2347
        %2591 = vmatprep.subr.bf16.mxu0 %v2344
        %2592 = vmatpush2.bf16.msra.mxu0 %v2343
        %2593 = vmatprep.subr.bf16.mxu0 %v2340
        %2594 = vmatpush2.bf16.msra.mxu0 %v2339
        %2595 = vmatprep.mubr.bf16.mxu0 %v1916
        %2596 = vmatmul.mubr.bf16.gmra.mxu0 %v1909
        %v2597 = vpop.f32.mrf.mxu0
        %v2598 = vadd.f32 %v1806, %v2597
        %v2599 = vpop.f32.mrf.mxu0
        %v2600 = vadd.f32 %v1808, %v2599
        %v2601 = vpop.f32.mrf.mxu0
        %v2602 = vpop.f32.mrf.mxu0
        %2603 = vdwg.mxu0
        %2604 = vmatprep.subr.bf16.mxu0 %v2400
        %2605 = vmatpush1.bf16.msra.mxu0 %v2399
        %2606 = vmatprep.subr.bf16.mxu0 %v2396
        %2607 = vmatpush1.bf16.msra.mxu0 %v2395
        %2608 = vmatprep.subr.bf16.mxu0 %v2392
        %2609 = vmatpush1.bf16.msra.mxu0 %v2391
        %2610 = vmatprep.subr.bf16.mxu0 %v2388
        %2611 = vmatpush1.bf16.msra.mxu0 %v2387
        %2612 = vmatprep.subr.bf16.mxu0 %v2384
        %2613 = vmatpush1.bf16.msra.mxu0 %v2383
        %2614 = vmatprep.subr.bf16.mxu0 %v2380
        %2615 = vmatpush1.bf16.msra.mxu0 %v2379
        %2616 = vmatprep.subr.bf16.mxu0 %v2376
        %2617 = vmatpush1.bf16.msra.mxu0 %v2375
        %2618 = vmatprep.subr.bf16.mxu0 %v2372
        %2619 = vmatpush1.bf16.msra.mxu0 %v2371
        %2620 = vmatprep.subr.bf16.mxu0 %v2432
        %2621 = vmatpush2.bf16.msra.mxu0 %v2431
        %2622 = vmatprep.subr.bf16.mxu0 %v2428
        %2623 = vmatpush2.bf16.msra.mxu0 %v2427
        %2624 = vmatprep.subr.bf16.mxu0 %v2424
        %2625 = vmatpush2.bf16.msra.mxu0 %v2423
        %2626 = vmatprep.subr.bf16.mxu0 %v2420
        %2627 = vmatpush2.bf16.msra.mxu0 %v2419
        %2628 = vmatprep.subr.bf16.mxu0 %v2416
        %2629 = vmatpush2.bf16.msra.mxu0 %v2415
        %2630 = vmatprep.subr.bf16.mxu0 %v2412
        %2631 = vmatpush2.bf16.msra.mxu0 %v2411
        %2632 = vmatprep.subr.bf16.mxu0 %v2408
        %2633 = vmatpush2.bf16.msra.mxu0 %v2407
        %2634 = vmatprep.subr.bf16.mxu0 %v2404
        %2635 = vmatpush2.bf16.msra.mxu0 %v2403
        %2636 = vmatprep.mubr.bf16.mxu0 %v1918
        %2637 = vmatmul.mubr.bf16.gmra.mxu0 %v1917
        %v2638 = vpop.f32.mrf.mxu0
        %v2639 = vadd.f32 %v2598, %v2638
        %v2640 = vpop.f32.mrf.mxu0
        %v2641 = vadd.f32 %v2600, %v2640
        %v2642 = vpop.f32.mrf.mxu0
        %v2643 = vpop.f32.mrf.mxu0
        %2644 = vdwg.mxu0
        %2645 = vmatprep.subr.bf16.mxu0 %v2338
        %2646 = vmatpush1.bf16.msra.mxu0 %v2337
        %2647 = vmatprep.subr.bf16.mxu0 %v2334
        %2648 = vmatpush1.bf16.msra.mxu0 %v2333
        %2649 = vmatprep.subr.bf16.mxu0 %v2330
        %2650 = vmatpush1.bf16.msra.mxu0 %v2329
        %2651 = vmatprep.subr.bf16.mxu0 %v2326
        %2652 = vmatpush1.bf16.msra.mxu0 %v2325
        %2653 = vmatprep.subr.bf16.mxu0 %v2322
        %2654 = vmatpush1.bf16.msra.mxu0 %v2321
        %2655 = vmatprep.subr.bf16.mxu0 %v2318
        %2656 = vmatpush1.bf16.msra.mxu0 %v2317
        %2657 = vmatprep.subr.bf16.mxu0 %v2314
        %2658 = vmatpush1.bf16.msra.mxu0 %v2313
        %2659 = vmatprep.subr.bf16.mxu0 %v2310
        %2660 = vmatpush1.bf16.msra.mxu0 %v2309
        %2661 = vmatprep.subr.bf16.mxu0 %v2370
        %2662 = vmatpush2.bf16.msra.mxu0 %v2369
        %2663 = vmatprep.subr.bf16.mxu0 %v2366
        %2664 = vmatpush2.bf16.msra.mxu0 %v2365
        %2665 = vmatprep.subr.bf16.mxu0 %v2362
        %2666 = vmatpush2.bf16.msra.mxu0 %v2361
        %2667 = vmatprep.subr.bf16.mxu0 %v2358
        %2668 = vmatpush2.bf16.msra.mxu0 %v2357
        %2669 = vmatprep.subr.bf16.mxu0 %v2354
        %2670 = vmatpush2.bf16.msra.mxu0 %v2353
        %2671 = vmatprep.subr.bf16.mxu0 %v2350
        %2672 = vmatpush2.bf16.msra.mxu0 %v2349
        %2673 = vmatprep.subr.bf16.mxu0 %v2346
        %2674 = vmatpush2.bf16.msra.mxu0 %v2345
        %2675 = vmatprep.subr.bf16.mxu0 %v2342
        %2676 = vmatpush2.bf16.msra.mxu0 %v2341
        %2677 = vmatprep.mubr.bf16.mxu0 %v1916
        %2678 = vmatmul.mubr.bf16.gmra.mxu0 %v1909
        %v2679 = vpop.f32.mrf.mxu0
        %v2680 = vadd.f32 %v1888, %v2679
        %v2681 = vpop.f32.mrf.mxu0
        %v2682 = vadd.f32 %v1890, %v2681
        %v2683 = vpop.f32.mrf.mxu0
        %v2684 = vpop.f32.mrf.mxu0
        %2685 = vdwg.mxu0
        %2686 = vmatprep.subr.bf16.mxu0 %v2402
        %2687 = vmatpush1.bf16.msra.mxu0 %v2401
        %2688 = vmatprep.subr.bf16.mxu0 %v2398
        %2689 = vmatpush1.bf16.msra.mxu0 %v2397
        %2690 = vmatprep.subr.bf16.mxu0 %v2394
        %2691 = vmatpush1.bf16.msra.mxu0 %v2393
        %2692 = vmatprep.subr.bf16.mxu0 %v2390
        %2693 = vmatpush1.bf16.msra.mxu0 %v2389
        %2694 = vmatprep.subr.bf16.mxu0 %v2386
        %2695 = vmatpush1.bf16.msra.mxu0 %v2385
        %2696 = vmatprep.subr.bf16.mxu0 %v2382
        %2697 = vmatpush1.bf16.msra.mxu0 %v2381
        %2698 = vmatprep.subr.bf16.mxu0 %v2378
        %2699 = vmatpush1.bf16.msra.mxu0 %v2377
        %2700 = vmatprep.subr.bf16.mxu0 %v2374
        %2701 = vmatpush1.bf16.msra.mxu0 %v2373
        %2702 = vmatprep.subr.bf16.mxu0 %v2434
        %2703 = vmatpush2.bf16.msra.mxu0 %v2433
        %2704 = vmatprep.subr.bf16.mxu0 %v2430
        %2705 = vmatpush2.bf16.msra.mxu0 %v2429
        %2706 = vmatprep.subr.bf16.mxu0 %v2426
        %2707 = vmatpush2.bf16.msra.mxu0 %v2425
        %2708 = vmatprep.subr.bf16.mxu0 %v2422
        %2709 = vmatpush2.bf16.msra.mxu0 %v2421
        %2710 = vmatprep.subr.bf16.mxu0 %v2418
        %2711 = vmatpush2.bf16.msra.mxu0 %v2417
        %2712 = vmatprep.subr.bf16.mxu0 %v2414
        %2713 = vmatpush2.bf16.msra.mxu0 %v2413
        %2714 = vmatprep.subr.bf16.mxu0 %v2410
        %2715 = vmatpush2.bf16.msra.mxu0 %v2409
        %2716 = vmatprep.subr.bf16.mxu0 %v2406
        %2717 = vmatpush2.bf16.msra.mxu0 %v2405
        %2718 = vmatprep.mubr.bf16.mxu0 %v1918
        %2719 = vmatmul.mubr.bf16.gmra.mxu0 %v1917
        %v2720 = vpop.f32.mrf.mxu0
        %v2721 = vadd.f32 %v2680, %v2720
        %v2722 = vpop.f32.mrf.mxu0
        %v2723 = vadd.f32 %v2682, %v2722
        %v2724 = vpop.f32.mrf.mxu0
        %v2725 = vpop.f32.mrf.mxu0
        %2726 = vdwg.mxu0
        %v2727 = vld [vmem:[#allocation10] sm:$0xf]
        %v2729 = vlaneseq
        %v2730 = vshrl.u32 %v2729, 7
        %v2731 = vsub.s32 0, %v2730
        %v2732 = vrot.slane %v2727, %v2731
        %v2733 = vlaneseq
        %v2734 = vshrl.u32 %v2733, 7
        %v2735 = vsub.s32 1, %v2734
        %v2736 = vrot.slane %v2727, %v2735
        %v2737 = vlaneseq
        %v2738 = vshrl.u32 %v2737, 7
        %v2739 = vsub.s32 2, %v2738
        %v2740 = vrot.slane %v2727, %v2739
        %v2741 = vlaneseq
        %v2742 = vshrl.u32 %v2741, 7
        %v2743 = vsub.s32 3, %v2742
        %v2744 = vrot.slane %v2727, %v2743
        %v2749 = vadd.f32 %v2639, %v2732
        %v2750 = vadd.f32 %v2641, %v2736
        %v2751 = vadd.f32 %v2721, %v2740
        %v2752 = vadd.f32 %v2723, %v2744
        %v2753 = vmax.f32 %v2749, 0.0
        %v2754 = vmax.f32 %v2750, 0.0
        %v2755 = vmax.f32 %v2751, 0.0
        %v2756 = vmax.f32 %v2752, 0.0
        %v2757 = vld [vmem:[#allocation6] sm:$0xff]
        %v2758 = vld [vmem:[#allocation12] sm:$0xff]
        %v2759 = vld [vmem:[#allocation12 + $0x8] sm:$0xff]
        %v2760 = vld [vmem:[#allocation12 + $0x10] sm:$0xff]
        %v2761 = vld [vmem:[#allocation12 + $0x18] sm:$0xff]
        %v2762 = vld [vmem:[#allocation12 + $0x20] sm:$0xff]
        %v2763 = vld [vmem:[#allocation12 + $0x28] sm:$0xff]
        %v2764 = vld [vmem:[#allocation12 + $0x30] sm:$0xff]
        %v2765 = vld [vmem:[#allocation12 + $0x38] sm:$0xff]
        %v2766 = vld [vmem:[#allocation12 + $0x40] sm:$0xff]
        %v2767 = vld [vmem:[#allocation12 + $0x48] sm:$0xff]
        %v2768 = vld [vmem:[#allocation12 + $0x50] sm:$0xff]
        %v2769 = vld [vmem:[#allocation12 + $0x58] sm:$0xff]
        %v2770 = vld [vmem:[#allocation12 + $0x60] sm:$0xff]
        %v2771 = vld [vmem:[#allocation12 + $0x68] sm:$0xff]
        %v2772 = vld [vmem:[#allocation12 + $0x70] sm:$0xff]
        %v2773 = vld [vmem:[#allocation12 + $0x78] sm:$0xff]
        %v2774 = vld [vmem:[#allocation12 + $0x80] sm:$0xff]
        %v2775 = vld [vmem:[#allocation12 + $0x88] sm:$0xff]
        %v2776 = vld [vmem:[#allocation12 + $0x90] sm:$0xff]
        %v2777 = vld [vmem:[#allocation12 + $0x98] sm:$0xff]
        %v2778 = vld [vmem:[#allocation12 + $0xa0] sm:$0xff]
        %v2779 = vld [vmem:[#allocation12 + $0xa8] sm:$0xff]
        %v2780 = vld [vmem:[#allocation12 + $0xb0] sm:$0xff]
        %v2781 = vld [vmem:[#allocation12 + $0xb8] sm:$0xff]
        %v2782 = vld [vmem:[#allocation12 + $0xc0] sm:$0xff]
        %v2783 = vld [vmem:[#allocation12 + $0xc8] sm:$0xff]
        %v2784 = vld [vmem:[#allocation12 + $0xd0] sm:$0xff]
        %v2785 = vld [vmem:[#allocation12 + $0xd8] sm:$0xff]
        %v2786 = vld [vmem:[#allocation12 + $0xe0] sm:$0xff]
        %v2787 = vld [vmem:[#allocation12 + $0xe8] sm:$0xff]
        %v2788 = vld [vmem:[#allocation12 + $0xf0] sm:$0xff]
        %v2789 = vld [vmem:[#allocation12 + $0xf8] sm:$0xff]
        %v2790 = vld [vmem:[#allocation12 + $0x100] sm:$0xff]
        %v2791 = vld [vmem:[#allocation12 + $0x108] sm:$0xff]
        %v2792 = vld [vmem:[#allocation12 + $0x110] sm:$0xff]
        %v2793 = vld [vmem:[#allocation12 + $0x118] sm:$0xff]
        %v2794 = vld [vmem:[#allocation12 + $0x120] sm:$0xff]
        %v2795 = vld [vmem:[#allocation12 + $0x128] sm:$0xff]
        %v2796 = vld [vmem:[#allocation12 + $0x130] sm:$0xff]
        %v2797 = vld [vmem:[#allocation12 + $0x138] sm:$0xff]
        %v2798 = vld [vmem:[#allocation12 + $0x140] sm:$0xff]
        %v2799 = vld [vmem:[#allocation12 + $0x148] sm:$0xff]
        %v2800 = vld [vmem:[#allocation12 + $0x150] sm:$0xff]
        %v2801 = vld [vmem:[#allocation12 + $0x158] sm:$0xff]
        %v2802 = vld [vmem:[#allocation12 + $0x160] sm:$0xff]
        %v2803 = vld [vmem:[#allocation12 + $0x168] sm:$0xff]
        %v2804 = vld [vmem:[#allocation12 + $0x170] sm:$0xff]
        %v2805 = vld [vmem:[#allocation12 + $0x178] sm:$0xff]
        %v2806 = vld [vmem:[#allocation12 + $0x180] sm:$0xff]
        %v2807 = vld [vmem:[#allocation12 + $0x188] sm:$0xff]
        %v2808 = vld [vmem:[#allocation12 + $0x190] sm:$0xff]
        %v2809 = vld [vmem:[#allocation12 + $0x198] sm:$0xff]
        %v2810 = vld [vmem:[#allocation12 + $0x1a0] sm:$0xff]
        %v2811 = vld [vmem:[#allocation12 + $0x1a8] sm:$0xff]
        %v2812 = vld [vmem:[#allocation12 + $0x1b0] sm:$0xff]
        %v2813 = vld [vmem:[#allocation12 + $0x1b8] sm:$0xff]
        %v2814 = vld [vmem:[#allocation12 + $0x1c0] sm:$0xff]
        %v2815 = vld [vmem:[#allocation12 + $0x1c8] sm:$0xff]
        %v2816 = vld [vmem:[#allocation12 + $0x1d0] sm:$0xff]
        %v2817 = vld [vmem:[#allocation12 + $0x1d8] sm:$0xff]
        %v2818 = vld [vmem:[#allocation12 + $0x1e0] sm:$0xff]
        %v2819 = vld [vmem:[#allocation12 + $0x1e8] sm:$0xff]
        %v2820 = vld [vmem:[#allocation12 + $0x1f0] sm:$0xff]
        %v2821 = vld [vmem:[#allocation12 + $0x1f8] sm:$0xff]
        %v2822 = vld [vmem:[#allocation12 + $0x200] sm:$0xff]
        %v2823 = vld [vmem:[#allocation12 + $0x208] sm:$0xff]
        %v2824 = vld [vmem:[#allocation12 + $0x210] sm:$0xff]
        %v2825 = vld [vmem:[#allocation12 + $0x218] sm:$0xff]
        %v2826 = vld [vmem:[#allocation12 + $0x220] sm:$0xff]
        %v2827 = vld [vmem:[#allocation12 + $0x228] sm:$0xff]
        %v2828 = vld [vmem:[#allocation12 + $0x230] sm:$0xff]
        %v2829 = vld [vmem:[#allocation12 + $0x238] sm:$0xff]
        %v2830 = vld [vmem:[#allocation12 + $0x240] sm:$0xff]
        %v2831 = vld [vmem:[#allocation12 + $0x248] sm:$0xff]
        %v2832 = vld [vmem:[#allocation12 + $0x250] sm:$0xff]
        %v2833 = vld [vmem:[#allocation12 + $0x258] sm:$0xff]
        %v2834 = vld [vmem:[#allocation12 + $0x260] sm:$0xff]
        %v2835 = vld [vmem:[#allocation12 + $0x268] sm:$0xff]
        %v2836 = vld [vmem:[#allocation12 + $0x270] sm:$0xff]
        %v2837 = vld [vmem:[#allocation12 + $0x278] sm:$0xff]
        %v2838 = vld [vmem:[#allocation12 + $0x280] sm:$0xff]
        %v2839 = vld [vmem:[#allocation12 + $0x288] sm:$0xff]
        %v2840 = vld [vmem:[#allocation12 + $0x290] sm:$0xff]
        %v2841 = vld [vmem:[#allocation12 + $0x298] sm:$0xff]
        %v2842 = vld [vmem:[#allocation12 + $0x2a0] sm:$0xff]
        %v2843 = vld [vmem:[#allocation12 + $0x2a8] sm:$0xff]
        %v2844 = vld [vmem:[#allocation12 + $0x2b0] sm:$0xff]
        %v2845 = vld [vmem:[#allocation12 + $0x2b8] sm:$0xff]
        %v2846 = vld [vmem:[#allocation12 + $0x2c0] sm:$0xff]
        %v2847 = vld [vmem:[#allocation12 + $0x2c8] sm:$0xff]
        %v2848 = vld [vmem:[#allocation12 + $0x2d0] sm:$0xff]
        %v2849 = vld [vmem:[#allocation12 + $0x2d8] sm:$0xff]
        %v2850 = vld [vmem:[#allocation12 + $0x2e0] sm:$0xff]
        %v2851 = vld [vmem:[#allocation12 + $0x2e8] sm:$0xff]
        %v2852 = vld [vmem:[#allocation12 + $0x2f0] sm:$0xff]
        %v2853 = vld [vmem:[#allocation12 + $0x2f8] sm:$0xff]
        %v2854 = vld [vmem:[#allocation12 + $0x300] sm:$0xff]
        %v2855 = vld [vmem:[#allocation12 + $0x308] sm:$0xff]
        %v2856 = vld [vmem:[#allocation12 + $0x310] sm:$0xff]
        %v2857 = vld [vmem:[#allocation12 + $0x318] sm:$0xff]
        %v2858 = vld [vmem:[#allocation12 + $0x320] sm:$0xff]
        %v2859 = vld [vmem:[#allocation12 + $0x328] sm:$0xff]
        %v2860 = vld [vmem:[#allocation12 + $0x330] sm:$0xff]
        %v2861 = vld [vmem:[#allocation12 + $0x338] sm:$0xff]
        %v2862 = vld [vmem:[#allocation12 + $0x340] sm:$0xff]
        %v2863 = vld [vmem:[#allocation12 + $0x348] sm:$0xff]
        %v2864 = vld [vmem:[#allocation12 + $0x350] sm:$0xff]
        %v2865 = vld [vmem:[#allocation12 + $0x358] sm:$0xff]
        %v2866 = vld [vmem:[#allocation12 + $0x360] sm:$0xff]
        %v2867 = vld [vmem:[#allocation12 + $0x368] sm:$0xff]
        %v2868 = vld [vmem:[#allocation12 + $0x370] sm:$0xff]
        %v2869 = vld [vmem:[#allocation12 + $0x378] sm:$0xff]
        %v2870 = vld [vmem:[#allocation12 + $0x380] sm:$0xff]
        %v2871 = vld [vmem:[#allocation12 + $0x388] sm:$0xff]
        %v2872 = vld [vmem:[#allocation12 + $0x390] sm:$0xff]
        %v2873 = vld [vmem:[#allocation12 + $0x398] sm:$0xff]
        %v2874 = vld [vmem:[#allocation12 + $0x3a0] sm:$0xff]
        %v2875 = vld [vmem:[#allocation12 + $0x3a8] sm:$0xff]
        %v2876 = vld [vmem:[#allocation12 + $0x3b0] sm:$0xff]
        %v2877 = vld [vmem:[#allocation12 + $0x3b8] sm:$0xff]
        %v2878 = vld [vmem:[#allocation12 + $0x3c0] sm:$0xff]
        %v2879 = vld [vmem:[#allocation12 + $0x3c8] sm:$0xff]
        %v2880 = vld [vmem:[#allocation12 + $0x3d0] sm:$0xff]
        %v2881 = vld [vmem:[#allocation12 + $0x3d8] sm:$0xff]
        %v2882 = vld [vmem:[#allocation12 + $0x3e0] sm:$0xff]
        %v2883 = vld [vmem:[#allocation12 + $0x3e8] sm:$0xff]
        %v2884 = vld [vmem:[#allocation12 + $0x3f0] sm:$0xff]
        %v2885 = vld [vmem:[#allocation12 + $0x3f8] sm:$0xff]
        %v2886 = vld [vmem:[#allocation12 + $0x400] sm:$0xff]
        %v2887 = vld [vmem:[#allocation12 + $0x408] sm:$0xff]
        %v2888 = vld [vmem:[#allocation12 + $0x410] sm:$0xff]
        %v2889 = vld [vmem:[#allocation12 + $0x418] sm:$0xff]
        %v2890 = vld [vmem:[#allocation12 + $0x420] sm:$0xff]
        %v2891 = vld [vmem:[#allocation12 + $0x428] sm:$0xff]
        %v2892 = vld [vmem:[#allocation12 + $0x430] sm:$0xff]
        %v2893 = vld [vmem:[#allocation12 + $0x438] sm:$0xff]
        %v2894 = vld [vmem:[#allocation12 + $0x440] sm:$0xff]
        %v2895 = vld [vmem:[#allocation12 + $0x448] sm:$0xff]
        %v2896 = vld [vmem:[#allocation12 + $0x450] sm:$0xff]
        %v2897 = vld [vmem:[#allocation12 + $0x458] sm:$0xff]
        %v2898 = vld [vmem:[#allocation12 + $0x460] sm:$0xff]
        %v2899 = vld [vmem:[#allocation12 + $0x468] sm:$0xff]
        %v2900 = vld [vmem:[#allocation12 + $0x470] sm:$0xff]
        %v2901 = vld [vmem:[#allocation12 + $0x478] sm:$0xff]
        %v2902 = vld [vmem:[#allocation12 + $0x480] sm:$0xff]
        %v2903 = vld [vmem:[#allocation12 + $0x488] sm:$0xff]
        %v2904 = vld [vmem:[#allocation12 + $0x490] sm:$0xff]
        %v2905 = vld [vmem:[#allocation12 + $0x498] sm:$0xff]
        %v2906 = vld [vmem:[#allocation12 + $0x4a0] sm:$0xff]
        %v2907 = vld [vmem:[#allocation12 + $0x4a8] sm:$0xff]
        %v2908 = vld [vmem:[#allocation12 + $0x4b0] sm:$0xff]
        %v2909 = vld [vmem:[#allocation12 + $0x4b8] sm:$0xff]
        %v2910 = vld [vmem:[#allocation12 + $0x4c0] sm:$0xff]
        %v2911 = vld [vmem:[#allocation12 + $0x4c8] sm:$0xff]
        %v2912 = vld [vmem:[#allocation12 + $0x4d0] sm:$0xff]
        %v2913 = vld [vmem:[#allocation12 + $0x4d8] sm:$0xff]
        %v2914 = vld [vmem:[#allocation12 + $0x4e0] sm:$0xff]
        %v2915 = vld [vmem:[#allocation12 + $0x4e8] sm:$0xff]
        %v2916 = vld [vmem:[#allocation12 + $0x4f0] sm:$0xff]
        %v2917 = vld [vmem:[#allocation12 + $0x4f8] sm:$0xff]
        %v2918 = vld [vmem:[#allocation12 + $0x500] sm:$0xff]
        %v2919 = vld [vmem:[#allocation12 + $0x508] sm:$0xff]
        %v2920 = vld [vmem:[#allocation12 + $0x510] sm:$0xff]
        %v2921 = vld [vmem:[#allocation12 + $0x518] sm:$0xff]
        %v2922 = vld [vmem:[#allocation12 + $0x520] sm:$0xff]
        %v2923 = vld [vmem:[#allocation12 + $0x528] sm:$0xff]
        %v2924 = vld [vmem:[#allocation12 + $0x530] sm:$0xff]
        %v2925 = vld [vmem:[#allocation12 + $0x538] sm:$0xff]
        %v2926 = vld [vmem:[#allocation12 + $0x540] sm:$0xff]
        %v2927 = vld [vmem:[#allocation12 + $0x548] sm:$0xff]
        %v2928 = vld [vmem:[#allocation12 + $0x550] sm:$0xff]
        %v2929 = vld [vmem:[#allocation12 + $0x558] sm:$0xff]
        %v2930 = vld [vmem:[#allocation12 + $0x560] sm:$0xff]
        %v2931 = vld [vmem:[#allocation12 + $0x568] sm:$0xff]
        %v2932 = vld [vmem:[#allocation12 + $0x570] sm:$0xff]
        %v2933 = vld [vmem:[#allocation12 + $0x578] sm:$0xff]
        %v2934 = vld [vmem:[#allocation12 + $0x580] sm:$0xff]
        %v2935 = vld [vmem:[#allocation12 + $0x588] sm:$0xff]
        %v2936 = vld [vmem:[#allocation12 + $0x590] sm:$0xff]
        %v2937 = vld [vmem:[#allocation12 + $0x598] sm:$0xff]
        %v2938 = vld [vmem:[#allocation12 + $0x5a0] sm:$0xff]
        %v2939 = vld [vmem:[#allocation12 + $0x5a8] sm:$0xff]
        %v2940 = vld [vmem:[#allocation12 + $0x5b0] sm:$0xff]
        %v2941 = vld [vmem:[#allocation12 + $0x5b8] sm:$0xff]
        %v2942 = vld [vmem:[#allocation12 + $0x5c0] sm:$0xff]
        %v2943 = vld [vmem:[#allocation12 + $0x5c8] sm:$0xff]
        %v2944 = vld [vmem:[#allocation12 + $0x5d0] sm:$0xff]
        %v2945 = vld [vmem:[#allocation12 + $0x5d8] sm:$0xff]
        %v2946 = vld [vmem:[#allocation12 + $0x5e0] sm:$0xff]
        %v2947 = vld [vmem:[#allocation12 + $0x5e8] sm:$0xff]
        %v2948 = vld [vmem:[#allocation12 + $0x5f0] sm:$0xff]
        %v2949 = vld [vmem:[#allocation12 + $0x5f8] sm:$0xff]
        %v2950 = vld [vmem:[#allocation12 + $0x600] sm:$0xff]
        %v2951 = vld [vmem:[#allocation12 + $0x608] sm:$0xff]
        %v2952 = vld [vmem:[#allocation12 + $0x610] sm:$0xff]
        %v2953 = vld [vmem:[#allocation12 + $0x618] sm:$0xff]
        %v2954 = vld [vmem:[#allocation12 + $0x620] sm:$0xff]
        %v2955 = vld [vmem:[#allocation12 + $0x628] sm:$0xff]
        %v2956 = vld [vmem:[#allocation12 + $0x630] sm:$0xff]
        %v2957 = vld [vmem:[#allocation12 + $0x638] sm:$0xff]
        %v2958 = vld [vmem:[#allocation12 + $0x640] sm:$0xff]
        %v2959 = vld [vmem:[#allocation12 + $0x648] sm:$0xff]
        %v2960 = vld [vmem:[#allocation12 + $0x650] sm:$0xff]
        %v2961 = vld [vmem:[#allocation12 + $0x658] sm:$0xff]
        %v2962 = vld [vmem:[#allocation12 + $0x660] sm:$0xff]
        %v2963 = vld [vmem:[#allocation12 + $0x668] sm:$0xff]
        %v2964 = vld [vmem:[#allocation12 + $0x670] sm:$0xff]
        %v2965 = vld [vmem:[#allocation12 + $0x678] sm:$0xff]
        %v2966 = vld [vmem:[#allocation12 + $0x680] sm:$0xff]
        %v2967 = vld [vmem:[#allocation12 + $0x688] sm:$0xff]
        %v2968 = vld [vmem:[#allocation12 + $0x690] sm:$0xff]
        %v2969 = vld [vmem:[#allocation12 + $0x698] sm:$0xff]
        %v2970 = vld [vmem:[#allocation12 + $0x6a0] sm:$0xff]
        %v2971 = vld [vmem:[#allocation12 + $0x6a8] sm:$0xff]
        %v2972 = vld [vmem:[#allocation12 + $0x6b0] sm:$0xff]
        %v2973 = vld [vmem:[#allocation12 + $0x6b8] sm:$0xff]
        %v2974 = vld [vmem:[#allocation12 + $0x6c0] sm:$0xff]
        %v2975 = vld [vmem:[#allocation12 + $0x6c8] sm:$0xff]
        %v2976 = vld [vmem:[#allocation12 + $0x6d0] sm:$0xff]
        %v2977 = vld [vmem:[#allocation12 + $0x6d8] sm:$0xff]
        %v2978 = vld [vmem:[#allocation12 + $0x6e0] sm:$0xff]
        %v2979 = vld [vmem:[#allocation12 + $0x6e8] sm:$0xff]
        %v2980 = vld [vmem:[#allocation12 + $0x6f0] sm:$0xff]
        %v2981 = vld [vmem:[#allocation12 + $0x6f8] sm:$0xff]
        %v2982 = vld [vmem:[#allocation12 + $0x700] sm:$0xff]
        %v2983 = vld [vmem:[#allocation12 + $0x708] sm:$0xff]
        %v2984 = vld [vmem:[#allocation12 + $0x710] sm:$0xff]
        %v2985 = vld [vmem:[#allocation12 + $0x718] sm:$0xff]
        %v2986 = vld [vmem:[#allocation12 + $0x720] sm:$0xff]
        %v2987 = vld [vmem:[#allocation12 + $0x728] sm:$0xff]
        %v2988 = vld [vmem:[#allocation12 + $0x730] sm:$0xff]
        %v2989 = vld [vmem:[#allocation12 + $0x738] sm:$0xff]
        %v2990 = vld [vmem:[#allocation12 + $0x740] sm:$0xff]
        %v2991 = vld [vmem:[#allocation12 + $0x748] sm:$0xff]
        %v2992 = vld [vmem:[#allocation12 + $0x750] sm:$0xff]
        %v2993 = vld [vmem:[#allocation12 + $0x758] sm:$0xff]
        %v2994 = vld [vmem:[#allocation12 + $0x760] sm:$0xff]
        %v2995 = vld [vmem:[#allocation12 + $0x768] sm:$0xff]
        %v2996 = vld [vmem:[#allocation12 + $0x770] sm:$0xff]
        %v2997 = vld [vmem:[#allocation12 + $0x778] sm:$0xff]
        %v2998 = vld [vmem:[#allocation12 + $0x780] sm:$0xff]
        %v2999 = vld [vmem:[#allocation12 + $0x788] sm:$0xff]
        %v3000 = vld [vmem:[#allocation12 + $0x790] sm:$0xff]
        %v3001 = vld [vmem:[#allocation12 + $0x798] sm:$0xff]
        %v3002 = vld [vmem:[#allocation12 + $0x7a0] sm:$0xff]
        %v3003 = vld [vmem:[#allocation12 + $0x7a8] sm:$0xff]
        %v3004 = vld [vmem:[#allocation12 + $0x7b0] sm:$0xff]
        %v3005 = vld [vmem:[#allocation12 + $0x7b8] sm:$0xff]
        %v3006 = vld [vmem:[#allocation12 + $0x7c0] sm:$0xff]
        %v3007 = vld [vmem:[#allocation12 + $0x7c8] sm:$0xff]
        %v3008 = vld [vmem:[#allocation13] sm:$0xf]
        %v3010 = vlaneseq
        %v3011 = vshrl.u32 %v3010, 7
        %v3012 = vsub.s32 0, %v3011
        %v3013 = vrot.slane %v3008, %v3012
        %v3014 = vlaneseq
        %v3015 = vshrl.u32 %v3014, 7
        %v3016 = vsub.s32 1, %v3015
        %v3017 = vrot.slane %v3008, %v3016
        %v3018 = vlaneseq
        %v3019 = vshrl.u32 %v3018, 7
        %v3020 = vsub.s32 2, %v3019
        %v3021 = vrot.slane %v3008, %v3020
        %v3022 = vlaneseq
        %v3023 = vshrl.u32 %v3022, 7
        %v3024 = vsub.s32 3, %v3023
        %v3025 = vrot.slane %v3008, %v3024
        %v3031 = vcombine.high %v2757, %v2757
        %v3033 = vunpack.c.l.s4 1966171168
        %v3034 = vunpack.c.0.s8 %v3033
        %v3035 = vlaneseq
        %v3036 = vshrl.u32 %v3035, 7
        %v3037 = vsub.s32 %v3034, %v3036
        %v3038 = vrot.slane %v2757, %v3037
        %v3040 = vunpack.c.l.s4 1966171168
        %v3041 = vunpack.c.0.s8 %v3040
        %v3042 = vlaneseq
        %v3043 = vshrl.u32 %v3042, 7
        %v3044 = vsub.s32 %v3041, %v3043
        %v3045 = vrot.slane %v3031, %v3044
        %v3046 = vcombine.high %v3038, %v3038
        %v3047 = vcombine.high %v3045, %v3045
        %v3049 = vunpack.c.l.s4 1966171168
        %v3050 = vunpack.c.0.s8 %v3049
        %v3051 = vlaneseq
        %v3052 = vshrl.u32 %v3051, 7
        %v3053 = vsub.s32 %v3050, %v3052
        %v3054 = vrot.slane %v3038, %v3053
        %v3056 = vunpack.c.l.s4 1966171168
        %v3057 = vunpack.c.0.s8 %v3056
        %v3058 = vlaneseq
        %v3059 = vshrl.u32 %v3058, 7
        %v3060 = vsub.s32 %v3057, %v3059
        %v3061 = vrot.slane %v3045, %v3060
        %v3063 = vunpack.c.l.s4 1966171168
        %v3064 = vunpack.c.0.s8 %v3063
        %v3065 = vlaneseq
        %v3066 = vshrl.u32 %v3065, 7
        %v3067 = vsub.s32 %v3064, %v3066
        %v3068 = vrot.slane %v3046, %v3067
        %v3070 = vunpack.c.l.s4 1966171168
        %v3071 = vunpack.c.0.s8 %v3070
        %v3072 = vlaneseq
        %v3073 = vshrl.u32 %v3072, 7
        %v3074 = vsub.s32 %v3071, %v3073
        %v3075 = vrot.slane %v3047, %v3074
        %v3076 = vcombine.high %v3054, %v3054
        %v3077 = vcombine.high %v3061, %v3061
        %v3078 = vcombine.high %v3068, %v3068
        %v3079 = vcombine.high %v3075, %v3075
        %v3337 = vunpack.c.l.b16 %v2758
        %v3338 = vunpack.c.h.b16 %v2758
        %v3339 = vunpack.c.l.b16 %v2759
        %v3340 = vunpack.c.h.b16 %v2759
        %v3341 = vunpack.c.l.b16 %v2760
        %v3342 = vunpack.c.h.b16 %v2760
        %v3343 = vunpack.c.l.b16 %v2761
        %v3344 = vunpack.c.h.b16 %v2761
        %v3345 = vunpack.c.l.b16 %v2762
        %v3346 = vunpack.c.h.b16 %v2762
        %v3347 = vunpack.c.l.b16 %v2763
        %v3348 = vunpack.c.h.b16 %v2763
        %v3349 = vunpack.c.l.b16 %v2764
        %v3350 = vunpack.c.h.b16 %v2764
        %v3351 = vunpack.c.l.b16 %v2765
        %v3352 = vunpack.c.h.b16 %v2765
        %v3353 = vunpack.c.l.b16 %v2766
        %v3354 = vunpack.c.h.b16 %v2766
        %v3355 = vunpack.c.l.b16 %v2767
        %v3356 = vunpack.c.h.b16 %v2767
        %v3357 = vunpack.c.l.b16 %v2768
        %v3358 = vunpack.c.h.b16 %v2768
        %v3359 = vunpack.c.l.b16 %v2769
        %v3360 = vunpack.c.h.b16 %v2769
        %v3361 = vunpack.c.l.b16 %v2770
        %v3362 = vunpack.c.h.b16 %v2770
        %v3363 = vunpack.c.l.b16 %v2771
        %v3364 = vunpack.c.h.b16 %v2771
        %v3365 = vunpack.c.l.b16 %v2772
        %v3366 = vunpack.c.h.b16 %v2772
        %v3367 = vunpack.c.l.b16 %v2773
        %v3368 = vunpack.c.h.b16 %v2773
        %v3369 = vunpack.c.l.b16 %v2774
        %v3370 = vunpack.c.h.b16 %v2774
        %v3371 = vunpack.c.l.b16 %v2775
        %v3372 = vunpack.c.h.b16 %v2775
        %v3373 = vunpack.c.l.b16 %v2776
        %v3374 = vunpack.c.h.b16 %v2776
        %v3375 = vunpack.c.l.b16 %v2777
        %v3376 = vunpack.c.h.b16 %v2777
        %v3377 = vunpack.c.l.b16 %v2778
        %v3378 = vunpack.c.h.b16 %v2778
        %v3379 = vunpack.c.l.b16 %v2779
        %v3380 = vunpack.c.h.b16 %v2779
        %v3381 = vunpack.c.l.b16 %v2780
        %v3382 = vunpack.c.h.b16 %v2780
        %v3383 = vunpack.c.l.b16 %v2781
        %v3384 = vunpack.c.h.b16 %v2781
        %v3385 = vunpack.c.l.b16 %v2782
        %v3386 = vunpack.c.h.b16 %v2782
        %v3387 = vunpack.c.l.b16 %v2783
        %v3388 = vunpack.c.h.b16 %v2783
        %v3389 = vunpack.c.l.b16 %v2784
        %v3390 = vunpack.c.h.b16 %v2784
        %v3391 = vunpack.c.l.b16 %v2785
        %v3392 = vunpack.c.h.b16 %v2785
        %v3393 = vunpack.c.l.b16 %v2786
        %v3394 = vunpack.c.h.b16 %v2786
        %v3395 = vunpack.c.l.b16 %v2787
        %v3396 = vunpack.c.h.b16 %v2787
        %v3397 = vunpack.c.l.b16 %v2788
        %v3398 = vunpack.c.h.b16 %v2788
        %v3399 = vunpack.c.l.b16 %v2789
        %v3400 = vunpack.c.h.b16 %v2789
        %v3401 = vunpack.c.l.b16 %v2790
        %v3402 = vunpack.c.h.b16 %v2790
        %v3403 = vunpack.c.l.b16 %v2791
        %v3404 = vunpack.c.h.b16 %v2791
        %v3405 = vunpack.c.l.b16 %v2792
        %v3406 = vunpack.c.h.b16 %v2792
        %v3407 = vunpack.c.l.b16 %v2793
        %v3408 = vunpack.c.h.b16 %v2793
        %v3409 = vunpack.c.l.b16 %v2794
        %v3410 = vunpack.c.h.b16 %v2794
        %v3411 = vunpack.c.l.b16 %v2795
        %v3412 = vunpack.c.h.b16 %v2795
        %v3413 = vunpack.c.l.b16 %v2796
        %v3414 = vunpack.c.h.b16 %v2796
        %v3415 = vunpack.c.l.b16 %v2797
        %v3416 = vunpack.c.h.b16 %v2797
        %v3417 = vunpack.c.l.b16 %v2798
        %v3418 = vunpack.c.h.b16 %v2798
        %v3419 = vunpack.c.l.b16 %v2799
        %v3420 = vunpack.c.h.b16 %v2799
        %v3421 = vunpack.c.l.b16 %v2800
        %v3422 = vunpack.c.h.b16 %v2800
        %v3423 = vunpack.c.l.b16 %v2801
        %v3424 = vunpack.c.h.b16 %v2801
        %v3425 = vunpack.c.l.b16 %v2802
        %v3426 = vunpack.c.h.b16 %v2802
        %v3427 = vunpack.c.l.b16 %v2803
        %v3428 = vunpack.c.h.b16 %v2803
        %v3429 = vunpack.c.l.b16 %v2804
        %v3430 = vunpack.c.h.b16 %v2804
        %v3431 = vunpack.c.l.b16 %v2805
        %v3432 = vunpack.c.h.b16 %v2805
        %v3433 = vunpack.c.l.b16 %v2806
        %v3434 = vunpack.c.h.b16 %v2806
        %v3435 = vunpack.c.l.b16 %v2807
        %v3436 = vunpack.c.h.b16 %v2807
        %v3437 = vunpack.c.l.b16 %v2808
        %v3438 = vunpack.c.h.b16 %v2808
        %v3439 = vunpack.c.l.b16 %v2809
        %v3440 = vunpack.c.h.b16 %v2809
        %v3441 = vunpack.c.l.b16 %v2810
        %v3442 = vunpack.c.h.b16 %v2810
        %v3443 = vunpack.c.l.b16 %v2811
        %v3444 = vunpack.c.h.b16 %v2811
        %v3445 = vunpack.c.l.b16 %v2812
        %v3446 = vunpack.c.h.b16 %v2812
        %v3447 = vunpack.c.l.b16 %v2813
        %v3448 = vunpack.c.h.b16 %v2813
        %v3449 = vunpack.c.l.b16 %v2814
        %v3450 = vunpack.c.h.b16 %v2814
        %v3451 = vunpack.c.l.b16 %v2815
        %v3452 = vunpack.c.h.b16 %v2815
        %v3453 = vunpack.c.l.b16 %v2816
        %v3454 = vunpack.c.h.b16 %v2816
        %v3455 = vunpack.c.l.b16 %v2817
        %v3456 = vunpack.c.h.b16 %v2817
        %v3457 = vunpack.c.l.b16 %v2818
        %v3458 = vunpack.c.h.b16 %v2818
        %v3459 = vunpack.c.l.b16 %v2819
        %v3460 = vunpack.c.h.b16 %v2819
        %v3461 = vunpack.c.l.b16 %v2820
        %v3462 = vunpack.c.h.b16 %v2820
        %v3463 = vunpack.c.l.b16 %v2821
        %v3464 = vunpack.c.h.b16 %v2821
        %v3465 = vunpack.c.l.b16 %v2822
        %v3466 = vunpack.c.h.b16 %v2822
        %v3467 = vunpack.c.l.b16 %v2823
        %v3468 = vunpack.c.h.b16 %v2823
        %v3469 = vunpack.c.l.b16 %v2824
        %v3470 = vunpack.c.h.b16 %v2824
        %v3471 = vunpack.c.l.b16 %v2825
        %v3472 = vunpack.c.h.b16 %v2825
        %v3473 = vunpack.c.l.b16 %v2826
        %v3474 = vunpack.c.h.b16 %v2826
        %v3475 = vunpack.c.l.b16 %v2827
        %v3476 = vunpack.c.h.b16 %v2827
        %v3477 = vunpack.c.l.b16 %v2828
        %v3478 = vunpack.c.h.b16 %v2828
        %v3479 = vunpack.c.l.b16 %v2829
        %v3480 = vunpack.c.h.b16 %v2829
        %v3481 = vunpack.c.l.b16 %v2830
        %v3482 = vunpack.c.h.b16 %v2830
        %v3483 = vunpack.c.l.b16 %v2831
        %v3484 = vunpack.c.h.b16 %v2831
        %v3485 = vunpack.c.l.b16 %v2832
        %v3486 = vunpack.c.h.b16 %v2832
        %v3487 = vunpack.c.l.b16 %v2833
        %v3488 = vunpack.c.h.b16 %v2833
        %v3489 = vunpack.c.l.b16 %v2834
        %v3490 = vunpack.c.h.b16 %v2834
        %v3491 = vunpack.c.l.b16 %v2835
        %v3492 = vunpack.c.h.b16 %v2835
        %v3493 = vunpack.c.l.b16 %v2836
        %v3494 = vunpack.c.h.b16 %v2836
        %v3495 = vunpack.c.l.b16 %v2837
        %v3496 = vunpack.c.h.b16 %v2837
        %v3497 = vunpack.c.l.b16 %v2838
        %v3498 = vunpack.c.h.b16 %v2838
        %v3499 = vunpack.c.l.b16 %v2839
        %v3500 = vunpack.c.h.b16 %v2839
        %v3501 = vunpack.c.l.b16 %v2840
        %v3502 = vunpack.c.h.b16 %v2840
        %v3503 = vunpack.c.l.b16 %v2841
        %v3504 = vunpack.c.h.b16 %v2841
        %v3505 = vunpack.c.l.b16 %v2842
        %v3506 = vunpack.c.h.b16 %v2842
        %v3507 = vunpack.c.l.b16 %v2843
        %v3508 = vunpack.c.h.b16 %v2843
        %v3509 = vunpack.c.l.b16 %v2844
        %v3510 = vunpack.c.h.b16 %v2844
        %v3511 = vunpack.c.l.b16 %v2845
        %v3512 = vunpack.c.h.b16 %v2845
        %v3513 = vunpack.c.l.b16 %v2846
        %v3514 = vunpack.c.h.b16 %v2846
        %v3515 = vunpack.c.l.b16 %v2847
        %v3516 = vunpack.c.h.b16 %v2847
        %v3517 = vunpack.c.l.b16 %v2848
        %v3518 = vunpack.c.h.b16 %v2848
        %v3519 = vunpack.c.l.b16 %v2849
        %v3520 = vunpack.c.h.b16 %v2849
        %v3521 = vunpack.c.l.b16 %v2850
        %v3522 = vunpack.c.h.b16 %v2850
        %v3523 = vunpack.c.l.b16 %v2851
        %v3524 = vunpack.c.h.b16 %v2851
        %v3525 = vunpack.c.l.b16 %v2852
        %v3526 = vunpack.c.h.b16 %v2852
        %v3527 = vunpack.c.l.b16 %v2853
        %v3528 = vunpack.c.h.b16 %v2853
        %v3529 = vunpack.c.l.b16 %v2854
        %v3530 = vunpack.c.h.b16 %v2854
        %v3531 = vunpack.c.l.b16 %v2855
        %v3532 = vunpack.c.h.b16 %v2855
        %v3533 = vunpack.c.l.b16 %v2856
        %v3534 = vunpack.c.h.b16 %v2856
        %v3535 = vunpack.c.l.b16 %v2857
        %v3536 = vunpack.c.h.b16 %v2857
        %v3537 = vunpack.c.l.b16 %v2858
        %v3538 = vunpack.c.h.b16 %v2858
        %v3539 = vunpack.c.l.b16 %v2859
        %v3540 = vunpack.c.h.b16 %v2859
        %v3541 = vunpack.c.l.b16 %v2860
        %v3542 = vunpack.c.h.b16 %v2860
        %v3543 = vunpack.c.l.b16 %v2861
        %v3544 = vunpack.c.h.b16 %v2861
        %v3545 = vunpack.c.l.b16 %v2862
        %v3546 = vunpack.c.h.b16 %v2862
        %v3547 = vunpack.c.l.b16 %v2863
        %v3548 = vunpack.c.h.b16 %v2863
        %v3549 = vunpack.c.l.b16 %v2864
        %v3550 = vunpack.c.h.b16 %v2864
        %v3551 = vunpack.c.l.b16 %v2865
        %v3552 = vunpack.c.h.b16 %v2865
        %v3553 = vunpack.c.l.b16 %v2866
        %v3554 = vunpack.c.h.b16 %v2866
        %v3555 = vunpack.c.l.b16 %v2867
        %v3556 = vunpack.c.h.b16 %v2867
        %v3557 = vunpack.c.l.b16 %v2868
        %v3558 = vunpack.c.h.b16 %v2868
        %v3559 = vunpack.c.l.b16 %v2869
        %v3560 = vunpack.c.h.b16 %v2869
        %v3561 = vunpack.c.l.b16 %v2870
        %v3562 = vunpack.c.h.b16 %v2870
        %v3563 = vunpack.c.l.b16 %v2871
        %v3564 = vunpack.c.h.b16 %v2871
        %v3565 = vunpack.c.l.b16 %v2872
        %v3566 = vunpack.c.h.b16 %v2872
        %v3567 = vunpack.c.l.b16 %v2873
        %v3568 = vunpack.c.h.b16 %v2873
        %v3569 = vunpack.c.l.b16 %v2874
        %v3570 = vunpack.c.h.b16 %v2874
        %v3571 = vunpack.c.l.b16 %v2875
        %v3572 = vunpack.c.h.b16 %v2875
        %v3573 = vunpack.c.l.b16 %v2876
        %v3574 = vunpack.c.h.b16 %v2876
        %v3575 = vunpack.c.l.b16 %v2877
        %v3576 = vunpack.c.h.b16 %v2877
        %v3577 = vunpack.c.l.b16 %v2878
        %v3578 = vunpack.c.h.b16 %v2878
        %v3579 = vunpack.c.l.b16 %v2879
        %v3580 = vunpack.c.h.b16 %v2879
        %v3581 = vunpack.c.l.b16 %v2880
        %v3582 = vunpack.c.h.b16 %v2880
        %v3583 = vunpack.c.l.b16 %v2881
        %v3584 = vunpack.c.h.b16 %v2881
        %v3585 = vunpack.c.l.b16 %v2882
        %v3586 = vunpack.c.h.b16 %v2882
        %v3587 = vunpack.c.l.b16 %v2883
        %v3588 = vunpack.c.h.b16 %v2883
        %v3589 = vunpack.c.l.b16 %v2884
        %v3590 = vunpack.c.h.b16 %v2884
        %v3591 = vunpack.c.l.b16 %v2885
        %v3592 = vunpack.c.h.b16 %v2885
        %v3593 = vunpack.c.l.b16 %v2886
        %v3594 = vunpack.c.h.b16 %v2886
        %v3595 = vunpack.c.l.b16 %v2887
        %v3596 = vunpack.c.h.b16 %v2887
        %v3597 = vunpack.c.l.b16 %v2888
        %v3598 = vunpack.c.h.b16 %v2888
        %v3599 = vunpack.c.l.b16 %v2889
        %v3600 = vunpack.c.h.b16 %v2889
        %v3601 = vunpack.c.l.b16 %v2890
        %v3602 = vunpack.c.h.b16 %v2890
        %v3603 = vunpack.c.l.b16 %v2891
        %v3604 = vunpack.c.h.b16 %v2891
        %v3605 = vunpack.c.l.b16 %v2892
        %v3606 = vunpack.c.h.b16 %v2892
        %v3607 = vunpack.c.l.b16 %v2893
        %v3608 = vunpack.c.h.b16 %v2893
        %v3609 = vunpack.c.l.b16 %v2894
        %v3610 = vunpack.c.h.b16 %v2894
        %v3611 = vunpack.c.l.b16 %v2895
        %v3612 = vunpack.c.h.b16 %v2895
        %v3613 = vunpack.c.l.b16 %v2896
        %v3614 = vunpack.c.h.b16 %v2896
        %v3615 = vunpack.c.l.b16 %v2897
        %v3616 = vunpack.c.h.b16 %v2897
        %v3617 = vunpack.c.l.b16 %v2898
        %v3618 = vunpack.c.h.b16 %v2898
        %v3619 = vunpack.c.l.b16 %v2899
        %v3620 = vunpack.c.h.b16 %v2899
        %v3621 = vunpack.c.l.b16 %v2900
        %v3622 = vunpack.c.h.b16 %v2900
        %v3623 = vunpack.c.l.b16 %v2901
        %v3624 = vunpack.c.h.b16 %v2901
        %v3625 = vunpack.c.l.b16 %v2902
        %v3626 = vunpack.c.h.b16 %v2902
        %v3627 = vunpack.c.l.b16 %v2903
        %v3628 = vunpack.c.h.b16 %v2903
        %v3629 = vunpack.c.l.b16 %v2904
        %v3630 = vunpack.c.h.b16 %v2904
        %v3631 = vunpack.c.l.b16 %v2905
        %v3632 = vunpack.c.h.b16 %v2905
        %v3633 = vunpack.c.l.b16 %v2906
        %v3634 = vunpack.c.h.b16 %v2906
        %v3635 = vunpack.c.l.b16 %v2907
        %v3636 = vunpack.c.h.b16 %v2907
        %v3637 = vunpack.c.l.b16 %v2908
        %v3638 = vunpack.c.h.b16 %v2908
        %v3639 = vunpack.c.l.b16 %v2909
        %v3640 = vunpack.c.h.b16 %v2909
        %v3641 = vunpack.c.l.b16 %v2910
        %v3642 = vunpack.c.h.b16 %v2910
        %v3643 = vunpack.c.l.b16 %v2911
        %v3644 = vunpack.c.h.b16 %v2911
        %v3645 = vunpack.c.l.b16 %v2912
        %v3646 = vunpack.c.h.b16 %v2912
        %v3647 = vunpack.c.l.b16 %v2913
        %v3648 = vunpack.c.h.b16 %v2913
        %v3649 = vunpack.c.l.b16 %v2914
        %v3650 = vunpack.c.h.b16 %v2914
        %v3651 = vunpack.c.l.b16 %v2915
        %v3652 = vunpack.c.h.b16 %v2915
        %v3653 = vunpack.c.l.b16 %v2916
        %v3654 = vunpack.c.h.b16 %v2916
        %v3655 = vunpack.c.l.b16 %v2917
        %v3656 = vunpack.c.h.b16 %v2917
        %v3657 = vunpack.c.l.b16 %v2918
        %v3658 = vunpack.c.h.b16 %v2918
        %v3659 = vunpack.c.l.b16 %v2919
        %v3660 = vunpack.c.h.b16 %v2919
        %v3661 = vunpack.c.l.b16 %v2920
        %v3662 = vunpack.c.h.b16 %v2920
        %v3663 = vunpack.c.l.b16 %v2921
        %v3664 = vunpack.c.h.b16 %v2921
        %v3665 = vunpack.c.l.b16 %v2922
        %v3666 = vunpack.c.h.b16 %v2922
        %v3667 = vunpack.c.l.b16 %v2923
        %v3668 = vunpack.c.h.b16 %v2923
        %v3669 = vunpack.c.l.b16 %v2924
        %v3670 = vunpack.c.h.b16 %v2924
        %v3671 = vunpack.c.l.b16 %v2925
        %v3672 = vunpack.c.h.b16 %v2925
        %v3673 = vunpack.c.l.b16 %v2926
        %v3674 = vunpack.c.h.b16 %v2926
        %v3675 = vunpack.c.l.b16 %v2927
        %v3676 = vunpack.c.h.b16 %v2927
        %v3677 = vunpack.c.l.b16 %v2928
        %v3678 = vunpack.c.h.b16 %v2928
        %v3679 = vunpack.c.l.b16 %v2929
        %v3680 = vunpack.c.h.b16 %v2929
        %v3681 = vunpack.c.l.b16 %v2930
        %v3682 = vunpack.c.h.b16 %v2930
        %v3683 = vunpack.c.l.b16 %v2931
        %v3684 = vunpack.c.h.b16 %v2931
        %v3685 = vunpack.c.l.b16 %v2932
        %v3686 = vunpack.c.h.b16 %v2932
        %v3687 = vunpack.c.l.b16 %v2933
        %v3688 = vunpack.c.h.b16 %v2933
        %v3689 = vunpack.c.l.b16 %v2934
        %v3690 = vunpack.c.h.b16 %v2934
        %v3691 = vunpack.c.l.b16 %v2935
        %v3692 = vunpack.c.h.b16 %v2935
        %v3693 = vunpack.c.l.b16 %v2936
        %v3694 = vunpack.c.h.b16 %v2936
        %v3695 = vunpack.c.l.b16 %v2937
        %v3696 = vunpack.c.h.b16 %v2937
        %v3697 = vunpack.c.l.b16 %v2938
        %v3698 = vunpack.c.h.b16 %v2938
        %v3699 = vunpack.c.l.b16 %v2939
        %v3700 = vunpack.c.h.b16 %v2939
        %v3701 = vunpack.c.l.b16 %v2940
        %v3702 = vunpack.c.h.b16 %v2940
        %v3703 = vunpack.c.l.b16 %v2941
        %v3704 = vunpack.c.h.b16 %v2941
        %v3705 = vunpack.c.l.b16 %v2942
        %v3706 = vunpack.c.h.b16 %v2942
        %v3707 = vunpack.c.l.b16 %v2943
        %v3708 = vunpack.c.h.b16 %v2943
        %v3709 = vunpack.c.l.b16 %v2944
        %v3710 = vunpack.c.h.b16 %v2944
        %v3711 = vunpack.c.l.b16 %v2945
        %v3712 = vunpack.c.h.b16 %v2945
        %v3713 = vunpack.c.l.b16 %v2946
        %v3714 = vunpack.c.h.b16 %v2946
        %v3715 = vunpack.c.l.b16 %v2947
        %v3716 = vunpack.c.h.b16 %v2947
        %v3717 = vunpack.c.l.b16 %v2948
        %v3718 = vunpack.c.h.b16 %v2948
        %v3719 = vunpack.c.l.b16 %v2949
        %v3720 = vunpack.c.h.b16 %v2949
        %v3721 = vunpack.c.l.b16 %v2950
        %v3722 = vunpack.c.h.b16 %v2950
        %v3723 = vunpack.c.l.b16 %v2951
        %v3724 = vunpack.c.h.b16 %v2951
        %v3725 = vunpack.c.l.b16 %v2952
        %v3726 = vunpack.c.h.b16 %v2952
        %v3727 = vunpack.c.l.b16 %v2953
        %v3728 = vunpack.c.h.b16 %v2953
        %v3729 = vunpack.c.l.b16 %v2954
        %v3730 = vunpack.c.h.b16 %v2954
        %v3731 = vunpack.c.l.b16 %v2955
        %v3732 = vunpack.c.h.b16 %v2955
        %v3733 = vunpack.c.l.b16 %v2956
        %v3734 = vunpack.c.h.b16 %v2956
        %v3735 = vunpack.c.l.b16 %v2957
        %v3736 = vunpack.c.h.b16 %v2957
        %v3737 = vunpack.c.l.b16 %v2958
        %v3738 = vunpack.c.h.b16 %v2958
        %v3739 = vunpack.c.l.b16 %v2959
        %v3740 = vunpack.c.h.b16 %v2959
        %v3741 = vunpack.c.l.b16 %v2960
        %v3742 = vunpack.c.h.b16 %v2960
        %v3743 = vunpack.c.l.b16 %v2961
        %v3744 = vunpack.c.h.b16 %v2961
        %v3745 = vunpack.c.l.b16 %v2962
        %v3746 = vunpack.c.h.b16 %v2962
        %v3747 = vunpack.c.l.b16 %v2963
        %v3748 = vunpack.c.h.b16 %v2963
        %v3749 = vunpack.c.l.b16 %v2964
        %v3750 = vunpack.c.h.b16 %v2964
        %v3751 = vunpack.c.l.b16 %v2965
        %v3752 = vunpack.c.h.b16 %v2965
        %v3753 = vunpack.c.l.b16 %v2966
        %v3754 = vunpack.c.h.b16 %v2966
        %v3755 = vunpack.c.l.b16 %v2967
        %v3756 = vunpack.c.h.b16 %v2967
        %v3757 = vunpack.c.l.b16 %v2968
        %v3758 = vunpack.c.h.b16 %v2968
        %v3759 = vunpack.c.l.b16 %v2969
        %v3760 = vunpack.c.h.b16 %v2969
        %v3761 = vunpack.c.l.b16 %v2970
        %v3762 = vunpack.c.h.b16 %v2970
        %v3763 = vunpack.c.l.b16 %v2971
        %v3764 = vunpack.c.h.b16 %v2971
        %v3765 = vunpack.c.l.b16 %v2972
        %v3766 = vunpack.c.h.b16 %v2972
        %v3767 = vunpack.c.l.b16 %v2973
        %v3768 = vunpack.c.h.b16 %v2973
        %v3769 = vunpack.c.l.b16 %v2974
        %v3770 = vunpack.c.h.b16 %v2974
        %v3771 = vunpack.c.l.b16 %v2975
        %v3772 = vunpack.c.h.b16 %v2975
        %v3773 = vunpack.c.l.b16 %v2976
        %v3774 = vunpack.c.h.b16 %v2976
        %v3775 = vunpack.c.l.b16 %v2977
        %v3776 = vunpack.c.h.b16 %v2977
        %v3777 = vunpack.c.l.b16 %v2978
        %v3778 = vunpack.c.h.b16 %v2978
        %v3779 = vunpack.c.l.b16 %v2979
        %v3780 = vunpack.c.h.b16 %v2979
        %v3781 = vunpack.c.l.b16 %v2980
        %v3782 = vunpack.c.h.b16 %v2980
        %v3783 = vunpack.c.l.b16 %v2981
        %v3784 = vunpack.c.h.b16 %v2981
        %v3785 = vunpack.c.l.b16 %v2982
        %v3786 = vunpack.c.h.b16 %v2982
        %v3787 = vunpack.c.l.b16 %v2983
        %v3788 = vunpack.c.h.b16 %v2983
        %v3789 = vunpack.c.l.b16 %v2984
        %v3790 = vunpack.c.h.b16 %v2984
        %v3791 = vunpack.c.l.b16 %v2985
        %v3792 = vunpack.c.h.b16 %v2985
        %v3793 = vunpack.c.l.b16 %v2986
        %v3794 = vunpack.c.h.b16 %v2986
        %v3795 = vunpack.c.l.b16 %v2987
        %v3796 = vunpack.c.h.b16 %v2987
        %v3797 = vunpack.c.l.b16 %v2988
        %v3798 = vunpack.c.h.b16 %v2988
        %v3799 = vunpack.c.l.b16 %v2989
        %v3800 = vunpack.c.h.b16 %v2989
        %v3801 = vunpack.c.l.b16 %v2990
        %v3802 = vunpack.c.h.b16 %v2990
        %v3803 = vunpack.c.l.b16 %v2991
        %v3804 = vunpack.c.h.b16 %v2991
        %v3805 = vunpack.c.l.b16 %v2992
        %v3806 = vunpack.c.h.b16 %v2992
        %v3807 = vunpack.c.l.b16 %v2993
        %v3808 = vunpack.c.h.b16 %v2993
        %v3809 = vunpack.c.l.b16 %v2994
        %v3810 = vunpack.c.h.b16 %v2994
        %v3811 = vunpack.c.l.b16 %v2995
        %v3812 = vunpack.c.h.b16 %v2995
        %v3813 = vunpack.c.l.b16 %v2996
        %v3814 = vunpack.c.h.b16 %v2996
        %v3815 = vunpack.c.l.b16 %v2997
        %v3816 = vunpack.c.h.b16 %v2997
        %v3817 = vunpack.c.l.b16 %v2998
        %v3818 = vunpack.c.h.b16 %v2998
        %v3819 = vunpack.c.l.b16 %v2999
        %v3820 = vunpack.c.h.b16 %v2999
        %v3821 = vunpack.c.l.b16 %v3000
        %v3822 = vunpack.c.h.b16 %v3000
        %v3823 = vunpack.c.l.b16 %v3001
        %v3824 = vunpack.c.h.b16 %v3001
        %v3825 = vunpack.c.l.b16 %v3002
        %v3826 = vunpack.c.h.b16 %v3002
        %v3827 = vunpack.c.l.b16 %v3003
        %v3828 = vunpack.c.h.b16 %v3003
        %v3829 = vunpack.c.l.b16 %v3004
        %v3830 = vunpack.c.h.b16 %v3004
        %v3831 = vunpack.c.l.b16 %v3005
        %v3832 = vunpack.c.h.b16 %v3005
        %v3833 = vunpack.c.l.b16 %v3006
        %v3834 = vunpack.c.h.b16 %v3006
        %v3835 = vunpack.c.l.b16 %v3007
        %v3836 = vunpack.c.h.b16 %v3007
        %v3837 = vpack.c.b16 %v3341, %v3337
        %v3838 = vpack.c.b16 %v3342, %v3338
        %v3839 = vpack.c.b16 %v3343, %v3339
        %v3840 = vpack.c.b16 %v3344, %v3340
        %v3841 = vpack.c.b16 %v3349, %v3345
        %v3842 = vpack.c.b16 %v3350, %v3346
        %v3843 = vpack.c.b16 %v3351, %v3347
        %v3844 = vpack.c.b16 %v3352, %v3348
        %v3845 = vpack.c.b16 %v3357, %v3353
        %v3846 = vpack.c.b16 %v3358, %v3354
        %v3847 = vpack.c.b16 %v3359, %v3355
        %v3848 = vpack.c.b16 %v3360, %v3356
        %v3849 = vpack.c.b16 %v3365, %v3361
        %v3850 = vpack.c.b16 %v3366, %v3362
        %v3851 = vpack.c.b16 %v3367, %v3363
        %v3852 = vpack.c.b16 %v3368, %v3364
        %v3853 = vpack.c.b16 %v3373, %v3369
        %v3854 = vpack.c.b16 %v3374, %v3370
        %v3855 = vpack.c.b16 %v3375, %v3371
        %v3856 = vpack.c.b16 %v3376, %v3372
        %v3857 = vpack.c.b16 %v3381, %v3377
        %v3858 = vpack.c.b16 %v3382, %v3378
        %v3859 = vpack.c.b16 %v3383, %v3379
        %v3860 = vpack.c.b16 %v3384, %v3380
        %v3861 = vpack.c.b16 %v3389, %v3385
        %v3862 = vpack.c.b16 %v3390, %v3386
        %v3863 = vpack.c.b16 %v3391, %v3387
        %v3864 = vpack.c.b16 %v3392, %v3388
        %v3865 = vpack.c.b16 %v3397, %v3393
        %v3866 = vpack.c.b16 %v3398, %v3394
        %v3867 = vpack.c.b16 %v3399, %v3395
        %v3868 = vpack.c.b16 %v3400, %v3396
        %v3869 = vpack.c.b16 %v3405, %v3401
        %v3870 = vpack.c.b16 %v3406, %v3402
        %v3871 = vpack.c.b16 %v3407, %v3403
        %v3872 = vpack.c.b16 %v3408, %v3404
        %v3873 = vpack.c.b16 %v3413, %v3409
        %v3874 = vpack.c.b16 %v3414, %v3410
        %v3875 = vpack.c.b16 %v3415, %v3411
        %v3876 = vpack.c.b16 %v3416, %v3412
        %v3877 = vpack.c.b16 %v3421, %v3417
        %v3878 = vpack.c.b16 %v3422, %v3418
        %v3879 = vpack.c.b16 %v3423, %v3419
        %v3880 = vpack.c.b16 %v3424, %v3420
        %v3881 = vpack.c.b16 %v3429, %v3425
        %v3882 = vpack.c.b16 %v3430, %v3426
        %v3883 = vpack.c.b16 %v3431, %v3427
        %v3884 = vpack.c.b16 %v3432, %v3428
        %v3885 = vpack.c.b16 %v3437, %v3433
        %v3886 = vpack.c.b16 %v3438, %v3434
        %v3887 = vpack.c.b16 %v3439, %v3435
        %v3888 = vpack.c.b16 %v3440, %v3436
        %v3889 = vpack.c.b16 %v3445, %v3441
        %v3890 = vpack.c.b16 %v3446, %v3442
        %v3891 = vpack.c.b16 %v3447, %v3443
        %v3892 = vpack.c.b16 %v3448, %v3444
        %v3893 = vpack.c.b16 %v3453, %v3449
        %v3894 = vpack.c.b16 %v3454, %v3450
        %v3895 = vpack.c.b16 %v3455, %v3451
        %v3896 = vpack.c.b16 %v3456, %v3452
        %v3897 = vpack.c.b16 %v3461, %v3457
        %v3898 = vpack.c.b16 %v3462, %v3458
        %v3899 = vpack.c.b16 %v3463, %v3459
        %v3900 = vpack.c.b16 %v3464, %v3460
        %v3901 = vpack.c.b16 %v3469, %v3465
        %v3902 = vpack.c.b16 %v3470, %v3466
        %v3903 = vpack.c.b16 %v3471, %v3467
        %v3904 = vpack.c.b16 %v3472, %v3468
        %v3905 = vpack.c.b16 %v3477, %v3473
        %v3906 = vpack.c.b16 %v3478, %v3474
        %v3907 = vpack.c.b16 %v3479, %v3475
        %v3908 = vpack.c.b16 %v3480, %v3476
        %v3909 = vpack.c.b16 %v3485, %v3481
        %v3910 = vpack.c.b16 %v3486, %v3482
        %v3911 = vpack.c.b16 %v3487, %v3483
        %v3912 = vpack.c.b16 %v3488, %v3484
        %v3913 = vpack.c.b16 %v3493, %v3489
        %v3914 = vpack.c.b16 %v3494, %v3490
        %v3915 = vpack.c.b16 %v3495, %v3491
        %v3916 = vpack.c.b16 %v3496, %v3492
        %v3917 = vpack.c.b16 %v3501, %v3497
        %v3918 = vpack.c.b16 %v3502, %v3498
        %v3919 = vpack.c.b16 %v3503, %v3499
        %v3920 = vpack.c.b16 %v3504, %v3500
        %v3921 = vpack.c.b16 %v3509, %v3505
        %v3922 = vpack.c.b16 %v3510, %v3506
        %v3923 = vpack.c.b16 %v3511, %v3507
        %v3924 = vpack.c.b16 %v3512, %v3508
        %v3925 = vpack.c.b16 %v3517, %v3513
        %v3926 = vpack.c.b16 %v3518, %v3514
        %v3927 = vpack.c.b16 %v3519, %v3515
        %v3928 = vpack.c.b16 %v3520, %v3516
        %v3929 = vpack.c.b16 %v3525, %v3521
        %v3930 = vpack.c.b16 %v3526, %v3522
        %v3931 = vpack.c.b16 %v3527, %v3523
        %v3932 = vpack.c.b16 %v3528, %v3524
        %v3933 = vpack.c.b16 %v3533, %v3529
        %v3934 = vpack.c.b16 %v3534, %v3530
        %v3935 = vpack.c.b16 %v3535, %v3531
        %v3936 = vpack.c.b16 %v3536, %v3532
        %v3937 = vpack.c.b16 %v3541, %v3537
        %v3938 = vpack.c.b16 %v3542, %v3538
        %v3939 = vpack.c.b16 %v3543, %v3539
        %v3940 = vpack.c.b16 %v3544, %v3540
        %v3941 = vpack.c.b16 %v3549, %v3545
        %v3942 = vpack.c.b16 %v3550, %v3546
        %v3943 = vpack.c.b16 %v3551, %v3547
        %v3944 = vpack.c.b16 %v3552, %v3548
        %v3945 = vpack.c.b16 %v3557, %v3553
        %v3946 = vpack.c.b16 %v3558, %v3554
        %v3947 = vpack.c.b16 %v3559, %v3555
        %v3948 = vpack.c.b16 %v3560, %v3556
        %v3949 = vpack.c.b16 %v3565, %v3561
        %v3950 = vpack.c.b16 %v3566, %v3562
        %v3951 = vpack.c.b16 %v3567, %v3563
        %v3952 = vpack.c.b16 %v3568, %v3564
        %v3953 = vpack.c.b16 %v3573, %v3569
        %v3954 = vpack.c.b16 %v3574, %v3570
        %v3955 = vpack.c.b16 %v3575, %v3571
        %v3956 = vpack.c.b16 %v3576, %v3572
        %v3957 = vpack.c.b16 %v3581, %v3577
        %v3958 = vpack.c.b16 %v3582, %v3578
        %v3959 = vpack.c.b16 %v3583, %v3579
        %v3960 = vpack.c.b16 %v3584, %v3580
        %v3961 = vpack.c.b16 %v3589, %v3585
        %v3962 = vpack.c.b16 %v3590, %v3586
        %v3963 = vpack.c.b16 %v3591, %v3587
        %v3964 = vpack.c.b16 %v3592, %v3588
        %v3965 = vpack.c.b16 %v3597, %v3593
        %v3966 = vpack.c.b16 %v3598, %v3594
        %v3967 = vpack.c.b16 %v3599, %v3595
        %v3968 = vpack.c.b16 %v3600, %v3596
        %v3969 = vpack.c.b16 %v3605, %v3601
        %v3970 = vpack.c.b16 %v3606, %v3602
        %v3971 = vpack.c.b16 %v3607, %v3603
        %v3972 = vpack.c.b16 %v3608, %v3604
        %v3973 = vpack.c.b16 %v3613, %v3609
        %v3974 = vpack.c.b16 %v3614, %v3610
        %v3975 = vpack.c.b16 %v3615, %v3611
        %v3976 = vpack.c.b16 %v3616, %v3612
        %v3977 = vpack.c.b16 %v3621, %v3617
        %v3978 = vpack.c.b16 %v3622, %v3618
        %v3979 = vpack.c.b16 %v3623, %v3619
        %v3980 = vpack.c.b16 %v3624, %v3620
        %v3981 = vpack.c.b16 %v3629, %v3625
        %v3982 = vpack.c.b16 %v3630, %v3626
        %v3983 = vpack.c.b16 %v3631, %v3627
        %v3984 = vpack.c.b16 %v3632, %v3628
        %v3985 = vpack.c.b16 %v3637, %v3633
        %v3986 = vpack.c.b16 %v3638, %v3634
        %v3987 = vpack.c.b16 %v3639, %v3635
        %v3988 = vpack.c.b16 %v3640, %v3636
        %v3989 = vpack.c.b16 %v3645, %v3641
        %v3990 = vpack.c.b16 %v3646, %v3642
        %v3991 = vpack.c.b16 %v3647, %v3643
        %v3992 = vpack.c.b16 %v3648, %v3644
        %v3993 = vpack.c.b16 %v3653, %v3649
        %v3994 = vpack.c.b16 %v3654, %v3650
        %v3995 = vpack.c.b16 %v3655, %v3651
        %v3996 = vpack.c.b16 %v3656, %v3652
        %v3997 = vpack.c.b16 %v3661, %v3657
        %v3998 = vpack.c.b16 %v3662, %v3658
        %v3999 = vpack.c.b16 %v3663, %v3659
        %v4000 = vpack.c.b16 %v3664, %v3660
        %v4001 = vpack.c.b16 %v3669, %v3665
        %v4002 = vpack.c.b16 %v3670, %v3666
        %v4003 = vpack.c.b16 %v3671, %v3667
        %v4004 = vpack.c.b16 %v3672, %v3668
        %v4005 = vpack.c.b16 %v3677, %v3673
        %v4006 = vpack.c.b16 %v3678, %v3674
        %v4007 = vpack.c.b16 %v3679, %v3675
        %v4008 = vpack.c.b16 %v3680, %v3676
        %v4009 = vpack.c.b16 %v3685, %v3681
        %v4010 = vpack.c.b16 %v3686, %v3682
        %v4011 = vpack.c.b16 %v3687, %v3683
        %v4012 = vpack.c.b16 %v3688, %v3684
        %v4013 = vpack.c.b16 %v3693, %v3689
        %v4014 = vpack.c.b16 %v3694, %v3690
        %v4015 = vpack.c.b16 %v3695, %v3691
        %v4016 = vpack.c.b16 %v3696, %v3692
        %v4017 = vpack.c.b16 %v3701, %v3697
        %v4018 = vpack.c.b16 %v3702, %v3698
        %v4019 = vpack.c.b16 %v3703, %v3699
        %v4020 = vpack.c.b16 %v3704, %v3700
        %v4021 = vpack.c.b16 %v3709, %v3705
        %v4022 = vpack.c.b16 %v3710, %v3706
        %v4023 = vpack.c.b16 %v3711, %v3707
        %v4024 = vpack.c.b16 %v3712, %v3708
        %v4025 = vpack.c.b16 %v3717, %v3713
        %v4026 = vpack.c.b16 %v3718, %v3714
        %v4027 = vpack.c.b16 %v3719, %v3715
        %v4028 = vpack.c.b16 %v3720, %v3716
        %v4029 = vpack.c.b16 %v3725, %v3721
        %v4030 = vpack.c.b16 %v3726, %v3722
        %v4031 = vpack.c.b16 %v3727, %v3723
        %v4032 = vpack.c.b16 %v3728, %v3724
        %v4033 = vpack.c.b16 %v3733, %v3729
        %v4034 = vpack.c.b16 %v3734, %v3730
        %v4035 = vpack.c.b16 %v3735, %v3731
        %v4036 = vpack.c.b16 %v3736, %v3732
        %v4037 = vpack.c.b16 %v3741, %v3737
        %v4038 = vpack.c.b16 %v3742, %v3738
        %v4039 = vpack.c.b16 %v3743, %v3739
        %v4040 = vpack.c.b16 %v3744, %v3740
        %v4041 = vpack.c.b16 %v3749, %v3745
        %v4042 = vpack.c.b16 %v3750, %v3746
        %v4043 = vpack.c.b16 %v3751, %v3747
        %v4044 = vpack.c.b16 %v3752, %v3748
        %v4045 = vpack.c.b16 %v3757, %v3753
        %v4046 = vpack.c.b16 %v3758, %v3754
        %v4047 = vpack.c.b16 %v3759, %v3755
        %v4048 = vpack.c.b16 %v3760, %v3756
        %v4049 = vpack.c.b16 %v3765, %v3761
        %v4050 = vpack.c.b16 %v3766, %v3762
        %v4051 = vpack.c.b16 %v3767, %v3763
        %v4052 = vpack.c.b16 %v3768, %v3764
        %v4053 = vpack.c.b16 %v3773, %v3769
        %v4054 = vpack.c.b16 %v3774, %v3770
        %v4055 = vpack.c.b16 %v3775, %v3771
        %v4056 = vpack.c.b16 %v3776, %v3772
        %v4057 = vpack.c.b16 %v3781, %v3777
        %v4058 = vpack.c.b16 %v3782, %v3778
        %v4059 = vpack.c.b16 %v3783, %v3779
        %v4060 = vpack.c.b16 %v3784, %v3780
        %v4061 = vpack.c.b16 %v3789, %v3785
        %v4062 = vpack.c.b16 %v3790, %v3786
        %v4063 = vpack.c.b16 %v3791, %v3787
        %v4064 = vpack.c.b16 %v3792, %v3788
        %v4065 = vpack.c.b16 %v3797, %v3793
        %v4066 = vpack.c.b16 %v3798, %v3794
        %v4067 = vpack.c.b16 %v3799, %v3795
        %v4068 = vpack.c.b16 %v3800, %v3796
        %v4069 = vpack.c.b16 %v3805, %v3801
        %v4070 = vpack.c.b16 %v3806, %v3802
        %v4071 = vpack.c.b16 %v3807, %v3803
        %v4072 = vpack.c.b16 %v3808, %v3804
        %v4073 = vpack.c.b16 %v3813, %v3809
        %v4074 = vpack.c.b16 %v3814, %v3810
        %v4075 = vpack.c.b16 %v3815, %v3811
        %v4076 = vpack.c.b16 %v3816, %v3812
        %v4077 = vpack.c.b16 %v3821, %v3817
        %v4078 = vpack.c.b16 %v3822, %v3818
        %v4079 = vpack.c.b16 %v3823, %v3819
        %v4080 = vpack.c.b16 %v3824, %v3820
        %v4081 = vpack.c.b16 %v3829, %v3825
        %v4082 = vpack.c.b16 %v3830, %v3826
        %v4083 = vpack.c.b16 %v3831, %v3827
        %v4084 = vpack.c.b16 %v3832, %v3828
        %v4085 = vpack.c.b16 %v3833, %v3833
        %v4086 = vpack.c.b16 %v3834, %v3834
        %v4087 = vpack.c.b16 %v3835, %v3835
        %v4088 = vpack.c.b16 %v3836, %v3836
        %vm4337 = vcmask 850944
        %v4339 = vsel %vm4337, %v3079, 0
        %vm4341 = vcmask 1043456
        %v4343 = vsel %vm4341, %v4085, 0
        %v4346 = vsel %vm4341, %v4086, 0
        %v4349 = vsel %vm4341, %v4087, 0
        %v4352 = vsel %vm4341, %v4088, 0
        %4354 = vmatprep.subr.bf16.mxu0 %v3866
        %4355 = vmatpush1.bf16.msra.mxu0 %v3865
        %4356 = vmatprep.subr.bf16.mxu0 %v3862
        %4357 = vmatpush1.bf16.msra.mxu0 %v3861
        %4358 = vmatprep.subr.bf16.mxu0 %v3858
        %4359 = vmatpush1.bf16.msra.mxu0 %v3857
        %4360 = vmatprep.subr.bf16.mxu0 %v3854
        %4361 = vmatpush1.bf16.msra.mxu0 %v3853
        %4362 = vmatprep.subr.bf16.mxu0 %v3850
        %4363 = vmatpush1.bf16.msra.mxu0 %v3849
        %4364 = vmatprep.subr.bf16.mxu0 %v3846
        %4365 = vmatpush1.bf16.msra.mxu0 %v3845
        %4366 = vmatprep.subr.bf16.mxu0 %v3842
        %4367 = vmatpush1.bf16.msra.mxu0 %v3841
        %4368 = vmatprep.subr.bf16.mxu0 %v3838
        %4369 = vmatpush1.bf16.msra.mxu0 %v3837
        %4370 = vmatprep.subr.bf16.mxu0 %v3898
        %4371 = vmatpush2.bf16.msra.mxu0 %v3897
        %4372 = vmatprep.subr.bf16.mxu0 %v3894
        %4373 = vmatpush2.bf16.msra.mxu0 %v3893
        %4374 = vmatprep.subr.bf16.mxu0 %v3890
        %4375 = vmatpush2.bf16.msra.mxu0 %v3889
        %4376 = vmatprep.subr.bf16.mxu0 %v3886
        %4377 = vmatpush2.bf16.msra.mxu0 %v3885
        %4378 = vmatprep.subr.bf16.mxu0 %v3882
        %4379 = vmatpush2.bf16.msra.mxu0 %v3881
        %4380 = vmatprep.subr.bf16.mxu0 %v3878
        %4381 = vmatpush2.bf16.msra.mxu0 %v3877
        %4382 = vmatprep.subr.bf16.mxu0 %v3874
        %4383 = vmatpush2.bf16.msra.mxu0 %v3873
        %4384 = vmatprep.subr.bf16.mxu0 %v3870
        %4385 = vmatpush2.bf16.msra.mxu0 %v3869
        %4386 = vmatprep.mubr.bf16.mxu0 %v3068
        %4387 = vmatmul.mubr.bf16.gmra.mxu0 %v3054
        %v4388 = vpop.f32.mrf.mxu0
        %v4389 = vadd.f32 %v3013, %v4388
        %v4390 = vpop.f32.mrf.mxu0
        %v4391 = vadd.f32 %v3017, %v4390
        %v4392 = vpop.f32.mrf.mxu0
        %v4393 = vpop.f32.mrf.mxu0
        %4394 = vdwg.mxu0
        %4395 = vmatprep.subr.bf16.mxu0 %v3930
        %4396 = vmatpush1.bf16.msra.mxu0 %v3929
        %4397 = vmatprep.subr.bf16.mxu0 %v3926
        %4398 = vmatpush1.bf16.msra.mxu0 %v3925
        %4399 = vmatprep.subr.bf16.mxu0 %v3922
        %4400 = vmatpush1.bf16.msra.mxu0 %v3921
        %4401 = vmatprep.subr.bf16.mxu0 %v3918
        %4402 = vmatpush1.bf16.msra.mxu0 %v3917
        %4403 = vmatprep.subr.bf16.mxu0 %v3914
        %4404 = vmatpush1.bf16.msra.mxu0 %v3913
        %4405 = vmatprep.subr.bf16.mxu0 %v3910
        %4406 = vmatpush1.bf16.msra.mxu0 %v3909
        %4407 = vmatprep.subr.bf16.mxu0 %v3906
        %4408 = vmatpush1.bf16.msra.mxu0 %v3905
        %4409 = vmatprep.subr.bf16.mxu0 %v3902
        %4410 = vmatpush1.bf16.msra.mxu0 %v3901
        %4411 = vmatprep.subr.bf16.mxu0 %v3962
        %4412 = vmatpush2.bf16.msra.mxu0 %v3961
        %4413 = vmatprep.subr.bf16.mxu0 %v3958
        %4414 = vmatpush2.bf16.msra.mxu0 %v3957
        %4415 = vmatprep.subr.bf16.mxu0 %v3954
        %4416 = vmatpush2.bf16.msra.mxu0 %v3953
        %4417 = vmatprep.subr.bf16.mxu0 %v3950
        %4418 = vmatpush2.bf16.msra.mxu0 %v3949
        %4419 = vmatprep.subr.bf16.mxu0 %v3946
        %4420 = vmatpush2.bf16.msra.mxu0 %v3945
        %4421 = vmatprep.subr.bf16.mxu0 %v3942
        %4422 = vmatpush2.bf16.msra.mxu0 %v3941
        %4423 = vmatprep.subr.bf16.mxu0 %v3938
        %4424 = vmatpush2.bf16.msra.mxu0 %v3937
        %4425 = vmatprep.subr.bf16.mxu0 %v3934
        %4426 = vmatpush2.bf16.msra.mxu0 %v3933
        %4427 = vmatprep.mubr.bf16.mxu0 %v3078
        %4428 = vmatmul.mubr.bf16.gmra.mxu0 %v3076
        %v4429 = vpop.f32.mrf.mxu0
        %v4430 = vadd.f32 %v4389, %v4429
        %v4431 = vpop.f32.mrf.mxu0
        %v4432 = vadd.f32 %v4391, %v4431
        %v4433 = vpop.f32.mrf.mxu0
        %v4434 = vpop.f32.mrf.mxu0
        %4435 = vdwg.mxu0
        %4436 = vmatprep.subr.bf16.mxu0 %v3994
        %4437 = vmatpush1.bf16.msra.mxu0 %v3993
        %4438 = vmatprep.subr.bf16.mxu0 %v3990
        %4439 = vmatpush1.bf16.msra.mxu0 %v3989
        %4440 = vmatprep.subr.bf16.mxu0 %v3986
        %4441 = vmatpush1.bf16.msra.mxu0 %v3985
        %4442 = vmatprep.subr.bf16.mxu0 %v3982
        %4443 = vmatpush1.bf16.msra.mxu0 %v3981
        %4444 = vmatprep.subr.bf16.mxu0 %v3978
        %4445 = vmatpush1.bf16.msra.mxu0 %v3977
        %4446 = vmatprep.subr.bf16.mxu0 %v3974
        %4447 = vmatpush1.bf16.msra.mxu0 %v3973
        %4448 = vmatprep.subr.bf16.mxu0 %v3970
        %4449 = vmatpush1.bf16.msra.mxu0 %v3969
        %4450 = vmatprep.subr.bf16.mxu0 %v3966
        %4451 = vmatpush1.bf16.msra.mxu0 %v3965
        %4452 = vmatprep.subr.bf16.mxu0 %v4026
        %4453 = vmatpush2.bf16.msra.mxu0 %v4025
        %4454 = vmatprep.subr.bf16.mxu0 %v4022
        %4455 = vmatpush2.bf16.msra.mxu0 %v4021
        %4456 = vmatprep.subr.bf16.mxu0 %v4018
        %4457 = vmatpush2.bf16.msra.mxu0 %v4017
        %4458 = vmatprep.subr.bf16.mxu0 %v4014
        %4459 = vmatpush2.bf16.msra.mxu0 %v4013
        %4460 = vmatprep.subr.bf16.mxu0 %v4010
        %4461 = vmatpush2.bf16.msra.mxu0 %v4009
        %4462 = vmatprep.subr.bf16.mxu0 %v4006
        %4463 = vmatpush2.bf16.msra.mxu0 %v4005
        %4464 = vmatprep.subr.bf16.mxu0 %v4002
        %4465 = vmatpush2.bf16.msra.mxu0 %v4001
        %4466 = vmatprep.subr.bf16.mxu0 %v3998
        %4467 = vmatpush2.bf16.msra.mxu0 %v3997
        %4468 = vmatprep.mubr.bf16.mxu0 %v3075
        %4469 = vmatmul.mubr.bf16.gmra.mxu0 %v3061
        %v4470 = vpop.f32.mrf.mxu0
        %v4471 = vadd.f32 %v4430, %v4470
        %v4472 = vpop.f32.mrf.mxu0
        %v4473 = vadd.f32 %v4432, %v4472
        %v4474 = vpop.f32.mrf.mxu0
        %v4475 = vpop.f32.mrf.mxu0
        %4476 = vdwg.mxu0
        %4477 = vmatprep.subr.bf16.mxu0 %v4058
        %4478 = vmatpush1.bf16.msra.mxu0 %v4057
        %4479 = vmatprep.subr.bf16.mxu0 %v4054
        %4480 = vmatpush1.bf16.msra.mxu0 %v4053
        %4481 = vmatprep.subr.bf16.mxu0 %v4050
        %4482 = vmatpush1.bf16.msra.mxu0 %v4049
        %4483 = vmatprep.subr.bf16.mxu0 %v4046
        %4484 = vmatpush1.bf16.msra.mxu0 %v4045
        %4485 = vmatprep.subr.bf16.mxu0 %v4042
        %4486 = vmatpush1.bf16.msra.mxu0 %v4041
        %4487 = vmatprep.subr.bf16.mxu0 %v4038
        %4488 = vmatpush1.bf16.msra.mxu0 %v4037
        %4489 = vmatprep.subr.bf16.mxu0 %v4034
        %4490 = vmatpush1.bf16.msra.mxu0 %v4033
        %4491 = vmatprep.subr.bf16.mxu0 %v4030
        %4492 = vmatpush1.bf16.msra.mxu0 %v4029
        %4493 = vmatprep.subr.bf16.mxu0 0
        %4494 = vmatpush2.bf16.msra.mxu0 0
        %4495 = vmatprep.subr.bf16.mxu0 %v4346
        %4496 = vmatpush2.bf16.msra.mxu0 %v4343
        %4497 = vmatprep.subr.bf16.mxu0 %v4082
        %4498 = vmatpush2.bf16.msra.mxu0 %v4081
        %4499 = vmatprep.subr.bf16.mxu0 %v4078
        %4500 = vmatpush2.bf16.msra.mxu0 %v4077
        %4501 = vmatprep.subr.bf16.mxu0 %v4074
        %4502 = vmatpush2.bf16.msra.mxu0 %v4073
        %4503 = vmatprep.subr.bf16.mxu0 %v4070
        %4504 = vmatpush2.bf16.msra.mxu0 %v4069
        %4505 = vmatprep.subr.bf16.mxu0 %v4066
        %4506 = vmatpush2.bf16.msra.mxu0 %v4065
        %4507 = vmatprep.subr.bf16.mxu0 %v4062
        %4508 = vmatpush2.bf16.msra.mxu0 %v4061
        %4509 = vmatprep.mubr.bf16.mxu0 %v4339
        %4510 = vmatmul.mubr.bf16.gmra.mxu0 %v3077
        %v4511 = vpop.f32.mrf.mxu0
        %v4512 = vadd.f32 %v4471, %v4511
        %v4513 = vpop.f32.mrf.mxu0
        %v4514 = vadd.f32 %v4473, %v4513
        %v4515 = vpop.f32.mrf.mxu0
        %v4516 = vpop.f32.mrf.mxu0
        %4517 = vdwg.mxu0
        %4518 = vmatprep.subr.bf16.mxu0 %v3868
        %4519 = vmatpush1.bf16.msra.mxu0 %v3867
        %4520 = vmatprep.subr.bf16.mxu0 %v3864
        %4521 = vmatpush1.bf16.msra.mxu0 %v3863
        %4522 = vmatprep.subr.bf16.mxu0 %v3860
        %4523 = vmatpush1.bf16.msra.mxu0 %v3859
        %4524 = vmatprep.subr.bf16.mxu0 %v3856
        %4525 = vmatpush1.bf16.msra.mxu0 %v3855
        %4526 = vmatprep.subr.bf16.mxu0 %v3852
        %4527 = vmatpush1.bf16.msra.mxu0 %v3851
        %4528 = vmatprep.subr.bf16.mxu0 %v3848
        %4529 = vmatpush1.bf16.msra.mxu0 %v3847
        %4530 = vmatprep.subr.bf16.mxu0 %v3844
        %4531 = vmatpush1.bf16.msra.mxu0 %v3843
        %4532 = vmatprep.subr.bf16.mxu0 %v3840
        %4533 = vmatpush1.bf16.msra.mxu0 %v3839
        %4534 = vmatprep.subr.bf16.mxu0 %v3900
        %4535 = vmatpush2.bf16.msra.mxu0 %v3899
        %4536 = vmatprep.subr.bf16.mxu0 %v3896
        %4537 = vmatpush2.bf16.msra.mxu0 %v3895
        %4538 = vmatprep.subr.bf16.mxu0 %v3892
        %4539 = vmatpush2.bf16.msra.mxu0 %v3891
        %4540 = vmatprep.subr.bf16.mxu0 %v3888
        %4541 = vmatpush2.bf16.msra.mxu0 %v3887
        %4542 = vmatprep.subr.bf16.mxu0 %v3884
        %4543 = vmatpush2.bf16.msra.mxu0 %v3883
        %4544 = vmatprep.subr.bf16.mxu0 %v3880
        %4545 = vmatpush2.bf16.msra.mxu0 %v3879
        %4546 = vmatprep.subr.bf16.mxu0 %v3876
        %4547 = vmatpush2.bf16.msra.mxu0 %v3875
        %4548 = vmatprep.subr.bf16.mxu0 %v3872
        %4549 = vmatpush2.bf16.msra.mxu0 %v3871
        %4550 = vmatprep.mubr.bf16.mxu0 %v3068
        %4551 = vmatmul.mubr.bf16.gmra.mxu0 %v3054
        %v4552 = vpop.f32.mrf.mxu0
        %v4553 = vadd.f32 %v3021, %v4552
        %v4554 = vpop.f32.mrf.mxu0
        %v4555 = vadd.f32 %v3025, %v4554
        %v4556 = vpop.f32.mrf.mxu0
        %v4557 = vpop.f32.mrf.mxu0
        %4558 = vdwg.mxu0
        %4559 = vmatprep.subr.bf16.mxu0 %v3932
        %4560 = vmatpush1.bf16.msra.mxu0 %v3931
        %4561 = vmatprep.subr.bf16.mxu0 %v3928
        %4562 = vmatpush1.bf16.msra.mxu0 %v3927
        %4563 = vmatprep.subr.bf16.mxu0 %v3924
        %4564 = vmatpush1.bf16.msra.mxu0 %v3923
        %4565 = vmatprep.subr.bf16.mxu0 %v3920
        %4566 = vmatpush1.bf16.msra.mxu0 %v3919
        %4567 = vmatprep.subr.bf16.mxu0 %v3916
        %4568 = vmatpush1.bf16.msra.mxu0 %v3915
        %4569 = vmatprep.subr.bf16.mxu0 %v3912
        %4570 = vmatpush1.bf16.msra.mxu0 %v3911
        %4571 = vmatprep.subr.bf16.mxu0 %v3908
        %4572 = vmatpush1.bf16.msra.mxu0 %v3907
        %4573 = vmatprep.subr.bf16.mxu0 %v3904
        %4574 = vmatpush1.bf16.msra.mxu0 %v3903
        %4575 = vmatprep.subr.bf16.mxu0 %v3964
        %4576 = vmatpush2.bf16.msra.mxu0 %v3963
        %4577 = vmatprep.subr.bf16.mxu0 %v3960
        %4578 = vmatpush2.bf16.msra.mxu0 %v3959
        %4579 = vmatprep.subr.bf16.mxu0 %v3956
        %4580 = vmatpush2.bf16.msra.mxu0 %v3955
        %4581 = vmatprep.subr.bf16.mxu0 %v3952
        %4582 = vmatpush2.bf16.msra.mxu0 %v3951
        %4583 = vmatprep.subr.bf16.mxu0 %v3948
        %4584 = vmatpush2.bf16.msra.mxu0 %v3947
        %4585 = vmatprep.subr.bf16.mxu0 %v3944
        %4586 = vmatpush2.bf16.msra.mxu0 %v3943
        %4587 = vmatprep.subr.bf16.mxu0 %v3940
        %4588 = vmatpush2.bf16.msra.mxu0 %v3939
        %4589 = vmatprep.subr.bf16.mxu0 %v3936
        %4590 = vmatpush2.bf16.msra.mxu0 %v3935
        %4591 = vmatprep.mubr.bf16.mxu0 %v3078
        %4592 = vmatmul.mubr.bf16.gmra.mxu0 %v3076
        %v4593 = vpop.f32.mrf.mxu0
        %v4594 = vadd.f32 %v4553, %v4593
        %v4595 = vpop.f32.mrf.mxu0
        %v4596 = vadd.f32 %v4555, %v4595
        %v4597 = vpop.f32.mrf.mxu0
        %v4598 = vpop.f32.mrf.mxu0
        %4599 = vdwg.mxu0
        %4600 = vmatprep.subr.bf16.mxu0 %v3996
        %4601 = vmatpush1.bf16.msra.mxu0 %v3995
        %4602 = vmatprep.subr.bf16.mxu0 %v3992
        %4603 = vmatpush1.bf16.msra.mxu0 %v3991
        %4604 = vmatprep.subr.bf16.mxu0 %v3988
        %4605 = vmatpush1.bf16.msra.mxu0 %v3987
        %4606 = vmatprep.subr.bf16.mxu0 %v3984
        %4607 = vmatpush1.bf16.msra.mxu0 %v3983
        %4608 = vmatprep.subr.bf16.mxu0 %v3980
        %4609 = vmatpush1.bf16.msra.mxu0 %v3979
        %4610 = vmatprep.subr.bf16.mxu0 %v3976
        %4611 = vmatpush1.bf16.msra.mxu0 %v3975
        %4612 = vmatprep.subr.bf16.mxu0 %v3972
        %4613 = vmatpush1.bf16.msra.mxu0 %v3971
        %4614 = vmatprep.subr.bf16.mxu0 %v3968
        %4615 = vmatpush1.bf16.msra.mxu0 %v3967
        %4616 = vmatprep.subr.bf16.mxu0 %v4028
        %4617 = vmatpush2.bf16.msra.mxu0 %v4027
        %4618 = vmatprep.subr.bf16.mxu0 %v4024
        %4619 = vmatpush2.bf16.msra.mxu0 %v4023
        %4620 = vmatprep.subr.bf16.mxu0 %v4020
        %4621 = vmatpush2.bf16.msra.mxu0 %v4019
        %4622 = vmatprep.subr.bf16.mxu0 %v4016
        %4623 = vmatpush2.bf16.msra.mxu0 %v4015
        %4624 = vmatprep.subr.bf16.mxu0 %v4012
        %4625 = vmatpush2.bf16.msra.mxu0 %v4011
        %4626 = vmatprep.subr.bf16.mxu0 %v4008
        %4627 = vmatpush2.bf16.msra.mxu0 %v4007
        %4628 = vmatprep.subr.bf16.mxu0 %v4004
        %4629 = vmatpush2.bf16.msra.mxu0 %v4003
        %4630 = vmatprep.subr.bf16.mxu0 %v4000
        %4631 = vmatpush2.bf16.msra.mxu0 %v3999
        %4632 = vmatprep.mubr.bf16.mxu0 %v3075
        %4633 = vmatmul.mubr.bf16.gmra.mxu0 %v3061
        %v4634 = vpop.f32.mrf.mxu0
        %v4635 = vadd.f32 %v4594, %v4634
        %v4636 = vpop.f32.mrf.mxu0
        %v4637 = vadd.f32 %v4596, %v4636
        %v4638 = vpop.f32.mrf.mxu0
        %v4639 = vpop.f32.mrf.mxu0
        %4640 = vdwg.mxu0
        %4641 = vmatprep.subr.bf16.mxu0 %v4060
        %4642 = vmatpush1.bf16.msra.mxu0 %v4059
        %4643 = vmatprep.subr.bf16.mxu0 %v4056
        %4644 = vmatpush1.bf16.msra.mxu0 %v4055
        %4645 = vmatprep.subr.bf16.mxu0 %v4052
        %4646 = vmatpush1.bf16.msra.mxu0 %v4051
        %4647 = vmatprep.subr.bf16.mxu0 %v4048
        %4648 = vmatpush1.bf16.msra.mxu0 %v4047
        %4649 = vmatprep.subr.bf16.mxu0 %v4044
        %4650 = vmatpush1.bf16.msra.mxu0 %v4043
        %4651 = vmatprep.subr.bf16.mxu0 %v4040
        %4652 = vmatpush1.bf16.msra.mxu0 %v4039
        %4653 = vmatprep.subr.bf16.mxu0 %v4036
        %4654 = vmatpush1.bf16.msra.mxu0 %v4035
        %4655 = vmatprep.subr.bf16.mxu0 %v4032
        %4656 = vmatpush1.bf16.msra.mxu0 %v4031
        %4657 = vmatprep.subr.bf16.mxu0 0
        %4658 = vmatpush2.bf16.msra.mxu0 0
        %4659 = vmatprep.subr.bf16.mxu0 %v4352
        %4660 = vmatpush2.bf16.msra.mxu0 %v4349
        %4661 = vmatprep.subr.bf16.mxu0 %v4084
        %4662 = vmatpush2.bf16.msra.mxu0 %v4083
        %4663 = vmatprep.subr.bf16.mxu0 %v4080
        %4664 = vmatpush2.bf16.msra.mxu0 %v4079
        %4665 = vmatprep.subr.bf16.mxu0 %v4076
        %4666 = vmatpush2.bf16.msra.mxu0 %v4075
        %4667 = vmatprep.subr.bf16.mxu0 %v4072
        %4668 = vmatpush2.bf16.msra.mxu0 %v4071
        %4669 = vmatprep.subr.bf16.mxu0 %v4068
        %4670 = vmatpush2.bf16.msra.mxu0 %v4067
        %4671 = vmatprep.subr.bf16.mxu0 %v4064
        %4672 = vmatpush2.bf16.msra.mxu0 %v4063
        %4673 = vmatprep.mubr.bf16.mxu0 %v4339
        %4674 = vmatmul.mubr.bf16.gmra.mxu0 %v3077
        %v4675 = vpop.f32.mrf.mxu0
        %v4676 = vadd.f32 %v4635, %v4675
        %v4677 = vpop.f32.mrf.mxu0
        %v4678 = vadd.f32 %v4637, %v4677
        %v4679 = vpop.f32.mrf.mxu0
        %v4680 = vpop.f32.mrf.mxu0
        %4681 = vdwg.mxu0
        %v4682 = vmax.f32 %v4512, 0.0
        %v4683 = vmax.f32 %v4514, 0.0
        %v4684 = vmax.f32 %v4676, 0.0
        %v4685 = vmax.f32 %v4678, 0.0
        %v4686 = vpack.c.bf16 %v2753, %v2753
        %v4687 = vpack.c.bf16 %v2754, %v2754
        %v4688 = vpack.c.bf16 %v2755, %v2755
        %v4689 = vpack.c.bf16 %v2756, %v2756
        %v4690 = vpack.c.bf16 %v4682, %v4682
        %v4691 = vpack.c.bf16 %v4683, %v4683
        %v4692 = vpack.c.bf16 %v4684, %v4684
        %v4693 = vpack.c.bf16 %v4685, %v4685
        %v4694 = vld [vmem:[%s680] sm:$0xff]
        %v4695 = vld [vmem:[%s680 + $0x8] sm:$0xff]
        %v4696 = vld [vmem:[%s680 + $0x10] sm:$0xff]
        %v4697 = vld [vmem:[%s680 + $0x18] sm:$0xff]
        %v4698 = vld [vmem:[%s680 + $0x20] sm:$0xff]
        %v4699 = vld [vmem:[%s680 + $0x28] sm:$0xff]
        %v4700 = vld [vmem:[%s680 + $0x30] sm:$0xff]
        %v4701 = vld [vmem:[%s680 + $0x38] sm:$0xff]
        %v4702 = vld [vmem:[%s680 + $0x40] sm:$0xff]
        %v4703 = vld [vmem:[%s680 + $0x48] sm:$0xff]
        %v4704 = vld [vmem:[%s680 + $0x50] sm:$0xff]
        %v4705 = vld [vmem:[%s680 + $0x58] sm:$0xff]
        %v4706 = vld [vmem:[%s680 + $0x60] sm:$0xff]
        %v4707 = vld [vmem:[%s680 + $0x68] sm:$0xff]
        %v4708 = vld [vmem:[%s680 + $0x70] sm:$0xff]
        %v4709 = vld [vmem:[%s680 + $0x78] sm:$0xff]
        %v4710 = vld [vmem:[%s680 + $0x80] sm:$0xff]
        %v4711 = vld [vmem:[%s680 + $0x88] sm:$0xff]
        %v4712 = vld [vmem:[%s680 + $0x90] sm:$0xff]
        %v4713 = vld [vmem:[%s680 + $0x98] sm:$0xff]
        %v4714 = vld [vmem:[%s680 + $0xa0] sm:$0xff]
        %v4715 = vld [vmem:[%s680 + $0xa8] sm:$0xff]
        %v4716 = vld [vmem:[%s680 + $0xb0] sm:$0xff]
        %v4717 = vld [vmem:[%s680 + $0xb8] sm:$0xff]
        %v4718 = vld [vmem:[%s680 + $0xc0] sm:$0xff]
        %v4719 = vld [vmem:[%s680 + $0xc8] sm:$0xff]
        %v4720 = vld [vmem:[%s680 + $0xd0] sm:$0xff]
        %v4721 = vld [vmem:[%s680 + $0xd8] sm:$0xff]
        %v4722 = vld [vmem:[%s680 + $0xe0] sm:$0xff]
        %v4723 = vld [vmem:[%s680 + $0xe8] sm:$0xff]
        %v4724 = vld [vmem:[%s680 + $0xf0] sm:$0xff]
        %v4725 = vld [vmem:[%s680 + $0xf8] sm:$0xff]
        %v4726 = vld [vmem:[%s680 + $0x100] sm:$0xff]
        %v4727 = vld [vmem:[%s680 + $0x108] sm:$0xff]
        %v4728 = vld [vmem:[%s680 + $0x110] sm:$0xff]
        %v4729 = vld [vmem:[%s680 + $0x118] sm:$0xff]
        %v4730 = vld [vmem:[%s680 + $0x120] sm:$0xff]
        %v4731 = vld [vmem:[%s680 + $0x128] sm:$0xff]
        %v4732 = vld [vmem:[%s680 + $0x130] sm:$0xff]
        %v4733 = vld [vmem:[%s680 + $0x138] sm:$0xff]
        %v4734 = vld [vmem:[%s680 + $0x140] sm:$0xff]
        %v4735 = vld [vmem:[%s680 + $0x148] sm:$0xff]
        %v4736 = vld [vmem:[%s680 + $0x150] sm:$0xff]
        %v4737 = vld [vmem:[%s680 + $0x158] sm:$0xff]
        %v4738 = vld [vmem:[%s680 + $0x160] sm:$0xff]
        %v4739 = vld [vmem:[%s680 + $0x168] sm:$0xff]
        %v4740 = vld [vmem:[%s680 + $0x170] sm:$0xff]
        %v4741 = vld [vmem:[%s680 + $0x178] sm:$0xff]
        %v4742 = vld [vmem:[%s680 + $0x180] sm:$0xff]
        %v4743 = vld [vmem:[%s680 + $0x188] sm:$0xff]
        %v4744 = vld [vmem:[%s680 + $0x190] sm:$0xff]
        %v4745 = vld [vmem:[%s680 + $0x198] sm:$0xff]
        %v4746 = vld [vmem:[%s680 + $0x1a0] sm:$0xff]
        %v4747 = vld [vmem:[%s680 + $0x1a8] sm:$0xff]
        %v4748 = vld [vmem:[%s680 + $0x1b0] sm:$0xff]
        %v4749 = vld [vmem:[%s680 + $0x1b8] sm:$0xff]
        %v4750 = vld [vmem:[%s680 + $0x1c0] sm:$0xff]
        %v4751 = vld [vmem:[%s680 + $0x1c8] sm:$0xff]
        %v4752 = vld [vmem:[%s680 + $0x1d0] sm:$0xff]
        %v4753 = vld [vmem:[%s680 + $0x1d8] sm:$0xff]
        %v4754 = vld [vmem:[%s680 + $0x1e0] sm:$0xff]
        %v4755 = vld [vmem:[%s680 + $0x1e8] sm:$0xff]
        %v4756 = vld [vmem:[%s680 + $0x1f0] sm:$0xff]
        %v4757 = vld [vmem:[%s680 + $0x1f8] sm:$0xff]
        %v4758 = vld [vmem:[%s680 + $0x200] sm:$0xff]
        %v4759 = vld [vmem:[%s680 + $0x208] sm:$0xff]
        %v4760 = vld [vmem:[%s680 + $0x210] sm:$0xff]
        %v4761 = vld [vmem:[%s680 + $0x218] sm:$0xff]
        %v4762 = vld [vmem:[%s680 + $0x220] sm:$0xff]
        %v4763 = vld [vmem:[%s680 + $0x228] sm:$0xff]
        %v4764 = vld [vmem:[%s680 + $0x230] sm:$0xff]
        %v4765 = vld [vmem:[%s680 + $0x238] sm:$0xff]
        %v4766 = vld [vmem:[%s680 + $0x240] sm:$0xff]
        %v4767 = vld [vmem:[%s680 + $0x248] sm:$0xff]
        %v4768 = vld [vmem:[%s680 + $0x250] sm:$0xff]
        %v4769 = vld [vmem:[%s680 + $0x258] sm:$0xff]
        %v4770 = vld [vmem:[%s680 + $0x260] sm:$0xff]
        %v4771 = vld [vmem:[%s680 + $0x268] sm:$0xff]
        %v4772 = vld [vmem:[%s680 + $0x270] sm:$0xff]
        %v4773 = vld [vmem:[%s680 + $0x278] sm:$0xff]
        %v4774 = vld [vmem:[%s680 + $0x280] sm:$0xff]
        %v4775 = vld [vmem:[%s680 + $0x288] sm:$0xff]
        %v4776 = vld [vmem:[%s680 + $0x290] sm:$0xff]
        %v4777 = vld [vmem:[%s680 + $0x298] sm:$0xff]
        %v4778 = vld [vmem:[%s680 + $0x2a0] sm:$0xff]
        %v4779 = vld [vmem:[%s680 + $0x2a8] sm:$0xff]
        %v4780 = vld [vmem:[%s680 + $0x2b0] sm:$0xff]
        %v4781 = vld [vmem:[%s680 + $0x2b8] sm:$0xff]
        %v4782 = vld [vmem:[%s680 + $0x2c0] sm:$0xff]
        %v4783 = vld [vmem:[%s680 + $0x2c8] sm:$0xff]
        %v4784 = vld [vmem:[%s680 + $0x2d0] sm:$0xff]
        %v4785 = vld [vmem:[%s680 + $0x2d8] sm:$0xff]
        %v4786 = vld [vmem:[%s680 + $0x2e0] sm:$0xff]
        %v4787 = vld [vmem:[%s680 + $0x2e8] sm:$0xff]
        %v4788 = vld [vmem:[%s680 + $0x2f0] sm:$0xff]
        %v4789 = vld [vmem:[%s680 + $0x2f8] sm:$0xff]
        %v4790 = vld [vmem:[%s680 + $0x300] sm:$0xff]
        %v4791 = vld [vmem:[%s680 + $0x308] sm:$0xff]
        %v4792 = vld [vmem:[%s680 + $0x310] sm:$0xff]
        %v4793 = vld [vmem:[%s680 + $0x318] sm:$0xff]
        %v4794 = vld [vmem:[%s680 + $0x320] sm:$0xff]
        %v4795 = vld [vmem:[%s680 + $0x328] sm:$0xff]
        %v4796 = vld [vmem:[%s680 + $0x330] sm:$0xff]
        %v4797 = vld [vmem:[%s680 + $0x338] sm:$0xff]
        %v4798 = vld [vmem:[%s680 + $0x340] sm:$0xff]
        %v4799 = vld [vmem:[%s680 + $0x348] sm:$0xff]
        %v4800 = vld [vmem:[%s680 + $0x350] sm:$0xff]
        %v4801 = vld [vmem:[%s680 + $0x358] sm:$0xff]
        %v4802 = vld [vmem:[%s680 + $0x360] sm:$0xff]
        %v4803 = vld [vmem:[%s680 + $0x368] sm:$0xff]
        %v4804 = vld [vmem:[%s680 + $0x370] sm:$0xff]
        %v4805 = vld [vmem:[%s680 + $0x378] sm:$0xff]
        %v4806 = vld [vmem:[%s680 + $0x380] sm:$0xff]
        %v4807 = vld [vmem:[%s680 + $0x388] sm:$0xff]
        %v4808 = vld [vmem:[%s680 + $0x390] sm:$0xff]
        %v4809 = vld [vmem:[%s680 + $0x398] sm:$0xff]
        %v4810 = vld [vmem:[%s680 + $0x3a0] sm:$0xff]
        %v4811 = vld [vmem:[%s680 + $0x3a8] sm:$0xff]
        %v4812 = vld [vmem:[%s680 + $0x3b0] sm:$0xff]
        %v4813 = vld [vmem:[%s680 + $0x3b8] sm:$0xff]
        %v4814 = vld [vmem:[%s680 + $0x3c0] sm:$0xff]
        %v4815 = vld [vmem:[%s680 + $0x3c8] sm:$0xff]
        %v4816 = vld [vmem:[%s680 + $0x3d0] sm:$0xff]
        %v4817 = vld [vmem:[%s680 + $0x3d8] sm:$0xff]
        %v4818 = vld [vmem:[%s680 + $0x3e0] sm:$0xff]
        %v4819 = vld [vmem:[%s680 + $0x3e8] sm:$0xff]
        %v4820 = vld [vmem:[%s680 + $0x3f0] sm:$0xff]
        %v4821 = vld [vmem:[%s680 + $0x3f8] sm:$0xff]
        %v4822 = vld [vmem:[%s680 + $0x400] sm:$0xff]
        %v4823 = vld [vmem:[%s680 + $0x408] sm:$0xff]
        %v4824 = vld [vmem:[%s680 + $0x410] sm:$0xff]
        %v4825 = vld [vmem:[%s680 + $0x418] sm:$0xff]
        %v4826 = vld [vmem:[%s680 + $0x420] sm:$0xff]
        %v4827 = vld [vmem:[%s680 + $0x428] sm:$0xff]
        %v4828 = vld [vmem:[%s680 + $0x430] sm:$0xff]
        %v4829 = vld [vmem:[%s680 + $0x438] sm:$0xff]
        %v4830 = vld [vmem:[%s680 + $0x440] sm:$0xff]
        %v4831 = vld [vmem:[%s680 + $0x448] sm:$0xff]
        %v4832 = vld [vmem:[%s680 + $0x450] sm:$0xff]
        %v4833 = vld [vmem:[%s680 + $0x458] sm:$0xff]
        %v4834 = vld [vmem:[%s680 + $0x460] sm:$0xff]
        %v4835 = vld [vmem:[%s680 + $0x468] sm:$0xff]
        %v4836 = vld [vmem:[%s680 + $0x470] sm:$0xff]
        %v4837 = vld [vmem:[%s680 + $0x478] sm:$0xff]
        %v4838 = vld [vmem:[%s680 + $0x480] sm:$0xff]
        %v4839 = vld [vmem:[%s680 + $0x488] sm:$0xff]
        %v4840 = vld [vmem:[%s680 + $0x490] sm:$0xff]
        %v4841 = vld [vmem:[%s680 + $0x498] sm:$0xff]
        %v4842 = vld [vmem:[%s680 + $0x4a0] sm:$0xff]
        %v4843 = vld [vmem:[%s680 + $0x4a8] sm:$0xff]
        %v4844 = vld [vmem:[%s680 + $0x4b0] sm:$0xff]
        %v4845 = vld [vmem:[%s680 + $0x4b8] sm:$0xff]
        %v4846 = vld [vmem:[%s680 + $0x4c0] sm:$0xff]
        %v4847 = vld [vmem:[%s680 + $0x4c8] sm:$0xff]
        %v4848 = vld [vmem:[%s680 + $0x4d0] sm:$0xff]
        %v4849 = vld [vmem:[%s680 + $0x4d8] sm:$0xff]
        %v4850 = vld [vmem:[%s680 + $0x4e0] sm:$0xff]
        %v4851 = vld [vmem:[%s680 + $0x4e8] sm:$0xff]
        %v4852 = vld [vmem:[%s680 + $0x4f0] sm:$0xff]
        %v4853 = vld [vmem:[%s680 + $0x4f8] sm:$0xff]
        %v4854 = vld [vmem:[%s680 + $0x500] sm:$0xff]
        %v4855 = vld [vmem:[%s680 + $0x508] sm:$0xff]
        %v4856 = vld [vmem:[%s680 + $0x510] sm:$0xff]
        %v4857 = vld [vmem:[%s680 + $0x518] sm:$0xff]
        %v4858 = vld [vmem:[%s680 + $0x520] sm:$0xff]
        %v4859 = vld [vmem:[%s680 + $0x528] sm:$0xff]
        %v4860 = vld [vmem:[%s680 + $0x530] sm:$0xff]
        %v4861 = vld [vmem:[%s680 + $0x538] sm:$0xff]
        %v4862 = vld [vmem:[%s680 + $0x540] sm:$0xff]
        %v4863 = vld [vmem:[%s680 + $0x548] sm:$0xff]
        %v4864 = vld [vmem:[%s680 + $0x550] sm:$0xff]
        %v4865 = vld [vmem:[%s680 + $0x558] sm:$0xff]
        %v4866 = vld [vmem:[%s680 + $0x560] sm:$0xff]
        %v4867 = vld [vmem:[%s680 + $0x568] sm:$0xff]
        %v4868 = vld [vmem:[%s680 + $0x570] sm:$0xff]
        %v4869 = vld [vmem:[%s680 + $0x578] sm:$0xff]
        %v4870 = vld [vmem:[%s680 + $0x580] sm:$0xff]
        %v4871 = vld [vmem:[%s680 + $0x588] sm:$0xff]
        %v4872 = vld [vmem:[%s680 + $0x590] sm:$0xff]
        %v4873 = vld [vmem:[%s680 + $0x598] sm:$0xff]
        %v4874 = vld [vmem:[%s680 + $0x5a0] sm:$0xff]
        %v4875 = vld [vmem:[%s680 + $0x5a8] sm:$0xff]
        %v4876 = vld [vmem:[%s680 + $0x5b0] sm:$0xff]
        %v4877 = vld [vmem:[%s680 + $0x5b8] sm:$0xff]
        %v4878 = vld [vmem:[%s680 + $0x5c0] sm:$0xff]
        %v4879 = vld [vmem:[%s680 + $0x5c8] sm:$0xff]
        %v4880 = vld [vmem:[%s680 + $0x5d0] sm:$0xff]
        %v4881 = vld [vmem:[%s680 + $0x5d8] sm:$0xff]
        %v4882 = vld [vmem:[%s680 + $0x5e0] sm:$0xff]
        %v4883 = vld [vmem:[%s680 + $0x5e8] sm:$0xff]
        %v4884 = vld [vmem:[%s680 + $0x5f0] sm:$0xff]
        %v4885 = vld [vmem:[%s680 + $0x5f8] sm:$0xff]
        %v4886 = vld [vmem:[%s680 + $0x600] sm:$0xff]
        %v4887 = vld [vmem:[%s680 + $0x608] sm:$0xff]
        %v4888 = vld [vmem:[%s680 + $0x610] sm:$0xff]
        %v4889 = vld [vmem:[%s680 + $0x618] sm:$0xff]
        %v4890 = vld [vmem:[%s680 + $0x620] sm:$0xff]
        %v4891 = vld [vmem:[%s680 + $0x628] sm:$0xff]
        %v4892 = vld [vmem:[%s680 + $0x630] sm:$0xff]
        %v4893 = vld [vmem:[%s680 + $0x638] sm:$0xff]
        %v4894 = vld [vmem:[%s680 + $0x640] sm:$0xff]
        %v4895 = vld [vmem:[%s680 + $0x648] sm:$0xff]
        %v4896 = vld [vmem:[%s680 + $0x650] sm:$0xff]
        %v4897 = vld [vmem:[%s680 + $0x658] sm:$0xff]
        %v4898 = vld [vmem:[%s680 + $0x660] sm:$0xff]
        %v4899 = vld [vmem:[%s680 + $0x668] sm:$0xff]
        %v4900 = vld [vmem:[%s680 + $0x670] sm:$0xff]
        %v4901 = vld [vmem:[%s680 + $0x678] sm:$0xff]
        %v4902 = vld [vmem:[%s680 + $0x680] sm:$0xff]
        %v4903 = vld [vmem:[%s680 + $0x688] sm:$0xff]
        %v4904 = vld [vmem:[%s680 + $0x690] sm:$0xff]
        %v4905 = vld [vmem:[%s680 + $0x698] sm:$0xff]
        %v4906 = vld [vmem:[%s680 + $0x6a0] sm:$0xff]
        %v4907 = vld [vmem:[%s680 + $0x6a8] sm:$0xff]
        %v4908 = vld [vmem:[%s680 + $0x6b0] sm:$0xff]
        %v4909 = vld [vmem:[%s680 + $0x6b8] sm:$0xff]
        %v4910 = vld [vmem:[%s680 + $0x6c0] sm:$0xff]
        %v4911 = vld [vmem:[%s680 + $0x6c8] sm:$0xff]
        %v4912 = vld [vmem:[%s680 + $0x6d0] sm:$0xff]
        %v4913 = vld [vmem:[%s680 + $0x6d8] sm:$0xff]
        %v4914 = vld [vmem:[%s680 + $0x6e0] sm:$0xff]
        %v4915 = vld [vmem:[%s680 + $0x6e8] sm:$0xff]
        %v4916 = vld [vmem:[%s680 + $0x6f0] sm:$0xff]
        %v4917 = vld [vmem:[%s680 + $0x6f8] sm:$0xff]
        %v4918 = vld [vmem:[%s680 + $0x700] sm:$0xff]
        %v4919 = vld [vmem:[%s680 + $0x708] sm:$0xff]
        %v4920 = vld [vmem:[%s680 + $0x710] sm:$0xff]
        %v4921 = vld [vmem:[%s680 + $0x718] sm:$0xff]
        %v4922 = vld [vmem:[%s680 + $0x720] sm:$0xff]
        %v4923 = vld [vmem:[%s680 + $0x728] sm:$0xff]
        %v4924 = vld [vmem:[%s680 + $0x730] sm:$0xff]
        %v4925 = vld [vmem:[%s680 + $0x738] sm:$0xff]
        %v4926 = vld [vmem:[%s680 + $0x740] sm:$0xff]
        %v4927 = vld [vmem:[%s680 + $0x748] sm:$0xff]
        %v4928 = vld [vmem:[%s680 + $0x750] sm:$0xff]
        %v4929 = vld [vmem:[%s680 + $0x758] sm:$0xff]
        %v4930 = vld [vmem:[%s680 + $0x760] sm:$0xff]
        %v4931 = vld [vmem:[%s680 + $0x768] sm:$0xff]
        %v4932 = vld [vmem:[%s680 + $0x770] sm:$0xff]
        %v4933 = vld [vmem:[%s680 + $0x778] sm:$0xff]
        %v4934 = vld [vmem:[%s680 + $0x780] sm:$0xff]
        %v4935 = vld [vmem:[%s680 + $0x788] sm:$0xff]
        %v4936 = vld [vmem:[%s680 + $0x790] sm:$0xff]
        %v4937 = vld [vmem:[%s680 + $0x798] sm:$0xff]
        %v4938 = vld [vmem:[%s680 + $0x7a0] sm:$0xff]
        %v4939 = vld [vmem:[%s680 + $0x7a8] sm:$0xff]
        %v4940 = vld [vmem:[%s680 + $0x7b0] sm:$0xff]
        %v4941 = vld [vmem:[%s680 + $0x7b8] sm:$0xff]
        %v4942 = vld [vmem:[%s680 + $0x7c0] sm:$0xff]
        %v4943 = vld [vmem:[%s680 + $0x7c8] sm:$0xff]
        %v4944 = vld [vmem:[%s680 + $0x7d0] sm:$0xff]
        %v4945 = vld [vmem:[%s680 + $0x7d8] sm:$0xff]
        %v4946 = vld [vmem:[%s680 + $0x7e0] sm:$0xff]
        %v4947 = vld [vmem:[%s680 + $0x7e8] sm:$0xff]
        %v4948 = vld [vmem:[%s680 + $0x7f0] sm:$0xff]
        %v4949 = vld [vmem:[%s680 + $0x7f8] sm:$0xff]
        %v4950 = vld [vmem:[%s689] sm:$0xff]
        %v4951 = vld [vmem:[%s689 + $0x8] sm:$0xff]
        %v4952 = vld [vmem:[%s689 + $0x10] sm:$0xff]
        %v4953 = vld [vmem:[%s689 + $0x18] sm:$0xff]
        %v4954 = vld [vmem:[%s689 + $0x20] sm:$0xff]
        %v4955 = vld [vmem:[%s689 + $0x28] sm:$0xff]
        %v4956 = vld [vmem:[%s689 + $0x30] sm:$0xff]
        %v4957 = vld [vmem:[%s689 + $0x38] sm:$0xff]
        %v4958 = vld [vmem:[%s689 + $0x40] sm:$0xff]
        %v4959 = vld [vmem:[%s689 + $0x48] sm:$0xff]
        %v4960 = vld [vmem:[%s689 + $0x50] sm:$0xff]
        %v4961 = vld [vmem:[%s689 + $0x58] sm:$0xff]
        %v4962 = vld [vmem:[%s689 + $0x60] sm:$0xff]
        %v4963 = vld [vmem:[%s689 + $0x68] sm:$0xff]
        %v4964 = vld [vmem:[%s689 + $0x70] sm:$0xff]
        %v4965 = vld [vmem:[%s689 + $0x78] sm:$0xff]
        %v4966 = vld [vmem:[%s689 + $0x80] sm:$0xff]
        %v4967 = vld [vmem:[%s689 + $0x88] sm:$0xff]
        %v4968 = vld [vmem:[%s689 + $0x90] sm:$0xff]
        %v4969 = vld [vmem:[%s689 + $0x98] sm:$0xff]
        %v4970 = vld [vmem:[%s689 + $0xa0] sm:$0xff]
        %v4971 = vld [vmem:[%s689 + $0xa8] sm:$0xff]
        %v4972 = vld [vmem:[%s689 + $0xb0] sm:$0xff]
        %v4973 = vld [vmem:[%s689 + $0xb8] sm:$0xff]
        %v4974 = vld [vmem:[%s689 + $0xc0] sm:$0xff]
        %v4975 = vld [vmem:[%s689 + $0xc8] sm:$0xff]
        %v4976 = vld [vmem:[%s689 + $0xd0] sm:$0xff]
        %v4977 = vld [vmem:[%s689 + $0xd8] sm:$0xff]
        %v4978 = vld [vmem:[%s689 + $0xe0] sm:$0xff]
        %v4979 = vld [vmem:[%s689 + $0xe8] sm:$0xff]
        %v4980 = vld [vmem:[%s689 + $0xf0] sm:$0xff]
        %v4981 = vld [vmem:[%s689 + $0xf8] sm:$0xff]
        %v4982 = vld [vmem:[%s689 + $0x100] sm:$0xff]
        %v4983 = vld [vmem:[%s689 + $0x108] sm:$0xff]
        %v4984 = vld [vmem:[%s689 + $0x110] sm:$0xff]
        %v4985 = vld [vmem:[%s689 + $0x118] sm:$0xff]
        %v4986 = vld [vmem:[%s689 + $0x120] sm:$0xff]
        %v4987 = vld [vmem:[%s689 + $0x128] sm:$0xff]
        %v4988 = vld [vmem:[%s689 + $0x130] sm:$0xff]
        %v4989 = vld [vmem:[%s689 + $0x138] sm:$0xff]
        %v4990 = vld [vmem:[%s689 + $0x140] sm:$0xff]
        %v4991 = vld [vmem:[%s689 + $0x148] sm:$0xff]
        %v4992 = vld [vmem:[%s689 + $0x150] sm:$0xff]
        %v4993 = vld [vmem:[%s689 + $0x158] sm:$0xff]
        %v4994 = vld [vmem:[%s689 + $0x160] sm:$0xff]
        %v4995 = vld [vmem:[%s689 + $0x168] sm:$0xff]
        %v4996 = vld [vmem:[%s689 + $0x170] sm:$0xff]
        %v4997 = vld [vmem:[%s689 + $0x178] sm:$0xff]
        %v4998 = vld [vmem:[%s689 + $0x180] sm:$0xff]
        %v4999 = vld [vmem:[%s689 + $0x188] sm:$0xff]
        %v5000 = vld [vmem:[%s689 + $0x190] sm:$0xff]
        %v5001 = vld [vmem:[%s689 + $0x198] sm:$0xff]
        %v5002 = vld [vmem:[%s689 + $0x1a0] sm:$0xff]
        %v5003 = vld [vmem:[%s689 + $0x1a8] sm:$0xff]
        %v5004 = vld [vmem:[%s689 + $0x1b0] sm:$0xff]
        %v5005 = vld [vmem:[%s689 + $0x1b8] sm:$0xff]
        %v5006 = vld [vmem:[%s689 + $0x1c0] sm:$0xff]
        %v5007 = vld [vmem:[%s689 + $0x1c8] sm:$0xff]
        %v5008 = vld [vmem:[%s689 + $0x1d0] sm:$0xff]
        %v5009 = vld [vmem:[%s689 + $0x1d8] sm:$0xff]
        %v5010 = vld [vmem:[%s689 + $0x1e0] sm:$0xff]
        %v5011 = vld [vmem:[%s689 + $0x1e8] sm:$0xff]
        %v5012 = vld [vmem:[%s689 + $0x1f0] sm:$0xff]
        %v5013 = vld [vmem:[%s689 + $0x1f8] sm:$0xff]
        %v5014 = vld [vmem:[%s689 + $0x200] sm:$0xff]
        %v5015 = vld [vmem:[%s689 + $0x208] sm:$0xff]
        %v5016 = vld [vmem:[%s689 + $0x210] sm:$0xff]
        %v5017 = vld [vmem:[%s689 + $0x218] sm:$0xff]
        %v5018 = vld [vmem:[%s689 + $0x220] sm:$0xff]
        %v5019 = vld [vmem:[%s689 + $0x228] sm:$0xff]
        %v5020 = vld [vmem:[%s689 + $0x230] sm:$0xff]
        %v5021 = vld [vmem:[%s689 + $0x238] sm:$0xff]
        %v5022 = vld [vmem:[%s689 + $0x240] sm:$0xff]
        %v5023 = vld [vmem:[%s689 + $0x248] sm:$0xff]
        %v5024 = vld [vmem:[%s689 + $0x250] sm:$0xff]
        %v5025 = vld [vmem:[%s689 + $0x258] sm:$0xff]
        %v5026 = vld [vmem:[%s689 + $0x260] sm:$0xff]
        %v5027 = vld [vmem:[%s689 + $0x268] sm:$0xff]
        %v5028 = vld [vmem:[%s689 + $0x270] sm:$0xff]
        %v5029 = vld [vmem:[%s689 + $0x278] sm:$0xff]
        %v5030 = vld [vmem:[%s689 + $0x280] sm:$0xff]
        %v5031 = vld [vmem:[%s689 + $0x288] sm:$0xff]
        %v5032 = vld [vmem:[%s689 + $0x290] sm:$0xff]
        %v5033 = vld [vmem:[%s689 + $0x298] sm:$0xff]
        %v5034 = vld [vmem:[%s689 + $0x2a0] sm:$0xff]
        %v5035 = vld [vmem:[%s689 + $0x2a8] sm:$0xff]
        %v5036 = vld [vmem:[%s689 + $0x2b0] sm:$0xff]
        %v5037 = vld [vmem:[%s689 + $0x2b8] sm:$0xff]
        %v5038 = vld [vmem:[%s689 + $0x2c0] sm:$0xff]
        %v5039 = vld [vmem:[%s689 + $0x2c8] sm:$0xff]
        %v5040 = vld [vmem:[%s689 + $0x2d0] sm:$0xff]
        %v5041 = vld [vmem:[%s689 + $0x2d8] sm:$0xff]
        %v5042 = vld [vmem:[%s689 + $0x2e0] sm:$0xff]
        %v5043 = vld [vmem:[%s689 + $0x2e8] sm:$0xff]
        %v5044 = vld [vmem:[%s689 + $0x2f0] sm:$0xff]
        %v5045 = vld [vmem:[%s689 + $0x2f8] sm:$0xff]
        %v5046 = vld [vmem:[%s689 + $0x300] sm:$0xff]
        %v5047 = vld [vmem:[%s689 + $0x308] sm:$0xff]
        %v5048 = vld [vmem:[%s689 + $0x310] sm:$0xff]
        %v5049 = vld [vmem:[%s689 + $0x318] sm:$0xff]
        %v5050 = vld [vmem:[%s689 + $0x320] sm:$0xff]
        %v5051 = vld [vmem:[%s689 + $0x328] sm:$0xff]
        %v5052 = vld [vmem:[%s689 + $0x330] sm:$0xff]
        %v5053 = vld [vmem:[%s689 + $0x338] sm:$0xff]
        %v5054 = vld [vmem:[%s689 + $0x340] sm:$0xff]
        %v5055 = vld [vmem:[%s689 + $0x348] sm:$0xff]
        %v5056 = vld [vmem:[%s689 + $0x350] sm:$0xff]
        %v5057 = vld [vmem:[%s689 + $0x358] sm:$0xff]
        %v5058 = vld [vmem:[%s689 + $0x360] sm:$0xff]
        %v5059 = vld [vmem:[%s689 + $0x368] sm:$0xff]
        %v5060 = vld [vmem:[%s689 + $0x370] sm:$0xff]
        %v5061 = vld [vmem:[%s689 + $0x378] sm:$0xff]
        %v5062 = vld [vmem:[%s689 + $0x380] sm:$0xff]
        %v5063 = vld [vmem:[%s689 + $0x388] sm:$0xff]
        %v5064 = vld [vmem:[%s689 + $0x390] sm:$0xff]
        %v5065 = vld [vmem:[%s689 + $0x398] sm:$0xff]
        %v5066 = vld [vmem:[%s689 + $0x3a0] sm:$0xff]
        %v5067 = vld [vmem:[%s689 + $0x3a8] sm:$0xff]
        %v5068 = vld [vmem:[%s689 + $0x3b0] sm:$0xff]
        %v5069 = vld [vmem:[%s689 + $0x3b8] sm:$0xff]
        %v5070 = vld [vmem:[%s689 + $0x3c0] sm:$0xff]
        %v5071 = vld [vmem:[%s689 + $0x3c8] sm:$0xff]
        %v5072 = vld [vmem:[%s689 + $0x3d0] sm:$0xff]
        %v5073 = vld [vmem:[%s689 + $0x3d8] sm:$0xff]
        %v5074 = vld [vmem:[%s689 + $0x3e0] sm:$0xff]
        %v5075 = vld [vmem:[%s689 + $0x3e8] sm:$0xff]
        %v5076 = vld [vmem:[%s689 + $0x3f0] sm:$0xff]
        %v5077 = vld [vmem:[%s689 + $0x3f8] sm:$0xff]
        %v5078 = vld [vmem:[%s689 + $0x400] sm:$0xff]
        %v5079 = vld [vmem:[%s689 + $0x408] sm:$0xff]
        %v5080 = vld [vmem:[%s689 + $0x410] sm:$0xff]
        %v5081 = vld [vmem:[%s689 + $0x418] sm:$0xff]
        %v5082 = vld [vmem:[%s689 + $0x420] sm:$0xff]
        %v5083 = vld [vmem:[%s689 + $0x428] sm:$0xff]
        %v5084 = vld [vmem:[%s689 + $0x430] sm:$0xff]
        %v5085 = vld [vmem:[%s689 + $0x438] sm:$0xff]
        %v5086 = vld [vmem:[%s689 + $0x440] sm:$0xff]
        %v5087 = vld [vmem:[%s689 + $0x448] sm:$0xff]
        %v5088 = vld [vmem:[%s689 + $0x450] sm:$0xff]
        %v5089 = vld [vmem:[%s689 + $0x458] sm:$0xff]
        %v5090 = vld [vmem:[%s689 + $0x460] sm:$0xff]
        %v5091 = vld [vmem:[%s689 + $0x468] sm:$0xff]
        %v5092 = vld [vmem:[%s689 + $0x470] sm:$0xff]
        %v5093 = vld [vmem:[%s689 + $0x478] sm:$0xff]
        %v5094 = vld [vmem:[%s689 + $0x480] sm:$0xff]
        %v5095 = vld [vmem:[%s689 + $0x488] sm:$0xff]
        %v5096 = vld [vmem:[%s689 + $0x490] sm:$0xff]
        %v5097 = vld [vmem:[%s689 + $0x498] sm:$0xff]
        %v5098 = vld [vmem:[%s689 + $0x4a0] sm:$0xff]
        %v5099 = vld [vmem:[%s689 + $0x4a8] sm:$0xff]
        %v5100 = vld [vmem:[%s689 + $0x4b0] sm:$0xff]
        %v5101 = vld [vmem:[%s689 + $0x4b8] sm:$0xff]
        %v5102 = vld [vmem:[%s689 + $0x4c0] sm:$0xff]
        %v5103 = vld [vmem:[%s689 + $0x4c8] sm:$0xff]
        %v5104 = vld [vmem:[%s689 + $0x4d0] sm:$0xff]
        %v5105 = vld [vmem:[%s689 + $0x4d8] sm:$0xff]
        %v5106 = vld [vmem:[%s689 + $0x4e0] sm:$0xff]
        %v5107 = vld [vmem:[%s689 + $0x4e8] sm:$0xff]
        %v5108 = vld [vmem:[%s689 + $0x4f0] sm:$0xff]
        %v5109 = vld [vmem:[%s689 + $0x4f8] sm:$0xff]
        %v5110 = vld [vmem:[%s689 + $0x500] sm:$0xff]
        %v5111 = vld [vmem:[%s689 + $0x508] sm:$0xff]
        %v5112 = vld [vmem:[%s689 + $0x510] sm:$0xff]
        %v5113 = vld [vmem:[%s689 + $0x518] sm:$0xff]
        %v5114 = vld [vmem:[%s689 + $0x520] sm:$0xff]
        %v5115 = vld [vmem:[%s689 + $0x528] sm:$0xff]
        %v5116 = vld [vmem:[%s689 + $0x530] sm:$0xff]
        %v5117 = vld [vmem:[%s689 + $0x538] sm:$0xff]
        %v5118 = vld [vmem:[%s689 + $0x540] sm:$0xff]
        %v5119 = vld [vmem:[%s689 + $0x548] sm:$0xff]
        %v5120 = vld [vmem:[%s689 + $0x550] sm:$0xff]
        %v5121 = vld [vmem:[%s689 + $0x558] sm:$0xff]
        %v5122 = vld [vmem:[%s689 + $0x560] sm:$0xff]
        %v5123 = vld [vmem:[%s689 + $0x568] sm:$0xff]
        %v5124 = vld [vmem:[%s689 + $0x570] sm:$0xff]
        %v5125 = vld [vmem:[%s689 + $0x578] sm:$0xff]
        %v5126 = vld [vmem:[%s689 + $0x580] sm:$0xff]
        %v5127 = vld [vmem:[%s689 + $0x588] sm:$0xff]
        %v5128 = vld [vmem:[%s689 + $0x590] sm:$0xff]
        %v5129 = vld [vmem:[%s689 + $0x598] sm:$0xff]
        %v5130 = vld [vmem:[%s689 + $0x5a0] sm:$0xff]
        %v5131 = vld [vmem:[%s689 + $0x5a8] sm:$0xff]
        %v5132 = vld [vmem:[%s689 + $0x5b0] sm:$0xff]
        %v5133 = vld [vmem:[%s689 + $0x5b8] sm:$0xff]
        %v5134 = vld [vmem:[%s689 + $0x5c0] sm:$0xff]
        %v5135 = vld [vmem:[%s689 + $0x5c8] sm:$0xff]
        %v5136 = vld [vmem:[%s689 + $0x5d0] sm:$0xff]
        %v5137 = vld [vmem:[%s689 + $0x5d8] sm:$0xff]
        %v5138 = vld [vmem:[%s689 + $0x5e0] sm:$0xff]
        %v5139 = vld [vmem:[%s689 + $0x5e8] sm:$0xff]
        %v5140 = vld [vmem:[%s689 + $0x5f0] sm:$0xff]
        %v5141 = vld [vmem:[%s689 + $0x5f8] sm:$0xff]
        %v5142 = vld [vmem:[%s689 + $0x600] sm:$0xff]
        %v5143 = vld [vmem:[%s689 + $0x608] sm:$0xff]
        %v5144 = vld [vmem:[%s689 + $0x610] sm:$0xff]
        %v5145 = vld [vmem:[%s689 + $0x618] sm:$0xff]
        %v5146 = vld [vmem:[%s689 + $0x620] sm:$0xff]
        %v5147 = vld [vmem:[%s689 + $0x628] sm:$0xff]
        %v5148 = vld [vmem:[%s689 + $0x630] sm:$0xff]
        %v5149 = vld [vmem:[%s689 + $0x638] sm:$0xff]
        %v5150 = vld [vmem:[%s689 + $0x640] sm:$0xff]
        %v5151 = vld [vmem:[%s689 + $0x648] sm:$0xff]
        %v5152 = vld [vmem:[%s689 + $0x650] sm:$0xff]
        %v5153 = vld [vmem:[%s689 + $0x658] sm:$0xff]
        %v5154 = vld [vmem:[%s689 + $0x660] sm:$0xff]
        %v5155 = vld [vmem:[%s689 + $0x668] sm:$0xff]
        %v5156 = vld [vmem:[%s689 + $0x670] sm:$0xff]
        %v5157 = vld [vmem:[%s689 + $0x678] sm:$0xff]
        %v5158 = vld [vmem:[%s689 + $0x680] sm:$0xff]
        %v5159 = vld [vmem:[%s689 + $0x688] sm:$0xff]
        %v5160 = vld [vmem:[%s689 + $0x690] sm:$0xff]
        %v5161 = vld [vmem:[%s689 + $0x698] sm:$0xff]
        %v5162 = vld [vmem:[%s689 + $0x6a0] sm:$0xff]
        %v5163 = vld [vmem:[%s689 + $0x6a8] sm:$0xff]
        %v5164 = vld [vmem:[%s689 + $0x6b0] sm:$0xff]
        %v5165 = vld [vmem:[%s689 + $0x6b8] sm:$0xff]
        %v5166 = vld [vmem:[%s689 + $0x6c0] sm:$0xff]
        %v5167 = vld [vmem:[%s689 + $0x6c8] sm:$0xff]
        %v5168 = vld [vmem:[%s689 + $0x6d0] sm:$0xff]
        %v5169 = vld [vmem:[%s689 + $0x6d8] sm:$0xff]
        %v5170 = vld [vmem:[%s689 + $0x6e0] sm:$0xff]
        %v5171 = vld [vmem:[%s689 + $0x6e8] sm:$0xff]
        %v5172 = vld [vmem:[%s689 + $0x6f0] sm:$0xff]
        %v5173 = vld [vmem:[%s689 + $0x6f8] sm:$0xff]
        %v5174 = vld [vmem:[%s689 + $0x700] sm:$0xff]
        %v5175 = vld [vmem:[%s689 + $0x708] sm:$0xff]
        %v5176 = vld [vmem:[%s689 + $0x710] sm:$0xff]
        %v5177 = vld [vmem:[%s689 + $0x718] sm:$0xff]
        %v5178 = vld [vmem:[%s689 + $0x720] sm:$0xff]
        %v5179 = vld [vmem:[%s689 + $0x728] sm:$0xff]
        %v5180 = vld [vmem:[%s689 + $0x730] sm:$0xff]
        %v5181 = vld [vmem:[%s689 + $0x738] sm:$0xff]
        %v5182 = vld [vmem:[%s689 + $0x740] sm:$0xff]
        %v5183 = vld [vmem:[%s689 + $0x748] sm:$0xff]
        %v5184 = vld [vmem:[%s689 + $0x750] sm:$0xff]
        %v5185 = vld [vmem:[%s689 + $0x758] sm:$0xff]
        %v5186 = vld [vmem:[%s689 + $0x760] sm:$0xff]
        %v5187 = vld [vmem:[%s689 + $0x768] sm:$0xff]
        %v5188 = vld [vmem:[%s689 + $0x770] sm:$0xff]
        %v5189 = vld [vmem:[%s689 + $0x778] sm:$0xff]
        %v5190 = vld [vmem:[%s689 + $0x780] sm:$0xff]
        %v5191 = vld [vmem:[%s689 + $0x788] sm:$0xff]
        %v5192 = vld [vmem:[%s689 + $0x790] sm:$0xff]
        %v5193 = vld [vmem:[%s689 + $0x798] sm:$0xff]
        %v5194 = vld [vmem:[%s689 + $0x7a0] sm:$0xff]
        %v5195 = vld [vmem:[%s689 + $0x7a8] sm:$0xff]
        %v5196 = vld [vmem:[%s689 + $0x7b0] sm:$0xff]
        %v5197 = vld [vmem:[%s689 + $0x7b8] sm:$0xff]
        %v5198 = vld [vmem:[%s689 + $0x7c0] sm:$0xff]
        %v5199 = vld [vmem:[%s689 + $0x7c8] sm:$0xff]
        %v5200 = vld [vmem:[%s689 + $0x7d0] sm:$0xff]
        %v5201 = vld [vmem:[%s689 + $0x7d8] sm:$0xff]
        %v5202 = vld [vmem:[%s689 + $0x7e0] sm:$0xff]
        %v5203 = vld [vmem:[%s689 + $0x7e8] sm:$0xff]
        %v5204 = vld [vmem:[%s689 + $0x7f0] sm:$0xff]
        %v5205 = vld [vmem:[%s689 + $0x7f8] sm:$0xff]
        %v5462 = vunpack.c.l.b16 %v4950
        %v5463 = vunpack.c.h.b16 %v4950
        %v5464 = vunpack.c.l.b16 %v4951
        %v5465 = vunpack.c.h.b16 %v4951
        %v5466 = vunpack.c.l.b16 %v4952
        %v5467 = vunpack.c.h.b16 %v4952
        %v5468 = vunpack.c.l.b16 %v4953
        %v5469 = vunpack.c.h.b16 %v4953
        %v5470 = vunpack.c.l.b16 %v4954
        %v5471 = vunpack.c.h.b16 %v4954
        %v5472 = vunpack.c.l.b16 %v4955
        %v5473 = vunpack.c.h.b16 %v4955
        %v5474 = vunpack.c.l.b16 %v4956
        %v5475 = vunpack.c.h.b16 %v4956
        %v5476 = vunpack.c.l.b16 %v4957
        %v5477 = vunpack.c.h.b16 %v4957
        %v5478 = vunpack.c.l.b16 %v4958
        %v5479 = vunpack.c.h.b16 %v4958
        %v5480 = vunpack.c.l.b16 %v4959
        %v5481 = vunpack.c.h.b16 %v4959
        %v5482 = vunpack.c.l.b16 %v4960
        %v5483 = vunpack.c.h.b16 %v4960
        %v5484 = vunpack.c.l.b16 %v4961
        %v5485 = vunpack.c.h.b16 %v4961
        %v5486 = vunpack.c.l.b16 %v4962
        %v5487 = vunpack.c.h.b16 %v4962
        %v5488 = vunpack.c.l.b16 %v4963
        %v5489 = vunpack.c.h.b16 %v4963
        %v5490 = vunpack.c.l.b16 %v4964
        %v5491 = vunpack.c.h.b16 %v4964
        %v5492 = vunpack.c.l.b16 %v4965
        %v5493 = vunpack.c.h.b16 %v4965
        %v5494 = vunpack.c.l.b16 %v4966
        %v5495 = vunpack.c.h.b16 %v4966
        %v5496 = vunpack.c.l.b16 %v4967
        %v5497 = vunpack.c.h.b16 %v4967
        %v5498 = vunpack.c.l.b16 %v4968
        %v5499 = vunpack.c.h.b16 %v4968
        %v5500 = vunpack.c.l.b16 %v4969
        %v5501 = vunpack.c.h.b16 %v4969
        %v5502 = vunpack.c.l.b16 %v4970
        %v5503 = vunpack.c.h.b16 %v4970
        %v5504 = vunpack.c.l.b16 %v4971
        %v5505 = vunpack.c.h.b16 %v4971
        %v5506 = vunpack.c.l.b16 %v4972
        %v5507 = vunpack.c.h.b16 %v4972
        %v5508 = vunpack.c.l.b16 %v4973
        %v5509 = vunpack.c.h.b16 %v4973
        %v5510 = vunpack.c.l.b16 %v4974
        %v5511 = vunpack.c.h.b16 %v4974
        %v5512 = vunpack.c.l.b16 %v4975
        %v5513 = vunpack.c.h.b16 %v4975
        %v5514 = vunpack.c.l.b16 %v4976
        %v5515 = vunpack.c.h.b16 %v4976
        %v5516 = vunpack.c.l.b16 %v4977
        %v5517 = vunpack.c.h.b16 %v4977
        %v5518 = vunpack.c.l.b16 %v4978
        %v5519 = vunpack.c.h.b16 %v4978
        %v5520 = vunpack.c.l.b16 %v4979
        %v5521 = vunpack.c.h.b16 %v4979
        %v5522 = vunpack.c.l.b16 %v4980
        %v5523 = vunpack.c.h.b16 %v4980
        %v5524 = vunpack.c.l.b16 %v4981
        %v5525 = vunpack.c.h.b16 %v4981
        %v5526 = vunpack.c.l.b16 %v4982
        %v5527 = vunpack.c.h.b16 %v4982
        %v5528 = vunpack.c.l.b16 %v4983
        %v5529 = vunpack.c.h.b16 %v4983
        %v5530 = vunpack.c.l.b16 %v4984
        %v5531 = vunpack.c.h.b16 %v4984
        %v5532 = vunpack.c.l.b16 %v4985
        %v5533 = vunpack.c.h.b16 %v4985
        %v5534 = vunpack.c.l.b16 %v4986
        %v5535 = vunpack.c.h.b16 %v4986
        %v5536 = vunpack.c.l.b16 %v4987
        %v5537 = vunpack.c.h.b16 %v4987
        %v5538 = vunpack.c.l.b16 %v4988
        %v5539 = vunpack.c.h.b16 %v4988
        %v5540 = vunpack.c.l.b16 %v4989
        %v5541 = vunpack.c.h.b16 %v4989
        %v5542 = vunpack.c.l.b16 %v4990
        %v5543 = vunpack.c.h.b16 %v4990
        %v5544 = vunpack.c.l.b16 %v4991
        %v5545 = vunpack.c.h.b16 %v4991
        %v5546 = vunpack.c.l.b16 %v4992
        %v5547 = vunpack.c.h.b16 %v4992
        %v5548 = vunpack.c.l.b16 %v4993
        %v5549 = vunpack.c.h.b16 %v4993
        %v5550 = vunpack.c.l.b16 %v4994
        %v5551 = vunpack.c.h.b16 %v4994
        %v5552 = vunpack.c.l.b16 %v4995
        %v5553 = vunpack.c.h.b16 %v4995
        %v5554 = vunpack.c.l.b16 %v4996
        %v5555 = vunpack.c.h.b16 %v4996
        %v5556 = vunpack.c.l.b16 %v4997
        %v5557 = vunpack.c.h.b16 %v4997
        %v5558 = vunpack.c.l.b16 %v4998
        %v5559 = vunpack.c.h.b16 %v4998
        %v5560 = vunpack.c.l.b16 %v4999
        %v5561 = vunpack.c.h.b16 %v4999
        %v5562 = vunpack.c.l.b16 %v5000
        %v5563 = vunpack.c.h.b16 %v5000
        %v5564 = vunpack.c.l.b16 %v5001
        %v5565 = vunpack.c.h.b16 %v5001
        %v5566 = vunpack.c.l.b16 %v5002
        %v5567 = vunpack.c.h.b16 %v5002
        %v5568 = vunpack.c.l.b16 %v5003
        %v5569 = vunpack.c.h.b16 %v5003
        %v5570 = vunpack.c.l.b16 %v5004
        %v5571 = vunpack.c.h.b16 %v5004
        %v5572 = vunpack.c.l.b16 %v5005
        %v5573 = vunpack.c.h.b16 %v5005
        %v5574 = vunpack.c.l.b16 %v5006
        %v5575 = vunpack.c.h.b16 %v5006
        %v5576 = vunpack.c.l.b16 %v5007
        %v5577 = vunpack.c.h.b16 %v5007
        %v5578 = vunpack.c.l.b16 %v5008
        %v5579 = vunpack.c.h.b16 %v5008
        %v5580 = vunpack.c.l.b16 %v5009
        %v5581 = vunpack.c.h.b16 %v5009
        %v5582 = vunpack.c.l.b16 %v5010
        %v5583 = vunpack.c.h.b16 %v5010
        %v5584 = vunpack.c.l.b16 %v5011
        %v5585 = vunpack.c.h.b16 %v5011
        %v5586 = vunpack.c.l.b16 %v5012
        %v5587 = vunpack.c.h.b16 %v5012
        %v5588 = vunpack.c.l.b16 %v5013
        %v5589 = vunpack.c.h.b16 %v5013
        %v5590 = vunpack.c.l.b16 %v5014
        %v5591 = vunpack.c.h.b16 %v5014
        %v5592 = vunpack.c.l.b16 %v5015
        %v5593 = vunpack.c.h.b16 %v5015
        %v5594 = vunpack.c.l.b16 %v5016
        %v5595 = vunpack.c.h.b16 %v5016
        %v5596 = vunpack.c.l.b16 %v5017
        %v5597 = vunpack.c.h.b16 %v5017
        %v5598 = vunpack.c.l.b16 %v5018
        %v5599 = vunpack.c.h.b16 %v5018
        %v5600 = vunpack.c.l.b16 %v5019
        %v5601 = vunpack.c.h.b16 %v5019
        %v5602 = vunpack.c.l.b16 %v5020
        %v5603 = vunpack.c.h.b16 %v5020
        %v5604 = vunpack.c.l.b16 %v5021
        %v5605 = vunpack.c.h.b16 %v5021
        %v5606 = vunpack.c.l.b16 %v5022
        %v5607 = vunpack.c.h.b16 %v5022
        %v5608 = vunpack.c.l.b16 %v5023
        %v5609 = vunpack.c.h.b16 %v5023
        %v5610 = vunpack.c.l.b16 %v5024
        %v5611 = vunpack.c.h.b16 %v5024
        %v5612 = vunpack.c.l.b16 %v5025
        %v5613 = vunpack.c.h.b16 %v5025
        %v5614 = vunpack.c.l.b16 %v5026
        %v5615 = vunpack.c.h.b16 %v5026
        %v5616 = vunpack.c.l.b16 %v5027
        %v5617 = vunpack.c.h.b16 %v5027
        %v5618 = vunpack.c.l.b16 %v5028
        %v5619 = vunpack.c.h.b16 %v5028
        %v5620 = vunpack.c.l.b16 %v5029
        %v5621 = vunpack.c.h.b16 %v5029
        %v5622 = vunpack.c.l.b16 %v5030
        %v5623 = vunpack.c.h.b16 %v5030
        %v5624 = vunpack.c.l.b16 %v5031
        %v5625 = vunpack.c.h.b16 %v5031
        %v5626 = vunpack.c.l.b16 %v5032
        %v5627 = vunpack.c.h.b16 %v5032
        %v5628 = vunpack.c.l.b16 %v5033
        %v5629 = vunpack.c.h.b16 %v5033
        %v5630 = vunpack.c.l.b16 %v5034
        %v5631 = vunpack.c.h.b16 %v5034
        %v5632 = vunpack.c.l.b16 %v5035
        %v5633 = vunpack.c.h.b16 %v5035
        %v5634 = vunpack.c.l.b16 %v5036
        %v5635 = vunpack.c.h.b16 %v5036
        %v5636 = vunpack.c.l.b16 %v5037
        %v5637 = vunpack.c.h.b16 %v5037
        %v5638 = vunpack.c.l.b16 %v5038
        %v5639 = vunpack.c.h.b16 %v5038
        %v5640 = vunpack.c.l.b16 %v5039
        %v5641 = vunpack.c.h.b16 %v5039
        %v5642 = vunpack.c.l.b16 %v5040
        %v5643 = vunpack.c.h.b16 %v5040
        %v5644 = vunpack.c.l.b16 %v5041
        %v5645 = vunpack.c.h.b16 %v5041
        %v5646 = vunpack.c.l.b16 %v5042
        %v5647 = vunpack.c.h.b16 %v5042
        %v5648 = vunpack.c.l.b16 %v5043
        %v5649 = vunpack.c.h.b16 %v5043
        %v5650 = vunpack.c.l.b16 %v5044
        %v5651 = vunpack.c.h.b16 %v5044
        %v5652 = vunpack.c.l.b16 %v5045
        %v5653 = vunpack.c.h.b16 %v5045
        %v5654 = vunpack.c.l.b16 %v5046
        %v5655 = vunpack.c.h.b16 %v5046
        %v5656 = vunpack.c.l.b16 %v5047
        %v5657 = vunpack.c.h.b16 %v5047
        %v5658 = vunpack.c.l.b16 %v5048
        %v5659 = vunpack.c.h.b16 %v5048
        %v5660 = vunpack.c.l.b16 %v5049
        %v5661 = vunpack.c.h.b16 %v5049
        %v5662 = vunpack.c.l.b16 %v5050
        %v5663 = vunpack.c.h.b16 %v5050
        %v5664 = vunpack.c.l.b16 %v5051
        %v5665 = vunpack.c.h.b16 %v5051
        %v5666 = vunpack.c.l.b16 %v5052
        %v5667 = vunpack.c.h.b16 %v5052
        %v5668 = vunpack.c.l.b16 %v5053
        %v5669 = vunpack.c.h.b16 %v5053
        %v5670 = vunpack.c.l.b16 %v5054
        %v5671 = vunpack.c.h.b16 %v5054
        %v5672 = vunpack.c.l.b16 %v5055
        %v5673 = vunpack.c.h.b16 %v5055
        %v5674 = vunpack.c.l.b16 %v5056
        %v5675 = vunpack.c.h.b16 %v5056
        %v5676 = vunpack.c.l.b16 %v5057
        %v5677 = vunpack.c.h.b16 %v5057
        %v5678 = vunpack.c.l.b16 %v5058
        %v5679 = vunpack.c.h.b16 %v5058
        %v5680 = vunpack.c.l.b16 %v5059
        %v5681 = vunpack.c.h.b16 %v5059
        %v5682 = vunpack.c.l.b16 %v5060
        %v5683 = vunpack.c.h.b16 %v5060
        %v5684 = vunpack.c.l.b16 %v5061
        %v5685 = vunpack.c.h.b16 %v5061
        %v5686 = vunpack.c.l.b16 %v5062
        %v5687 = vunpack.c.h.b16 %v5062
        %v5688 = vunpack.c.l.b16 %v5063
        %v5689 = vunpack.c.h.b16 %v5063
        %v5690 = vunpack.c.l.b16 %v5064
        %v5691 = vunpack.c.h.b16 %v5064
        %v5692 = vunpack.c.l.b16 %v5065
        %v5693 = vunpack.c.h.b16 %v5065
        %v5694 = vunpack.c.l.b16 %v5066
        %v5695 = vunpack.c.h.b16 %v5066
        %v5696 = vunpack.c.l.b16 %v5067
        %v5697 = vunpack.c.h.b16 %v5067
        %v5698 = vunpack.c.l.b16 %v5068
        %v5699 = vunpack.c.h.b16 %v5068
        %v5700 = vunpack.c.l.b16 %v5069
        %v5701 = vunpack.c.h.b16 %v5069
        %v5702 = vunpack.c.l.b16 %v5070
        %v5703 = vunpack.c.h.b16 %v5070
        %v5704 = vunpack.c.l.b16 %v5071
        %v5705 = vunpack.c.h.b16 %v5071
        %v5706 = vunpack.c.l.b16 %v5072
        %v5707 = vunpack.c.h.b16 %v5072
        %v5708 = vunpack.c.l.b16 %v5073
        %v5709 = vunpack.c.h.b16 %v5073
        %v5710 = vunpack.c.l.b16 %v5074
        %v5711 = vunpack.c.h.b16 %v5074
        %v5712 = vunpack.c.l.b16 %v5075
        %v5713 = vunpack.c.h.b16 %v5075
        %v5714 = vunpack.c.l.b16 %v5076
        %v5715 = vunpack.c.h.b16 %v5076
        %v5716 = vunpack.c.l.b16 %v5077
        %v5717 = vunpack.c.h.b16 %v5077
        %v5718 = vunpack.c.l.b16 %v5078
        %v5719 = vunpack.c.h.b16 %v5078
        %v5720 = vunpack.c.l.b16 %v5079
        %v5721 = vunpack.c.h.b16 %v5079
        %v5722 = vunpack.c.l.b16 %v5080
        %v5723 = vunpack.c.h.b16 %v5080
        %v5724 = vunpack.c.l.b16 %v5081
        %v5725 = vunpack.c.h.b16 %v5081
        %v5726 = vunpack.c.l.b16 %v5082
        %v5727 = vunpack.c.h.b16 %v5082
        %v5728 = vunpack.c.l.b16 %v5083
        %v5729 = vunpack.c.h.b16 %v5083
        %v5730 = vunpack.c.l.b16 %v5084
        %v5731 = vunpack.c.h.b16 %v5084
        %v5732 = vunpack.c.l.b16 %v5085
        %v5733 = vunpack.c.h.b16 %v5085
        %v5734 = vunpack.c.l.b16 %v5086
        %v5735 = vunpack.c.h.b16 %v5086
        %v5736 = vunpack.c.l.b16 %v5087
        %v5737 = vunpack.c.h.b16 %v5087
        %v5738 = vunpack.c.l.b16 %v5088
        %v5739 = vunpack.c.h.b16 %v5088
        %v5740 = vunpack.c.l.b16 %v5089
        %v5741 = vunpack.c.h.b16 %v5089
        %v5742 = vunpack.c.l.b16 %v5090
        %v5743 = vunpack.c.h.b16 %v5090
        %v5744 = vunpack.c.l.b16 %v5091
        %v5745 = vunpack.c.h.b16 %v5091
        %v5746 = vunpack.c.l.b16 %v5092
        %v5747 = vunpack.c.h.b16 %v5092
        %v5748 = vunpack.c.l.b16 %v5093
        %v5749 = vunpack.c.h.b16 %v5093
        %v5750 = vunpack.c.l.b16 %v5094
        %v5751 = vunpack.c.h.b16 %v5094
        %v5752 = vunpack.c.l.b16 %v5095
        %v5753 = vunpack.c.h.b16 %v5095
        %v5754 = vunpack.c.l.b16 %v5096
        %v5755 = vunpack.c.h.b16 %v5096
        %v5756 = vunpack.c.l.b16 %v5097
        %v5757 = vunpack.c.h.b16 %v5097
        %v5758 = vunpack.c.l.b16 %v5098
        %v5759 = vunpack.c.h.b16 %v5098
        %v5760 = vunpack.c.l.b16 %v5099
        %v5761 = vunpack.c.h.b16 %v5099
        %v5762 = vunpack.c.l.b16 %v5100
        %v5763 = vunpack.c.h.b16 %v5100
        %v5764 = vunpack.c.l.b16 %v5101
        %v5765 = vunpack.c.h.b16 %v5101
        %v5766 = vunpack.c.l.b16 %v5102
        %v5767 = vunpack.c.h.b16 %v5102
        %v5768 = vunpack.c.l.b16 %v5103
        %v5769 = vunpack.c.h.b16 %v5103
        %v5770 = vunpack.c.l.b16 %v5104
        %v5771 = vunpack.c.h.b16 %v5104
        %v5772 = vunpack.c.l.b16 %v5105
        %v5773 = vunpack.c.h.b16 %v5105
        %v5774 = vunpack.c.l.b16 %v5106
        %v5775 = vunpack.c.h.b16 %v5106
        %v5776 = vunpack.c.l.b16 %v5107
        %v5777 = vunpack.c.h.b16 %v5107
        %v5778 = vunpack.c.l.b16 %v5108
        %v5779 = vunpack.c.h.b16 %v5108
        %v5780 = vunpack.c.l.b16 %v5109
        %v5781 = vunpack.c.h.b16 %v5109
        %v5782 = vunpack.c.l.b16 %v5110
        %v5783 = vunpack.c.h.b16 %v5110
        %v5784 = vunpack.c.l.b16 %v5111
        %v5785 = vunpack.c.h.b16 %v5111
        %v5786 = vunpack.c.l.b16 %v5112
        %v5787 = vunpack.c.h.b16 %v5112
        %v5788 = vunpack.c.l.b16 %v5113
        %v5789 = vunpack.c.h.b16 %v5113
        %v5790 = vunpack.c.l.b16 %v5114
        %v5791 = vunpack.c.h.b16 %v5114
        %v5792 = vunpack.c.l.b16 %v5115
        %v5793 = vunpack.c.h.b16 %v5115
        %v5794 = vunpack.c.l.b16 %v5116
        %v5795 = vunpack.c.h.b16 %v5116
        %v5796 = vunpack.c.l.b16 %v5117
        %v5797 = vunpack.c.h.b16 %v5117
        %v5798 = vunpack.c.l.b16 %v5118
        %v5799 = vunpack.c.h.b16 %v5118
        %v5800 = vunpack.c.l.b16 %v5119
        %v5801 = vunpack.c.h.b16 %v5119
        %v5802 = vunpack.c.l.b16 %v5120
        %v5803 = vunpack.c.h.b16 %v5120
        %v5804 = vunpack.c.l.b16 %v5121
        %v5805 = vunpack.c.h.b16 %v5121
        %v5806 = vunpack.c.l.b16 %v5122
        %v5807 = vunpack.c.h.b16 %v5122
        %v5808 = vunpack.c.l.b16 %v5123
        %v5809 = vunpack.c.h.b16 %v5123
        %v5810 = vunpack.c.l.b16 %v5124
        %v5811 = vunpack.c.h.b16 %v5124
        %v5812 = vunpack.c.l.b16 %v5125
        %v5813 = vunpack.c.h.b16 %v5125
        %v5814 = vunpack.c.l.b16 %v5126
        %v5815 = vunpack.c.h.b16 %v5126
        %v5816 = vunpack.c.l.b16 %v5127
        %v5817 = vunpack.c.h.b16 %v5127
        %v5818 = vunpack.c.l.b16 %v5128
        %v5819 = vunpack.c.h.b16 %v5128
        %v5820 = vunpack.c.l.b16 %v5129
        %v5821 = vunpack.c.h.b16 %v5129
        %v5822 = vunpack.c.l.b16 %v5130
        %v5823 = vunpack.c.h.b16 %v5130
        %v5824 = vunpack.c.l.b16 %v5131
        %v5825 = vunpack.c.h.b16 %v5131
        %v5826 = vunpack.c.l.b16 %v5132
        %v5827 = vunpack.c.h.b16 %v5132
        %v5828 = vunpack.c.l.b16 %v5133
        %v5829 = vunpack.c.h.b16 %v5133
        %v5830 = vunpack.c.l.b16 %v5134
        %v5831 = vunpack.c.h.b16 %v5134
        %v5832 = vunpack.c.l.b16 %v5135
        %v5833 = vunpack.c.h.b16 %v5135
        %v5834 = vunpack.c.l.b16 %v5136
        %v5835 = vunpack.c.h.b16 %v5136
        %v5836 = vunpack.c.l.b16 %v5137
        %v5837 = vunpack.c.h.b16 %v5137
        %v5838 = vunpack.c.l.b16 %v5138
        %v5839 = vunpack.c.h.b16 %v5138
        %v5840 = vunpack.c.l.b16 %v5139
        %v5841 = vunpack.c.h.b16 %v5139
        %v5842 = vunpack.c.l.b16 %v5140
        %v5843 = vunpack.c.h.b16 %v5140
        %v5844 = vunpack.c.l.b16 %v5141
        %v5845 = vunpack.c.h.b16 %v5141
        %v5846 = vunpack.c.l.b16 %v5142
        %v5847 = vunpack.c.h.b16 %v5142
        %v5848 = vunpack.c.l.b16 %v5143
        %v5849 = vunpack.c.h.b16 %v5143
        %v5850 = vunpack.c.l.b16 %v5144
        %v5851 = vunpack.c.h.b16 %v5144
        %v5852 = vunpack.c.l.b16 %v5145
        %v5853 = vunpack.c.h.b16 %v5145
        %v5854 = vunpack.c.l.b16 %v5146
        %v5855 = vunpack.c.h.b16 %v5146
        %v5856 = vunpack.c.l.b16 %v5147
        %v5857 = vunpack.c.h.b16 %v5147
        %v5858 = vunpack.c.l.b16 %v5148
        %v5859 = vunpack.c.h.b16 %v5148
        %v5860 = vunpack.c.l.b16 %v5149
        %v5861 = vunpack.c.h.b16 %v5149
        %v5862 = vunpack.c.l.b16 %v5150
        %v5863 = vunpack.c.h.b16 %v5150
        %v5864 = vunpack.c.l.b16 %v5151
        %v5865 = vunpack.c.h.b16 %v5151
        %v5866 = vunpack.c.l.b16 %v5152
        %v5867 = vunpack.c.h.b16 %v5152
        %v5868 = vunpack.c.l.b16 %v5153
        %v5869 = vunpack.c.h.b16 %v5153
        %v5870 = vunpack.c.l.b16 %v5154
        %v5871 = vunpack.c.h.b16 %v5154
        %v5872 = vunpack.c.l.b16 %v5155
        %v5873 = vunpack.c.h.b16 %v5155
        %v5874 = vunpack.c.l.b16 %v5156
        %v5875 = vunpack.c.h.b16 %v5156
        %v5876 = vunpack.c.l.b16 %v5157
        %v5877 = vunpack.c.h.b16 %v5157
        %v5878 = vunpack.c.l.b16 %v5158
        %v5879 = vunpack.c.h.b16 %v5158
        %v5880 = vunpack.c.l.b16 %v5159
        %v5881 = vunpack.c.h.b16 %v5159
        %v5882 = vunpack.c.l.b16 %v5160
        %v5883 = vunpack.c.h.b16 %v5160
        %v5884 = vunpack.c.l.b16 %v5161
        %v5885 = vunpack.c.h.b16 %v5161
        %v5886 = vunpack.c.l.b16 %v5162
        %v5887 = vunpack.c.h.b16 %v5162
        %v5888 = vunpack.c.l.b16 %v5163
        %v5889 = vunpack.c.h.b16 %v5163
        %v5890 = vunpack.c.l.b16 %v5164
        %v5891 = vunpack.c.h.b16 %v5164
        %v5892 = vunpack.c.l.b16 %v5165
        %v5893 = vunpack.c.h.b16 %v5165
        %v5894 = vunpack.c.l.b16 %v5166
        %v5895 = vunpack.c.h.b16 %v5166
        %v5896 = vunpack.c.l.b16 %v5167
        %v5897 = vunpack.c.h.b16 %v5167
        %v5898 = vunpack.c.l.b16 %v5168
        %v5899 = vunpack.c.h.b16 %v5168
        %v5900 = vunpack.c.l.b16 %v5169
        %v5901 = vunpack.c.h.b16 %v5169
        %v5902 = vunpack.c.l.b16 %v5170
        %v5903 = vunpack.c.h.b16 %v5170
        %v5904 = vunpack.c.l.b16 %v5171
        %v5905 = vunpack.c.h.b16 %v5171
        %v5906 = vunpack.c.l.b16 %v5172
        %v5907 = vunpack.c.h.b16 %v5172
        %v5908 = vunpack.c.l.b16 %v5173
        %v5909 = vunpack.c.h.b16 %v5173
        %v5910 = vunpack.c.l.b16 %v5174
        %v5911 = vunpack.c.h.b16 %v5174
        %v5912 = vunpack.c.l.b16 %v5175
        %v5913 = vunpack.c.h.b16 %v5175
        %v5914 = vunpack.c.l.b16 %v5176
        %v5915 = vunpack.c.h.b16 %v5176
        %v5916 = vunpack.c.l.b16 %v5177
        %v5917 = vunpack.c.h.b16 %v5177
        %v5918 = vunpack.c.l.b16 %v5178
        %v5919 = vunpack.c.h.b16 %v5178
        %v5920 = vunpack.c.l.b16 %v5179
        %v5921 = vunpack.c.h.b16 %v5179
        %v5922 = vunpack.c.l.b16 %v5180
        %v5923 = vunpack.c.h.b16 %v5180
        %v5924 = vunpack.c.l.b16 %v5181
        %v5925 = vunpack.c.h.b16 %v5181
        %v5926 = vunpack.c.l.b16 %v5182
        %v5927 = vunpack.c.h.b16 %v5182
        %v5928 = vunpack.c.l.b16 %v5183
        %v5929 = vunpack.c.h.b16 %v5183
        %v5930 = vunpack.c.l.b16 %v5184
        %v5931 = vunpack.c.h.b16 %v5184
        %v5932 = vunpack.c.l.b16 %v5185
        %v5933 = vunpack.c.h.b16 %v5185
        %v5934 = vunpack.c.l.b16 %v5186
        %v5935 = vunpack.c.h.b16 %v5186
        %v5936 = vunpack.c.l.b16 %v5187
        %v5937 = vunpack.c.h.b16 %v5187
        %v5938 = vunpack.c.l.b16 %v5188
        %v5939 = vunpack.c.h.b16 %v5188
        %v5940 = vunpack.c.l.b16 %v5189
        %v5941 = vunpack.c.h.b16 %v5189
        %v5942 = vunpack.c.l.b16 %v5190
        %v5943 = vunpack.c.h.b16 %v5190
        %v5944 = vunpack.c.l.b16 %v5191
        %v5945 = vunpack.c.h.b16 %v5191
        %v5946 = vunpack.c.l.b16 %v5192
        %v5947 = vunpack.c.h.b16 %v5192
        %v5948 = vunpack.c.l.b16 %v5193
        %v5949 = vunpack.c.h.b16 %v5193
        %v5950 = vunpack.c.l.b16 %v5194
        %v5951 = vunpack.c.h.b16 %v5194
        %v5952 = vunpack.c.l.b16 %v5195
        %v5953 = vunpack.c.h.b16 %v5195
        %v5954 = vunpack.c.l.b16 %v5196
        %v5955 = vunpack.c.h.b16 %v5196
        %v5956 = vunpack.c.l.b16 %v5197
        %v5957 = vunpack.c.h.b16 %v5197
        %v5958 = vunpack.c.l.b16 %v5198
        %v5959 = vunpack.c.h.b16 %v5198
        %v5960 = vunpack.c.l.b16 %v5199
        %v5961 = vunpack.c.h.b16 %v5199
        %v5962 = vunpack.c.l.b16 %v5200
        %v5963 = vunpack.c.h.b16 %v5200
        %v5964 = vunpack.c.l.b16 %v5201
        %v5965 = vunpack.c.h.b16 %v5201
        %v5966 = vunpack.c.l.b16 %v5202
        %v5967 = vunpack.c.h.b16 %v5202
        %v5968 = vunpack.c.l.b16 %v5203
        %v5969 = vunpack.c.h.b16 %v5203
        %v5970 = vunpack.c.l.b16 %v5204
        %v5971 = vunpack.c.h.b16 %v5204
        %v5972 = vunpack.c.l.b16 %v5205
        %v5973 = vunpack.c.h.b16 %v5205
        %v5974 = vpack.c.b16 %v5470, %v5462
        %v5975 = vpack.c.b16 %v5471, %v5463
        %v5976 = vpack.c.b16 %v5472, %v5464
        %v5977 = vpack.c.b16 %v5473, %v5465
        %v5978 = vpack.c.b16 %v5474, %v5466
        %v5979 = vpack.c.b16 %v5475, %v5467
        %v5980 = vpack.c.b16 %v5476, %v5468
        %v5981 = vpack.c.b16 %v5477, %v5469
        %v5982 = vpack.c.b16 %v5486, %v5478
        %v5983 = vpack.c.b16 %v5487, %v5479
        %v5984 = vpack.c.b16 %v5488, %v5480
        %v5985 = vpack.c.b16 %v5489, %v5481
        %v5986 = vpack.c.b16 %v5490, %v5482
        %v5987 = vpack.c.b16 %v5491, %v5483
        %v5988 = vpack.c.b16 %v5492, %v5484
        %v5989 = vpack.c.b16 %v5493, %v5485
        %v5990 = vpack.c.b16 %v5502, %v5494
        %v5991 = vpack.c.b16 %v5503, %v5495
        %v5992 = vpack.c.b16 %v5504, %v5496
        %v5993 = vpack.c.b16 %v5505, %v5497
        %v5994 = vpack.c.b16 %v5506, %v5498
        %v5995 = vpack.c.b16 %v5507, %v5499
        %v5996 = vpack.c.b16 %v5508, %v5500
        %v5997 = vpack.c.b16 %v5509, %v5501
        %v5998 = vpack.c.b16 %v5518, %v5510
        %v5999 = vpack.c.b16 %v5519, %v5511
        %v6000 = vpack.c.b16 %v5520, %v5512
        %v6001 = vpack.c.b16 %v5521, %v5513
        %v6002 = vpack.c.b16 %v5522, %v5514
        %v6003 = vpack.c.b16 %v5523, %v5515
        %v6004 = vpack.c.b16 %v5524, %v5516
        %v6005 = vpack.c.b16 %v5525, %v5517
        %v6006 = vpack.c.b16 %v5534, %v5526
        %v6007 = vpack.c.b16 %v5535, %v5527
        %v6008 = vpack.c.b16 %v5536, %v5528
        %v6009 = vpack.c.b16 %v5537, %v5529
        %v6010 = vpack.c.b16 %v5538, %v5530
        %v6011 = vpack.c.b16 %v5539, %v5531
        %v6012 = vpack.c.b16 %v5540, %v5532
        %v6013 = vpack.c.b16 %v5541, %v5533
        %v6014 = vpack.c.b16 %v5550, %v5542
        %v6015 = vpack.c.b16 %v5551, %v5543
        %v6016 = vpack.c.b16 %v5552, %v5544
        %v6017 = vpack.c.b16 %v5553, %v5545
        %v6018 = vpack.c.b16 %v5554, %v5546
        %v6019 = vpack.c.b16 %v5555, %v5547
        %v6020 = vpack.c.b16 %v5556, %v5548
        %v6021 = vpack.c.b16 %v5557, %v5549
        %v6022 = vpack.c.b16 %v5566, %v5558
        %v6023 = vpack.c.b16 %v5567, %v5559
        %v6024 = vpack.c.b16 %v5568, %v5560
        %v6025 = vpack.c.b16 %v5569, %v5561
        %v6026 = vpack.c.b16 %v5570, %v5562
        %v6027 = vpack.c.b16 %v5571, %v5563
        %v6028 = vpack.c.b16 %v5572, %v5564
        %v6029 = vpack.c.b16 %v5573, %v5565
        %v6030 = vpack.c.b16 %v5582, %v5574
        %v6031 = vpack.c.b16 %v5583, %v5575
        %v6032 = vpack.c.b16 %v5584, %v5576
        %v6033 = vpack.c.b16 %v5585, %v5577
        %v6034 = vpack.c.b16 %v5586, %v5578
        %v6035 = vpack.c.b16 %v5587, %v5579
        %v6036 = vpack.c.b16 %v5588, %v5580
        %v6037 = vpack.c.b16 %v5589, %v5581
        %v6038 = vpack.c.b16 %v5598, %v5590
        %v6039 = vpack.c.b16 %v5599, %v5591
        %v6040 = vpack.c.b16 %v5600, %v5592
        %v6041 = vpack.c.b16 %v5601, %v5593
        %v6042 = vpack.c.b16 %v5602, %v5594
        %v6043 = vpack.c.b16 %v5603, %v5595
        %v6044 = vpack.c.b16 %v5604, %v5596
        %v6045 = vpack.c.b16 %v5605, %v5597
        %v6046 = vpack.c.b16 %v5614, %v5606
        %v6047 = vpack.c.b16 %v5615, %v5607
        %v6048 = vpack.c.b16 %v5616, %v5608
        %v6049 = vpack.c.b16 %v5617, %v5609
        %v6050 = vpack.c.b16 %v5618, %v5610
        %v6051 = vpack.c.b16 %v5619, %v5611
        %v6052 = vpack.c.b16 %v5620, %v5612
        %v6053 = vpack.c.b16 %v5621, %v5613
        %v6054 = vpack.c.b16 %v5630, %v5622
        %v6055 = vpack.c.b16 %v5631, %v5623
        %v6056 = vpack.c.b16 %v5632, %v5624
        %v6057 = vpack.c.b16 %v5633, %v5625
        %v6058 = vpack.c.b16 %v5634, %v5626
        %v6059 = vpack.c.b16 %v5635, %v5627
        %v6060 = vpack.c.b16 %v5636, %v5628
        %v6061 = vpack.c.b16 %v5637, %v5629
        %v6062 = vpack.c.b16 %v5646, %v5638
        %v6063 = vpack.c.b16 %v5647, %v5639
        %v6064 = vpack.c.b16 %v5648, %v5640
        %v6065 = vpack.c.b16 %v5649, %v5641
        %v6066 = vpack.c.b16 %v5650, %v5642
        %v6067 = vpack.c.b16 %v5651, %v5643
        %v6068 = vpack.c.b16 %v5652, %v5644
        %v6069 = vpack.c.b16 %v5653, %v5645
        %v6070 = vpack.c.b16 %v5662, %v5654
        %v6071 = vpack.c.b16 %v5663, %v5655
        %v6072 = vpack.c.b16 %v5664, %v5656
        %v6073 = vpack.c.b16 %v5665, %v5657
        %v6074 = vpack.c.b16 %v5666, %v5658
        %v6075 = vpack.c.b16 %v5667, %v5659
        %v6076 = vpack.c.b16 %v5668, %v5660
        %v6077 = vpack.c.b16 %v5669, %v5661
        %v6078 = vpack.c.b16 %v5678, %v5670
        %v6079 = vpack.c.b16 %v5679, %v5671
        %v6080 = vpack.c.b16 %v5680, %v5672
        %v6081 = vpack.c.b16 %v5681, %v5673
        %v6082 = vpack.c.b16 %v5682, %v5674
        %v6083 = vpack.c.b16 %v5683, %v5675
        %v6084 = vpack.c.b16 %v5684, %v5676
        %v6085 = vpack.c.b16 %v5685, %v5677
        %v6086 = vpack.c.b16 %v5694, %v5686
        %v6087 = vpack.c.b16 %v5695, %v5687
        %v6088 = vpack.c.b16 %v5696, %v5688
        %v6089 = vpack.c.b16 %v5697, %v5689
        %v6090 = vpack.c.b16 %v5698, %v5690
        %v6091 = vpack.c.b16 %v5699, %v5691
        %v6092 = vpack.c.b16 %v5700, %v5692
        %v6093 = vpack.c.b16 %v5701, %v5693
        %v6094 = vpack.c.b16 %v5710, %v5702
        %v6095 = vpack.c.b16 %v5711, %v5703
        %v6096 = vpack.c.b16 %v5712, %v5704
        %v6097 = vpack.c.b16 %v5713, %v5705
        %v6098 = vpack.c.b16 %v5714, %v5706
        %v6099 = vpack.c.b16 %v5715, %v5707
        %v6100 = vpack.c.b16 %v5716, %v5708
        %v6101 = vpack.c.b16 %v5717, %v5709
        %v6102 = vpack.c.b16 %v5726, %v5718
        %v6103 = vpack.c.b16 %v5727, %v5719
        %v6104 = vpack.c.b16 %v5728, %v5720
        %v6105 = vpack.c.b16 %v5729, %v5721
        %v6106 = vpack.c.b16 %v5730, %v5722
        %v6107 = vpack.c.b16 %v5731, %v5723
        %v6108 = vpack.c.b16 %v5732, %v5724
        %v6109 = vpack.c.b16 %v5733, %v5725
        %v6110 = vpack.c.b16 %v5742, %v5734
        %v6111 = vpack.c.b16 %v5743, %v5735
        %v6112 = vpack.c.b16 %v5744, %v5736
        %v6113 = vpack.c.b16 %v5745, %v5737
        %v6114 = vpack.c.b16 %v5746, %v5738
        %v6115 = vpack.c.b16 %v5747, %v5739
        %v6116 = vpack.c.b16 %v5748, %v5740
        %v6117 = vpack.c.b16 %v5749, %v5741
        %v6118 = vpack.c.b16 %v5758, %v5750
        %v6119 = vpack.c.b16 %v5759, %v5751
        %v6120 = vpack.c.b16 %v5760, %v5752
        %v6121 = vpack.c.b16 %v5761, %v5753
        %v6122 = vpack.c.b16 %v5762, %v5754
        %v6123 = vpack.c.b16 %v5763, %v5755
        %v6124 = vpack.c.b16 %v5764, %v5756
        %v6125 = vpack.c.b16 %v5765, %v5757
        %v6126 = vpack.c.b16 %v5774, %v5766
        %v6127 = vpack.c.b16 %v5775, %v5767
        %v6128 = vpack.c.b16 %v5776, %v5768
        %v6129 = vpack.c.b16 %v5777, %v5769
        %v6130 = vpack.c.b16 %v5778, %v5770
        %v6131 = vpack.c.b16 %v5779, %v5771
        %v6132 = vpack.c.b16 %v5780, %v5772
        %v6133 = vpack.c.b16 %v5781, %v5773
        %v6134 = vpack.c.b16 %v5790, %v5782
        %v6135 = vpack.c.b16 %v5791, %v5783
        %v6136 = vpack.c.b16 %v5792, %v5784
        %v6137 = vpack.c.b16 %v5793, %v5785
        %v6138 = vpack.c.b16 %v5794, %v5786
        %v6139 = vpack.c.b16 %v5795, %v5787
        %v6140 = vpack.c.b16 %v5796, %v5788
        %v6141 = vpack.c.b16 %v5797, %v5789
        %v6142 = vpack.c.b16 %v5806, %v5798
        %v6143 = vpack.c.b16 %v5807, %v5799
        %v6144 = vpack.c.b16 %v5808, %v5800
        %v6145 = vpack.c.b16 %v5809, %v5801
        %v6146 = vpack.c.b16 %v5810, %v5802
        %v6147 = vpack.c.b16 %v5811, %v5803
        %v6148 = vpack.c.b16 %v5812, %v5804
        %v6149 = vpack.c.b16 %v5813, %v5805
        %v6150 = vpack.c.b16 %v5822, %v5814
        %v6151 = vpack.c.b16 %v5823, %v5815
        %v6152 = vpack.c.b16 %v5824, %v5816
        %v6153 = vpack.c.b16 %v5825, %v5817
        %v6154 = vpack.c.b16 %v5826, %v5818
        %v6155 = vpack.c.b16 %v5827, %v5819
        %v6156 = vpack.c.b16 %v5828, %v5820
        %v6157 = vpack.c.b16 %v5829, %v5821
        %v6158 = vpack.c.b16 %v5838, %v5830
        %v6159 = vpack.c.b16 %v5839, %v5831
        %v6160 = vpack.c.b16 %v5840, %v5832
        %v6161 = vpack.c.b16 %v5841, %v5833
        %v6162 = vpack.c.b16 %v5842, %v5834
        %v6163 = vpack.c.b16 %v5843, %v5835
        %v6164 = vpack.c.b16 %v5844, %v5836
        %v6165 = vpack.c.b16 %v5845, %v5837
        %v6166 = vpack.c.b16 %v5854, %v5846
        %v6167 = vpack.c.b16 %v5855, %v5847
        %v6168 = vpack.c.b16 %v5856, %v5848
        %v6169 = vpack.c.b16 %v5857, %v5849
        %v6170 = vpack.c.b16 %v5858, %v5850
        %v6171 = vpack.c.b16 %v5859, %v5851
        %v6172 = vpack.c.b16 %v5860, %v5852
        %v6173 = vpack.c.b16 %v5861, %v5853
        %v6174 = vpack.c.b16 %v5870, %v5862
        %v6175 = vpack.c.b16 %v5871, %v5863
        %v6176 = vpack.c.b16 %v5872, %v5864
        %v6177 = vpack.c.b16 %v5873, %v5865
        %v6178 = vpack.c.b16 %v5874, %v5866
        %v6179 = vpack.c.b16 %v5875, %v5867
        %v6180 = vpack.c.b16 %v5876, %v5868
        %v6181 = vpack.c.b16 %v5877, %v5869
        %v6182 = vpack.c.b16 %v5886, %v5878
        %v6183 = vpack.c.b16 %v5887, %v5879
        %v6184 = vpack.c.b16 %v5888, %v5880
        %v6185 = vpack.c.b16 %v5889, %v5881
        %v6186 = vpack.c.b16 %v5890, %v5882
        %v6187 = vpack.c.b16 %v5891, %v5883
        %v6188 = vpack.c.b16 %v5892, %v5884
        %v6189 = vpack.c.b16 %v5893, %v5885
        %v6190 = vpack.c.b16 %v5902, %v5894
        %v6191 = vpack.c.b16 %v5903, %v5895
        %v6192 = vpack.c.b16 %v5904, %v5896
        %v6193 = vpack.c.b16 %v5905, %v5897
        %v6194 = vpack.c.b16 %v5906, %v5898
        %v6195 = vpack.c.b16 %v5907, %v5899
        %v6196 = vpack.c.b16 %v5908, %v5900
        %v6197 = vpack.c.b16 %v5909, %v5901
        %v6198 = vpack.c.b16 %v5918, %v5910
        %v6199 = vpack.c.b16 %v5919, %v5911
        %v6200 = vpack.c.b16 %v5920, %v5912
        %v6201 = vpack.c.b16 %v5921, %v5913
        %v6202 = vpack.c.b16 %v5922, %v5914
        %v6203 = vpack.c.b16 %v5923, %v5915
        %v6204 = vpack.c.b16 %v5924, %v5916
        %v6205 = vpack.c.b16 %v5925, %v5917
        %v6206 = vpack.c.b16 %v5934, %v5926
        %v6207 = vpack.c.b16 %v5935, %v5927
        %v6208 = vpack.c.b16 %v5936, %v5928
        %v6209 = vpack.c.b16 %v5937, %v5929
        %v6210 = vpack.c.b16 %v5938, %v5930
        %v6211 = vpack.c.b16 %v5939, %v5931
        %v6212 = vpack.c.b16 %v5940, %v5932
        %v6213 = vpack.c.b16 %v5941, %v5933
        %v6214 = vpack.c.b16 %v5950, %v5942
        %v6215 = vpack.c.b16 %v5951, %v5943
        %v6216 = vpack.c.b16 %v5952, %v5944
        %v6217 = vpack.c.b16 %v5953, %v5945
        %v6218 = vpack.c.b16 %v5954, %v5946
        %v6219 = vpack.c.b16 %v5955, %v5947
        %v6220 = vpack.c.b16 %v5956, %v5948
        %v6221 = vpack.c.b16 %v5957, %v5949
        %v6222 = vpack.c.b16 %v5966, %v5958
        %v6223 = vpack.c.b16 %v5967, %v5959
        %v6224 = vpack.c.b16 %v5968, %v5960
        %v6225 = vpack.c.b16 %v5969, %v5961
        %v6226 = vpack.c.b16 %v5970, %v5962
        %v6227 = vpack.c.b16 %v5971, %v5963
        %v6228 = vpack.c.b16 %v5972, %v5964
        %v6229 = vpack.c.b16 %v5973, %v5965
        %6486 = vmatprep.subr.bf16.mxu0 %v6031
        %6487 = vmatpush1.bf16.msra.mxu0 %v6030
        %6488 = vmatprep.subr.bf16.mxu0 %v6023
        %6489 = vmatpush1.bf16.msra.mxu0 %v6022
        %6490 = vmatprep.subr.bf16.mxu0 %v6015
        %6491 = vmatpush1.bf16.msra.mxu0 %v6014
        %6492 = vmatprep.subr.bf16.mxu0 %v6007
        %6493 = vmatpush1.bf16.msra.mxu0 %v6006
        %6494 = vmatprep.subr.bf16.mxu0 %v5999
        %6495 = vmatpush1.bf16.msra.mxu0 %v5998
        %6496 = vmatprep.subr.bf16.mxu0 %v5991
        %6497 = vmatpush1.bf16.msra.mxu0 %v5990
        %6498 = vmatprep.subr.bf16.mxu0 %v5983
        %6499 = vmatpush1.bf16.msra.mxu0 %v5982
        %6500 = vmatprep.subr.bf16.mxu0 %v5975
        %6501 = vmatpush1.bf16.msra.mxu0 %v5974
        %6502 = vmatprep.subr.bf16.mxu0 %v6095
        %6503 = vmatpush2.bf16.msra.mxu0 %v6094
        %6504 = vmatprep.subr.bf16.mxu0 %v6087
        %6505 = vmatpush2.bf16.msra.mxu0 %v6086
        %6506 = vmatprep.subr.bf16.mxu0 %v6079
        %6507 = vmatpush2.bf16.msra.mxu0 %v6078
        %6508 = vmatprep.subr.bf16.mxu0 %v6071
        %6509 = vmatpush2.bf16.msra.mxu0 %v6070
        %6510 = vmatprep.subr.bf16.mxu0 %v6063
        %6511 = vmatpush2.bf16.msra.mxu0 %v6062
        %6512 = vmatprep.subr.bf16.mxu0 %v6055
        %6513 = vmatpush2.bf16.msra.mxu0 %v6054
        %6514 = vmatprep.subr.bf16.mxu0 %v6047
        %6515 = vmatpush2.bf16.msra.mxu0 %v6046
        %6516 = vmatprep.subr.bf16.mxu0 %v6039
        %6517 = vmatpush2.bf16.msra.mxu0 %v6038
        %6518 = vmatprep.mubr.bf16.mxu0 %v4691
        %6519 = vmatmul.mubr.bf16.gmra.mxu0 %v4690
        %v6520 = vpop.f32.mrf.mxu0
        %v6521 = vadd.f32 0.0, %v6520
        %v6522 = vpop.f32.mrf.mxu0
        %v6523 = vadd.f32 0.0, %v6522
        %v6524 = vpop.f32.mrf.mxu0
        %v6525 = vpop.f32.mrf.mxu0
        %6526 = vdwg.mxu0
        %6527 = vmatprep.subr.bf16.mxu0 %v6159
        %6528 = vmatpush1.bf16.msra.mxu0 %v6158
        %6529 = vmatprep.subr.bf16.mxu0 %v6151
        %6530 = vmatpush1.bf16.msra.mxu0 %v6150
        %6531 = vmatprep.subr.bf16.mxu0 %v6143
        %6532 = vmatpush1.bf16.msra.mxu0 %v6142
        %6533 = vmatprep.subr.bf16.mxu0 %v6135
        %6534 = vmatpush1.bf16.msra.mxu0 %v6134
        %6535 = vmatprep.subr.bf16.mxu0 %v6127
        %6536 = vmatpush1.bf16.msra.mxu0 %v6126
        %6537 = vmatprep.subr.bf16.mxu0 %v6119
        %6538 = vmatpush1.bf16.msra.mxu0 %v6118
        %6539 = vmatprep.subr.bf16.mxu0 %v6111
        %6540 = vmatpush1.bf16.msra.mxu0 %v6110
        %6541 = vmatprep.subr.bf16.mxu0 %v6103
        %6542 = vmatpush1.bf16.msra.mxu0 %v6102
        %6543 = vmatprep.subr.bf16.mxu0 %v6223
        %6544 = vmatpush2.bf16.msra.mxu0 %v6222
        %6545 = vmatprep.subr.bf16.mxu0 %v6215
        %6546 = vmatpush2.bf16.msra.mxu0 %v6214
        %6547 = vmatprep.subr.bf16.mxu0 %v6207
        %6548 = vmatpush2.bf16.msra.mxu0 %v6206
        %6549 = vmatprep.subr.bf16.mxu0 %v6199
        %6550 = vmatpush2.bf16.msra.mxu0 %v6198
        %6551 = vmatprep.subr.bf16.mxu0 %v6191
        %6552 = vmatpush2.bf16.msra.mxu0 %v6190
        %6553 = vmatprep.subr.bf16.mxu0 %v6183
        %6554 = vmatpush2.bf16.msra.mxu0 %v6182
        %6555 = vmatprep.subr.bf16.mxu0 %v6175
        %6556 = vmatpush2.bf16.msra.mxu0 %v6174
        %6557 = vmatprep.subr.bf16.mxu0 %v6167
        %6558 = vmatpush2.bf16.msra.mxu0 %v6166
        %6559 = vmatprep.mubr.bf16.mxu0 %v4693
        %6560 = vmatmul.mubr.bf16.gmra.mxu0 %v4692
        %v6561 = vpop.f32.mrf.mxu0
        %v6562 = vadd.f32 %v6521, %v6561
        %v6563 = vpop.f32.mrf.mxu0
        %v6564 = vadd.f32 %v6523, %v6563
        %v6565 = vpop.f32.mrf.mxu0
        %v6566 = vpop.f32.mrf.mxu0
        %6567 = vdwg.mxu0
        %6568 = vmatprep.subr.bf16.mxu0 %v6033
        %6569 = vmatpush1.bf16.msra.mxu0 %v6032
        %6570 = vmatprep.subr.bf16.mxu0 %v6025
        %6571 = vmatpush1.bf16.msra.mxu0 %v6024
        %6572 = vmatprep.subr.bf16.mxu0 %v6017
        %6573 = vmatpush1.bf16.msra.mxu0 %v6016
        %6574 = vmatprep.subr.bf16.mxu0 %v6009
        %6575 = vmatpush1.bf16.msra.mxu0 %v6008
        %6576 = vmatprep.subr.bf16.mxu0 %v6001
        %6577 = vmatpush1.bf16.msra.mxu0 %v6000
        %6578 = vmatprep.subr.bf16.mxu0 %v5993
        %6579 = vmatpush1.bf16.msra.mxu0 %v5992
        %6580 = vmatprep.subr.bf16.mxu0 %v5985
        %6581 = vmatpush1.bf16.msra.mxu0 %v5984
        %6582 = vmatprep.subr.bf16.mxu0 %v5977
        %6583 = vmatpush1.bf16.msra.mxu0 %v5976
        %6584 = vmatprep.subr.bf16.mxu0 %v6097
        %6585 = vmatpush2.bf16.msra.mxu0 %v6096
        %6586 = vmatprep.subr.bf16.mxu0 %v6089
        %6587 = vmatpush2.bf16.msra.mxu0 %v6088
        %6588 = vmatprep.subr.bf16.mxu0 %v6081
        %6589 = vmatpush2.bf16.msra.mxu0 %v6080
        %6590 = vmatprep.subr.bf16.mxu0 %v6073
        %6591 = vmatpush2.bf16.msra.mxu0 %v6072
        %6592 = vmatprep.subr.bf16.mxu0 %v6065
        %6593 = vmatpush2.bf16.msra.mxu0 %v6064
        %6594 = vmatprep.subr.bf16.mxu0 %v6057
        %6595 = vmatpush2.bf16.msra.mxu0 %v6056
        %6596 = vmatprep.subr.bf16.mxu0 %v6049
        %6597 = vmatpush2.bf16.msra.mxu0 %v6048
        %6598 = vmatprep.subr.bf16.mxu0 %v6041
        %6599 = vmatpush2.bf16.msra.mxu0 %v6040
        %6600 = vmatprep.mubr.bf16.mxu0 %v4691
        %6601 = vmatmul.mubr.bf16.gmra.mxu0 %v4690
        %v6602 = vpop.f32.mrf.mxu0
        %v6603 = vadd.f32 0.0, %v6602
        %v6604 = vpop.f32.mrf.mxu0
        %v6605 = vadd.f32 0.0, %v6604
        %v6606 = vpop.f32.mrf.mxu0
        %v6607 = vpop.f32.mrf.mxu0
        %6608 = vdwg.mxu0
        %6609 = vmatprep.subr.bf16.mxu0 %v6161
        %6610 = vmatpush1.bf16.msra.mxu0 %v6160
        %6611 = vmatprep.subr.bf16.mxu0 %v6153
        %6612 = vmatpush1.bf16.msra.mxu0 %v6152
        %6613 = vmatprep.subr.bf16.mxu0 %v6145
        %6614 = vmatpush1.bf16.msra.mxu0 %v6144
        %6615 = vmatprep.subr.bf16.mxu0 %v6137
        %6616 = vmatpush1.bf16.msra.mxu0 %v6136
        %6617 = vmatprep.subr.bf16.mxu0 %v6129
        %6618 = vmatpush1.bf16.msra.mxu0 %v6128
        %6619 = vmatprep.subr.bf16.mxu0 %v6121
        %6620 = vmatpush1.bf16.msra.mxu0 %v6120
        %6621 = vmatprep.subr.bf16.mxu0 %v6113
        %6622 = vmatpush1.bf16.msra.mxu0 %v6112
        %6623 = vmatprep.subr.bf16.mxu0 %v6105
        %6624 = vmatpush1.bf16.msra.mxu0 %v6104
        %6625 = vmatprep.subr.bf16.mxu0 %v6225
        %6626 = vmatpush2.bf16.msra.mxu0 %v6224
        %6627 = vmatprep.subr.bf16.mxu0 %v6217
        %6628 = vmatpush2.bf16.msra.mxu0 %v6216
        %6629 = vmatprep.subr.bf16.mxu0 %v6209
        %6630 = vmatpush2.bf16.msra.mxu0 %v6208
        %6631 = vmatprep.subr.bf16.mxu0 %v6201
        %6632 = vmatpush2.bf16.msra.mxu0 %v6200
        %6633 = vmatprep.subr.bf16.mxu0 %v6193
        %6634 = vmatpush2.bf16.msra.mxu0 %v6192
        %6635 = vmatprep.subr.bf16.mxu0 %v6185
        %6636 = vmatpush2.bf16.msra.mxu0 %v6184
        %6637 = vmatprep.subr.bf16.mxu0 %v6177
        %6638 = vmatpush2.bf16.msra.mxu0 %v6176
        %6639 = vmatprep.subr.bf16.mxu0 %v6169
        %6640 = vmatpush2.bf16.msra.mxu0 %v6168
        %6641 = vmatprep.mubr.bf16.mxu0 %v4693
        %6642 = vmatmul.mubr.bf16.gmra.mxu0 %v4692
        %v6643 = vpop.f32.mrf.mxu0
        %v6644 = vadd.f32 %v6603, %v6643
        %v6645 = vpop.f32.mrf.mxu0
        %v6646 = vadd.f32 %v6605, %v6645
        %v6647 = vpop.f32.mrf.mxu0
        %v6648 = vpop.f32.mrf.mxu0
        %6649 = vdwg.mxu0
        %6650 = vmatprep.subr.bf16.mxu0 %v6035
        %6651 = vmatpush1.bf16.msra.mxu0 %v6034
        %6652 = vmatprep.subr.bf16.mxu0 %v6027
        %6653 = vmatpush1.bf16.msra.mxu0 %v6026
        %6654 = vmatprep.subr.bf16.mxu0 %v6019
        %6655 = vmatpush1.bf16.msra.mxu0 %v6018
        %6656 = vmatprep.subr.bf16.mxu0 %v6011
        %6657 = vmatpush1.bf16.msra.mxu0 %v6010
        %6658 = vmatprep.subr.bf16.mxu0 %v6003
        %6659 = vmatpush1.bf16.msra.mxu0 %v6002
        %6660 = vmatprep.subr.bf16.mxu0 %v5995
        %6661 = vmatpush1.bf16.msra.mxu0 %v5994
        %6662 = vmatprep.subr.bf16.mxu0 %v5987
        %6663 = vmatpush1.bf16.msra.mxu0 %v5986
        %6664 = vmatprep.subr.bf16.mxu0 %v5979
        %6665 = vmatpush1.bf16.msra.mxu0 %v5978
        %6666 = vmatprep.subr.bf16.mxu0 %v6099
        %6667 = vmatpush2.bf16.msra.mxu0 %v6098
        %6668 = vmatprep.subr.bf16.mxu0 %v6091
        %6669 = vmatpush2.bf16.msra.mxu0 %v6090
        %6670 = vmatprep.subr.bf16.mxu0 %v6083
        %6671 = vmatpush2.bf16.msra.mxu0 %v6082
        %6672 = vmatprep.subr.bf16.mxu0 %v6075
        %6673 = vmatpush2.bf16.msra.mxu0 %v6074
        %6674 = vmatprep.subr.bf16.mxu0 %v6067
        %6675 = vmatpush2.bf16.msra.mxu0 %v6066
        %6676 = vmatprep.subr.bf16.mxu0 %v6059
        %6677 = vmatpush2.bf16.msra.mxu0 %v6058
        %6678 = vmatprep.subr.bf16.mxu0 %v6051
        %6679 = vmatpush2.bf16.msra.mxu0 %v6050
        %6680 = vmatprep.subr.bf16.mxu0 %v6043
        %6681 = vmatpush2.bf16.msra.mxu0 %v6042
        %6682 = vmatprep.mubr.bf16.mxu0 %v4691
        %6683 = vmatmul.mubr.bf16.gmra.mxu0 %v4690
        %v6684 = vpop.f32.mrf.mxu0
        %v6685 = vadd.f32 0.0, %v6684
        %v6686 = vpop.f32.mrf.mxu0
        %v6687 = vadd.f32 0.0, %v6686
        %v6688 = vpop.f32.mrf.mxu0
        %v6689 = vpop.f32.mrf.mxu0
        %6690 = vdwg.mxu0
        %6691 = vmatprep.subr.bf16.mxu0 %v6163
        %6692 = vmatpush1.bf16.msra.mxu0 %v6162
        %6693 = vmatprep.subr.bf16.mxu0 %v6155
        %6694 = vmatpush1.bf16.msra.mxu0 %v6154
        %6695 = vmatprep.subr.bf16.mxu0 %v6147
        %6696 = vmatpush1.bf16.msra.mxu0 %v6146
        %6697 = vmatprep.subr.bf16.mxu0 %v6139
        %6698 = vmatpush1.bf16.msra.mxu0 %v6138
        %6699 = vmatprep.subr.bf16.mxu0 %v6131
        %6700 = vmatpush1.bf16.msra.mxu0 %v6130
        %6701 = vmatprep.subr.bf16.mxu0 %v6123
        %6702 = vmatpush1.bf16.msra.mxu0 %v6122
        %6703 = vmatprep.subr.bf16.mxu0 %v6115
        %6704 = vmatpush1.bf16.msra.mxu0 %v6114
        %6705 = vmatprep.subr.bf16.mxu0 %v6107
        %6706 = vmatpush1.bf16.msra.mxu0 %v6106
        %6707 = vmatprep.subr.bf16.mxu0 %v6227
        %6708 = vmatpush2.bf16.msra.mxu0 %v6226
        %6709 = vmatprep.subr.bf16.mxu0 %v6219
        %6710 = vmatpush2.bf16.msra.mxu0 %v6218
        %6711 = vmatprep.subr.bf16.mxu0 %v6211
        %6712 = vmatpush2.bf16.msra.mxu0 %v6210
        %6713 = vmatprep.subr.bf16.mxu0 %v6203
        %6714 = vmatpush2.bf16.msra.mxu0 %v6202
        %6715 = vmatprep.subr.bf16.mxu0 %v6195
        %6716 = vmatpush2.bf16.msra.mxu0 %v6194
        %6717 = vmatprep.subr.bf16.mxu0 %v6187
        %6718 = vmatpush2.bf16.msra.mxu0 %v6186
        %6719 = vmatprep.subr.bf16.mxu0 %v6179
        %6720 = vmatpush2.bf16.msra.mxu0 %v6178
        %6721 = vmatprep.subr.bf16.mxu0 %v6171
        %6722 = vmatpush2.bf16.msra.mxu0 %v6170
        %6723 = vmatprep.mubr.bf16.mxu0 %v4693
        %6724 = vmatmul.mubr.bf16.gmra.mxu0 %v4692
        %v6725 = vpop.f32.mrf.mxu0
        %v6726 = vadd.f32 %v6685, %v6725
        %v6727 = vpop.f32.mrf.mxu0
        %v6728 = vadd.f32 %v6687, %v6727
        %v6729 = vpop.f32.mrf.mxu0
        %v6730 = vpop.f32.mrf.mxu0
        %6731 = vdwg.mxu0
        %6732 = vmatprep.subr.bf16.mxu0 %v6037
        %6733 = vmatpush1.bf16.msra.mxu0 %v6036
        %6734 = vmatprep.subr.bf16.mxu0 %v6029
        %6735 = vmatpush1.bf16.msra.mxu0 %v6028
        %6736 = vmatprep.subr.bf16.mxu0 %v6021
        %6737 = vmatpush1.bf16.msra.mxu0 %v6020
        %6738 = vmatprep.subr.bf16.mxu0 %v6013
        %6739 = vmatpush1.bf16.msra.mxu0 %v6012
        %6740 = vmatprep.subr.bf16.mxu0 %v6005
        %6741 = vmatpush1.bf16.msra.mxu0 %v6004
        %6742 = vmatprep.subr.bf16.mxu0 %v5997
        %6743 = vmatpush1.bf16.msra.mxu0 %v5996
        %6744 = vmatprep.subr.bf16.mxu0 %v5989
        %6745 = vmatpush1.bf16.msra.mxu0 %v5988
        %6746 = vmatprep.subr.bf16.mxu0 %v5981
        %6747 = vmatpush1.bf16.msra.mxu0 %v5980
        %6748 = vmatprep.subr.bf16.mxu0 %v6101
        %6749 = vmatpush2.bf16.msra.mxu0 %v6100
        %6750 = vmatprep.subr.bf16.mxu0 %v6093
        %6751 = vmatpush2.bf16.msra.mxu0 %v6092
        %6752 = vmatprep.subr.bf16.mxu0 %v6085
        %6753 = vmatpush2.bf16.msra.mxu0 %v6084
        %6754 = vmatprep.subr.bf16.mxu0 %v6077
        %6755 = vmatpush2.bf16.msra.mxu0 %v6076
        %6756 = vmatprep.subr.bf16.mxu0 %v6069
        %6757 = vmatpush2.bf16.msra.mxu0 %v6068
        %6758 = vmatprep.subr.bf16.mxu0 %v6061
        %6759 = vmatpush2.bf16.msra.mxu0 %v6060
        %6760 = vmatprep.subr.bf16.mxu0 %v6053
        %6761 = vmatpush2.bf16.msra.mxu0 %v6052
        %6762 = vmatprep.subr.bf16.mxu0 %v6045
        %6763 = vmatpush2.bf16.msra.mxu0 %v6044
        %6764 = vmatprep.mubr.bf16.mxu0 %v4691
        %6765 = vmatmul.mubr.bf16.gmra.mxu0 %v4690
        %v6766 = vpop.f32.mrf.mxu0
        %v6767 = vadd.f32 0.0, %v6766
        %v6768 = vpop.f32.mrf.mxu0
        %v6769 = vadd.f32 0.0, %v6768
        %v6770 = vpop.f32.mrf.mxu0
        %v6771 = vpop.f32.mrf.mxu0
        %6772 = vdwg.mxu0
        %6773 = vmatprep.subr.bf16.mxu0 %v6165
        %6774 = vmatpush1.bf16.msra.mxu0 %v6164
        %6775 = vmatprep.subr.bf16.mxu0 %v6157
        %6776 = vmatpush1.bf16.msra.mxu0 %v6156
        %6777 = vmatprep.subr.bf16.mxu0 %v6149
        %6778 = vmatpush1.bf16.msra.mxu0 %v6148
        %6779 = vmatprep.subr.bf16.mxu0 %v6141
        %6780 = vmatpush1.bf16.msra.mxu0 %v6140
        %6781 = vmatprep.subr.bf16.mxu0 %v6133
        %6782 = vmatpush1.bf16.msra.mxu0 %v6132
        %6783 = vmatprep.subr.bf16.mxu0 %v6125
        %6784 = vmatpush1.bf16.msra.mxu0 %v6124
        %6785 = vmatprep.subr.bf16.mxu0 %v6117
        %6786 = vmatpush1.bf16.msra.mxu0 %v6116
        %6787 = vmatprep.subr.bf16.mxu0 %v6109
        %6788 = vmatpush1.bf16.msra.mxu0 %v6108
        %6789 = vmatprep.subr.bf16.mxu0 %v6229
        %6790 = vmatpush2.bf16.msra.mxu0 %v6228
        %6791 = vmatprep.subr.bf16.mxu0 %v6221
        %6792 = vmatpush2.bf16.msra.mxu0 %v6220
        %6793 = vmatprep.subr.bf16.mxu0 %v6213
        %6794 = vmatpush2.bf16.msra.mxu0 %v6212
        %6795 = vmatprep.subr.bf16.mxu0 %v6205
        %6796 = vmatpush2.bf16.msra.mxu0 %v6204
        %6797 = vmatprep.subr.bf16.mxu0 %v6197
        %6798 = vmatpush2.bf16.msra.mxu0 %v6196
        %6799 = vmatprep.subr.bf16.mxu0 %v6189
        %6800 = vmatpush2.bf16.msra.mxu0 %v6188
        %6801 = vmatprep.subr.bf16.mxu0 %v6181
        %6802 = vmatpush2.bf16.msra.mxu0 %v6180
        %6803 = vmatprep.subr.bf16.mxu0 %v6173
        %6804 = vmatpush2.bf16.msra.mxu0 %v6172
        %6805 = vmatprep.mubr.bf16.mxu0 %v4693
        %6806 = vmatmul.mubr.bf16.gmra.mxu0 %v4692
        %v6807 = vpop.f32.mrf.mxu0
        %v6808 = vadd.f32 %v6767, %v6807
        %v6809 = vpop.f32.mrf.mxu0
        %v6810 = vadd.f32 %v6769, %v6809
        %v6811 = vpop.f32.mrf.mxu0
        %v6812 = vpop.f32.mrf.mxu0
        %6813 = vdwg.mxu0
        %v7070 = vunpack.c.l.b16 %v4694
        %v7071 = vunpack.c.h.b16 %v4694
        %v7072 = vunpack.c.l.b16 %v4695
        %v7073 = vunpack.c.h.b16 %v4695
        %v7074 = vunpack.c.l.b16 %v4696
        %v7075 = vunpack.c.h.b16 %v4696
        %v7076 = vunpack.c.l.b16 %v4697
        %v7077 = vunpack.c.h.b16 %v4697
        %v7078 = vunpack.c.l.b16 %v4698
        %v7079 = vunpack.c.h.b16 %v4698
        %v7080 = vunpack.c.l.b16 %v4699
        %v7081 = vunpack.c.h.b16 %v4699
        %v7082 = vunpack.c.l.b16 %v4700
        %v7083 = vunpack.c.h.b16 %v4700
        %v7084 = vunpack.c.l.b16 %v4701
        %v7085 = vunpack.c.h.b16 %v4701
        %v7086 = vunpack.c.l.b16 %v4702
        %v7087 = vunpack.c.h.b16 %v4702
        %v7088 = vunpack.c.l.b16 %v4703
        %v7089 = vunpack.c.h.b16 %v4703
        %v7090 = vunpack.c.l.b16 %v4704
        %v7091 = vunpack.c.h.b16 %v4704
        %v7092 = vunpack.c.l.b16 %v4705
        %v7093 = vunpack.c.h.b16 %v4705
        %v7094 = vunpack.c.l.b16 %v4706
        %v7095 = vunpack.c.h.b16 %v4706
        %v7096 = vunpack.c.l.b16 %v4707
        %v7097 = vunpack.c.h.b16 %v4707
        %v7098 = vunpack.c.l.b16 %v4708
        %v7099 = vunpack.c.h.b16 %v4708
        %v7100 = vunpack.c.l.b16 %v4709
        %v7101 = vunpack.c.h.b16 %v4709
        %v7102 = vunpack.c.l.b16 %v4710
        %v7103 = vunpack.c.h.b16 %v4710
        %v7104 = vunpack.c.l.b16 %v4711
        %v7105 = vunpack.c.h.b16 %v4711
        %v7106 = vunpack.c.l.b16 %v4712
        %v7107 = vunpack.c.h.b16 %v4712
        %v7108 = vunpack.c.l.b16 %v4713
        %v7109 = vunpack.c.h.b16 %v4713
        %v7110 = vunpack.c.l.b16 %v4714
        %v7111 = vunpack.c.h.b16 %v4714
        %v7112 = vunpack.c.l.b16 %v4715
        %v7113 = vunpack.c.h.b16 %v4715
        %v7114 = vunpack.c.l.b16 %v4716
        %v7115 = vunpack.c.h.b16 %v4716
        %v7116 = vunpack.c.l.b16 %v4717
        %v7117 = vunpack.c.h.b16 %v4717
        %v7118 = vunpack.c.l.b16 %v4718
        %v7119 = vunpack.c.h.b16 %v4718
        %v7120 = vunpack.c.l.b16 %v4719
        %v7121 = vunpack.c.h.b16 %v4719
        %v7122 = vunpack.c.l.b16 %v4720
        %v7123 = vunpack.c.h.b16 %v4720
        %v7124 = vunpack.c.l.b16 %v4721
        %v7125 = vunpack.c.h.b16 %v4721
        %v7126 = vunpack.c.l.b16 %v4722
        %v7127 = vunpack.c.h.b16 %v4722
        %v7128 = vunpack.c.l.b16 %v4723
        %v7129 = vunpack.c.h.b16 %v4723
        %v7130 = vunpack.c.l.b16 %v4724
        %v7131 = vunpack.c.h.b16 %v4724
        %v7132 = vunpack.c.l.b16 %v4725
        %v7133 = vunpack.c.h.b16 %v4725
        %v7134 = vunpack.c.l.b16 %v4726
        %v7135 = vunpack.c.h.b16 %v4726
        %v7136 = vunpack.c.l.b16 %v4727
        %v7137 = vunpack.c.h.b16 %v4727
        %v7138 = vunpack.c.l.b16 %v4728
        %v7139 = vunpack.c.h.b16 %v4728
        %v7140 = vunpack.c.l.b16 %v4729
        %v7141 = vunpack.c.h.b16 %v4729
        %v7142 = vunpack.c.l.b16 %v4730
        %v7143 = vunpack.c.h.b16 %v4730
        %v7144 = vunpack.c.l.b16 %v4731
        %v7145 = vunpack.c.h.b16 %v4731
        %v7146 = vunpack.c.l.b16 %v4732
        %v7147 = vunpack.c.h.b16 %v4732
        %v7148 = vunpack.c.l.b16 %v4733
        %v7149 = vunpack.c.h.b16 %v4733
        %v7150 = vunpack.c.l.b16 %v4734
        %v7151 = vunpack.c.h.b16 %v4734
        %v7152 = vunpack.c.l.b16 %v4735
        %v7153 = vunpack.c.h.b16 %v4735
        %v7154 = vunpack.c.l.b16 %v4736
        %v7155 = vunpack.c.h.b16 %v4736
        %v7156 = vunpack.c.l.b16 %v4737
        %v7157 = vunpack.c.h.b16 %v4737
        %v7158 = vunpack.c.l.b16 %v4738
        %v7159 = vunpack.c.h.b16 %v4738
        %v7160 = vunpack.c.l.b16 %v4739
        %v7161 = vunpack.c.h.b16 %v4739
        %v7162 = vunpack.c.l.b16 %v4740
        %v7163 = vunpack.c.h.b16 %v4740
        %v7164 = vunpack.c.l.b16 %v4741
        %v7165 = vunpack.c.h.b16 %v4741
        %v7166 = vunpack.c.l.b16 %v4742
        %v7167 = vunpack.c.h.b16 %v4742
        %v7168 = vunpack.c.l.b16 %v4743
        %v7169 = vunpack.c.h.b16 %v4743
        %v7170 = vunpack.c.l.b16 %v4744
        %v7171 = vunpack.c.h.b16 %v4744
        %v7172 = vunpack.c.l.b16 %v4745
        %v7173 = vunpack.c.h.b16 %v4745
        %v7174 = vunpack.c.l.b16 %v4746
        %v7175 = vunpack.c.h.b16 %v4746
        %v7176 = vunpack.c.l.b16 %v4747
        %v7177 = vunpack.c.h.b16 %v4747
        %v7178 = vunpack.c.l.b16 %v4748
        %v7179 = vunpack.c.h.b16 %v4748
        %v7180 = vunpack.c.l.b16 %v4749
        %v7181 = vunpack.c.h.b16 %v4749
        %v7182 = vunpack.c.l.b16 %v4750
        %v7183 = vunpack.c.h.b16 %v4750
        %v7184 = vunpack.c.l.b16 %v4751
        %v7185 = vunpack.c.h.b16 %v4751
        %v7186 = vunpack.c.l.b16 %v4752
        %v7187 = vunpack.c.h.b16 %v4752
        %v7188 = vunpack.c.l.b16 %v4753
        %v7189 = vunpack.c.h.b16 %v4753
        %v7190 = vunpack.c.l.b16 %v4754
        %v7191 = vunpack.c.h.b16 %v4754
        %v7192 = vunpack.c.l.b16 %v4755
        %v7193 = vunpack.c.h.b16 %v4755
        %v7194 = vunpack.c.l.b16 %v4756
        %v7195 = vunpack.c.h.b16 %v4756
        %v7196 = vunpack.c.l.b16 %v4757
        %v7197 = vunpack.c.h.b16 %v4757
        %v7198 = vunpack.c.l.b16 %v4758
        %v7199 = vunpack.c.h.b16 %v4758
        %v7200 = vunpack.c.l.b16 %v4759
        %v7201 = vunpack.c.h.b16 %v4759
        %v7202 = vunpack.c.l.b16 %v4760
        %v7203 = vunpack.c.h.b16 %v4760
        %v7204 = vunpack.c.l.b16 %v4761
        %v7205 = vunpack.c.h.b16 %v4761
        %v7206 = vunpack.c.l.b16 %v4762
        %v7207 = vunpack.c.h.b16 %v4762
        %v7208 = vunpack.c.l.b16 %v4763
        %v7209 = vunpack.c.h.b16 %v4763
        %v7210 = vunpack.c.l.b16 %v4764
        %v7211 = vunpack.c.h.b16 %v4764
        %v7212 = vunpack.c.l.b16 %v4765
        %v7213 = vunpack.c.h.b16 %v4765
        %v7214 = vunpack.c.l.b16 %v4766
        %v7215 = vunpack.c.h.b16 %v4766
        %v7216 = vunpack.c.l.b16 %v4767
        %v7217 = vunpack.c.h.b16 %v4767
        %v7218 = vunpack.c.l.b16 %v4768
        %v7219 = vunpack.c.h.b16 %v4768
        %v7220 = vunpack.c.l.b16 %v4769
        %v7221 = vunpack.c.h.b16 %v4769
        %v7222 = vunpack.c.l.b16 %v4770
        %v7223 = vunpack.c.h.b16 %v4770
        %v7224 = vunpack.c.l.b16 %v4771
        %v7225 = vunpack.c.h.b16 %v4771
        %v7226 = vunpack.c.l.b16 %v4772
        %v7227 = vunpack.c.h.b16 %v4772
        %v7228 = vunpack.c.l.b16 %v4773
        %v7229 = vunpack.c.h.b16 %v4773
        %v7230 = vunpack.c.l.b16 %v4774
        %v7231 = vunpack.c.h.b16 %v4774
        %v7232 = vunpack.c.l.b16 %v4775
        %v7233 = vunpack.c.h.b16 %v4775
        %v7234 = vunpack.c.l.b16 %v4776
        %v7235 = vunpack.c.h.b16 %v4776
        %v7236 = vunpack.c.l.b16 %v4777
        %v7237 = vunpack.c.h.b16 %v4777
        %v7238 = vunpack.c.l.b16 %v4778
        %v7239 = vunpack.c.h.b16 %v4778
        %v7240 = vunpack.c.l.b16 %v4779
        %v7241 = vunpack.c.h.b16 %v4779
        %v7242 = vunpack.c.l.b16 %v4780
        %v7243 = vunpack.c.h.b16 %v4780
        %v7244 = vunpack.c.l.b16 %v4781
        %v7245 = vunpack.c.h.b16 %v4781
        %v7246 = vunpack.c.l.b16 %v4782
        %v7247 = vunpack.c.h.b16 %v4782
        %v7248 = vunpack.c.l.b16 %v4783
        %v7249 = vunpack.c.h.b16 %v4783
        %v7250 = vunpack.c.l.b16 %v4784
        %v7251 = vunpack.c.h.b16 %v4784
        %v7252 = vunpack.c.l.b16 %v4785
        %v7253 = vunpack.c.h.b16 %v4785
        %v7254 = vunpack.c.l.b16 %v4786
        %v7255 = vunpack.c.h.b16 %v4786
        %v7256 = vunpack.c.l.b16 %v4787
        %v7257 = vunpack.c.h.b16 %v4787
        %v7258 = vunpack.c.l.b16 %v4788
        %v7259 = vunpack.c.h.b16 %v4788
        %v7260 = vunpack.c.l.b16 %v4789
        %v7261 = vunpack.c.h.b16 %v4789
        %v7262 = vunpack.c.l.b16 %v4790
        %v7263 = vunpack.c.h.b16 %v4790
        %v7264 = vunpack.c.l.b16 %v4791
        %v7265 = vunpack.c.h.b16 %v4791
        %v7266 = vunpack.c.l.b16 %v4792
        %v7267 = vunpack.c.h.b16 %v4792
        %v7268 = vunpack.c.l.b16 %v4793
        %v7269 = vunpack.c.h.b16 %v4793
        %v7270 = vunpack.c.l.b16 %v4794
        %v7271 = vunpack.c.h.b16 %v4794
        %v7272 = vunpack.c.l.b16 %v4795
        %v7273 = vunpack.c.h.b16 %v4795
        %v7274 = vunpack.c.l.b16 %v4796
        %v7275 = vunpack.c.h.b16 %v4796
        %v7276 = vunpack.c.l.b16 %v4797
        %v7277 = vunpack.c.h.b16 %v4797
        %v7278 = vunpack.c.l.b16 %v4798
        %v7279 = vunpack.c.h.b16 %v4798
        %v7280 = vunpack.c.l.b16 %v4799
        %v7281 = vunpack.c.h.b16 %v4799
        %v7282 = vunpack.c.l.b16 %v4800
        %v7283 = vunpack.c.h.b16 %v4800
        %v7284 = vunpack.c.l.b16 %v4801
        %v7285 = vunpack.c.h.b16 %v4801
        %v7286 = vunpack.c.l.b16 %v4802
        %v7287 = vunpack.c.h.b16 %v4802
        %v7288 = vunpack.c.l.b16 %v4803
        %v7289 = vunpack.c.h.b16 %v4803
        %v7290 = vunpack.c.l.b16 %v4804
        %v7291 = vunpack.c.h.b16 %v4804
        %v7292 = vunpack.c.l.b16 %v4805
        %v7293 = vunpack.c.h.b16 %v4805
        %v7294 = vunpack.c.l.b16 %v4806
        %v7295 = vunpack.c.h.b16 %v4806
        %v7296 = vunpack.c.l.b16 %v4807
        %v7297 = vunpack.c.h.b16 %v4807
        %v7298 = vunpack.c.l.b16 %v4808
        %v7299 = vunpack.c.h.b16 %v4808
        %v7300 = vunpack.c.l.b16 %v4809
        %v7301 = vunpack.c.h.b16 %v4809
        %v7302 = vunpack.c.l.b16 %v4810
        %v7303 = vunpack.c.h.b16 %v4810
        %v7304 = vunpack.c.l.b16 %v4811
        %v7305 = vunpack.c.h.b16 %v4811
        %v7306 = vunpack.c.l.b16 %v4812
        %v7307 = vunpack.c.h.b16 %v4812
        %v7308 = vunpack.c.l.b16 %v4813
        %v7309 = vunpack.c.h.b16 %v4813
        %v7310 = vunpack.c.l.b16 %v4814
        %v7311 = vunpack.c.h.b16 %v4814
        %v7312 = vunpack.c.l.b16 %v4815
        %v7313 = vunpack.c.h.b16 %v4815
        %v7314 = vunpack.c.l.b16 %v4816
        %v7315 = vunpack.c.h.b16 %v4816
        %v7316 = vunpack.c.l.b16 %v4817
        %v7317 = vunpack.c.h.b16 %v4817
        %v7318 = vunpack.c.l.b16 %v4818
        %v7319 = vunpack.c.h.b16 %v4818
        %v7320 = vunpack.c.l.b16 %v4819
        %v7321 = vunpack.c.h.b16 %v4819
        %v7322 = vunpack.c.l.b16 %v4820
        %v7323 = vunpack.c.h.b16 %v4820
        %v7324 = vunpack.c.l.b16 %v4821
        %v7325 = vunpack.c.h.b16 %v4821
        %v7326 = vunpack.c.l.b16 %v4822
        %v7327 = vunpack.c.h.b16 %v4822
        %v7328 = vunpack.c.l.b16 %v4823
        %v7329 = vunpack.c.h.b16 %v4823
        %v7330 = vunpack.c.l.b16 %v4824
        %v7331 = vunpack.c.h.b16 %v4824
        %v7332 = vunpack.c.l.b16 %v4825
        %v7333 = vunpack.c.h.b16 %v4825
        %v7334 = vunpack.c.l.b16 %v4826
        %v7335 = vunpack.c.h.b16 %v4826
        %v7336 = vunpack.c.l.b16 %v4827
        %v7337 = vunpack.c.h.b16 %v4827
        %v7338 = vunpack.c.l.b16 %v4828
        %v7339 = vunpack.c.h.b16 %v4828
        %v7340 = vunpack.c.l.b16 %v4829
        %v7341 = vunpack.c.h.b16 %v4829
        %v7342 = vunpack.c.l.b16 %v4830
        %v7343 = vunpack.c.h.b16 %v4830
        %v7344 = vunpack.c.l.b16 %v4831
        %v7345 = vunpack.c.h.b16 %v4831
        %v7346 = vunpack.c.l.b16 %v4832
        %v7347 = vunpack.c.h.b16 %v4832
        %v7348 = vunpack.c.l.b16 %v4833
        %v7349 = vunpack.c.h.b16 %v4833
        %v7350 = vunpack.c.l.b16 %v4834
        %v7351 = vunpack.c.h.b16 %v4834
        %v7352 = vunpack.c.l.b16 %v4835
        %v7353 = vunpack.c.h.b16 %v4835
        %v7354 = vunpack.c.l.b16 %v4836
        %v7355 = vunpack.c.h.b16 %v4836
        %v7356 = vunpack.c.l.b16 %v4837
        %v7357 = vunpack.c.h.b16 %v4837
        %v7358 = vunpack.c.l.b16 %v4838
        %v7359 = vunpack.c.h.b16 %v4838
        %v7360 = vunpack.c.l.b16 %v4839
        %v7361 = vunpack.c.h.b16 %v4839
        %v7362 = vunpack.c.l.b16 %v4840
        %v7363 = vunpack.c.h.b16 %v4840
        %v7364 = vunpack.c.l.b16 %v4841
        %v7365 = vunpack.c.h.b16 %v4841
        %v7366 = vunpack.c.l.b16 %v4842
        %v7367 = vunpack.c.h.b16 %v4842
        %v7368 = vunpack.c.l.b16 %v4843
        %v7369 = vunpack.c.h.b16 %v4843
        %v7370 = vunpack.c.l.b16 %v4844
        %v7371 = vunpack.c.h.b16 %v4844
        %v7372 = vunpack.c.l.b16 %v4845
        %v7373 = vunpack.c.h.b16 %v4845
        %v7374 = vunpack.c.l.b16 %v4846
        %v7375 = vunpack.c.h.b16 %v4846
        %v7376 = vunpack.c.l.b16 %v4847
        %v7377 = vunpack.c.h.b16 %v4847
        %v7378 = vunpack.c.l.b16 %v4848
        %v7379 = vunpack.c.h.b16 %v4848
        %v7380 = vunpack.c.l.b16 %v4849
        %v7381 = vunpack.c.h.b16 %v4849
        %v7382 = vunpack.c.l.b16 %v4850
        %v7383 = vunpack.c.h.b16 %v4850
        %v7384 = vunpack.c.l.b16 %v4851
        %v7385 = vunpack.c.h.b16 %v4851
        %v7386 = vunpack.c.l.b16 %v4852
        %v7387 = vunpack.c.h.b16 %v4852
        %v7388 = vunpack.c.l.b16 %v4853
        %v7389 = vunpack.c.h.b16 %v4853
        %v7390 = vunpack.c.l.b16 %v4854
        %v7391 = vunpack.c.h.b16 %v4854
        %v7392 = vunpack.c.l.b16 %v4855
        %v7393 = vunpack.c.h.b16 %v4855
        %v7394 = vunpack.c.l.b16 %v4856
        %v7395 = vunpack.c.h.b16 %v4856
        %v7396 = vunpack.c.l.b16 %v4857
        %v7397 = vunpack.c.h.b16 %v4857
        %v7398 = vunpack.c.l.b16 %v4858
        %v7399 = vunpack.c.h.b16 %v4858
        %v7400 = vunpack.c.l.b16 %v4859
        %v7401 = vunpack.c.h.b16 %v4859
        %v7402 = vunpack.c.l.b16 %v4860
        %v7403 = vunpack.c.h.b16 %v4860
        %v7404 = vunpack.c.l.b16 %v4861
        %v7405 = vunpack.c.h.b16 %v4861
        %v7406 = vunpack.c.l.b16 %v4862
        %v7407 = vunpack.c.h.b16 %v4862
        %v7408 = vunpack.c.l.b16 %v4863
        %v7409 = vunpack.c.h.b16 %v4863
        %v7410 = vunpack.c.l.b16 %v4864
        %v7411 = vunpack.c.h.b16 %v4864
        %v7412 = vunpack.c.l.b16 %v4865
        %v7413 = vunpack.c.h.b16 %v4865
        %v7414 = vunpack.c.l.b16 %v4866
        %v7415 = vunpack.c.h.b16 %v4866
        %v7416 = vunpack.c.l.b16 %v4867
        %v7417 = vunpack.c.h.b16 %v4867
        %v7418 = vunpack.c.l.b16 %v4868
        %v7419 = vunpack.c.h.b16 %v4868
        %v7420 = vunpack.c.l.b16 %v4869
        %v7421 = vunpack.c.h.b16 %v4869
        %v7422 = vunpack.c.l.b16 %v4870
        %v7423 = vunpack.c.h.b16 %v4870
        %v7424 = vunpack.c.l.b16 %v4871
        %v7425 = vunpack.c.h.b16 %v4871
        %v7426 = vunpack.c.l.b16 %v4872
        %v7427 = vunpack.c.h.b16 %v4872
        %v7428 = vunpack.c.l.b16 %v4873
        %v7429 = vunpack.c.h.b16 %v4873
        %v7430 = vunpack.c.l.b16 %v4874
        %v7431 = vunpack.c.h.b16 %v4874
        %v7432 = vunpack.c.l.b16 %v4875
        %v7433 = vunpack.c.h.b16 %v4875
        %v7434 = vunpack.c.l.b16 %v4876
        %v7435 = vunpack.c.h.b16 %v4876
        %v7436 = vunpack.c.l.b16 %v4877
        %v7437 = vunpack.c.h.b16 %v4877
        %v7438 = vunpack.c.l.b16 %v4878
        %v7439 = vunpack.c.h.b16 %v4878
        %v7440 = vunpack.c.l.b16 %v4879
        %v7441 = vunpack.c.h.b16 %v4879
        %v7442 = vunpack.c.l.b16 %v4880
        %v7443 = vunpack.c.h.b16 %v4880
        %v7444 = vunpack.c.l.b16 %v4881
        %v7445 = vunpack.c.h.b16 %v4881
        %v7446 = vunpack.c.l.b16 %v4882
        %v7447 = vunpack.c.h.b16 %v4882
        %v7448 = vunpack.c.l.b16 %v4883
        %v7449 = vunpack.c.h.b16 %v4883
        %v7450 = vunpack.c.l.b16 %v4884
        %v7451 = vunpack.c.h.b16 %v4884
        %v7452 = vunpack.c.l.b16 %v4885
        %v7453 = vunpack.c.h.b16 %v4885
        %v7454 = vunpack.c.l.b16 %v4886
        %v7455 = vunpack.c.h.b16 %v4886
        %v7456 = vunpack.c.l.b16 %v4887
        %v7457 = vunpack.c.h.b16 %v4887
        %v7458 = vunpack.c.l.b16 %v4888
        %v7459 = vunpack.c.h.b16 %v4888
        %v7460 = vunpack.c.l.b16 %v4889
        %v7461 = vunpack.c.h.b16 %v4889
        %v7462 = vunpack.c.l.b16 %v4890
        %v7463 = vunpack.c.h.b16 %v4890
        %v7464 = vunpack.c.l.b16 %v4891
        %v7465 = vunpack.c.h.b16 %v4891
        %v7466 = vunpack.c.l.b16 %v4892
        %v7467 = vunpack.c.h.b16 %v4892
        %v7468 = vunpack.c.l.b16 %v4893
        %v7469 = vunpack.c.h.b16 %v4893
        %v7470 = vunpack.c.l.b16 %v4894
        %v7471 = vunpack.c.h.b16 %v4894
        %v7472 = vunpack.c.l.b16 %v4895
        %v7473 = vunpack.c.h.b16 %v4895
        %v7474 = vunpack.c.l.b16 %v4896
        %v7475 = vunpack.c.h.b16 %v4896
        %v7476 = vunpack.c.l.b16 %v4897
        %v7477 = vunpack.c.h.b16 %v4897
        %v7478 = vunpack.c.l.b16 %v4898
        %v7479 = vunpack.c.h.b16 %v4898
        %v7480 = vunpack.c.l.b16 %v4899
        %v7481 = vunpack.c.h.b16 %v4899
        %v7482 = vunpack.c.l.b16 %v4900
        %v7483 = vunpack.c.h.b16 %v4900
        %v7484 = vunpack.c.l.b16 %v4901
        %v7485 = vunpack.c.h.b16 %v4901
        %v7486 = vunpack.c.l.b16 %v4902
        %v7487 = vunpack.c.h.b16 %v4902
        %v7488 = vunpack.c.l.b16 %v4903
        %v7489 = vunpack.c.h.b16 %v4903
        %v7490 = vunpack.c.l.b16 %v4904
        %v7491 = vunpack.c.h.b16 %v4904
        %v7492 = vunpack.c.l.b16 %v4905
        %v7493 = vunpack.c.h.b16 %v4905
        %v7494 = vunpack.c.l.b16 %v4906
        %v7495 = vunpack.c.h.b16 %v4906
        %v7496 = vunpack.c.l.b16 %v4907
        %v7497 = vunpack.c.h.b16 %v4907
        %v7498 = vunpack.c.l.b16 %v4908
        %v7499 = vunpack.c.h.b16 %v4908
        %v7500 = vunpack.c.l.b16 %v4909
        %v7501 = vunpack.c.h.b16 %v4909
        %v7502 = vunpack.c.l.b16 %v4910
        %v7503 = vunpack.c.h.b16 %v4910
        %v7504 = vunpack.c.l.b16 %v4911
        %v7505 = vunpack.c.h.b16 %v4911
        %v7506 = vunpack.c.l.b16 %v4912
        %v7507 = vunpack.c.h.b16 %v4912
        %v7508 = vunpack.c.l.b16 %v4913
        %v7509 = vunpack.c.h.b16 %v4913
        %v7510 = vunpack.c.l.b16 %v4914
        %v7511 = vunpack.c.h.b16 %v4914
        %v7512 = vunpack.c.l.b16 %v4915
        %v7513 = vunpack.c.h.b16 %v4915
        %v7514 = vunpack.c.l.b16 %v4916
        %v7515 = vunpack.c.h.b16 %v4916
        %v7516 = vunpack.c.l.b16 %v4917
        %v7517 = vunpack.c.h.b16 %v4917
        %v7518 = vunpack.c.l.b16 %v4918
        %v7519 = vunpack.c.h.b16 %v4918
        %v7520 = vunpack.c.l.b16 %v4919
        %v7521 = vunpack.c.h.b16 %v4919
        %v7522 = vunpack.c.l.b16 %v4920
        %v7523 = vunpack.c.h.b16 %v4920
        %v7524 = vunpack.c.l.b16 %v4921
        %v7525 = vunpack.c.h.b16 %v4921
        %v7526 = vunpack.c.l.b16 %v4922
        %v7527 = vunpack.c.h.b16 %v4922
        %v7528 = vunpack.c.l.b16 %v4923
        %v7529 = vunpack.c.h.b16 %v4923
        %v7530 = vunpack.c.l.b16 %v4924
        %v7531 = vunpack.c.h.b16 %v4924
        %v7532 = vunpack.c.l.b16 %v4925
        %v7533 = vunpack.c.h.b16 %v4925
        %v7534 = vunpack.c.l.b16 %v4926
        %v7535 = vunpack.c.h.b16 %v4926
        %v7536 = vunpack.c.l.b16 %v4927
        %v7537 = vunpack.c.h.b16 %v4927
        %v7538 = vunpack.c.l.b16 %v4928
        %v7539 = vunpack.c.h.b16 %v4928
        %v7540 = vunpack.c.l.b16 %v4929
        %v7541 = vunpack.c.h.b16 %v4929
        %v7542 = vunpack.c.l.b16 %v4930
        %v7543 = vunpack.c.h.b16 %v4930
        %v7544 = vunpack.c.l.b16 %v4931
        %v7545 = vunpack.c.h.b16 %v4931
        %v7546 = vunpack.c.l.b16 %v4932
        %v7547 = vunpack.c.h.b16 %v4932
        %v7548 = vunpack.c.l.b16 %v4933
        %v7549 = vunpack.c.h.b16 %v4933
        %v7550 = vunpack.c.l.b16 %v4934
        %v7551 = vunpack.c.h.b16 %v4934
        %v7552 = vunpack.c.l.b16 %v4935
        %v7553 = vunpack.c.h.b16 %v4935
        %v7554 = vunpack.c.l.b16 %v4936
        %v7555 = vunpack.c.h.b16 %v4936
        %v7556 = vunpack.c.l.b16 %v4937
        %v7557 = vunpack.c.h.b16 %v4937
        %v7558 = vunpack.c.l.b16 %v4938
        %v7559 = vunpack.c.h.b16 %v4938
        %v7560 = vunpack.c.l.b16 %v4939
        %v7561 = vunpack.c.h.b16 %v4939
        %v7562 = vunpack.c.l.b16 %v4940
        %v7563 = vunpack.c.h.b16 %v4940
        %v7564 = vunpack.c.l.b16 %v4941
        %v7565 = vunpack.c.h.b16 %v4941
        %v7566 = vunpack.c.l.b16 %v4942
        %v7567 = vunpack.c.h.b16 %v4942
        %v7568 = vunpack.c.l.b16 %v4943
        %v7569 = vunpack.c.h.b16 %v4943
        %v7570 = vunpack.c.l.b16 %v4944
        %v7571 = vunpack.c.h.b16 %v4944
        %v7572 = vunpack.c.l.b16 %v4945
        %v7573 = vunpack.c.h.b16 %v4945
        %v7574 = vunpack.c.l.b16 %v4946
        %v7575 = vunpack.c.h.b16 %v4946
        %v7576 = vunpack.c.l.b16 %v4947
        %v7577 = vunpack.c.h.b16 %v4947
        %v7578 = vunpack.c.l.b16 %v4948
        %v7579 = vunpack.c.h.b16 %v4948
        %v7580 = vunpack.c.l.b16 %v4949
        %v7581 = vunpack.c.h.b16 %v4949
        %v7582 = vpack.c.b16 %v7078, %v7070
        %v7583 = vpack.c.b16 %v7079, %v7071
        %v7584 = vpack.c.b16 %v7080, %v7072
        %v7585 = vpack.c.b16 %v7081, %v7073
        %v7586 = vpack.c.b16 %v7082, %v7074
        %v7587 = vpack.c.b16 %v7083, %v7075
        %v7588 = vpack.c.b16 %v7084, %v7076
        %v7589 = vpack.c.b16 %v7085, %v7077
        %v7590 = vpack.c.b16 %v7094, %v7086
        %v7591 = vpack.c.b16 %v7095, %v7087
        %v7592 = vpack.c.b16 %v7096, %v7088
        %v7593 = vpack.c.b16 %v7097, %v7089
        %v7594 = vpack.c.b16 %v7098, %v7090
        %v7595 = vpack.c.b16 %v7099, %v7091
        %v7596 = vpack.c.b16 %v7100, %v7092
        %v7597 = vpack.c.b16 %v7101, %v7093
        %v7598 = vpack.c.b16 %v7110, %v7102
        %v7599 = vpack.c.b16 %v7111, %v7103
        %v7600 = vpack.c.b16 %v7112, %v7104
        %v7601 = vpack.c.b16 %v7113, %v7105
        %v7602 = vpack.c.b16 %v7114, %v7106
        %v7603 = vpack.c.b16 %v7115, %v7107
        %v7604 = vpack.c.b16 %v7116, %v7108
        %v7605 = vpack.c.b16 %v7117, %v7109
        %v7606 = vpack.c.b16 %v7126, %v7118
        %v7607 = vpack.c.b16 %v7127, %v7119
        %v7608 = vpack.c.b16 %v7128, %v7120
        %v7609 = vpack.c.b16 %v7129, %v7121
        %v7610 = vpack.c.b16 %v7130, %v7122
        %v7611 = vpack.c.b16 %v7131, %v7123
        %v7612 = vpack.c.b16 %v7132, %v7124
        %v7613 = vpack.c.b16 %v7133, %v7125
        %v7614 = vpack.c.b16 %v7142, %v7134
        %v7615 = vpack.c.b16 %v7143, %v7135
        %v7616 = vpack.c.b16 %v7144, %v7136
        %v7617 = vpack.c.b16 %v7145, %v7137
        %v7618 = vpack.c.b16 %v7146, %v7138
        %v7619 = vpack.c.b16 %v7147, %v7139
        %v7620 = vpack.c.b16 %v7148, %v7140
        %v7621 = vpack.c.b16 %v7149, %v7141
        %v7622 = vpack.c.b16 %v7158, %v7150
        %v7623 = vpack.c.b16 %v7159, %v7151
        %v7624 = vpack.c.b16 %v7160, %v7152
        %v7625 = vpack.c.b16 %v7161, %v7153
        %v7626 = vpack.c.b16 %v7162, %v7154
        %v7627 = vpack.c.b16 %v7163, %v7155
        %v7628 = vpack.c.b16 %v7164, %v7156
        %v7629 = vpack.c.b16 %v7165, %v7157
        %v7630 = vpack.c.b16 %v7174, %v7166
        %v7631 = vpack.c.b16 %v7175, %v7167
        %v7632 = vpack.c.b16 %v7176, %v7168
        %v7633 = vpack.c.b16 %v7177, %v7169
        %v7634 = vpack.c.b16 %v7178, %v7170
        %v7635 = vpack.c.b16 %v7179, %v7171
        %v7636 = vpack.c.b16 %v7180, %v7172
        %v7637 = vpack.c.b16 %v7181, %v7173
        %v7638 = vpack.c.b16 %v7190, %v7182
        %v7639 = vpack.c.b16 %v7191, %v7183
        %v7640 = vpack.c.b16 %v7192, %v7184
        %v7641 = vpack.c.b16 %v7193, %v7185
        %v7642 = vpack.c.b16 %v7194, %v7186
        %v7643 = vpack.c.b16 %v7195, %v7187
        %v7644 = vpack.c.b16 %v7196, %v7188
        %v7645 = vpack.c.b16 %v7197, %v7189
        %v7646 = vpack.c.b16 %v7206, %v7198
        %v7647 = vpack.c.b16 %v7207, %v7199
        %v7648 = vpack.c.b16 %v7208, %v7200
        %v7649 = vpack.c.b16 %v7209, %v7201
        %v7650 = vpack.c.b16 %v7210, %v7202
        %v7651 = vpack.c.b16 %v7211, %v7203
        %v7652 = vpack.c.b16 %v7212, %v7204
        %v7653 = vpack.c.b16 %v7213, %v7205
        %v7654 = vpack.c.b16 %v7222, %v7214
        %v7655 = vpack.c.b16 %v7223, %v7215
        %v7656 = vpack.c.b16 %v7224, %v7216
        %v7657 = vpack.c.b16 %v7225, %v7217
        %v7658 = vpack.c.b16 %v7226, %v7218
        %v7659 = vpack.c.b16 %v7227, %v7219
        %v7660 = vpack.c.b16 %v7228, %v7220
        %v7661 = vpack.c.b16 %v7229, %v7221
        %v7662 = vpack.c.b16 %v7238, %v7230
        %v7663 = vpack.c.b16 %v7239, %v7231
        %v7664 = vpack.c.b16 %v7240, %v7232
        %v7665 = vpack.c.b16 %v7241, %v7233
        %v7666 = vpack.c.b16 %v7242, %v7234
        %v7667 = vpack.c.b16 %v7243, %v7235
        %v7668 = vpack.c.b16 %v7244, %v7236
        %v7669 = vpack.c.b16 %v7245, %v7237
        %v7670 = vpack.c.b16 %v7254, %v7246
        %v7671 = vpack.c.b16 %v7255, %v7247
        %v7672 = vpack.c.b16 %v7256, %v7248
        %v7673 = vpack.c.b16 %v7257, %v7249
        %v7674 = vpack.c.b16 %v7258, %v7250
        %v7675 = vpack.c.b16 %v7259, %v7251
        %v7676 = vpack.c.b16 %v7260, %v7252
        %v7677 = vpack.c.b16 %v7261, %v7253
        %v7678 = vpack.c.b16 %v7270, %v7262
        %v7679 = vpack.c.b16 %v7271, %v7263
        %v7680 = vpack.c.b16 %v7272, %v7264
        %v7681 = vpack.c.b16 %v7273, %v7265
        %v7682 = vpack.c.b16 %v7274, %v7266
        %v7683 = vpack.c.b16 %v7275, %v7267
        %v7684 = vpack.c.b16 %v7276, %v7268
        %v7685 = vpack.c.b16 %v7277, %v7269
        %v7686 = vpack.c.b16 %v7286, %v7278
        %v7687 = vpack.c.b16 %v7287, %v7279
        %v7688 = vpack.c.b16 %v7288, %v7280
        %v7689 = vpack.c.b16 %v7289, %v7281
        %v7690 = vpack.c.b16 %v7290, %v7282
        %v7691 = vpack.c.b16 %v7291, %v7283
        %v7692 = vpack.c.b16 %v7292, %v7284
        %v7693 = vpack.c.b16 %v7293, %v7285
        %v7694 = vpack.c.b16 %v7302, %v7294
        %v7695 = vpack.c.b16 %v7303, %v7295
        %v7696 = vpack.c.b16 %v7304, %v7296
        %v7697 = vpack.c.b16 %v7305, %v7297
        %v7698 = vpack.c.b16 %v7306, %v7298
        %v7699 = vpack.c.b16 %v7307, %v7299
        %v7700 = vpack.c.b16 %v7308, %v7300
        %v7701 = vpack.c.b16 %v7309, %v7301
        %v7702 = vpack.c.b16 %v7318, %v7310
        %v7703 = vpack.c.b16 %v7319, %v7311
        %v7704 = vpack.c.b16 %v7320, %v7312
        %v7705 = vpack.c.b16 %v7321, %v7313
        %v7706 = vpack.c.b16 %v7322, %v7314
        %v7707 = vpack.c.b16 %v7323, %v7315
        %v7708 = vpack.c.b16 %v7324, %v7316
        %v7709 = vpack.c.b16 %v7325, %v7317
        %v7710 = vpack.c.b16 %v7334, %v7326
        %v7711 = vpack.c.b16 %v7335, %v7327
        %v7712 = vpack.c.b16 %v7336, %v7328
        %v7713 = vpack.c.b16 %v7337, %v7329
        %v7714 = vpack.c.b16 %v7338, %v7330
        %v7715 = vpack.c.b16 %v7339, %v7331
        %v7716 = vpack.c.b16 %v7340, %v7332
        %v7717 = vpack.c.b16 %v7341, %v7333
        %v7718 = vpack.c.b16 %v7350, %v7342
        %v7719 = vpack.c.b16 %v7351, %v7343
        %v7720 = vpack.c.b16 %v7352, %v7344
        %v7721 = vpack.c.b16 %v7353, %v7345
        %v7722 = vpack.c.b16 %v7354, %v7346
        %v7723 = vpack.c.b16 %v7355, %v7347
        %v7724 = vpack.c.b16 %v7356, %v7348
        %v7725 = vpack.c.b16 %v7357, %v7349
        %v7726 = vpack.c.b16 %v7366, %v7358
        %v7727 = vpack.c.b16 %v7367, %v7359
        %v7728 = vpack.c.b16 %v7368, %v7360
        %v7729 = vpack.c.b16 %v7369, %v7361
        %v7730 = vpack.c.b16 %v7370, %v7362
        %v7731 = vpack.c.b16 %v7371, %v7363
        %v7732 = vpack.c.b16 %v7372, %v7364
        %v7733 = vpack.c.b16 %v7373, %v7365
        %v7734 = vpack.c.b16 %v7382, %v7374
        %v7735 = vpack.c.b16 %v7383, %v7375
        %v7736 = vpack.c.b16 %v7384, %v7376
        %v7737 = vpack.c.b16 %v7385, %v7377
        %v7738 = vpack.c.b16 %v7386, %v7378
        %v7739 = vpack.c.b16 %v7387, %v7379
        %v7740 = vpack.c.b16 %v7388, %v7380
        %v7741 = vpack.c.b16 %v7389, %v7381
        %v7742 = vpack.c.b16 %v7398, %v7390
        %v7743 = vpack.c.b16 %v7399, %v7391
        %v7744 = vpack.c.b16 %v7400, %v7392
        %v7745 = vpack.c.b16 %v7401, %v7393
        %v7746 = vpack.c.b16 %v7402, %v7394
        %v7747 = vpack.c.b16 %v7403, %v7395
        %v7748 = vpack.c.b16 %v7404, %v7396
        %v7749 = vpack.c.b16 %v7405, %v7397
        %v7750 = vpack.c.b16 %v7414, %v7406
        %v7751 = vpack.c.b16 %v7415, %v7407
        %v7752 = vpack.c.b16 %v7416, %v7408
        %v7753 = vpack.c.b16 %v7417, %v7409
        %v7754 = vpack.c.b16 %v7418, %v7410
        %v7755 = vpack.c.b16 %v7419, %v7411
        %v7756 = vpack.c.b16 %v7420, %v7412
        %v7757 = vpack.c.b16 %v7421, %v7413
        %v7758 = vpack.c.b16 %v7430, %v7422
        %v7759 = vpack.c.b16 %v7431, %v7423
        %v7760 = vpack.c.b16 %v7432, %v7424
        %v7761 = vpack.c.b16 %v7433, %v7425
        %v7762 = vpack.c.b16 %v7434, %v7426
        %v7763 = vpack.c.b16 %v7435, %v7427
        %v7764 = vpack.c.b16 %v7436, %v7428
        %v7765 = vpack.c.b16 %v7437, %v7429
        %v7766 = vpack.c.b16 %v7446, %v7438
        %v7767 = vpack.c.b16 %v7447, %v7439
        %v7768 = vpack.c.b16 %v7448, %v7440
        %v7769 = vpack.c.b16 %v7449, %v7441
        %v7770 = vpack.c.b16 %v7450, %v7442
        %v7771 = vpack.c.b16 %v7451, %v7443
        %v7772 = vpack.c.b16 %v7452, %v7444
        %v7773 = vpack.c.b16 %v7453, %v7445
        %v7774 = vpack.c.b16 %v7462, %v7454
        %v7775 = vpack.c.b16 %v7463, %v7455
        %v7776 = vpack.c.b16 %v7464, %v7456
        %v7777 = vpack.c.b16 %v7465, %v7457
        %v7778 = vpack.c.b16 %v7466, %v7458
        %v7779 = vpack.c.b16 %v7467, %v7459
        %v7780 = vpack.c.b16 %v7468, %v7460
        %v7781 = vpack.c.b16 %v7469, %v7461
        %v7782 = vpack.c.b16 %v7478, %v7470
        %v7783 = vpack.c.b16 %v7479, %v7471
        %v7784 = vpack.c.b16 %v7480, %v7472
        %v7785 = vpack.c.b16 %v7481, %v7473
        %v7786 = vpack.c.b16 %v7482, %v7474
        %v7787 = vpack.c.b16 %v7483, %v7475
        %v7788 = vpack.c.b16 %v7484, %v7476
        %v7789 = vpack.c.b16 %v7485, %v7477
        %v7790 = vpack.c.b16 %v7494, %v7486
        %v7791 = vpack.c.b16 %v7495, %v7487
        %v7792 = vpack.c.b16 %v7496, %v7488
        %v7793 = vpack.c.b16 %v7497, %v7489
        %v7794 = vpack.c.b16 %v7498, %v7490
        %v7795 = vpack.c.b16 %v7499, %v7491
        %v7796 = vpack.c.b16 %v7500, %v7492
        %v7797 = vpack.c.b16 %v7501, %v7493
        %v7798 = vpack.c.b16 %v7510, %v7502
        %v7799 = vpack.c.b16 %v7511, %v7503
        %v7800 = vpack.c.b16 %v7512, %v7504
        %v7801 = vpack.c.b16 %v7513, %v7505
        %v7802 = vpack.c.b16 %v7514, %v7506
        %v7803 = vpack.c.b16 %v7515, %v7507
        %v7804 = vpack.c.b16 %v7516, %v7508
        %v7805 = vpack.c.b16 %v7517, %v7509
        %v7806 = vpack.c.b16 %v7526, %v7518
        %v7807 = vpack.c.b16 %v7527, %v7519
        %v7808 = vpack.c.b16 %v7528, %v7520
        %v7809 = vpack.c.b16 %v7529, %v7521
        %v7810 = vpack.c.b16 %v7530, %v7522
        %v7811 = vpack.c.b16 %v7531, %v7523
        %v7812 = vpack.c.b16 %v7532, %v7524
        %v7813 = vpack.c.b16 %v7533, %v7525
        %v7814 = vpack.c.b16 %v7542, %v7534
        %v7815 = vpack.c.b16 %v7543, %v7535
        %v7816 = vpack.c.b16 %v7544, %v7536
        %v7817 = vpack.c.b16 %v7545, %v7537
        %v7818 = vpack.c.b16 %v7546, %v7538
        %v7819 = vpack.c.b16 %v7547, %v7539
        %v7820 = vpack.c.b16 %v7548, %v7540
        %v7821 = vpack.c.b16 %v7549, %v7541
        %v7822 = vpack.c.b16 %v7558, %v7550
        %v7823 = vpack.c.b16 %v7559, %v7551
        %v7824 = vpack.c.b16 %v7560, %v7552
        %v7825 = vpack.c.b16 %v7561, %v7553
        %v7826 = vpack.c.b16 %v7562, %v7554
        %v7827 = vpack.c.b16 %v7563, %v7555
        %v7828 = vpack.c.b16 %v7564, %v7556
        %v7829 = vpack.c.b16 %v7565, %v7557
        %v7830 = vpack.c.b16 %v7574, %v7566
        %v7831 = vpack.c.b16 %v7575, %v7567
        %v7832 = vpack.c.b16 %v7576, %v7568
        %v7833 = vpack.c.b16 %v7577, %v7569
        %v7834 = vpack.c.b16 %v7578, %v7570
        %v7835 = vpack.c.b16 %v7579, %v7571
        %v7836 = vpack.c.b16 %v7580, %v7572
        %v7837 = vpack.c.b16 %v7581, %v7573
        %8094 = vmatprep.subr.bf16.mxu0 %v7639
        %8095 = vmatpush1.bf16.msra.mxu0 %v7638
        %8096 = vmatprep.subr.bf16.mxu0 %v7631
        %8097 = vmatpush1.bf16.msra.mxu0 %v7630
        %8098 = vmatprep.subr.bf16.mxu0 %v7623
        %8099 = vmatpush1.bf16.msra.mxu0 %v7622
        %8100 = vmatprep.subr.bf16.mxu0 %v7615
        %8101 = vmatpush1.bf16.msra.mxu0 %v7614
        %8102 = vmatprep.subr.bf16.mxu0 %v7607
        %8103 = vmatpush1.bf16.msra.mxu0 %v7606
        %8104 = vmatprep.subr.bf16.mxu0 %v7599
        %8105 = vmatpush1.bf16.msra.mxu0 %v7598
        %8106 = vmatprep.subr.bf16.mxu0 %v7591
        %8107 = vmatpush1.bf16.msra.mxu0 %v7590
        %8108 = vmatprep.subr.bf16.mxu0 %v7583
        %8109 = vmatpush1.bf16.msra.mxu0 %v7582
        %8110 = vmatprep.subr.bf16.mxu0 %v7703
        %8111 = vmatpush2.bf16.msra.mxu0 %v7702
        %8112 = vmatprep.subr.bf16.mxu0 %v7695
        %8113 = vmatpush2.bf16.msra.mxu0 %v7694
        %8114 = vmatprep.subr.bf16.mxu0 %v7687
        %8115 = vmatpush2.bf16.msra.mxu0 %v7686
        %8116 = vmatprep.subr.bf16.mxu0 %v7679
        %8117 = vmatpush2.bf16.msra.mxu0 %v7678
        %8118 = vmatprep.subr.bf16.mxu0 %v7671
        %8119 = vmatpush2.bf16.msra.mxu0 %v7670
        %8120 = vmatprep.subr.bf16.mxu0 %v7663
        %8121 = vmatpush2.bf16.msra.mxu0 %v7662
        %8122 = vmatprep.subr.bf16.mxu0 %v7655
        %8123 = vmatpush2.bf16.msra.mxu0 %v7654
        %8124 = vmatprep.subr.bf16.mxu0 %v7647
        %8125 = vmatpush2.bf16.msra.mxu0 %v7646
        %8126 = vmatprep.mubr.bf16.mxu0 %v4687
        %8127 = vmatmul.mubr.bf16.gmra.mxu0 %v4686
        %v8128 = vpop.f32.mrf.mxu0
        %v8129 = vadd.f32 %v6562, %v8128
        %v8130 = vpop.f32.mrf.mxu0
        %v8131 = vadd.f32 %v6564, %v8130
        %v8132 = vpop.f32.mrf.mxu0
        %v8133 = vpop.f32.mrf.mxu0
        %8134 = vdwg.mxu0
        %8135 = vmatprep.subr.bf16.mxu0 %v7767
        %8136 = vmatpush1.bf16.msra.mxu0 %v7766
        %8137 = vmatprep.subr.bf16.mxu0 %v7759
        %8138 = vmatpush1.bf16.msra.mxu0 %v7758
        %8139 = vmatprep.subr.bf16.mxu0 %v7751
        %8140 = vmatpush1.bf16.msra.mxu0 %v7750
        %8141 = vmatprep.subr.bf16.mxu0 %v7743
        %8142 = vmatpush1.bf16.msra.mxu0 %v7742
        %8143 = vmatprep.subr.bf16.mxu0 %v7735
        %8144 = vmatpush1.bf16.msra.mxu0 %v7734
        %8145 = vmatprep.subr.bf16.mxu0 %v7727
        %8146 = vmatpush1.bf16.msra.mxu0 %v7726
        %8147 = vmatprep.subr.bf16.mxu0 %v7719
        %8148 = vmatpush1.bf16.msra.mxu0 %v7718
        %8149 = vmatprep.subr.bf16.mxu0 %v7711
        %8150 = vmatpush1.bf16.msra.mxu0 %v7710
        %8151 = vmatprep.subr.bf16.mxu0 %v7831
        %8152 = vmatpush2.bf16.msra.mxu0 %v7830
        %8153 = vmatprep.subr.bf16.mxu0 %v7823
        %8154 = vmatpush2.bf16.msra.mxu0 %v7822
        %8155 = vmatprep.subr.bf16.mxu0 %v7815
        %8156 = vmatpush2.bf16.msra.mxu0 %v7814
        %8157 = vmatprep.subr.bf16.mxu0 %v7807
        %8158 = vmatpush2.bf16.msra.mxu0 %v7806
        %8159 = vmatprep.subr.bf16.mxu0 %v7799
        %8160 = vmatpush2.bf16.msra.mxu0 %v7798
        %8161 = vmatprep.subr.bf16.mxu0 %v7791
        %8162 = vmatpush2.bf16.msra.mxu0 %v7790
        %8163 = vmatprep.subr.bf16.mxu0 %v7783
        %8164 = vmatpush2.bf16.msra.mxu0 %v7782
        %8165 = vmatprep.subr.bf16.mxu0 %v7775
        %8166 = vmatpush2.bf16.msra.mxu0 %v7774
        %8167 = vmatprep.mubr.bf16.mxu0 %v4689
        %8168 = vmatmul.mubr.bf16.gmra.mxu0 %v4688
        %v8169 = vpop.f32.mrf.mxu0
        %v8170 = vadd.f32 %v8129, %v8169
        %v8171 = vpop.f32.mrf.mxu0
        %v8172 = vadd.f32 %v8131, %v8171
        %v8173 = vpop.f32.mrf.mxu0
        %v8174 = vpop.f32.mrf.mxu0
        %8175 = vdwg.mxu0
        %8176 = vmatprep.subr.bf16.mxu0 %v7641
        %8177 = vmatpush1.bf16.msra.mxu0 %v7640
        %8178 = vmatprep.subr.bf16.mxu0 %v7633
        %8179 = vmatpush1.bf16.msra.mxu0 %v7632
        %8180 = vmatprep.subr.bf16.mxu0 %v7625
        %8181 = vmatpush1.bf16.msra.mxu0 %v7624
        %8182 = vmatprep.subr.bf16.mxu0 %v7617
        %8183 = vmatpush1.bf16.msra.mxu0 %v7616
        %8184 = vmatprep.subr.bf16.mxu0 %v7609
        %8185 = vmatpush1.bf16.msra.mxu0 %v7608
        %8186 = vmatprep.subr.bf16.mxu0 %v7601
        %8187 = vmatpush1.bf16.msra.mxu0 %v7600
        %8188 = vmatprep.subr.bf16.mxu0 %v7593
        %8189 = vmatpush1.bf16.msra.mxu0 %v7592
        %8190 = vmatprep.subr.bf16.mxu0 %v7585
        %8191 = vmatpush1.bf16.msra.mxu0 %v7584
        %8192 = vmatprep.subr.bf16.mxu0 %v7705
        %8193 = vmatpush2.bf16.msra.mxu0 %v7704
        %8194 = vmatprep.subr.bf16.mxu0 %v7697
        %8195 = vmatpush2.bf16.msra.mxu0 %v7696
        %8196 = vmatprep.subr.bf16.mxu0 %v7689
        %8197 = vmatpush2.bf16.msra.mxu0 %v7688
        %8198 = vmatprep.subr.bf16.mxu0 %v7681
        %8199 = vmatpush2.bf16.msra.mxu0 %v7680
        %8200 = vmatprep.subr.bf16.mxu0 %v7673
        %8201 = vmatpush2.bf16.msra.mxu0 %v7672
        %8202 = vmatprep.subr.bf16.mxu0 %v7665
        %8203 = vmatpush2.bf16.msra.mxu0 %v7664
        %8204 = vmatprep.subr.bf16.mxu0 %v7657
        %8205 = vmatpush2.bf16.msra.mxu0 %v7656
        %8206 = vmatprep.subr.bf16.mxu0 %v7649
        %8207 = vmatpush2.bf16.msra.mxu0 %v7648
        %8208 = vmatprep.mubr.bf16.mxu0 %v4687
        %8209 = vmatmul.mubr.bf16.gmra.mxu0 %v4686
        %v8210 = vpop.f32.mrf.mxu0
        %v8211 = vadd.f32 %v6644, %v8210
        %v8212 = vpop.f32.mrf.mxu0
        %v8213 = vadd.f32 %v6646, %v8212
        %v8214 = vpop.f32.mrf.mxu0
        %v8215 = vpop.f32.mrf.mxu0
        %8216 = vdwg.mxu0
        %8217 = vmatprep.subr.bf16.mxu0 %v7769
        %8218 = vmatpush1.bf16.msra.mxu0 %v7768
        %8219 = vmatprep.subr.bf16.mxu0 %v7761
        %8220 = vmatpush1.bf16.msra.mxu0 %v7760
        %8221 = vmatprep.subr.bf16.mxu0 %v7753
        %8222 = vmatpush1.bf16.msra.mxu0 %v7752
        %8223 = vmatprep.subr.bf16.mxu0 %v7745
        %8224 = vmatpush1.bf16.msra.mxu0 %v7744
        %8225 = vmatprep.subr.bf16.mxu0 %v7737
        %8226 = vmatpush1.bf16.msra.mxu0 %v7736
        %8227 = vmatprep.subr.bf16.mxu0 %v7729
        %8228 = vmatpush1.bf16.msra.mxu0 %v7728
        %8229 = vmatprep.subr.bf16.mxu0 %v7721
        %8230 = vmatpush1.bf16.msra.mxu0 %v7720
        %8231 = vmatprep.subr.bf16.mxu0 %v7713
        %8232 = vmatpush1.bf16.msra.mxu0 %v7712
        %8233 = vmatprep.subr.bf16.mxu0 %v7833
        %8234 = vmatpush2.bf16.msra.mxu0 %v7832
        %8235 = vmatprep.subr.bf16.mxu0 %v7825
        %8236 = vmatpush2.bf16.msra.mxu0 %v7824
        %8237 = vmatprep.subr.bf16.mxu0 %v7817
        %8238 = vmatpush2.bf16.msra.mxu0 %v7816
        %8239 = vmatprep.subr.bf16.mxu0 %v7809
        %8240 = vmatpush2.bf16.msra.mxu0 %v7808
        %8241 = vmatprep.subr.bf16.mxu0 %v7801
        %8242 = vmatpush2.bf16.msra.mxu0 %v7800
        %8243 = vmatprep.subr.bf16.mxu0 %v7793
        %8244 = vmatpush2.bf16.msra.mxu0 %v7792
        %8245 = vmatprep.subr.bf16.mxu0 %v7785
        %8246 = vmatpush2.bf16.msra.mxu0 %v7784
        %8247 = vmatprep.subr.bf16.mxu0 %v7777
        %8248 = vmatpush2.bf16.msra.mxu0 %v7776
        %8249 = vmatprep.mubr.bf16.mxu0 %v4689
        %8250 = vmatmul.mubr.bf16.gmra.mxu0 %v4688
        %v8251 = vpop.f32.mrf.mxu0
        %v8252 = vadd.f32 %v8211, %v8251
        %v8253 = vpop.f32.mrf.mxu0
        %v8254 = vadd.f32 %v8213, %v8253
        %v8255 = vpop.f32.mrf.mxu0
        %v8256 = vpop.f32.mrf.mxu0
        %8257 = vdwg.mxu0
        %8258 = vmatprep.subr.bf16.mxu0 %v7643
        %8259 = vmatpush1.bf16.msra.mxu0 %v7642
        %8260 = vmatprep.subr.bf16.mxu0 %v7635
        %8261 = vmatpush1.bf16.msra.mxu0 %v7634
        %8262 = vmatprep.subr.bf16.mxu0 %v7627
        %8263 = vmatpush1.bf16.msra.mxu0 %v7626
        %8264 = vmatprep.subr.bf16.mxu0 %v7619
        %8265 = vmatpush1.bf16.msra.mxu0 %v7618
        %8266 = vmatprep.subr.bf16.mxu0 %v7611
        %8267 = vmatpush1.bf16.msra.mxu0 %v7610
        %8268 = vmatprep.subr.bf16.mxu0 %v7603
        %8269 = vmatpush1.bf16.msra.mxu0 %v7602
        %8270 = vmatprep.subr.bf16.mxu0 %v7595
        %8271 = vmatpush1.bf16.msra.mxu0 %v7594
        %8272 = vmatprep.subr.bf16.mxu0 %v7587
        %8273 = vmatpush1.bf16.msra.mxu0 %v7586
        %8274 = vmatprep.subr.bf16.mxu0 %v7707
        %8275 = vmatpush2.bf16.msra.mxu0 %v7706
        %8276 = vmatprep.subr.bf16.mxu0 %v7699
        %8277 = vmatpush2.bf16.msra.mxu0 %v7698
        %8278 = vmatprep.subr.bf16.mxu0 %v7691
        %8279 = vmatpush2.bf16.msra.mxu0 %v7690
        %8280 = vmatprep.subr.bf16.mxu0 %v7683
        %8281 = vmatpush2.bf16.msra.mxu0 %v7682
        %8282 = vmatprep.subr.bf16.mxu0 %v7675
        %8283 = vmatpush2.bf16.msra.mxu0 %v7674
        %8284 = vmatprep.subr.bf16.mxu0 %v7667
        %8285 = vmatpush2.bf16.msra.mxu0 %v7666
        %8286 = vmatprep.subr.bf16.mxu0 %v7659
        %8287 = vmatpush2.bf16.msra.mxu0 %v7658
        %8288 = vmatprep.subr.bf16.mxu0 %v7651
        %8289 = vmatpush2.bf16.msra.mxu0 %v7650
        %8290 = vmatprep.mubr.bf16.mxu0 %v4687
        %8291 = vmatmul.mubr.bf16.gmra.mxu0 %v4686
        %v8292 = vpop.f32.mrf.mxu0
        %v8293 = vadd.f32 %v6726, %v8292
        %v8294 = vpop.f32.mrf.mxu0
        %v8295 = vadd.f32 %v6728, %v8294
        %v8296 = vpop.f32.mrf.mxu0
        %v8297 = vpop.f32.mrf.mxu0
        %8298 = vdwg.mxu0
        %8299 = vmatprep.subr.bf16.mxu0 %v7771
        %8300 = vmatpush1.bf16.msra.mxu0 %v7770
        %8301 = vmatprep.subr.bf16.mxu0 %v7763
        %8302 = vmatpush1.bf16.msra.mxu0 %v7762
        %8303 = vmatprep.subr.bf16.mxu0 %v7755
        %8304 = vmatpush1.bf16.msra.mxu0 %v7754
        %8305 = vmatprep.subr.bf16.mxu0 %v7747
        %8306 = vmatpush1.bf16.msra.mxu0 %v7746
        %8307 = vmatprep.subr.bf16.mxu0 %v7739
        %8308 = vmatpush1.bf16.msra.mxu0 %v7738
        %8309 = vmatprep.subr.bf16.mxu0 %v7731
        %8310 = vmatpush1.bf16.msra.mxu0 %v7730
        %8311 = vmatprep.subr.bf16.mxu0 %v7723
        %8312 = vmatpush1.bf16.msra.mxu0 %v7722
        %8313 = vmatprep.subr.bf16.mxu0 %v7715
        %8314 = vmatpush1.bf16.msra.mxu0 %v7714
        %8315 = vmatprep.subr.bf16.mxu0 %v7835
        %8316 = vmatpush2.bf16.msra.mxu0 %v7834
        %8317 = vmatprep.subr.bf16.mxu0 %v7827
        %8318 = vmatpush2.bf16.msra.mxu0 %v7826
        %8319 = vmatprep.subr.bf16.mxu0 %v7819
        %8320 = vmatpush2.bf16.msra.mxu0 %v7818
        %8321 = vmatprep.subr.bf16.mxu0 %v7811
        %8322 = vmatpush2.bf16.msra.mxu0 %v7810
        %8323 = vmatprep.subr.bf16.mxu0 %v7803
        %8324 = vmatpush2.bf16.msra.mxu0 %v7802
        %8325 = vmatprep.subr.bf16.mxu0 %v7795
        %8326 = vmatpush2.bf16.msra.mxu0 %v7794
        %8327 = vmatprep.subr.bf16.mxu0 %v7787
        %8328 = vmatpush2.bf16.msra.mxu0 %v7786
        %8329 = vmatprep.subr.bf16.mxu0 %v7779
        %8330 = vmatpush2.bf16.msra.mxu0 %v7778
        %8331 = vmatprep.mubr.bf16.mxu0 %v4689
        %8332 = vmatmul.mubr.bf16.gmra.mxu0 %v4688
        %v8333 = vpop.f32.mrf.mxu0
        %v8334 = vadd.f32 %v8293, %v8333
        %v8335 = vpop.f32.mrf.mxu0
        %v8336 = vadd.f32 %v8295, %v8335
        %v8337 = vpop.f32.mrf.mxu0
        %v8338 = vpop.f32.mrf.mxu0
        %8339 = vdwg.mxu0
        %8340 = vmatprep.subr.bf16.mxu0 %v7645
        %8341 = vmatpush1.bf16.msra.mxu0 %v7644
        %8342 = vmatprep.subr.bf16.mxu0 %v7637
        %8343 = vmatpush1.bf16.msra.mxu0 %v7636
        %8344 = vmatprep.subr.bf16.mxu0 %v7629
        %8345 = vmatpush1.bf16.msra.mxu0 %v7628
        %8346 = vmatprep.subr.bf16.mxu0 %v7621
        %8347 = vmatpush1.bf16.msra.mxu0 %v7620
        %8348 = vmatprep.subr.bf16.mxu0 %v7613
        %8349 = vmatpush1.bf16.msra.mxu0 %v7612
        %8350 = vmatprep.subr.bf16.mxu0 %v7605
        %8351 = vmatpush1.bf16.msra.mxu0 %v7604
        %8352 = vmatprep.subr.bf16.mxu0 %v7597
        %8353 = vmatpush1.bf16.msra.mxu0 %v7596
        %8354 = vmatprep.subr.bf16.mxu0 %v7589
        %8355 = vmatpush1.bf16.msra.mxu0 %v7588
        %8356 = vmatprep.subr.bf16.mxu0 %v7709
        %8357 = vmatpush2.bf16.msra.mxu0 %v7708
        %8358 = vmatprep.subr.bf16.mxu0 %v7701
        %8359 = vmatpush2.bf16.msra.mxu0 %v7700
        %8360 = vmatprep.subr.bf16.mxu0 %v7693
        %8361 = vmatpush2.bf16.msra.mxu0 %v7692
        %8362 = vmatprep.subr.bf16.mxu0 %v7685
        %8363 = vmatpush2.bf16.msra.mxu0 %v7684
        %8364 = vmatprep.subr.bf16.mxu0 %v7677
        %8365 = vmatpush2.bf16.msra.mxu0 %v7676
        %8366 = vmatprep.subr.bf16.mxu0 %v7669
        %8367 = vmatpush2.bf16.msra.mxu0 %v7668
        %8368 = vmatprep.subr.bf16.mxu0 %v7661
        %8369 = vmatpush2.bf16.msra.mxu0 %v7660
        %8370 = vmatprep.subr.bf16.mxu0 %v7653
        %8371 = vmatpush2.bf16.msra.mxu0 %v7652
        %8372 = vmatprep.mubr.bf16.mxu0 %v4687
        %8373 = vmatmul.mubr.bf16.gmra.mxu0 %v4686
        %v8374 = vpop.f32.mrf.mxu0
        %v8375 = vadd.f32 %v6808, %v8374
        %v8376 = vpop.f32.mrf.mxu0
        %v8377 = vadd.f32 %v6810, %v8376
        %v8378 = vpop.f32.mrf.mxu0
        %v8379 = vpop.f32.mrf.mxu0
        %8380 = vdwg.mxu0
        %8381 = vmatprep.subr.bf16.mxu0 %v7773
        %8382 = vmatpush1.bf16.msra.mxu0 %v7772
        %8383 = vmatprep.subr.bf16.mxu0 %v7765
        %8384 = vmatpush1.bf16.msra.mxu0 %v7764
        %8385 = vmatprep.subr.bf16.mxu0 %v7757
        %8386 = vmatpush1.bf16.msra.mxu0 %v7756
        %8387 = vmatprep.subr.bf16.mxu0 %v7749
        %8388 = vmatpush1.bf16.msra.mxu0 %v7748
        %8389 = vmatprep.subr.bf16.mxu0 %v7741
        %8390 = vmatpush1.bf16.msra.mxu0 %v7740
        %8391 = vmatprep.subr.bf16.mxu0 %v7733
        %8392 = vmatpush1.bf16.msra.mxu0 %v7732
        %8393 = vmatprep.subr.bf16.mxu0 %v7725
        %8394 = vmatpush1.bf16.msra.mxu0 %v7724
        %8395 = vmatprep.subr.bf16.mxu0 %v7717
        %8396 = vmatpush1.bf16.msra.mxu0 %v7716
        %8397 = vmatprep.subr.bf16.mxu0 %v7837
        %8398 = vmatpush2.bf16.msra.mxu0 %v7836
        %8399 = vmatprep.subr.bf16.mxu0 %v7829
        %8400 = vmatpush2.bf16.msra.mxu0 %v7828
        %8401 = vmatprep.subr.bf16.mxu0 %v7821
        %8402 = vmatpush2.bf16.msra.mxu0 %v7820
        %8403 = vmatprep.subr.bf16.mxu0 %v7813
        %8404 = vmatpush2.bf16.msra.mxu0 %v7812
        %8405 = vmatprep.subr.bf16.mxu0 %v7805
        %8406 = vmatpush2.bf16.msra.mxu0 %v7804
        %8407 = vmatprep.subr.bf16.mxu0 %v7797
        %8408 = vmatpush2.bf16.msra.mxu0 %v7796
        %8409 = vmatprep.subr.bf16.mxu0 %v7789
        %8410 = vmatpush2.bf16.msra.mxu0 %v7788
        %8411 = vmatprep.subr.bf16.mxu0 %v7781
        %8412 = vmatpush2.bf16.msra.mxu0 %v7780
        %8413 = vmatprep.mubr.bf16.mxu0 %v4689
        %8414 = vmatmul.mubr.bf16.gmra.mxu0 %v4688
        %v8415 = vpop.f32.mrf.mxu0
        %v8416 = vadd.f32 %v8375, %v8415
        %v8417 = vpop.f32.mrf.mxu0
        %v8418 = vadd.f32 %v8377, %v8417
        %v8419 = vpop.f32.mrf.mxu0
        %v8420 = vpop.f32.mrf.mxu0
        %8421 = vdwg.mxu0
        %v8422 = vld [vmem:[%s698] sm:$0xff]
        %v8424 = vlaneseq
        %v8425 = vshrl.u32 %v8424, 7
        %v8426 = vsub.s32 0, %v8425
        %v8427 = vrot.slane %v8422, %v8426
        %v8428 = vlaneseq
        %v8429 = vshrl.u32 %v8428, 7
        %v8430 = vsub.s32 1, %v8429
        %v8431 = vrot.slane %v8422, %v8430
        %v8432 = vlaneseq
        %v8433 = vshrl.u32 %v8432, 7
        %v8434 = vsub.s32 2, %v8433
        %v8435 = vrot.slane %v8422, %v8434
        %v8436 = vlaneseq
        %v8437 = vshrl.u32 %v8436, 7
        %v8438 = vsub.s32 3, %v8437
        %v8439 = vrot.slane %v8422, %v8438
        %v8440 = vlaneseq
        %v8441 = vshrl.u32 %v8440, 7
        %v8442 = vsub.s32 4, %v8441
        %v8443 = vrot.slane %v8422, %v8442
        %v8444 = vlaneseq
        %v8445 = vshrl.u32 %v8444, 7
        %v8446 = vsub.s32 5, %v8445
        %v8447 = vrot.slane %v8422, %v8446
        %v8448 = vlaneseq
        %v8449 = vshrl.u32 %v8448, 7
        %v8450 = vsub.s32 6, %v8449
        %v8451 = vrot.slane %v8422, %v8450
        %v8452 = vlaneseq
        %v8453 = vshrl.u32 %v8452, 7
        %v8454 = vsub.s32 7, %v8453
        %v8455 = vrot.slane %v8422, %v8454
        %v8464 = vadd.f32 %v8170, %v8427
        %v8465 = vadd.f32 %v8172, %v8431
        %v8466 = vadd.f32 %v8252, %v8435
        %v8467 = vadd.f32 %v8254, %v8439
        %v8468 = vadd.f32 %v8334, %v8443
        %v8469 = vadd.f32 %v8336, %v8447
        %v8470 = vadd.f32 %v8416, %v8451
        %v8471 = vadd.f32 %v8418, %v8455
        %v8472 = vmax.f32 %v8464, 0.0
        %v8473 = vmax.f32 %v8465, 0.0
        %v8474 = vmax.f32 %v8466, 0.0
        %v8475 = vmax.f32 %v8467, 0.0
        %v8476 = vmax.f32 %v8468, 0.0
        %v8477 = vmax.f32 %v8469, 0.0
        %v8478 = vmax.f32 %v8470, 0.0
        %v8479 = vmax.f32 %v8471, 0.0
        %v8480 = vpack.c.bf16 %v8472, %v8472
        %v8481 = vpack.c.bf16 %v8473, %v8473
        %v8482 = vpack.c.bf16 %v8474, %v8474
        %v8483 = vpack.c.bf16 %v8475, %v8475
        %v8484 = vpack.c.bf16 %v8476, %v8476
        %v8485 = vpack.c.bf16 %v8477, %v8477
        %v8486 = vpack.c.bf16 %v8478, %v8478
        %v8487 = vpack.c.bf16 %v8479, %v8479
        %v8488 = vld [vmem:[%s707] sm:$0xf]
        %v8489 = vld [vmem:[%s707 + $0x4] sm:$0xf]
        %v8490 = vld [vmem:[%s707 + $0x8] sm:$0xf]
        %v8491 = vld [vmem:[%s707 + $0xc] sm:$0xf]
        %v8492 = vld [vmem:[%s707 + $0x10] sm:$0xf]
        %v8493 = vld [vmem:[%s707 + $0x14] sm:$0xf]
        %v8494 = vld [vmem:[%s707 + $0x18] sm:$0xf]
        %v8495 = vld [vmem:[%s707 + $0x1c] sm:$0xf]
        %v8496 = vld [vmem:[%s707 + $0x20] sm:$0xf]
        %v8497 = vld [vmem:[%s707 + $0x24] sm:$0xf]
        %v8498 = vld [vmem:[%s707 + $0x28] sm:$0xf]
        %v8499 = vld [vmem:[%s707 + $0x2c] sm:$0xf]
        %v8500 = vld [vmem:[%s707 + $0x30] sm:$0xf]
        %v8501 = vld [vmem:[%s707 + $0x34] sm:$0xf]
        %v8502 = vld [vmem:[%s707 + $0x38] sm:$0xf]
        %v8503 = vld [vmem:[%s707 + $0x3c] sm:$0xf]
        %v8504 = vld [vmem:[%s707 + $0x40] sm:$0xf]
        %v8505 = vld [vmem:[%s707 + $0x44] sm:$0xf]
        %v8506 = vld [vmem:[%s707 + $0x48] sm:$0xf]
        %v8507 = vld [vmem:[%s707 + $0x4c] sm:$0xf]
        %v8508 = vld [vmem:[%s707 + $0x50] sm:$0xf]
        %v8509 = vld [vmem:[%s707 + $0x54] sm:$0xf]
        %v8510 = vld [vmem:[%s707 + $0x58] sm:$0xf]
        %v8511 = vld [vmem:[%s707 + $0x5c] sm:$0xf]
        %v8512 = vld [vmem:[%s707 + $0x60] sm:$0xf]
        %v8513 = vld [vmem:[%s707 + $0x64] sm:$0xf]
        %v8514 = vld [vmem:[%s707 + $0x68] sm:$0xf]
        %v8515 = vld [vmem:[%s707 + $0x6c] sm:$0xf]
        %v8516 = vld [vmem:[%s707 + $0x70] sm:$0xf]
        %v8517 = vld [vmem:[%s707 + $0x74] sm:$0xf]
        %v8518 = vld [vmem:[%s707 + $0x78] sm:$0xf]
        %v8519 = vld [vmem:[%s707 + $0x7c] sm:$0xf]
        %v8520 = vld [vmem:[%s707 + $0x80] sm:$0xf]
        %v8521 = vld [vmem:[%s707 + $0x84] sm:$0xf]
        %v8522 = vld [vmem:[%s707 + $0x88] sm:$0xf]
        %v8523 = vld [vmem:[%s707 + $0x8c] sm:$0xf]
        %v8524 = vld [vmem:[%s707 + $0x90] sm:$0xf]
        %v8525 = vld [vmem:[%s707 + $0x94] sm:$0xf]
        %v8526 = vld [vmem:[%s707 + $0x98] sm:$0xf]
        %v8527 = vld [vmem:[%s707 + $0x9c] sm:$0xf]
        %v8528 = vld [vmem:[%s707 + $0xa0] sm:$0xf]
        %v8529 = vld [vmem:[%s707 + $0xa4] sm:$0xf]
        %v8530 = vld [vmem:[%s707 + $0xa8] sm:$0xf]
        %v8531 = vld [vmem:[%s707 + $0xac] sm:$0xf]
        %v8532 = vld [vmem:[%s707 + $0xb0] sm:$0xf]
        %v8533 = vld [vmem:[%s707 + $0xb4] sm:$0xf]
        %v8534 = vld [vmem:[%s707 + $0xb8] sm:$0xf]
        %v8535 = vld [vmem:[%s707 + $0xbc] sm:$0xf]
        %v8536 = vld [vmem:[%s707 + $0xc0] sm:$0xf]
        %v8537 = vld [vmem:[%s707 + $0xc4] sm:$0xf]
        %v8538 = vld [vmem:[%s707 + $0xc8] sm:$0xf]
        %v8539 = vld [vmem:[%s707 + $0xcc] sm:$0xf]
        %v8540 = vld [vmem:[%s707 + $0xd0] sm:$0xf]
        %v8541 = vld [vmem:[%s707 + $0xd4] sm:$0xf]
        %v8542 = vld [vmem:[%s707 + $0xd8] sm:$0xf]
        %v8543 = vld [vmem:[%s707 + $0xdc] sm:$0xf]
        %v8544 = vld [vmem:[%s707 + $0xe0] sm:$0xf]
        %v8545 = vld [vmem:[%s707 + $0xe4] sm:$0xf]
        %v8546 = vld [vmem:[%s707 + $0xe8] sm:$0xf]
        %v8547 = vld [vmem:[%s707 + $0xec] sm:$0xf]
        %v8548 = vld [vmem:[%s707 + $0xf0] sm:$0xf]
        %v8549 = vld [vmem:[%s707 + $0xf4] sm:$0xf]
        %v8550 = vld [vmem:[%s707 + $0xf8] sm:$0xf]
        %v8551 = vld [vmem:[%s707 + $0xfc] sm:$0xf]
        %v8552 = vld [vmem:[%s707 + $0x100] sm:$0xf]
        %v8553 = vld [vmem:[%s707 + $0x104] sm:$0xf]
        %v8554 = vld [vmem:[%s707 + $0x108] sm:$0xf]
        %v8555 = vld [vmem:[%s707 + $0x10c] sm:$0xf]
        %v8556 = vld [vmem:[%s707 + $0x110] sm:$0xf]
        %v8557 = vld [vmem:[%s707 + $0x114] sm:$0xf]
        %v8558 = vld [vmem:[%s707 + $0x118] sm:$0xf]
        %v8559 = vld [vmem:[%s707 + $0x11c] sm:$0xf]
        %v8560 = vld [vmem:[%s707 + $0x120] sm:$0xf]
        %v8561 = vld [vmem:[%s707 + $0x124] sm:$0xf]
        %v8562 = vld [vmem:[%s707 + $0x128] sm:$0xf]
        %v8563 = vld [vmem:[%s707 + $0x12c] sm:$0xf]
        %v8564 = vld [vmem:[%s707 + $0x130] sm:$0xf]
        %v8565 = vld [vmem:[%s707 + $0x134] sm:$0xf]
        %v8566 = vld [vmem:[%s707 + $0x138] sm:$0xf]
        %v8567 = vld [vmem:[%s707 + $0x13c] sm:$0xf]
        %v8568 = vld [vmem:[%s707 + $0x140] sm:$0xf]
        %v8569 = vld [vmem:[%s707 + $0x144] sm:$0xf]
        %v8570 = vld [vmem:[%s707 + $0x148] sm:$0xf]
        %v8571 = vld [vmem:[%s707 + $0x14c] sm:$0xf]
        %v8572 = vld [vmem:[%s707 + $0x150] sm:$0xf]
        %v8573 = vld [vmem:[%s707 + $0x154] sm:$0xf]
        %v8574 = vld [vmem:[%s707 + $0x158] sm:$0xf]
        %v8575 = vld [vmem:[%s707 + $0x15c] sm:$0xf]
        %v8576 = vld [vmem:[%s707 + $0x160] sm:$0xf]
        %v8577 = vld [vmem:[%s707 + $0x164] sm:$0xf]
        %v8578 = vld [vmem:[%s707 + $0x168] sm:$0xf]
        %v8579 = vld [vmem:[%s707 + $0x16c] sm:$0xf]
        %v8580 = vld [vmem:[%s707 + $0x170] sm:$0xf]
        %v8581 = vld [vmem:[%s707 + $0x174] sm:$0xf]
        %v8582 = vld [vmem:[%s707 + $0x178] sm:$0xf]
        %v8583 = vld [vmem:[%s707 + $0x17c] sm:$0xf]
        %v8584 = vld [vmem:[%s707 + $0x180] sm:$0xf]
        %v8585 = vld [vmem:[%s707 + $0x184] sm:$0xf]
        %v8586 = vld [vmem:[%s707 + $0x188] sm:$0xf]
        %v8587 = vld [vmem:[%s707 + $0x18c] sm:$0xf]
        %v8588 = vld [vmem:[%s707 + $0x190] sm:$0xf]
        %v8589 = vld [vmem:[%s707 + $0x194] sm:$0xf]
        %v8590 = vld [vmem:[%s707 + $0x198] sm:$0xf]
        %v8591 = vld [vmem:[%s707 + $0x19c] sm:$0xf]
        %v8592 = vld [vmem:[%s707 + $0x1a0] sm:$0xf]
        %v8593 = vld [vmem:[%s707 + $0x1a4] sm:$0xf]
        %v8594 = vld [vmem:[%s707 + $0x1a8] sm:$0xf]
        %v8595 = vld [vmem:[%s707 + $0x1ac] sm:$0xf]
        %v8596 = vld [vmem:[%s707 + $0x1b0] sm:$0xf]
        %v8597 = vld [vmem:[%s707 + $0x1b4] sm:$0xf]
        %v8598 = vld [vmem:[%s707 + $0x1b8] sm:$0xf]
        %v8599 = vld [vmem:[%s707 + $0x1bc] sm:$0xf]
        %v8600 = vld [vmem:[%s707 + $0x1c0] sm:$0xf]
        %v8601 = vld [vmem:[%s707 + $0x1c4] sm:$0xf]
        %v8602 = vld [vmem:[%s707 + $0x1c8] sm:$0xf]
        %v8603 = vld [vmem:[%s707 + $0x1cc] sm:$0xf]
        %v8604 = vld [vmem:[%s707 + $0x1d0] sm:$0xf]
        %v8605 = vld [vmem:[%s707 + $0x1d4] sm:$0xf]
        %v8606 = vld [vmem:[%s707 + $0x1d8] sm:$0xf]
        %v8607 = vld [vmem:[%s707 + $0x1dc] sm:$0xf]
        %v8608 = vld [vmem:[%s707 + $0x1e0] sm:$0xf]
        %v8609 = vld [vmem:[%s707 + $0x1e4] sm:$0xf]
        %v8610 = vld [vmem:[%s707 + $0x1e8] sm:$0xf]
        %v8611 = vld [vmem:[%s707 + $0x1ec] sm:$0xf]
        %v8612 = vld [vmem:[%s707 + $0x1f0] sm:$0xf]
        %v8613 = vld [vmem:[%s707 + $0x1f4] sm:$0xf]
        %v8614 = vld [vmem:[%s707 + $0x1f8] sm:$0xf]
        %v8615 = vld [vmem:[%s707 + $0x1fc] sm:$0xf]
        %v8616 = vld [vmem:[%s715] sm:$0x1]
        %v8618 = vlaneseq
        %v8619 = vshrl.u32 %v8618, 7
        %v8620 = vsub.s32 0, %v8619
        %v8621 = vrot.slane %v8616, %v8620
        %v8751 = vunpack.c.l.b16 %v8488
        %v8752 = vunpack.c.l.b16 %v8489
        %v8753 = vunpack.c.l.b16 %v8490
        %v8754 = vunpack.c.l.b16 %v8491
        %v8755 = vunpack.c.l.b16 %v8492
        %v8756 = vunpack.c.l.b16 %v8493
        %v8757 = vunpack.c.l.b16 %v8494
        %v8758 = vunpack.c.l.b16 %v8495
        %v8759 = vunpack.c.l.b16 %v8496
        %v8760 = vunpack.c.l.b16 %v8497
        %v8761 = vunpack.c.l.b16 %v8498
        %v8762 = vunpack.c.l.b16 %v8499
        %v8763 = vunpack.c.l.b16 %v8500
        %v8764 = vunpack.c.l.b16 %v8501
        %v8765 = vunpack.c.l.b16 %v8502
        %v8766 = vunpack.c.l.b16 %v8503
        %v8767 = vunpack.c.l.b16 %v8504
        %v8768 = vunpack.c.l.b16 %v8505
        %v8769 = vunpack.c.l.b16 %v8506
        %v8770 = vunpack.c.l.b16 %v8507
        %v8771 = vunpack.c.l.b16 %v8508
        %v8772 = vunpack.c.l.b16 %v8509
        %v8773 = vunpack.c.l.b16 %v8510
        %v8774 = vunpack.c.l.b16 %v8511
        %v8775 = vunpack.c.l.b16 %v8512
        %v8776 = vunpack.c.l.b16 %v8513
        %v8777 = vunpack.c.l.b16 %v8514
        %v8778 = vunpack.c.l.b16 %v8515
        %v8779 = vunpack.c.l.b16 %v8516
        %v8780 = vunpack.c.l.b16 %v8517
        %v8781 = vunpack.c.l.b16 %v8518
        %v8782 = vunpack.c.l.b16 %v8519
        %v8783 = vunpack.c.l.b16 %v8520
        %v8784 = vunpack.c.l.b16 %v8521
        %v8785 = vunpack.c.l.b16 %v8522
        %v8786 = vunpack.c.l.b16 %v8523
        %v8787 = vunpack.c.l.b16 %v8524
        %v8788 = vunpack.c.l.b16 %v8525
        %v8789 = vunpack.c.l.b16 %v8526
        %v8790 = vunpack.c.l.b16 %v8527
        %v8791 = vunpack.c.l.b16 %v8528
        %v8792 = vunpack.c.l.b16 %v8529
        %v8793 = vunpack.c.l.b16 %v8530
        %v8794 = vunpack.c.l.b16 %v8531
        %v8795 = vunpack.c.l.b16 %v8532
        %v8796 = vunpack.c.l.b16 %v8533
        %v8797 = vunpack.c.l.b16 %v8534
        %v8798 = vunpack.c.l.b16 %v8535
        %v8799 = vunpack.c.l.b16 %v8536
        %v8800 = vunpack.c.l.b16 %v8537
        %v8801 = vunpack.c.l.b16 %v8538
        %v8802 = vunpack.c.l.b16 %v8539
        %v8803 = vunpack.c.l.b16 %v8540
        %v8804 = vunpack.c.l.b16 %v8541
        %v8805 = vunpack.c.l.b16 %v8542
        %v8806 = vunpack.c.l.b16 %v8543
        %v8807 = vunpack.c.l.b16 %v8544
        %v8808 = vunpack.c.l.b16 %v8545
        %v8809 = vunpack.c.l.b16 %v8546
        %v8810 = vunpack.c.l.b16 %v8547
        %v8811 = vunpack.c.l.b16 %v8548
        %v8812 = vunpack.c.l.b16 %v8549
        %v8813 = vunpack.c.l.b16 %v8550
        %v8814 = vunpack.c.l.b16 %v8551
        %v8815 = vunpack.c.l.b16 %v8552
        %v8816 = vunpack.c.l.b16 %v8553
        %v8817 = vunpack.c.l.b16 %v8554
        %v8818 = vunpack.c.l.b16 %v8555
        %v8819 = vunpack.c.l.b16 %v8556
        %v8820 = vunpack.c.l.b16 %v8557
        %v8821 = vunpack.c.l.b16 %v8558
        %v8822 = vunpack.c.l.b16 %v8559
        %v8823 = vunpack.c.l.b16 %v8560
        %v8824 = vunpack.c.l.b16 %v8561
        %v8825 = vunpack.c.l.b16 %v8562
        %v8826 = vunpack.c.l.b16 %v8563
        %v8827 = vunpack.c.l.b16 %v8564
        %v8828 = vunpack.c.l.b16 %v8565
        %v8829 = vunpack.c.l.b16 %v8566
        %v8830 = vunpack.c.l.b16 %v8567
        %v8831 = vunpack.c.l.b16 %v8568
        %v8832 = vunpack.c.l.b16 %v8569
        %v8833 = vunpack.c.l.b16 %v8570
        %v8834 = vunpack.c.l.b16 %v8571
        %v8835 = vunpack.c.l.b16 %v8572
        %v8836 = vunpack.c.l.b16 %v8573
        %v8837 = vunpack.c.l.b16 %v8574
        %v8838 = vunpack.c.l.b16 %v8575
        %v8839 = vunpack.c.l.b16 %v8576
        %v8840 = vunpack.c.l.b16 %v8577
        %v8841 = vunpack.c.l.b16 %v8578
        %v8842 = vunpack.c.l.b16 %v8579
        %v8843 = vunpack.c.l.b16 %v8580
        %v8844 = vunpack.c.l.b16 %v8581
        %v8845 = vunpack.c.l.b16 %v8582
        %v8846 = vunpack.c.l.b16 %v8583
        %v8847 = vunpack.c.l.b16 %v8584
        %v8848 = vunpack.c.l.b16 %v8585
        %v8849 = vunpack.c.l.b16 %v8586
        %v8850 = vunpack.c.l.b16 %v8587
        %v8851 = vunpack.c.l.b16 %v8588
        %v8852 = vunpack.c.l.b16 %v8589
        %v8853 = vunpack.c.l.b16 %v8590
        %v8854 = vunpack.c.l.b16 %v8591
        %v8855 = vunpack.c.l.b16 %v8592
        %v8856 = vunpack.c.l.b16 %v8593
        %v8857 = vunpack.c.l.b16 %v8594
        %v8858 = vunpack.c.l.b16 %v8595
        %v8859 = vunpack.c.l.b16 %v8596
        %v8860 = vunpack.c.l.b16 %v8597
        %v8861 = vunpack.c.l.b16 %v8598
        %v8862 = vunpack.c.l.b16 %v8599
        %v8863 = vunpack.c.l.b16 %v8600
        %v8864 = vunpack.c.l.b16 %v8601
        %v8865 = vunpack.c.l.b16 %v8602
        %v8866 = vunpack.c.l.b16 %v8603
        %v8867 = vunpack.c.l.b16 %v8604
        %v8868 = vunpack.c.l.b16 %v8605
        %v8869 = vunpack.c.l.b16 %v8606
        %v8870 = vunpack.c.l.b16 %v8607
        %v8871 = vunpack.c.l.b16 %v8608
        %v8872 = vunpack.c.l.b16 %v8609
        %v8873 = vunpack.c.l.b16 %v8610
        %v8874 = vunpack.c.l.b16 %v8611
        %v8875 = vunpack.c.l.b16 %v8612
        %v8876 = vunpack.c.l.b16 %v8613
        %v8877 = vunpack.c.l.b16 %v8614
        %v8878 = vunpack.c.l.b16 %v8615
        %v8879 = vpack.c.b16 %v8752, %v8751
        %v8880 = vpack.c.b16 %v8754, %v8753
        %v8881 = vpack.c.b16 %v8756, %v8755
        %v8882 = vpack.c.b16 %v8758, %v8757
        %v8883 = vpack.c.b16 %v8760, %v8759
        %v8884 = vpack.c.b16 %v8762, %v8761
        %v8885 = vpack.c.b16 %v8764, %v8763
        %v8886 = vpack.c.b16 %v8766, %v8765
        %v8887 = vpack.c.b16 %v8768, %v8767
        %v8888 = vpack.c.b16 %v8770, %v8769
        %v8889 = vpack.c.b16 %v8772, %v8771
        %v8890 = vpack.c.b16 %v8774, %v8773
        %v8891 = vpack.c.b16 %v8776, %v8775
        %v8892 = vpack.c.b16 %v8778, %v8777
        %v8893 = vpack.c.b16 %v8780, %v8779
        %v8894 = vpack.c.b16 %v8782, %v8781
        %v8895 = vpack.c.b16 %v8784, %v8783
        %v8896 = vpack.c.b16 %v8786, %v8785
        %v8897 = vpack.c.b16 %v8788, %v8787
        %v8898 = vpack.c.b16 %v8790, %v8789
        %v8899 = vpack.c.b16 %v8792, %v8791
        %v8900 = vpack.c.b16 %v8794, %v8793
        %v8901 = vpack.c.b16 %v8796, %v8795
        %v8902 = vpack.c.b16 %v8798, %v8797
        %v8903 = vpack.c.b16 %v8800, %v8799
        %v8904 = vpack.c.b16 %v8802, %v8801
        %v8905 = vpack.c.b16 %v8804, %v8803
        %v8906 = vpack.c.b16 %v8806, %v8805
        %v8907 = vpack.c.b16 %v8808, %v8807
        %v8908 = vpack.c.b16 %v8810, %v8809
        %v8909 = vpack.c.b16 %v8812, %v8811
        %v8910 = vpack.c.b16 %v8814, %v8813
        %v8911 = vpack.c.b16 %v8816, %v8815
        %v8912 = vpack.c.b16 %v8818, %v8817
        %v8913 = vpack.c.b16 %v8820, %v8819
        %v8914 = vpack.c.b16 %v8822, %v8821
        %v8915 = vpack.c.b16 %v8824, %v8823
        %v8916 = vpack.c.b16 %v8826, %v8825
        %v8917 = vpack.c.b16 %v8828, %v8827
        %v8918 = vpack.c.b16 %v8830, %v8829
        %v8919 = vpack.c.b16 %v8832, %v8831
        %v8920 = vpack.c.b16 %v8834, %v8833
        %v8921 = vpack.c.b16 %v8836, %v8835
        %v8922 = vpack.c.b16 %v8838, %v8837
        %v8923 = vpack.c.b16 %v8840, %v8839
        %v8924 = vpack.c.b16 %v8842, %v8841
        %v8925 = vpack.c.b16 %v8844, %v8843
        %v8926 = vpack.c.b16 %v8846, %v8845
        %v8927 = vpack.c.b16 %v8848, %v8847
        %v8928 = vpack.c.b16 %v8850, %v8849
        %v8929 = vpack.c.b16 %v8852, %v8851
        %v8930 = vpack.c.b16 %v8854, %v8853
        %v8931 = vpack.c.b16 %v8856, %v8855
        %v8932 = vpack.c.b16 %v8858, %v8857
        %v8933 = vpack.c.b16 %v8860, %v8859
        %v8934 = vpack.c.b16 %v8862, %v8861
        %v8935 = vpack.c.b16 %v8864, %v8863
        %v8936 = vpack.c.b16 %v8866, %v8865
        %v8937 = vpack.c.b16 %v8868, %v8867
        %v8938 = vpack.c.b16 %v8870, %v8869
        %v8939 = vpack.c.b16 %v8872, %v8871
        %v8940 = vpack.c.b16 %v8874, %v8873
        %v8941 = vpack.c.b16 %v8876, %v8875
        %v8942 = vpack.c.b16 %v8878, %v8877
        %9007 = vmatprep.subr.bf16.mxu0 0
        %9008 = vmatpush1.bf16.msra.mxu0 %v8886
        %9009 = vmatprep.subr.bf16.mxu0 0
        %9010 = vmatpush1.bf16.msra.mxu0 %v8885
        %9011 = vmatprep.subr.bf16.mxu0 0
        %9012 = vmatpush1.bf16.msra.mxu0 %v8884
        %9013 = vmatprep.subr.bf16.mxu0 0
        %9014 = vmatpush1.bf16.msra.mxu0 %v8883
        %9015 = vmatprep.subr.bf16.mxu0 0
        %9016 = vmatpush1.bf16.msra.mxu0 %v8882
        %9017 = vmatprep.subr.bf16.mxu0 0
        %9018 = vmatpush1.bf16.msra.mxu0 %v8881
        %9019 = vmatprep.subr.bf16.mxu0 0
        %9020 = vmatpush1.bf16.msra.mxu0 %v8880
        %9021 = vmatprep.subr.bf16.mxu0 0
        %9022 = vmatpush1.bf16.msra.mxu0 %v8879
        %9023 = vmatprep.subr.bf16.mxu0 0
        %9024 = vmatpush2.bf16.msra.mxu0 %v8894
        %9025 = vmatprep.subr.bf16.mxu0 0
        %9026 = vmatpush2.bf16.msra.mxu0 %v8893
        %9027 = vmatprep.subr.bf16.mxu0 0
        %9028 = vmatpush2.bf16.msra.mxu0 %v8892
        %9029 = vmatprep.subr.bf16.mxu0 0
        %9030 = vmatpush2.bf16.msra.mxu0 %v8891
        %9031 = vmatprep.subr.bf16.mxu0 0
        %9032 = vmatpush2.bf16.msra.mxu0 %v8890
        %9033 = vmatprep.subr.bf16.mxu0 0
        %9034 = vmatpush2.bf16.msra.mxu0 %v8889
        %9035 = vmatprep.subr.bf16.mxu0 0
        %9036 = vmatpush2.bf16.msra.mxu0 %v8888
        %9037 = vmatprep.subr.bf16.mxu0 0
        %9038 = vmatpush2.bf16.msra.mxu0 %v8887
        %9039 = vmatprep.mubr.bf16.mxu0 %v8481
        %9040 = vmatmul.mubr.bf16.gmra.mxu0 %v8480
        %v9041 = vpop.f32.mrf.mxu0
        %v9042 = vadd.f32 %v8621, %v9041
        %v9043 = vpop.f32.mrf.mxu0
        %v9044 = vpop.f32.mrf.mxu0
        %v9045 = vpop.f32.mrf.mxu0
        %9046 = vdwg.mxu0
        %9047 = vmatprep.subr.bf16.mxu0 0
        %9048 = vmatpush1.bf16.msra.mxu0 %v8902
        %9049 = vmatprep.subr.bf16.mxu0 0
        %9050 = vmatpush1.bf16.msra.mxu0 %v8901
        %9051 = vmatprep.subr.bf16.mxu0 0
        %9052 = vmatpush1.bf16.msra.mxu0 %v8900
        %9053 = vmatprep.subr.bf16.mxu0 0
        %9054 = vmatpush1.bf16.msra.mxu0 %v8899
        %9055 = vmatprep.subr.bf16.mxu0 0
        %9056 = vmatpush1.bf16.msra.mxu0 %v8898
        %9057 = vmatprep.subr.bf16.mxu0 0
        %9058 = vmatpush1.bf16.msra.mxu0 %v8897
        %9059 = vmatprep.subr.bf16.mxu0 0
        %9060 = vmatpush1.bf16.msra.mxu0 %v8896
        %9061 = vmatprep.subr.bf16.mxu0 0
        %9062 = vmatpush1.bf16.msra.mxu0 %v8895
        %9063 = vmatprep.subr.bf16.mxu0 0
        %9064 = vmatpush2.bf16.msra.mxu0 %v8910
        %9065 = vmatprep.subr.bf16.mxu0 0
        %9066 = vmatpush2.bf16.msra.mxu0 %v8909
        %9067 = vmatprep.subr.bf16.mxu0 0
        %9068 = vmatpush2.bf16.msra.mxu0 %v8908
        %9069 = vmatprep.subr.bf16.mxu0 0
        %9070 = vmatpush2.bf16.msra.mxu0 %v8907
        %9071 = vmatprep.subr.bf16.mxu0 0
        %9072 = vmatpush2.bf16.msra.mxu0 %v8906
        %9073 = vmatprep.subr.bf16.mxu0 0
        %9074 = vmatpush2.bf16.msra.mxu0 %v8905
        %9075 = vmatprep.subr.bf16.mxu0 0
        %9076 = vmatpush2.bf16.msra.mxu0 %v8904
        %9077 = vmatprep.subr.bf16.mxu0 0
        %9078 = vmatpush2.bf16.msra.mxu0 %v8903
        %9079 = vmatprep.mubr.bf16.mxu0 %v8483
        %9080 = vmatmul.mubr.bf16.gmra.mxu0 %v8482
        %v9081 = vpop.f32.mrf.mxu0
        %v9082 = vadd.f32 %v9042, %v9081
        %v9083 = vpop.f32.mrf.mxu0
        %v9084 = vpop.f32.mrf.mxu0
        %v9085 = vpop.f32.mrf.mxu0
        %9086 = vdwg.mxu0
        %9087 = vmatprep.subr.bf16.mxu0 0
        %9088 = vmatpush1.bf16.msra.mxu0 %v8918
        %9089 = vmatprep.subr.bf16.mxu0 0
        %9090 = vmatpush1.bf16.msra.mxu0 %v8917
        %9091 = vmatprep.subr.bf16.mxu0 0
        %9092 = vmatpush1.bf16.msra.mxu0 %v8916
        %9093 = vmatprep.subr.bf16.mxu0 0
        %9094 = vmatpush1.bf16.msra.mxu0 %v8915
        %9095 = vmatprep.subr.bf16.mxu0 0
        %9096 = vmatpush1.bf16.msra.mxu0 %v8914
        %9097 = vmatprep.subr.bf16.mxu0 0
        %9098 = vmatpush1.bf16.msra.mxu0 %v8913
        %9099 = vmatprep.subr.bf16.mxu0 0
        %9100 = vmatpush1.bf16.msra.mxu0 %v8912
        %9101 = vmatprep.subr.bf16.mxu0 0
        %9102 = vmatpush1.bf16.msra.mxu0 %v8911
        %9103 = vmatprep.subr.bf16.mxu0 0
        %9104 = vmatpush2.bf16.msra.mxu0 %v8926
        %9105 = vmatprep.subr.bf16.mxu0 0
        %9106 = vmatpush2.bf16.msra.mxu0 %v8925
        %9107 = vmatprep.subr.bf16.mxu0 0
        %9108 = vmatpush2.bf16.msra.mxu0 %v8924
        %9109 = vmatprep.subr.bf16.mxu0 0
        %9110 = vmatpush2.bf16.msra.mxu0 %v8923
        %9111 = vmatprep.subr.bf16.mxu0 0
        %9112 = vmatpush2.bf16.msra.mxu0 %v8922
        %9113 = vmatprep.subr.bf16.mxu0 0
        %9114 = vmatpush2.bf16.msra.mxu0 %v8921
        %9115 = vmatprep.subr.bf16.mxu0 0
        %9116 = vmatpush2.bf16.msra.mxu0 %v8920
        %9117 = vmatprep.subr.bf16.mxu0 0
        %9118 = vmatpush2.bf16.msra.mxu0 %v8919
        %9119 = vmatprep.mubr.bf16.mxu0 %v8485
        %9120 = vmatmul.mubr.bf16.gmra.mxu0 %v8484
        %v9121 = vpop.f32.mrf.mxu0
        %v9122 = vadd.f32 %v9082, %v9121
        %v9123 = vpop.f32.mrf.mxu0
        %v9124 = vpop.f32.mrf.mxu0
        %v9125 = vpop.f32.mrf.mxu0
        %9126 = vdwg.mxu0
        %9127 = vmatprep.subr.bf16.mxu0 0
        %9128 = vmatpush1.bf16.msra.mxu0 %v8934
        %9129 = vmatprep.subr.bf16.mxu0 0
        %9130 = vmatpush1.bf16.msra.mxu0 %v8933
        %9131 = vmatprep.subr.bf16.mxu0 0
        %9132 = vmatpush1.bf16.msra.mxu0 %v8932
        %9133 = vmatprep.subr.bf16.mxu0 0
        %9134 = vmatpush1.bf16.msra.mxu0 %v8931
        %9135 = vmatprep.subr.bf16.mxu0 0
        %9136 = vmatpush1.bf16.msra.mxu0 %v8930
        %9137 = vmatprep.subr.bf16.mxu0 0
        %9138 = vmatpush1.bf16.msra.mxu0 %v8929
        %9139 = vmatprep.subr.bf16.mxu0 0
        %9140 = vmatpush1.bf16.msra.mxu0 %v8928
        %9141 = vmatprep.subr.bf16.mxu0 0
        %9142 = vmatpush1.bf16.msra.mxu0 %v8927
        %9143 = vmatprep.subr.bf16.mxu0 0
        %9144 = vmatpush2.bf16.msra.mxu0 %v8942
        %9145 = vmatprep.subr.bf16.mxu0 0
        %9146 = vmatpush2.bf16.msra.mxu0 %v8941
        %9147 = vmatprep.subr.bf16.mxu0 0
        %9148 = vmatpush2.bf16.msra.mxu0 %v8940
        %9149 = vmatprep.subr.bf16.mxu0 0
        %9150 = vmatpush2.bf16.msra.mxu0 %v8939
        %9151 = vmatprep.subr.bf16.mxu0 0
        %9152 = vmatpush2.bf16.msra.mxu0 %v8938
        %9153 = vmatprep.subr.bf16.mxu0 0
        %9154 = vmatpush2.bf16.msra.mxu0 %v8937
        %9155 = vmatprep.subr.bf16.mxu0 0
        %9156 = vmatpush2.bf16.msra.mxu0 %v8936
        %9157 = vmatprep.subr.bf16.mxu0 0
        %9158 = vmatpush2.bf16.msra.mxu0 %v8935
        %9159 = vmatprep.mubr.bf16.mxu0 %v8487
        %9160 = vmatmul.mubr.bf16.gmra.mxu0 %v8486
        %v9161 = vpop.f32.mrf.mxu0
        %v9162 = vadd.f32 %v9122, %v9161
        %v9163 = vpop.f32.mrf.mxu0
        %v9164 = vpop.f32.mrf.mxu0
        %v9165 = vpop.f32.mrf.mxu0
        %9166 = vdwg.mxu0
        %v9167 = vmax.f32 %v9162, 0.0
        %v9168 = vld [vmem:[%s723] sm:$0x1]
        %v9170 = vlaneseq
        %v9171 = vshrl.u32 %v9170, 7
        %v9172 = vsub.s32 0, %v9171
        %v9173 = vrot.slane %v9168, %v9172
        %v9175 = vmul.f32 %v9167, %v9173
        %vm9176 = vcmask 1041408
        %v9177 = vsel %vm9176, %v9175, 0.0
        %9178 = vadd.xlane.f32.xlu0 %v9177
        %v9179 = vpop.xlane.xlu0 %9178
        %v9180 = vld [vmem:[%s797] sm:$0x1]
        %v9182 = vlaneseq
        %v9183 = vshrl.u32 %v9182, 7
        %v9184 = vsub.s32 0, %v9183
        %v9185 = vrot.slane %v9180, %v9184
        %v9187 = vadd.f32 %v9179, %v9185
        %vm9188 = vcmask 1024
        %9189 = vst.msk [vmem:[%s801] sm:$0x3] %vm9188, %v9187
        %p9190 = scmp.lt.s32.totalorder %s31, 2
        %s9191 = scalar_select %p9190, %s31, 2
        %s9192 = smul.addr %s9191, 2
        %s9193 = scalar_lea.vmem %s15, %s9192
        // Predicated region
        $region137: #{tpu_custom_call.1} parent=79 // pred_check
          %p9194 = pneg %p399
        $region138: #{tpu_custom_call.1} parent=79 // pred_check_branch
          %9196 = sbr.rel (%p9194) target = $region140
        $region139: #{tpu_custom_call.1} parent=79 // pred_region
          _
        $region140: #{tpu_custom_call.1} parent=79 // pred_fallthru
          _
      $region80: #{tpu_custom_call.1} parent=5 // pred_fallthru
        _
      %p9197 = scmp.le.s32.totalorder 2, %s26
      // Predicated region
      $region141: #{tpu_custom_call.1} parent=5 // pred_check
        %p9198 = pneg %p9197
      $region142: #{tpu_custom_call.1} parent=5 // pred_check_branch
        %9200 = sbr.rel (%p9198) target = $region144
      $region143: #{tpu_custom_call.1} parent=5 // pred_region
        %s9201 = ssub.s32 %s26, 2
        // Predicated region
        $region145: #{tpu_custom_call.1} parent=143 // pred_check
          %p9202 = pneg %p405
        $region146: #{tpu_custom_call.1} parent=143 // pred_check_branch
          %9204 = sbr.rel (%p9202) target = $region148
        $region147: #{tpu_custom_call.1} parent=143 // pred_region
          %p9205 = scmp.lt.s32.totalorder %s32, 2
          %s9206 = scalar_select %p9205, %s32, 2
          %s9207 = smul.addr %s9206, 2
          %s9208 = scalar_lea.vmem %s15, %s9207
        $region148: #{tpu_custom_call.1} parent=143 // pred_fallthru
          _
      $region144: #{tpu_custom_call.1} parent=5 // pred_fallthru
        _
    $region6: #{tpu_custom_call.1} parent=1 // loop_footer
      %s30 = sadd.s32 1, %s26
    $region7: #{tpu_custom_call.1} parent=1 // loop_footer_branch
      %25 = sbr.rel target = $region3
    $region8: #{tpu_custom_call.1} parent=1 // loop_exit
      _
    %9209 = vsyncpa [#allocation3], 1
    %s9210 = scalar_lea.sflag [#allocation3], 1
    %9211 = vsyncpa %s9210, 1
    %9212 = vsyncpa [#allocation5], 1
    %9213 = vsyncpa [#allocation8], 1
    %9214 = vsyncpa [#allocation11], 1
    %9215 = vsyncpa [#allocation14], 1

</llo_original>
